<compile_context>
chip_gen: v5e
topology: v5e:2x2
jax: 0.10.0
libtpu: 0.0.40
codegen_flags: <defaults>
</compile_context>

<pallas_src>
import math

import jax
import jax.numpy as jnp
from jax.experimental import pallas as pl
from jax.experimental.pallas import tpu as pltpu


# ----------------------------------------------------------------------------
# Fused CascadeRdn kernel (single grid step, whole folded batch in VMEM)
# ----------------------------------------------------------------------------
def _make_cascade_kernel(H, W, C, F, d_outer, d_inner, L, dot_dtype):
    taps9 = [(dy, dx) for dy in range(3) for dx in range(3)]
    n_in = 2 + d_inner + 1 + d_outer + 1  # x, mask, w3_j..., b3, w1_i..., b1

    def kernel(*refs):
        x_ref, mask_ref = refs[0], refs[1]
        w3_refs = refs[2:2 + d_inner]                       # (d_outer, F, 9*C*(j+1))
        b3_ref = refs[2 + d_inner]                          # (d_outer*d_inner, F, 1)
        w1_refs = refs[3 + d_inner:3 + d_inner + d_outer]   # (F, C*(i+2))
        b1_ref = refs[3 + d_inner + d_outer]                # (d_outer, F, 1)
        o_ref = refs[n_in]
        stack_ref = refs[n_in + 1]   # (9*C*d_inner, L) VMEM: shared 3x3-conv RHS
        cat_ref = refs[n_in + 2]     # (C*(d_outer+1), L) VMEM: torch.cat(fl)

        f32 = jnp.float32
        masks = mask_ref[...]        # (9, L) f32, precomputed on host

        def write_source(slot, a):
            """Stage the 9 masked tap-shifted copies of (C, L) source `a` into
            the shared RHS scratch at row block `slot`.  Each source is rolled
            exactly once per tap; the copies live in VMEM, not vregs."""
            base = slot * 9 * C
            for k, (dy, dx) in enumerate(taps9):
                off = (dy - 1) * W + (dx - 1)                # flat source offset
                piece = a if off == 0 else pltpu.roll(a, (-off) % L, axis=1)
                if (dy, dx) != (1, 1):                       # zero padded/wrapped pixels
                    piece = piece * masks[k:k + 1, :]
                stack_ref[base + k * C:base + (k + 1) * C, :] = (
                    piece.astype(stack_ref.dtype))

        def conv3x3(i, j, nsrc, relu, residual=None):
            """3x3 'same' conv over nsrc concatenated sources as ONE deep-K dot."""
            rhs = stack_ref[0:nsrc * 9 * C, :]               # (9*C*nsrc, L)
            acc = jnp.dot(w3_refs[j][i], rhs, preferred_element_type=f32)
            acc = acc + b3_ref[i * d_inner + j]              # (F, 1) broadcast
            if relu:
                acc = jnp.maximum(acc, 0.0)
            if residual is not None:
                acc = acc + residual                         # Rdb scaling == 1.0
            return acc

        def conv1x1(i):
            """conv11_i over torch.cat(fl, dim=1) as one (F, C*(i+2)) dot."""
            rhs = cat_ref[0:C * (i + 2), :]
            acc = jnp.dot(w1_refs[i][...], rhs, preferred_element_type=f32)
            return acc + b1_ref[i]

        # ---- CascadeRdn forward (mirrors the PyTorch control flow) ----------
        x = x_ref[...]                                       # (C, L)
        cat_ref[0:C, :] = x.astype(cat_ref.dtype)            # fl[0] = inputs
        cur = x
        for i in range(d_outer):
            rdb_in = cur
            write_source(0, rdb_in)
            for j in range(d_inner):
                last = j == d_inner - 1
                y = conv3x3(i, j, nsrc=j + 1, relu=not last,
                            residual=rdb_in if last else None)
                if not last:
                    write_source(j + 1, y)
                else:
                    cur = y                                  # Rdb output
            cat_ref[C * (i + 1):C * (i + 2), :] = cur.astype(cat_ref.dtype)
            cur = conv1x1(i)

        o_ref[...] = cur.astype(o_ref.dtype)                 # lane-dense (F, L) store

    return kernel


# ----------------------------------------------------------------------------
# Parameter packing: PyTorch OIHW weights -> lane-dense fused-dot matrices
# ----------------------------------------------------------------------------
def _pack_params(params, C, F, d_outer, d_inner, dot_dtype):
    # w3_list[j]: (d_outer, F, 9*C*(j+1)); column order = source-major, then
    # tap (dy, dx), then in-channel -> matches write_source()'s RHS rows.
    w3_list = []
    for j in range(d_inner):
        per_rdb = []
        for i in range(d_outer):
            w = params["rdb"][i]["w"][j]                     # (cout, cin, 3, 3)
            cout, cin = w.shape[0], w.shape[1]
            nsrc = cin // C
            wt = jnp.transpose(w.reshape(cout, nsrc, C, 3, 3), (0, 1, 3, 4, 2))
            per_rdb.append(wt.reshape(cout, nsrc * 9 * C))
        w3_list.append(jnp.stack(per_rdb).astype(dot_dtype))
    b3 = jnp.stack([params["rdb"][i]["b"][j].reshape(-1, 1)
                    for i in range(d_outer) for j in range(d_inner)])
    w1_list = [params["c11_w"][i].reshape(F, -1).astype(dot_dtype)
               for i in range(d_outer)]                      # (F, C*(i+2))
    b1 = jnp.stack([params["c11_b"][i].reshape(F, 1) for i in range(d_outer)])
    return w3_list, b3, w1_list, b1


def _boundary_masks(N, H, W):
    """(9, N*H*W) f32: 1 where the tap's source pixel is inside the image."""
    M = H * W
    pos = jnp.arange(N * M, dtype=jnp.int32)
    h = (pos % M) // W
    w = pos % W
    rows = []
    for dy in range(3):
        for dx in range(3):
            ok = ((h + dy - 1 >= 0) & (h + dy - 1 < H) &
                  (w + dx - 1 >= 0) & (w + dx - 1 < W))
            rows.append(ok.astype(jnp.float32))
    return jnp.stack(rows)


def _full_spec(shape):
    zeros = (0,) * len(shape)
    return pl.BlockSpec(shape, lambda n, z=zeros: z)


def cascade_rdn_forward(x_nchw, params, dot_dtype=jnp.float32):
    """CascadeRdn forward.  x_nchw: (N, C, H, W) float32 (PyTorch layout).

    dot_dtype=jnp.bfloat16 enables bf16 MXU operands (f32 accumulation kept) —
    the v6e/v7x throughput lever for realistic H,W; default f32 preserves the
    1e-4 numerical check.
    """
    N, C, H, W = x_nchw.shape
    d_outer = len(params["rdb"])
    d_inner = len(params["rdb"][0]["w"])
    F = params["c11_w"][0].shape[0]
    assert C == F, "CascadeRdn requires channels == filters"
    L = N * H * W

    w3_list, b3, w1_list, b1 = _pack_params(params, C, F, d_outer, d_inner, dot_dtype)
    masks = _boundary_masks(N, H, W)
    # Fold the batch: (N, C, H, W) -> (C, N*H*W); rolls never cross a valid
    # image boundary because the per-position masks zero every boundary tap.
    x2 = jnp.transpose(x_nchw, (1, 0, 2, 3)).reshape(C, L)

    inputs = (x2, masks, *w3_list, b3, *w1_list, b1)
    kernel = _make_cascade_kernel(H, W, C, F, d_outer, d_inner, L, dot_dtype)

    out = pl.pallas_call(
        kernel,
        out_shape=jax.ShapeDtypeStruct((F, L), x_nchw.dtype),
        grid_spec=pltpu.PrefetchScalarGridSpec(
            num_scalar_prefetch=0,
            grid=(1,),
            in_specs=[_full_spec(a.shape) for a in inputs],
            out_specs=_full_spec((F, L)),
            scratch_shapes=[
                pltpu.VMEM((9 * C * d_inner, L), dot_dtype),     # shared conv RHS
                pltpu.VMEM((C * (d_outer + 1), L), dot_dtype),   # torch.cat(fl)
            ]),
        compiler_params=pltpu.CompilerParams(
            dimension_semantics=("arbitrary",),
            vmem_limit_bytes=32 * 1024 * 1024),
    )(*inputs)
    return jnp.transpose(out.reshape(F, N, H, W), (1, 0, 2, 3))


# ----------------------------------------------------------------------------
# Pure-JAX reference (NCHW / OIHW, faithful to the PyTorch module)
# ----------------------------------------------------------------------------
def _ref_conv(x, w, b, *, relu=False, pad=0):
    y = jax.lax.conv_general_dilated(
        x, w, window_strides=(1, 1), padding=((pad, pad), (pad, pad)),
        dimension_numbers=("NCHW", "OIHW", "NCHW"),
        precision=jax.lax.Precision.HIGHEST,
    ) + b.reshape(1, -1, 1, 1)
    return jnp.maximum(y, 0.0) if relu else y


def _ref_rdb(x, rdb):
    d = len(rdb["w"])
    fl = [x]
    for j in range(d):
        y = _ref_conv(jnp.concatenate(fl, axis=1), rdb["w"][j], rdb["b"][j],
                      relu=(j < d - 1), pad=1)
        fl.append(y)
    return fl[-1] * 1.0 + x


def _ref_cascade(x, params):
    fl = [x]
    for i in range(len(params["rdb"])):
        x = _ref_rdb(x, params["rdb"][i])
        fl.append(x)
        x = _ref_conv(jnp.concatenate(fl, axis=1),
                      params["c11_w"][i], params["c11_b"][i], pad=0)
    return x


# ----------------------------------------------------------------------------
# Deterministic parameter init (PyTorch-style uniform fan-in bound, OIHW)
# ----------------------------------------------------------------------------
def _init_conv(key, cout, cin, kh, kw):
    k1, k2 = jax.random.split(key)
    bound = 1.0 / math.sqrt(cin * kh * kw)
    w = jax.random.uniform(k1, (cout, cin, kh, kw), jnp.float32, -bound, bound)
    b = jax.random.uniform(k2, (cout,), jnp.float32, -bound, bound)
    return w, b


def make_params(key, channels, filters, d_outer, d_inner):
    C, F = channels, filters
    params = {"rdb": [], "c11_w": [], "c11_b": []}
    for i in range(d_outer):
        ws, bs = [], []
        for j in range(d_inner):
            key, k = jax.random.split(key)
            cin = C + F * j
            cout = F if j < d_inner - 1 else C            # last Rdb conv -> channels
            w, b = _init_conv(k, cout, cin, 3, 3)
            ws.append(w)
            bs.append(b)
        params["rdb"].append({"w": ws, "b": bs})
        key, k = jax.random.split(key)
        w11, b11 = _init_conv(k, F, C + F * (i + 1), 1, 1)
        params["c11_w"].append(w11)
        params["c11_b"].append(b11)
    return params


# ----------------------------------------------------------------------------
if __name__ == "__main__":
    N, H, W = 2, 16, 16
    CHANNELS = FILTERS = 16          # CascadeRdn requires channels == filters
    D_OUTER, D_INNER = 3, 3          # depth = (3, 3)

    key = jax.random.PRNGKey(0)
    key, kx = jax.random.split(key)
    x = jax.random.normal(kx, (N, CHANNELS, H, W), jnp.float32)   # NCHW
    params = make_params(key, CHANNELS, FILTERS, D_OUTER, D_INNER)

    out = jax.block_until_ready(jax.jit(cascade_rdn_forward)(x, params))
    ref = jax.block_until_ready(jax.jit(_ref_cascade)(x, params))

    assert out.shape == (N, FILTERS, H, W)
    max_err = float(jnp.max(jnp.abs(out - ref)))
    assert jnp.allclose(out, ref, atol=1e-4, rtol=1e-4), max_err

    print("KERNEL_OK")
</pallas_src>

<mosaic_0001>
module attributes {stable_mosaic.version = 11 : i64} {
  func.func @kernel(%arg0: i32, %arg1: memref<16x512xf32, #tpu.memory_space<vmem>>, %arg2: memref<9x512xf32, #tpu.memory_space<vmem>>, %arg3: memref<3x16x144xf32, #tpu.memory_space<vmem>>, %arg4: memref<3x16x288xf32, #tpu.memory_space<vmem>>, %arg5: memref<3x16x432xf32, #tpu.memory_space<vmem>>, %arg6: memref<9x16x1xf32, #tpu.memory_space<vmem>>, %arg7: memref<16x32xf32, #tpu.memory_space<vmem>>, %arg8: memref<16x48xf32, #tpu.memory_space<vmem>>, %arg9: memref<16x64xf32, #tpu.memory_space<vmem>>, %arg10: memref<3x16x1xf32, #tpu.memory_space<vmem>>, %arg11: memref<16x512xf32, #tpu.memory_space<vmem>>, %arg12: memref<432x512xf32, #tpu.memory_space<vmem>>, %arg13: memref<64x512xf32, #tpu.memory_space<vmem>>) attributes {dimension_semantics = [#tpu.dimension_semantics<arbitrary>], iteration_bounds = array<i64: 1>, scalar_prefetch = 0 : i64, scratch_operands = 2 : i64, tpu.core_type = #tpu.core_type<tc>, window_params = [{pipeline_mode = #tpu.pipeline_mode<synchronous>, transform_indices = @transform_0, window_bounds = array<i64: 16, 512>}, {pipeline_mode = #tpu.pipeline_mode<synchronous>, transform_indices = @transform_1, window_bounds = array<i64: 9, 512>}, {pipeline_mode = #tpu.pipeline_mode<synchronous>, transform_indices = @transform_2, window_bounds = array<i64: 3, 16, 144>}, {pipeline_mode = #tpu.pipeline_mode<synchronous>, transform_indices = @transform_3, window_bounds = array<i64: 3, 16, 288>}, {pipeline_mode = #tpu.pipeline_mode<synchronous>, transform_indices = @transform_4, window_bounds = array<i64: 3, 16, 432>}, {pipeline_mode = #tpu.pipeline_mode<synchronous>, transform_indices = @transform_5, window_bounds = array<i64: 9, 16, 1>}, {pipeline_mode = #tpu.pipeline_mode<synchronous>, transform_indices = @transform_6, window_bounds = array<i64: 16, 32>}, {pipeline_mode = #tpu.pipeline_mode<synchronous>, transform_indices = @transform_7, window_bounds = array<i64: 16, 48>}, {pipeline_mode = #tpu.pipeline_mode<synchronous>, transform_indices = @transform_8, window_bounds = array<i64: 16, 64>}, {pipeline_mode = #tpu.pipeline_mode<synchronous>, transform_indices = @transform_9, window_bounds = array<i64: 3, 16, 1>}, {pipeline_mode = #tpu.pipeline_mode<synchronous>, transform_indices = @transform_10, window_bounds = array<i64: 16, 512>}]} {
    %c0 = arith.constant 0 : index
    %c0_0 = arith.constant 0 : index
    %0 = vector.load %arg2[%c0, %c0_0] : memref<9x512xf32, #tpu.memory_space<vmem>>, vector<9x512xf32>
    %c0_1 = arith.constant 0 : index
    %c0_2 = arith.constant 0 : index
    %1 = vector.load %arg1[%c0_1, %c0_2] : memref<16x512xf32, #tpu.memory_space<vmem>>, vector<16x512xf32>
    %c0_3 = arith.constant 0 : index
    %c0_4 = arith.constant 0 : index
    %2 = vector.load %arg13[%c0_3, %c0_4] : memref<64x512xf32, #tpu.memory_space<vmem>>, vector<16x512xf32>
    tpu.vector_store %arg13[%c0_3, %c0_4], %1 {strides = array<i32>} : memref<64x512xf32, #tpu.memory_space<vmem>>, vector<16x512xf32>,
    %c17_i32 = arith.constant 17 : i32
    %3 = tpu.dynamic_rotate %1 by %c17_i32 dim 1 : vector<16x512xf32>, i32 -> vector<16x512xf32>
    %4 = vector.extract_strided_slice %0 {offsets = [0, 0], sizes = [1, 512], strides = [1, 1]} : vector<9x512xf32> to vector<1x512xf32>
    %5 = vector.broadcast %4 : vector<1x512xf32> to vector<16x512xf32>
    %6 = arith.mulf %3, %5 : vector<16x512xf32>
    %c0_5 = arith.constant 0 : index
    %c0_6 = arith.constant 0 : index
    %7 = vector.load %arg12[%c0_5, %c0_6] : memref<432x512xf32, #tpu.memory_space<vmem>>, vector<16x512xf32>
    tpu.vector_store %arg12[%c0_5, %c0_6], %6 {strides = array<i32>} : memref<432x512xf32, #tpu.memory_space<vmem>>, vector<16x512xf32>,
    %c16_i32 = arith.constant 16 : i32
    %8 = tpu.dynamic_rotate %1 by %c16_i32 dim 1 : vector<16x512xf32>, i32 -> vector<16x512xf32>
    %9 = vector.extract_strided_slice %0 {offsets = [1, 0], sizes = [1, 512], strides = [1, 1]} : vector<9x512xf32> to vector<1x512xf32>
    %10 = vector.broadcast %9 : vector<1x512xf32> to vector<16x512xf32>
    %11 = arith.mulf %8, %10 : vector<16x512xf32>
    %c16 = arith.constant 16 : index
    %c0_7 = arith.constant 0 : index
    %12 = vector.load %arg12[%c16, %c0_7] : memref<432x512xf32, #tpu.memory_space<vmem>>, vector<16x512xf32>
    tpu.vector_store %arg12[%c16, %c0_7], %11 {strides = array<i32>} : memref<432x512xf32, #tpu.memory_space<vmem>>, vector<16x512xf32>,
    %c15_i32 = arith.constant 15 : i32
    %13 = tpu.dynamic_rotate %1 by %c15_i32 dim 1 : vector<16x512xf32>, i32 -> vector<16x512xf32>
    %14 = vector.extract_strided_slice %0 {offsets = [2, 0], sizes = [1, 512], strides = [1, 1]} : vector<9x512xf32> to vector<1x512xf32>
    %15 = vector.broadcast %14 : vector<1x512xf32> to vector<16x512xf32>
    %16 = arith.mulf %13, %15 : vector<16x512xf32>
    %c32 = arith.constant 32 : index
    %c0_8 = arith.constant 0 : index
    %17 = vector.load %arg12[%c32, %c0_8] : memref<432x512xf32, #tpu.memory_space<vmem>>, vector<16x512xf32>
    tpu.vector_store %arg12[%c32, %c0_8], %16 {strides = array<i32>} : memref<432x512xf32, #tpu.memory_space<vmem>>, vector<16x512xf32>,
    %c1_i32 = arith.constant 1 : i32
    %18 = tpu.dynamic_rotate %1 by %c1_i32 dim 1 : vector<16x512xf32>, i32 -> vector<16x512xf32>
    %19 = vector.extract_strided_slice %0 {offsets = [3, 0], sizes = [1, 512], strides = [1, 1]} : vector<9x512xf32> to vector<1x512xf32>
    %20 = vector.broadcast %19 : vector<1x512xf32> to vector<16x512xf32>
    %21 = arith.mulf %18, %20 : vector<16x512xf32>
    %c48 = arith.constant 48 : index
    %c0_9 = arith.constant 0 : index
    %22 = vector.load %arg12[%c48, %c0_9] : memref<432x512xf32, #tpu.memory_space<vmem>>, vector<16x512xf32>
    tpu.vector_store %arg12[%c48, %c0_9], %21 {strides = array<i32>} : memref<432x512xf32, #tpu.memory_space<vmem>>, vector<16x512xf32>,
    %c64 = arith.constant 64 : index
    %c0_10 = arith.constant 0 : index
    %23 = vector.load %arg12[%c64, %c0_10] : memref<432x512xf32, #tpu.memory_space<vmem>>, vector<16x512xf32>
    tpu.vector_store %arg12[%c64, %c0_10], %1 {strides = array<i32>} : memref<432x512xf32, #tpu.memory_space<vmem>>, vector<16x512xf32>,
    %c511_i32 = arith.constant 511 : i32
    %24 = tpu.dynamic_rotate %1 by %c511_i32 dim 1 : vector<16x512xf32>, i32 -> vector<16x512xf32>
    %25 = vector.extract_strided_slice %0 {offsets = [5, 0], sizes = [1, 512], strides = [1, 1]} : vector<9x512xf32> to vector<1x512xf32>
    %26 = vector.broadcast %25 : vector<1x512xf32> to vector<16x512xf32>
    %27 = arith.mulf %24, %26 : vector<16x512xf32>
    %c80 = arith.constant 80 : index
    %c0_11 = arith.constant 0 : index
    %28 = vector.load %arg12[%c80, %c0_11] : memref<432x512xf32, #tpu.memory_space<vmem>>, vector<16x512xf32>
    tpu.vector_store %arg12[%c80, %c0_11], %27 {strides = array<i32>} : memref<432x512xf32, #tpu.memory_space<vmem>>, vector<16x512xf32>,
    %c497_i32 = arith.constant 497 : i32
    %29 = tpu.dynamic_rotate %1 by %c497_i32 dim 1 : vector<16x512xf32>, i32 -> vector<16x512xf32>
    %30 = vector.extract_strided_slice %0 {offsets = [6, 0], sizes = [1, 512], strides = [1, 1]} : vector<9x512xf32> to vector<1x512xf32>
    %31 = vector.broadcast %30 : vector<1x512xf32> to vector<16x512xf32>
    %32 = arith.mulf %29, %31 : vector<16x512xf32>
    %c96 = arith.constant 96 : index
    %c0_12 = arith.constant 0 : index
    %33 = vector.load %arg12[%c96, %c0_12] : memref<432x512xf32, #tpu.memory_space<vmem>>, vector<16x512xf32>
    tpu.vector_store %arg12[%c96, %c0_12], %32 {strides = array<i32>} : memref<432x512xf32, #tpu.memory_space<vmem>>, vector<16x512xf32>,
    %c496_i32 = arith.constant 496 : i32
    %34 = tpu.dynamic_rotate %1 by %c496_i32 dim 1 : vector<16x512xf32>, i32 -> vector<16x512xf32>
    %35 = vector.extract_strided_slice %0 {offsets = [7, 0], sizes = [1, 512], strides = [1, 1]} : vector<9x512xf32> to vector<1x512xf32>
    %36 = vector.broadcast %35 : vector<1x512xf32> to vector<16x512xf32>
    %37 = arith.mulf %34, %36 : vector<16x512xf32>
    %c112 = arith.constant 112 : index
    %c0_13 = arith.constant 0 : index
    %38 = vector.load %arg12[%c112, %c0_13] : memref<432x512xf32, #tpu.memory_space<vmem>>, vector<16x512xf32>
    tpu.vector_store %arg12[%c112, %c0_13], %37 {strides = array<i32>} : memref<432x512xf32, #tpu.memory_space<vmem>>, vector<16x512xf32>,
    %c495_i32 = arith.constant 495 : i32
    %39 = tpu.dynamic_rotate %1 by %c495_i32 dim 1 : vector<16x512xf32>, i32 -> vector<16x512xf32>
    %40 = vector.extract_strided_slice %0 {offsets = [8, 0], sizes = [1, 512], strides = [1, 1]} : vector<9x512xf32> to vector<1x512xf32>
    %41 = vector.broadcast %40 : vector<1x512xf32> to vector<16x512xf32>
    %42 = arith.mulf %39, %41 : vector<16x512xf32>
    %c128 = arith.constant 128 : index
    %c0_14 = arith.constant 0 : index
    %43 = vector.load %arg12[%c128, %c0_14] : memref<432x512xf32, #tpu.memory_space<vmem>>, vector<16x512xf32>
    tpu.vector_store %arg12[%c128, %c0_14], %42 {strides = array<i32>} : memref<432x512xf32, #tpu.memory_space<vmem>>, vector<16x512xf32>,
    %c0_15 = arith.constant 0 : index
    %c0_16 = arith.constant 0 : index
    %44 = vector.load %arg12[%c0_15, %c0_16] : memref<432x512xf32, #tpu.memory_space<vmem>>, vector<144x512xf32>
    %c0_17 = arith.constant 0 : index
    %c0_18 = arith.constant 0 : index
    %c0_19 = arith.constant 0 : index
    %45 = vector.load %arg3[%c0_17, %c0_18, %c0_19] : memref<3x16x144xf32, #tpu.memory_space<vmem>>, vector<1x16x144xf32>
    %46 = vector.shape_cast %45 : vector<1x16x144xf32> to vector<16x144xf32>
    %cst = arith.constant dense<0.000000e+00> : vector<16x512xf32>
    %47 = tpu.matmul %46, %44, %cst {dimension_numbers = #tpu.dot_dimension_numbers<[1], [0], [0], [1], [0, 0, 1, 1], [], []>} : vector<16x144xf32>, vector<144x512xf32>, vector<16x512xf32> -> vector<16x512xf32>
    %c0_20 = arith.constant 0 : index
    %c0_21 = arith.constant 0 : index
    %c0_22 = arith.constant 0 : index
    %48 = vector.load %arg6[%c0_20, %c0_21, %c0_22] : memref<9x16x1xf32, #tpu.memory_space<vmem>>, vector<1x16x1xf32>
    %49 = vector.shape_cast %48 : vector<1x16x1xf32> to vector<16x1xf32>
    %50 = vector.broadcast %49 : vector<16x1xf32> to vector<16x512xf32>
    %51 = arith.addf %47, %50 : vector<16x512xf32>
    %cst_23 = arith.constant 0.000000e+00 : f32
    %52 = vector.broadcast %cst_23 : f32 to vector<16x512xf32>
    %53 = arith.maximumf %51, %52 : vector<16x512xf32>
    %c17_i32_24 = arith.constant 17 : i32
    %54 = tpu.dynamic_rotate %53 by %c17_i32_24 dim 1 : vector<16x512xf32>, i32 -> vector<16x512xf32>
    %55 = vector.extract_strided_slice %0 {offsets = [0, 0], sizes = [1, 512], strides = [1, 1]} : vector<9x512xf32> to vector<1x512xf32>
    %56 = vector.broadcast %55 : vector<1x512xf32> to vector<16x512xf32>
    %57 = arith.mulf %54, %56 : vector<16x512xf32>
    %c144 = arith.constant 144 : index
    %c0_25 = arith.constant 0 : index
    %58 = vector.load %arg12[%c144, %c0_25] : memref<432x512xf32, #tpu.memory_space<vmem>>, vector<16x512xf32>
    tpu.vector_store %arg12[%c144, %c0_25], %57 {strides = array<i32>} : memref<432x512xf32, #tpu.memory_space<vmem>>, vector<16x512xf32>,
    %c16_i32_26 = arith.constant 16 : i32
    %59 = tpu.dynamic_rotate %53 by %c16_i32_26 dim 1 : vector<16x512xf32>, i32 -> vector<16x512xf32>
    %60 = vector.extract_strided_slice %0 {offsets = [1, 0], sizes = [1, 512], strides = [1, 1]} : vector<9x512xf32> to vector<1x512xf32>
    %61 = vector.broadcast %60 : vector<1x512xf32> to vector<16x512xf32>
    %62 = arith.mulf %59, %61 : vector<16x512xf32>
    %c160 = arith.constant 160 : index
    %c0_27 = arith.constant 0 : index
    %63 = vector.load %arg12[%c160, %c0_27] : memref<432x512xf32, #tpu.memory_space<vmem>>, vector<16x512xf32>
    tpu.vector_store %arg12[%c160, %c0_27], %62 {strides = array<i32>} : memref<432x512xf32, #tpu.memory_space<vmem>>, vector<16x512xf32>,
    %c15_i32_28 = arith.constant 15 : i32
    %64 = tpu.dynamic_rotate %53 by %c15_i32_28 dim 1 : vector<16x512xf32>, i32 -> vector<16x512xf32>
    %65 = vector.extract_strided_slice %0 {offsets = [2, 0], sizes = [1, 512], strides = [1, 1]} : vector<9x512xf32> to vector<1x512xf32>
    %66 = vector.broadcast %65 : vector<1x512xf32> to vector<16x512xf32>
    %67 = arith.mulf %64, %66 : vector<16x512xf32>
    %c176 = arith.constant 176 : index
    %c0_29 = arith.constant 0 : index
    %68 = vector.load %arg12[%c176, %c0_29] : memref<432x512xf32, #tpu.memory_space<vmem>>, vector<16x512xf32>
    tpu.vector_store %arg12[%c176, %c0_29], %67 {strides = array<i32>} : memref<432x512xf32, #tpu.memory_space<vmem>>, vector<16x512xf32>,
    %c1_i32_30 = arith.constant 1 : i32
    %69 = tpu.dynamic_rotate %53 by %c1_i32_30 dim 1 : vector<16x512xf32>, i32 -> vector<16x512xf32>
    %70 = vector.extract_strided_slice %0 {offsets = [3, 0], sizes = [1, 512], strides = [1, 1]} : vector<9x512xf32> to vector<1x512xf32>
    %71 = vector.broadcast %70 : vector<1x512xf32> to vector<16x512xf32>
    %72 = arith.mulf %69, %71 : vector<16x512xf32>
    %c192 = arith.constant 192 : index
    %c0_31 = arith.constant 0 : index
    %73 = vector.load %arg12[%c192, %c0_31] : memref<432x512xf32, #tpu.memory_space<vmem>>, vector<16x512xf32>
    tpu.vector_store %arg12[%c192, %c0_31], %72 {strides = array<i32>} : memref<432x512xf32, #tpu.memory_space<vmem>>, vector<16x512xf32>,
    %c208 = arith.constant 208 : index
    %c0_32 = arith.constant 0 : index
    %74 = vector.load %arg12[%c208, %c0_32] : memref<432x512xf32, #tpu.memory_space<vmem>>, vector<16x512xf32>
    tpu.vector_store %arg12[%c208, %c0_32], %53 {strides = array<i32>} : memref<432x512xf32, #tpu.memory_space<vmem>>, vector<16x512xf32>,
    %c511_i32_33 = arith.constant 511 : i32
    %75 = tpu.dynamic_rotate %53 by %c511_i32_33 dim 1 : vector<16x512xf32>, i32 -> vector<16x512xf32>
    %76 = vector.extract_strided_slice %0 {offsets = [5, 0], sizes = [1, 512], strides = [1, 1]} : vector<9x512xf32> to vector<1x512xf32>
    %77 = vector.broadcast %76 : vector<1x512xf32> to vector<16x512xf32>
    %78 = arith.mulf %75, %77 : vector<16x512xf32>
    %c224 = arith.constant 224 : index
    %c0_34 = arith.constant 0 : index
    %79 = vector.load %arg12[%c224, %c0_34] : memref<432x512xf32, #tpu.memory_space<vmem>>, vector<16x512xf32>
    tpu.vector_store %arg12[%c224, %c0_34], %78 {strides = array<i32>} : memref<432x512xf32, #tpu.memory_space<vmem>>, vector<16x512xf32>,
    %c497_i32_35 = arith.constant 497 : i32
    %80 = tpu.dynamic_rotate %53 by %c497_i32_35 dim 1 : vector<16x512xf32>, i32 -> vector<16x512xf32>
    %81 = vector.extract_strided_slice %0 {offsets = [6, 0], sizes = [1, 512], strides = [1, 1]} : vector<9x512xf32> to vector<1x512xf32>
    %82 = vector.broadcast %81 : vector<1x512xf32> to vector<16x512xf32>
    %83 = arith.mulf %80, %82 : vector<16x512xf32>
    %c240 = arith.constant 240 : index
    %c0_36 = arith.constant 0 : index
    %84 = vector.load %arg12[%c240, %c0_36] : memref<432x512xf32, #tpu.memory_space<vmem>>, vector<16x512xf32>
    tpu.vector_store %arg12[%c240, %c0_36], %83 {strides = array<i32>} : memref<432x512xf32, #tpu.memory_space<vmem>>, vector<16x512xf32>,
    %c496_i32_37 = arith.constant 496 : i32
    %85 = tpu.dynamic_rotate %53 by %c496_i32_37 dim 1 : vector<16x512xf32>, i32 -> vector<16x512xf32>
    %86 = vector.extract_strided_slice %0 {offsets = [7, 0], sizes = [1, 512], strides = [1, 1]} : vector<9x512xf32> to vector<1x512xf32>
    %87 = vector.broadcast %86 : vector<1x512xf32> to vector<16x512xf32>
    %88 = arith.mulf %85, %87 : vector<16x512xf32>
    %c256 = arith.constant 256 : index
    %c0_38 = arith.constant 0 : index
    %89 = vector.load %arg12[%c256, %c0_38] : memref<432x512xf32, #tpu.memory_space<vmem>>, vector<16x512xf32>
    tpu.vector_store %arg12[%c256, %c0_38], %88 {strides = array<i32>} : memref<432x512xf32, #tpu.memory_space<vmem>>, vector<16x512xf32>,
    %c495_i32_39 = arith.constant 495 : i32
    %90 = tpu.dynamic_rotate %53 by %c495_i32_39 dim 1 : vector<16x512xf32>, i32 -> vector<16x512xf32>
    %91 = vector.extract_strided_slice %0 {offsets = [8, 0], sizes = [1, 512], strides = [1, 1]} : vector<9x512xf32> to vector<1x512xf32>
    %92 = vector.broadcast %91 : vector<1x512xf32> to vector<16x512xf32>
    %93 = arith.mulf %90, %92 : vector<16x512xf32>
    %c272 = arith.constant 272 : index
    %c0_40 = arith.constant 0 : index
    %94 = vector.load %arg12[%c272, %c0_40] : memref<432x512xf32, #tpu.memory_space<vmem>>, vector<16x512xf32>
    tpu.vector_store %arg12[%c272, %c0_40], %93 {strides = array<i32>} : memref<432x512xf32, #tpu.memory_space<vmem>>, vector<16x512xf32>,
    %c0_41 = arith.constant 0 : index
    %c0_42 = arith.constant 0 : index
    %95 = vector.load %arg12[%c0_41, %c0_42] : memref<432x512xf32, #tpu.memory_space<vmem>>, vector<288x512xf32>
    %c0_43 = arith.constant 0 : index
    %c0_44 = arith.constant 0 : index
    %c0_45 = arith.constant 0 : index
    %96 = vector.load %arg4[%c0_43, %c0_44, %c0_45] : memref<3x16x288xf32, #tpu.memory_space<vmem>>, vector<1x16x288xf32>
    %97 = vector.shape_cast %96 : vector<1x16x288xf32> to vector<16x288xf32>
    %cst_46 = arith.constant dense<0.000000e+00> : vector<16x512xf32>
    %98 = tpu.matmul %97, %95, %cst_46 {dimension_numbers = #tpu.dot_dimension_numbers<[1], [0], [0], [1], [0, 0, 1, 1], [], []>} : vector<16x288xf32>, vector<288x512xf32>, vector<16x512xf32> -> vector<16x512xf32>
    %c1 = arith.constant 1 : index
    %c0_47 = arith.constant 0 : index
    %c0_48 = arith.constant 0 : index
    %99 = vector.load %arg6[%c1, %c0_47, %c0_48] : memref<9x16x1xf32, #tpu.memory_space<vmem>>, vector<1x16x1xf32>
    %100 = vector.shape_cast %99 : vector<1x16x1xf32> to vector<16x1xf32>
    %101 = vector.broadcast %100 : vector<16x1xf32> to vector<16x512xf32>
    %102 = arith.addf %98, %101 : vector<16x512xf32>
    %cst_49 = arith.constant 0.000000e+00 : f32
    %103 = vector.broadcast %cst_49 : f32 to vector<16x512xf32>
    %104 = arith.maximumf %102, %103 : vector<16x512xf32>
    %c17_i32_50 = arith.constant 17 : i32
    %105 = tpu.dynamic_rotate %104 by %c17_i32_50 dim 1 : vector<16x512xf32>, i32 -> vector<16x512xf32>
    %106 = vector.extract_strided_slice %0 {offsets = [0, 0], sizes = [1, 512], strides = [1, 1]} : vector<9x512xf32> to vector<1x512xf32>
    %107 = vector.broadcast %106 : vector<1x512xf32> to vector<16x512xf32>
    %108 = arith.mulf %105, %107 : vector<16x512xf32>
    %c288 = arith.constant 288 : index
    %c0_51 = arith.constant 0 : index
    %109 = vector.load %arg12[%c288, %c0_51] : memref<432x512xf32, #tpu.memory_space<vmem>>, vector<16x512xf32>
    tpu.vector_store %arg12[%c288, %c0_51], %108 {strides = array<i32>} : memref<432x512xf32, #tpu.memory_space<vmem>>, vector<16x512xf32>,
    %c16_i32_52 = arith.constant 16 : i32
    %110 = tpu.dynamic_rotate %104 by %c16_i32_52 dim 1 : vector<16x512xf32>, i32 -> vector<16x512xf32>
    %111 = vector.extract_strided_slice %0 {offsets = [1, 0], sizes = [1, 512], strides = [1, 1]} : vector<9x512xf32> to vector<1x512xf32>
    %112 = vector.broadcast %111 : vector<1x512xf32> to vector<16x512xf32>
    %113 = arith.mulf %110, %112 : vector<16x512xf32>
    %c304 = arith.constant 304 : index
    %c0_53 = arith.constant 0 : index
    %114 = vector.load %arg12[%c304, %c0_53] : memref<432x512xf32, #tpu.memory_space<vmem>>, vector<16x512xf32>
    tpu.vector_store %arg12[%c304, %c0_53], %113 {strides = array<i32>} : memref<432x512xf32, #tpu.memory_space<vmem>>, vector<16x512xf32>,
    %c15_i32_54 = arith.constant 15 : i32
    %115 = tpu.dynamic_rotate %104 by %c15_i32_54 dim 1 : vector<16x512xf32>, i32 -> vector<16x512xf32>
    %116 = vector.extract_strided_slice %0 {offsets = [2, 0], sizes = [1, 512], strides = [1, 1]} : vector<9x512xf32> to vector<1x512xf32>
    %117 = vector.broadcast %116 : vector<1x512xf32> to vector<16x512xf32>
    %118 = arith.mulf %115, %117 : vector<16x512xf32>
    %c320 = arith.constant 320 : index
    %c0_55 = arith.constant 0 : index
    %119 = vector.load %arg12[%c320, %c0_55] : memref<432x512xf32, #tpu.memory_space<vmem>>, vector<16x512xf32>
    tpu.vector_store %arg12[%c320, %c0_55], %118 {strides = array<i32>} : memref<432x512xf32, #tpu.memory_space<vmem>>, vector<16x512xf32>,
    %c1_i32_56 = arith.constant 1 : i32
    %120 = tpu.dynamic_rotate %104 by %c1_i32_56 dim 1 : vector<16x512xf32>, i32 -> vector<16x512xf32>
    %121 = vector.extract_strided_slice %0 {offsets = [3, 0], sizes = [1, 512], strides = [1, 1]} : vector<9x512xf32> to vector<1x512xf32>
    %122 = vector.broadcast %121 : vector<1x512xf32> to vector<16x512xf32>
    %123 = arith.mulf %120, %122 : vector<16x512xf32>
    %c336 = arith.constant 336 : index
    %c0_57 = arith.constant 0 : index
    %124 = vector.load %arg12[%c336, %c0_57] : memref<432x512xf32, #tpu.memory_space<vmem>>, vector<16x512xf32>
    tpu.vector_store %arg12[%c336, %c0_57], %123 {strides = array<i32>} : memref<432x512xf32, #tpu.memory_space<vmem>>, vector<16x512xf32>,
    %c352 = arith.constant 352 : index
    %c0_58 = arith.constant 0 : index
    %125 = vector.load %arg12[%c352, %c0_58] : memref<432x512xf32, #tpu.memory_space<vmem>>, vector<16x512xf32>
    tpu.vector_store %arg12[%c352, %c0_58], %104 {strides = array<i32>} : memref<432x512xf32, #tpu.memory_space<vmem>>, vector<16x512xf32>,
    %c511_i32_59 = arith.constant 511 : i32
    %126 = tpu.dynamic_rotate %104 by %c511_i32_59 dim 1 : vector<16x512xf32>, i32 -> vector<16x512xf32>
    %127 = vector.extract_strided_slice %0 {offsets = [5, 0], sizes = [1, 512], strides = [1, 1]} : vector<9x512xf32> to vector<1x512xf32>
    %128 = vector.broadcast %127 : vector<1x512xf32> to vector<16x512xf32>
    %129 = arith.mulf %126, %128 : vector<16x512xf32>
    %c368 = arith.constant 368 : index
    %c0_60 = arith.constant 0 : index
    %130 = vector.load %arg12[%c368, %c0_60] : memref<432x512xf32, #tpu.memory_space<vmem>>, vector<16x512xf32>
    tpu.vector_store %arg12[%c368, %c0_60], %129 {strides = array<i32>} : memref<432x512xf32, #tpu.memory_space<vmem>>, vector<16x512xf32>,
    %c497_i32_61 = arith.constant 497 : i32
    %131 = tpu.dynamic_rotate %104 by %c497_i32_61 dim 1 : vector<16x512xf32>, i32 -> vector<16x512xf32>
    %132 = vector.extract_strided_slice %0 {offsets = [6, 0], sizes = [1, 512], strides = [1, 1]} : vector<9x512xf32> to vector<1x512xf32>
    %133 = vector.broadcast %132 : vector<1x512xf32> to vector<16x512xf32>
    %134 = arith.mulf %131, %133 : vector<16x512xf32>
    %c384 = arith.constant 384 : index
    %c0_62 = arith.constant 0 : index
    %135 = vector.load %arg12[%c384, %c0_62] : memref<432x512xf32, #tpu.memory_space<vmem>>, vector<16x512xf32>
    tpu.vector_store %arg12[%c384, %c0_62], %134 {strides = array<i32>} : memref<432x512xf32, #tpu.memory_space<vmem>>, vector<16x512xf32>,
    %c496_i32_63 = arith.constant 496 : i32
    %136 = tpu.dynamic_rotate %104 by %c496_i32_63 dim 1 : vector<16x512xf32>, i32 -> vector<16x512xf32>
    %137 = vector.extract_strided_slice %0 {offsets = [7, 0], sizes = [1, 512], strides = [1, 1]} : vector<9x512xf32> to vector<1x512xf32>
    %138 = vector.broadcast %137 : vector<1x512xf32> to vector<16x512xf32>
    %139 = arith.mulf %136, %138 : vector<16x512xf32>
    %c400 = arith.constant 400 : index
    %c0_64 = arith.constant 0 : index
    %140 = vector.load %arg12[%c400, %c0_64] : memref<432x512xf32, #tpu.memory_space<vmem>>, vector<16x512xf32>
    tpu.vector_store %arg12[%c400, %c0_64], %139 {strides = array<i32>} : memref<432x512xf32, #tpu.memory_space<vmem>>, vector<16x512xf32>,
    %c495_i32_65 = arith.constant 495 : i32
    %141 = tpu.dynamic_rotate %104 by %c495_i32_65 dim 1 : vector<16x512xf32>, i32 -> vector<16x512xf32>
    %142 = vector.extract_strided_slice %0 {offsets = [8, 0], sizes = [1, 512], strides = [1, 1]} : vector<9x512xf32> to vector<1x512xf32>
    %143 = vector.broadcast %142 : vector<1x512xf32> to vector<16x512xf32>
    %144 = arith.mulf %141, %143 : vector<16x512xf32>
    %c416 = arith.constant 416 : index
    %c0_66 = arith.constant 0 : index
    %145 = vector.load %arg12[%c416, %c0_66] : memref<432x512xf32, #tpu.memory_space<vmem>>, vector<16x512xf32>
    tpu.vector_store %arg12[%c416, %c0_66], %144 {strides = array<i32>} : memref<432x512xf32, #tpu.memory_space<vmem>>, vector<16x512xf32>,
    %c0_67 = arith.constant 0 : index
    %c0_68 = arith.constant 0 : index
    %146 = vector.load %arg12[%c0_67, %c0_68] : memref<432x512xf32, #tpu.memory_space<vmem>>, vector<432x512xf32>
    %c0_69 = arith.constant 0 : index
    %c0_70 = arith.constant 0 : index
    %c0_71 = arith.constant 0 : index
    %147 = vector.load %arg5[%c0_69, %c0_70, %c0_71] : memref<3x16x432xf32, #tpu.memory_space<vmem>>, vector<1x16x432xf32>
    %148 = vector.shape_cast %147 : vector<1x16x432xf32> to vector<16x432xf32>
    %cst_72 = arith.constant dense<0.000000e+00> : vector<16x512xf32>
    %149 = tpu.matmul %148, %146, %cst_72 {dimension_numbers = #tpu.dot_dimension_numbers<[1], [0], [0], [1], [0, 0, 1, 1], [], []>} : vector<16x432xf32>, vector<432x512xf32>, vector<16x512xf32> -> vector<16x512xf32>
    %c2 = arith.constant 2 : index
    %c0_73 = arith.constant 0 : index
    %c0_74 = arith.constant 0 : index
    %150 = vector.load %arg6[%c2, %c0_73, %c0_74] : memref<9x16x1xf32, #tpu.memory_space<vmem>>, vector<1x16x1xf32>
    %151 = vector.shape_cast %150 : vector<1x16x1xf32> to vector<16x1xf32>
    %152 = vector.broadcast %151 : vector<16x1xf32> to vector<16x512xf32>
    %153 = arith.addf %149, %152 : vector<16x512xf32>
    %154 = arith.addf %153, %1 : vector<16x512xf32>
    %c16_75 = arith.constant 16 : index
    %c0_76 = arith.constant 0 : index
    %155 = vector.load %arg13[%c16_75, %c0_76] : memref<64x512xf32, #tpu.memory_space<vmem>>, vector<16x512xf32>
    tpu.vector_store %arg13[%c16_75, %c0_76], %154 {strides = array<i32>} : memref<64x512xf32, #tpu.memory_space<vmem>>, vector<16x512xf32>,
    %c0_77 = arith.constant 0 : index
    %c0_78 = arith.constant 0 : index
    %156 = vector.load %arg13[%c0_77, %c0_78] : memref<64x512xf32, #tpu.memory_space<vmem>>, vector<32x512xf32>
    %c0_79 = arith.constant 0 : index
    %c0_80 = arith.constant 0 : index
    %157 = vector.load %arg7[%c0_79, %c0_80] : memref<16x32xf32, #tpu.memory_space<vmem>>, vector<16x32xf32>
    %cst_81 = arith.constant dense<0.000000e+00> : vector<16x512xf32>
    %158 = tpu.matmul %157, %156, %cst_81 {dimension_numbers = #tpu.dot_dimension_numbers<[1], [0], [0], [1], [0, 0, 1, 1], [], []>} : vector<16x32xf32>, vector<32x512xf32>, vector<16x512xf32> -> vector<16x512xf32>
    %c0_82 = arith.constant 0 : index
    %c0_83 = arith.constant 0 : index
    %c0_84 = arith.constant 0 : index
    %159 = vector.load %arg10[%c0_82, %c0_83, %c0_84] : memref<3x16x1xf32, #tpu.memory_space<vmem>>, vector<1x16x1xf32>
    %160 = vector.shape_cast %159 : vector<1x16x1xf32> to vector<16x1xf32>
    %161 = vector.broadcast %160 : vector<16x1xf32> to vector<16x512xf32>
    %162 = arith.addf %158, %161 : vector<16x512xf32>
    %c17_i32_85 = arith.constant 17 : i32
    %163 = tpu.dynamic_rotate %162 by %c17_i32_85 dim 1 : vector<16x512xf32>, i32 -> vector<16x512xf32>
    %164 = vector.extract_strided_slice %0 {offsets = [0, 0], sizes = [1, 512], strides = [1, 1]} : vector<9x512xf32> to vector<1x512xf32>
    %165 = vector.broadcast %164 : vector<1x512xf32> to vector<16x512xf32>
    %166 = arith.mulf %163, %165 : vector<16x512xf32>
    %c0_86 = arith.constant 0 : index
    %c0_87 = arith.constant 0 : index
    %167 = vector.load %arg12[%c0_86, %c0_87] : memref<432x512xf32, #tpu.memory_space<vmem>>, vector<16x512xf32>
    tpu.vector_store %arg12[%c0_86, %c0_87], %166 {strides = array<i32>} : memref<432x512xf32, #tpu.memory_space<vmem>>, vector<16x512xf32>,
    %c16_i32_88 = arith.constant 16 : i32
    %168 = tpu.dynamic_rotate %162 by %c16_i32_88 dim 1 : vector<16x512xf32>, i32 -> vector<16x512xf32>
    %169 = vector.extract_strided_slice %0 {offsets = [1, 0], sizes = [1, 512], strides = [1, 1]} : vector<9x512xf32> to vector<1x512xf32>
    %170 = vector.broadcast %169 : vector<1x512xf32> to vector<16x512xf32>
    %171 = arith.mulf %168, %170 : vector<16x512xf32>
    %c16_89 = arith.constant 16 : index
    %c0_90 = arith.constant 0 : index
    %172 = vector.load %arg12[%c16_89, %c0_90] : memref<432x512xf32, #tpu.memory_space<vmem>>, vector<16x512xf32>
    tpu.vector_store %arg12[%c16_89, %c0_90], %171 {strides = array<i32>} : memref<432x512xf32, #tpu.memory_space<vmem>>, vector<16x512xf32>,
    %c15_i32_91 = arith.constant 15 : i32
    %173 = tpu.dynamic_rotate %162 by %c15_i32_91 dim 1 : vector<16x512xf32>, i32 -> vector<16x512xf32>
    %174 = vector.extract_strided_slice %0 {offsets = [2, 0], sizes = [1, 512], strides = [1, 1]} : vector<9x512xf32> to vector<1x512xf32>
    %175 = vector.broadcast %174 : vector<1x512xf32> to vector<16x512xf32>
    %176 = arith.mulf %173, %175 : vector<16x512xf32>
    %c32_92 = arith.constant 32 : index
    %c0_93 = arith.constant 0 : index
    %177 = vector.load %arg12[%c32_92, %c0_93] : memref<432x512xf32, #tpu.memory_space<vmem>>, vector<16x512xf32>
    tpu.vector_store %arg12[%c32_92, %c0_93], %176 {strides = array<i32>} : memref<432x512xf32, #tpu.memory_space<vmem>>, vector<16x512xf32>,
    %c1_i32_94 = arith.constant 1 : i32
    %178 = tpu.dynamic_rotate %162 by %c1_i32_94 dim 1 : vector<16x512xf32>, i32 -> vector<16x512xf32>
    %179 = vector.extract_strided_slice %0 {offsets = [3, 0], sizes = [1, 512], strides = [1, 1]} : vector<9x512xf32> to vector<1x512xf32>
    %180 = vector.broadcast %179 : vector<1x512xf32> to vector<16x512xf32>
    %181 = arith.mulf %178, %180 : vector<16x512xf32>
    %c48_95 = arith.constant 48 : index
    %c0_96 = arith.constant 0 : index
    %182 = vector.load %arg12[%c48_95, %c0_96] : memref<432x512xf32, #tpu.memory_space<vmem>>, vector<16x512xf32>
    tpu.vector_store %arg12[%c48_95, %c0_96], %181 {strides = array<i32>} : memref<432x512xf32, #tpu.memory_space<vmem>>, vector<16x512xf32>,
    %c64_97 = arith.constant 64 : index
    %c0_98 = arith.constant 0 : index
    %183 = vector.load %arg12[%c64_97, %c0_98] : memref<432x512xf32, #tpu.memory_space<vmem>>, vector<16x512xf32>
    tpu.vector_store %arg12[%c64_97, %c0_98], %162 {strides = array<i32>} : memref<432x512xf32, #tpu.memory_space<vmem>>, vector<16x512xf32>,
    %c511_i32_99 = arith.constant 511 : i32
    %184 = tpu.dynamic_rotate %162 by %c511_i32_99 dim 1 : vector<16x512xf32>, i32 -> vector<16x512xf32>
    %185 = vector.extract_strided_slice %0 {offsets = [5, 0], sizes = [1, 512], strides = [1, 1]} : vector<9x512xf32> to vector<1x512xf32>
    %186 = vector.broadcast %185 : vector<1x512xf32> to vector<16x512xf32>
    %187 = arith.mulf %184, %186 : vector<16x512xf32>
    %c80_100 = arith.constant 80 : index
    %c0_101 = arith.constant 0 : index
    %188 = vector.load %arg12[%c80_100, %c0_101] : memref<432x512xf32, #tpu.memory_space<vmem>>, vector<16x512xf32>
    tpu.vector_store %arg12[%c80_100, %c0_101], %187 {strides = array<i32>} : memref<432x512xf32, #tpu.memory_space<vmem>>, vector<16x512xf32>,
    %c497_i32_102 = arith.constant 497 : i32
    %189 = tpu.dynamic_rotate %162 by %c497_i32_102 dim 1 : vector<16x512xf32>, i32 -> vector<16x512xf32>
    %190 = vector.extract_strided_slice %0 {offsets = [6, 0], sizes = [1, 512], strides = [1, 1]} : vector<9x512xf32> to vector<1x512xf32>
    %191 = vector.broadcast %190 : vector<1x512xf32> to vector<16x512xf32>
    %192 = arith.mulf %189, %191 : vector<16x512xf32>
    %c96_103 = arith.constant 96 : index
    %c0_104 = arith.constant 0 : index
    %193 = vector.load %arg12[%c96_103, %c0_104] : memref<432x512xf32, #tpu.memory_space<vmem>>, vector<16x512xf32>
    tpu.vector_store %arg12[%c96_103, %c0_104], %192 {strides = array<i32>} : memref<432x512xf32, #tpu.memory_space<vmem>>, vector<16x512xf32>,
    %c496_i32_105 = arith.constant 496 : i32
    %194 = tpu.dynamic_rotate %162 by %c496_i32_105 dim 1 : vector<16x512xf32>, i32 -> vector<16x512xf32>
    %195 = vector.extract_strided_slice %0 {offsets = [7, 0], sizes = [1, 512], strides = [1, 1]} : vector<9x512xf32> to vector<1x512xf32>
    %196 = vector.broadcast %195 : vector<1x512xf32> to vector<16x512xf32>
    %197 = arith.mulf %194, %196 : vector<16x512xf32>
    %c112_106 = arith.constant 112 : index
    %c0_107 = arith.constant 0 : index
    %198 = vector.load %arg12[%c112_106, %c0_107] : memref<432x512xf32, #tpu.memory_space<vmem>>, vector<16x512xf32>
    tpu.vector_store %arg12[%c112_106, %c0_107], %197 {strides = array<i32>} : memref<432x512xf32, #tpu.memory_space<vmem>>, vector<16x512xf32>,
    %c495_i32_108 = arith.constant 495 : i32
    %199 = tpu.dynamic_rotate %162 by %c495_i32_108 dim 1 : vector<16x512xf32>, i32 -> vector<16x512xf32>
    %200 = vector.extract_strided_slice %0 {offsets = [8, 0], sizes = [1, 512], strides = [1, 1]} : vector<9x512xf32> to vector<1x512xf32>
    %201 = vector.broadcast %200 : vector<1x512xf32> to vector<16x512xf32>
    %202 = arith.mulf %199, %201 : vector<16x512xf32>
    %c128_109 = arith.constant 128 : index
    %c0_110 = arith.constant 0 : index
    %203 = vector.load %arg12[%c128_109, %c0_110] : memref<432x512xf32, #tpu.memory_space<vmem>>, vector<16x512xf32>
    tpu.vector_store %arg12[%c128_109, %c0_110], %202 {strides = array<i32>} : memref<432x512xf32, #tpu.memory_space<vmem>>, vector<16x512xf32>,
    %c0_111 = arith.constant 0 : index
    %c0_112 = arith.constant 0 : index
    %204 = vector.load %arg12[%c0_111, %c0_112] : memref<432x512xf32, #tpu.memory_space<vmem>>, vector<144x512xf32>
    %c1_113 = arith.constant 1 : index
    %c0_114 = arith.constant 0 : index
    %c0_115 = arith.constant 0 : index
    %205 = vector.load %arg3[%c1_113, %c0_114, %c0_115] : memref<3x16x144xf32, #tpu.memory_space<vmem>>, vector<1x16x144xf32>
    %206 = vector.shape_cast %205 : vector<1x16x144xf32> to vector<16x144xf32>
    %cst_116 = arith.constant dense<0.000000e+00> : vector<16x512xf32>
    %207 = tpu.matmul %206, %204, %cst_116 {dimension_numbers = #tpu.dot_dimension_numbers<[1], [0], [0], [1], [0, 0, 1, 1], [], []>} : vector<16x144xf32>, vector<144x512xf32>, vector<16x512xf32> -> vector<16x512xf32>
    %c3 = arith.constant 3 : index
    %c0_117 = arith.constant 0 : index
    %c0_118 = arith.constant 0 : index
    %208 = vector.load %arg6[%c3, %c0_117, %c0_118] : memref<9x16x1xf32, #tpu.memory_space<vmem>>, vector<1x16x1xf32>
    %209 = vector.shape_cast %208 : vector<1x16x1xf32> to vector<16x1xf32>
    %210 = vector.broadcast %209 : vector<16x1xf32> to vector<16x512xf32>
    %211 = arith.addf %207, %210 : vector<16x512xf32>
    %cst_119 = arith.constant 0.000000e+00 : f32
    %212 = vector.broadcast %cst_119 : f32 to vector<16x512xf32>
    %213 = arith.maximumf %211, %212 : vector<16x512xf32>
    %c17_i32_120 = arith.constant 17 : i32
    %214 = tpu.dynamic_rotate %213 by %c17_i32_120 dim 1 : vector<16x512xf32>, i32 -> vector<16x512xf32>
    %215 = vector.extract_strided_slice %0 {offsets = [0, 0], sizes = [1, 512], strides = [1, 1]} : vector<9x512xf32> to vector<1x512xf32>
    %216 = vector.broadcast %215 : vector<1x512xf32> to vector<16x512xf32>
    %217 = arith.mulf %214, %216 : vector<16x512xf32>
    %c144_121 = arith.constant 144 : index
    %c0_122 = arith.constant 0 : index
    %218 = vector.load %arg12[%c144_121, %c0_122] : memref<432x512xf32, #tpu.memory_space<vmem>>, vector<16x512xf32>
    tpu.vector_store %arg12[%c144_121, %c0_122], %217 {strides = array<i32>} : memref<432x512xf32, #tpu.memory_space<vmem>>, vector<16x512xf32>,
    %c16_i32_123 = arith.constant 16 : i32
    %219 = tpu.dynamic_rotate %213 by %c16_i32_123 dim 1 : vector<16x512xf32>, i32 -> vector<16x512xf32>
    %220 = vector.extract_strided_slice %0 {offsets = [1, 0], sizes = [1, 512], strides = [1, 1]} : vector<9x512xf32> to vector<1x512xf32>
    %221 = vector.broadcast %220 : vector<1x512xf32> to vector<16x512xf32>
    %222 = arith.mulf %219, %221 : vector<16x512xf32>
    %c160_124 = arith.constant 160 : index
    %c0_125 = arith.constant 0 : index
    %223 = vector.load %arg12[%c160_124, %c0_125] : memref<432x512xf32, #tpu.memory_space<vmem>>, vector<16x512xf32>
    tpu.vector_store %arg12[%c160_124, %c0_125], %222 {strides = array<i32>} : memref<432x512xf32, #tpu.memory_space<vmem>>, vector<16x512xf32>,
    %c15_i32_126 = arith.constant 15 : i32
    %224 = tpu.dynamic_rotate %213 by %c15_i32_126 dim 1 : vector<16x512xf32>, i32 -> vector<16x512xf32>
    %225 = vector.extract_strided_slice %0 {offsets = [2, 0], sizes = [1, 512], strides = [1, 1]} : vector<9x512xf32> to vector<1x512xf32>
    %226 = vector.broadcast %225 : vector<1x512xf32> to vector<16x512xf32>
    %227 = arith.mulf %224, %226 : vector<16x512xf32>
    %c176_127 = arith.constant 176 : index
    %c0_128 = arith.constant 0 : index
    %228 = vector.load %arg12[%c176_127, %c0_128] : memref<432x512xf32, #tpu.memory_space<vmem>>, vector<16x512xf32>
    tpu.vector_store %arg12[%c176_127, %c0_128], %227 {strides = array<i32>} : memref<432x512xf32, #tpu.memory_space<vmem>>, vector<16x512xf32>,
    %c1_i32_129 = arith.constant 1 : i32
    %229 = tpu.dynamic_rotate %213 by %c1_i32_129 dim 1 : vector<16x512xf32>, i32 -> vector<16x512xf32>
    %230 = vector.extract_strided_slice %0 {offsets = [3, 0], sizes = [1, 512], strides = [1, 1]} : vector<9x512xf32> to vector<1x512xf32>
    %231 = vector.broadcast %230 : vector<1x512xf32> to vector<16x512xf32>
    %232 = arith.mulf %229, %231 : vector<16x512xf32>
    %c192_130 = arith.constant 192 : index
    %c0_131 = arith.constant 0 : index
    %233 = vector.load %arg12[%c192_130, %c0_131] : memref<432x512xf32, #tpu.memory_space<vmem>>, vector<16x512xf32>
    tpu.vector_store %arg12[%c192_130, %c0_131], %232 {strides = array<i32>} : memref<432x512xf32, #tpu.memory_space<vmem>>, vector<16x512xf32>,
    %c208_132 = arith.constant 208 : index
    %c0_133 = arith.constant 0 : index
    %234 = vector.load %arg12[%c208_132, %c0_133] : memref<432x512xf32, #tpu.memory_space<vmem>>, vector<16x512xf32>
    tpu.vector_store %arg12[%c208_132, %c0_133], %213 {strides = array<i32>} : memref<432x512xf32, #tpu.memory_space<vmem>>, vector<16x512xf32>,
    %c511_i32_134 = arith.constant 511 : i32
    %235 = tpu.dynamic_rotate %213 by %c511_i32_134 dim 1 : vector<16x512xf32>, i32 -> vector<16x512xf32>
    %236 = vector.extract_strided_slice %0 {offsets = [5, 0], sizes = [1, 512], strides = [1, 1]} : vector<9x512xf32> to vector<1x512xf32>
    %237 = vector.broadcast %236 : vector<1x512xf32> to vector<16x512xf32>
    %238 = arith.mulf %235, %237 : vector<16x512xf32>
    %c224_135 = arith.constant 224 : index
    %c0_136 = arith.constant 0 : index
    %239 = vector.load %arg12[%c224_135, %c0_136] : memref<432x512xf32, #tpu.memory_space<vmem>>, vector<16x512xf32>
    tpu.vector_store %arg12[%c224_135, %c0_136], %238 {strides = array<i32>} : memref<432x512xf32, #tpu.memory_space<vmem>>, vector<16x512xf32>,
    %c497_i32_137 = arith.constant 497 : i32
    %240 = tpu.dynamic_rotate %213 by %c497_i32_137 dim 1 : vector<16x512xf32>, i32 -> vector<16x512xf32>
    %241 = vector.extract_strided_slice %0 {offsets = [6, 0], sizes = [1, 512], strides = [1, 1]} : vector<9x512xf32> to vector<1x512xf32>
    %242 = vector.broadcast %241 : vector<1x512xf32> to vector<16x512xf32>
    %243 = arith.mulf %240, %242 : vector<16x512xf32>
    %c240_138 = arith.constant 240 : index
    %c0_139 = arith.constant 0 : index
    %244 = vector.load %arg12[%c240_138, %c0_139] : memref<432x512xf32, #tpu.memory_space<vmem>>, vector<16x512xf32>
    tpu.vector_store %arg12[%c240_138, %c0_139], %243 {strides = array<i32>} : memref<432x512xf32, #tpu.memory_space<vmem>>, vector<16x512xf32>,
    %c496_i32_140 = arith.constant 496 : i32
    %245 = tpu.dynamic_rotate %213 by %c496_i32_140 dim 1 : vector<16x512xf32>, i32 -> vector<16x512xf32>
    %246 = vector.extract_strided_slice %0 {offsets = [7, 0], sizes = [1, 512], strides = [1, 1]} : vector<9x512xf32> to vector<1x512xf32>
    %247 = vector.broadcast %246 : vector<1x512xf32> to vector<16x512xf32>
    %248 = arith.mulf %245, %247 : vector<16x512xf32>
    %c256_141 = arith.constant 256 : index
    %c0_142 = arith.constant 0 : index
    %249 = vector.load %arg12[%c256_141, %c0_142] : memref<432x512xf32, #tpu.memory_space<vmem>>, vector<16x512xf32>
    tpu.vector_store %arg12[%c256_141, %c0_142], %248 {strides = array<i32>} : memref<432x512xf32, #tpu.memory_space<vmem>>, vector<16x512xf32>,
    %c495_i32_143 = arith.constant 495 : i32
    %250 = tpu.dynamic_rotate %213 by %c495_i32_143 dim 1 : vector<16x512xf32>, i32 -> vector<16x512xf32>
    %251 = vector.extract_strided_slice %0 {offsets = [8, 0], sizes = [1, 512], strides = [1, 1]} : vector<9x512xf32> to vector<1x512xf32>
    %252 = vector.broadcast %251 : vector<1x512xf32> to vector<16x512xf32>
    %253 = arith.mulf %250, %252 : vector<16x512xf32>
    %c272_144 = arith.constant 272 : index
    %c0_145 = arith.constant 0 : index
    %254 = vector.load %arg12[%c272_144, %c0_145] : memref<432x512xf32, #tpu.memory_space<vmem>>, vector<16x512xf32>
    tpu.vector_store %arg12[%c272_144, %c0_145], %253 {strides = array<i32>} : memref<432x512xf32, #tpu.memory_space<vmem>>, vector<16x512xf32>,
    %c0_146 = arith.constant 0 : index
    %c0_147 = arith.constant 0 : index
    %255 = vector.load %arg12[%c0_146, %c0_147] : memref<432x512xf32, #tpu.memory_space<vmem>>, vector<288x512xf32>
    %c1_148 = arith.constant 1 : index
    %c0_149 = arith.constant 0 : index
    %c0_150 = arith.constant 0 : index
    %256 = vector.load %arg4[%c1_148, %c0_149, %c0_150] : memref<3x16x288xf32, #tpu.memory_space<vmem>>, vector<1x16x288xf32>
    %257 = vector.shape_cast %256 : vector<1x16x288xf32> to vector<16x288xf32>
    %cst_151 = arith.constant dense<0.000000e+00> : vector<16x512xf32>
    %258 = tpu.matmul %257, %255, %cst_151 {dimension_numbers = #tpu.dot_dimension_numbers<[1], [0], [0], [1], [0, 0, 1, 1], [], []>} : vector<16x288xf32>, vector<288x512xf32>, vector<16x512xf32> -> vector<16x512xf32>
    %c4 = arith.constant 4 : index
    %c0_152 = arith.constant 0 : index
    %c0_153 = arith.constant 0 : index
    %259 = vector.load %arg6[%c4, %c0_152, %c0_153] : memref<9x16x1xf32, #tpu.memory_space<vmem>>, vector<1x16x1xf32>
    %260 = vector.shape_cast %259 : vector<1x16x1xf32> to vector<16x1xf32>
    %261 = vector.broadcast %260 : vector<16x1xf32> to vector<16x512xf32>
    %262 = arith.addf %258, %261 : vector<16x512xf32>
    %cst_154 = arith.constant 0.000000e+00 : f32
    %263 = vector.broadcast %cst_154 : f32 to vector<16x512xf32>
    %264 = arith.maximumf %262, %263 : vector<16x512xf32>
    %c17_i32_155 = arith.constant 17 : i32
    %265 = tpu.dynamic_rotate %264 by %c17_i32_155 dim 1 : vector<16x512xf32>, i32 -> vector<16x512xf32>
    %266 = vector.extract_strided_slice %0 {offsets = [0, 0], sizes = [1, 512], strides = [1, 1]} : vector<9x512xf32> to vector<1x512xf32>
    %267 = vector.broadcast %266 : vector<1x512xf32> to vector<16x512xf32>
    %268 = arith.mulf %265, %267 : vector<16x512xf32>
    %c288_156 = arith.constant 288 : index
    %c0_157 = arith.constant 0 : index
    %269 = vector.load %arg12[%c288_156, %c0_157] : memref<432x512xf32, #tpu.memory_space<vmem>>, vector<16x512xf32>
    tpu.vector_store %arg12[%c288_156, %c0_157], %268 {strides = array<i32>} : memref<432x512xf32, #tpu.memory_space<vmem>>, vector<16x512xf32>,
    %c16_i32_158 = arith.constant 16 : i32
    %270 = tpu.dynamic_rotate %264 by %c16_i32_158 dim 1 : vector<16x512xf32>, i32 -> vector<16x512xf32>
    %271 = vector.extract_strided_slice %0 {offsets = [1, 0], sizes = [1, 512], strides = [1, 1]} : vector<9x512xf32> to vector<1x512xf32>
    %272 = vector.broadcast %271 : vector<1x512xf32> to vector<16x512xf32>
    %273 = arith.mulf %270, %272 : vector<16x512xf32>
    %c304_159 = arith.constant 304 : index
    %c0_160 = arith.constant 0 : index
    %274 = vector.load %arg12[%c304_159, %c0_160] : memref<432x512xf32, #tpu.memory_space<vmem>>, vector<16x512xf32>
    tpu.vector_store %arg12[%c304_159, %c0_160], %273 {strides = array<i32>} : memref<432x512xf32, #tpu.memory_space<vmem>>, vector<16x512xf32>,
    %c15_i32_161 = arith.constant 15 : i32
    %275 = tpu.dynamic_rotate %264 by %c15_i32_161 dim 1 : vector<16x512xf32>, i32 -> vector<16x512xf32>
    %276 = vector.extract_strided_slice %0 {offsets = [2, 0], sizes = [1, 512], strides = [1, 1]} : vector<9x512xf32> to vector<1x512xf32>
    %277 = vector.broadcast %276 : vector<1x512xf32> to vector<16x512xf32>
    %278 = arith.mulf %275, %277 : vector<16x512xf32>
    %c320_162 = arith.constant 320 : index
    %c0_163 = arith.constant 0 : index
    %279 = vector.load %arg12[%c320_162, %c0_163] : memref<432x512xf32, #tpu.memory_space<vmem>>, vector<16x512xf32>
    tpu.vector_store %arg12[%c320_162, %c0_163], %278 {strides = array<i32>} : memref<432x512xf32, #tpu.memory_space<vmem>>, vector<16x512xf32>,
    %c1_i32_164 = arith.constant 1 : i32
    %280 = tpu.dynamic_rotate %264 by %c1_i32_164 dim 1 : vector<16x512xf32>, i32 -> vector<16x512xf32>
    %281 = vector.extract_strided_slice %0 {offsets = [3, 0], sizes = [1, 512], strides = [1, 1]} : vector<9x512xf32> to vector<1x512xf32>
    %282 = vector.broadcast %281 : vector<1x512xf32> to vector<16x512xf32>
    %283 = arith.mulf %280, %282 : vector<16x512xf32>
    %c336_165 = arith.constant 336 : index
    %c0_166 = arith.constant 0 : index
    %284 = vector.load %arg12[%c336_165, %c0_166] : memref<432x512xf32, #tpu.memory_space<vmem>>, vector<16x512xf32>
    tpu.vector_store %arg12[%c336_165, %c0_166], %283 {strides = array<i32>} : memref<432x512xf32, #tpu.memory_space<vmem>>, vector<16x512xf32>,
    %c352_167 = arith.constant 352 : index
    %c0_168 = arith.constant 0 : index
    %285 = vector.load %arg12[%c352_167, %c0_168] : memref<432x512xf32, #tpu.memory_space<vmem>>, vector<16x512xf32>
    tpu.vector_store %arg12[%c352_167, %c0_168], %264 {strides = array<i32>} : memref<432x512xf32, #tpu.memory_space<vmem>>, vector<16x512xf32>,
    %c511_i32_169 = arith.constant 511 : i32
    %286 = tpu.dynamic_rotate %264 by %c511_i32_169 dim 1 : vector<16x512xf32>, i32 -> vector<16x512xf32>
    %287 = vector.extract_strided_slice %0 {offsets = [5, 0], sizes = [1, 512], strides = [1, 1]} : vector<9x512xf32> to vector<1x512xf32>
    %288 = vector.broadcast %287 : vector<1x512xf32> to vector<16x512xf32>
    %289 = arith.mulf %286, %288 : vector<16x512xf32>
    %c368_170 = arith.constant 368 : index
    %c0_171 = arith.constant 0 : index
    %290 = vector.load %arg12[%c368_170, %c0_171] : memref<432x512xf32, #tpu.memory_space<vmem>>, vector<16x512xf32>
    tpu.vector_store %arg12[%c368_170, %c0_171], %289 {strides = array<i32>} : memref<432x512xf32, #tpu.memory_space<vmem>>, vector<16x512xf32>,
    %c497_i32_172 = arith.constant 497 : i32
    %291 = tpu.dynamic_rotate %264 by %c497_i32_172 dim 1 : vector<16x512xf32>, i32 -> vector<16x512xf32>
    %292 = vector.extract_strided_slice %0 {offsets = [6, 0], sizes = [1, 512], strides = [1, 1]} : vector<9x512xf32> to vector<1x512xf32>
    %293 = vector.broadcast %292 : vector<1x512xf32> to vector<16x512xf32>
    %294 = arith.mulf %291, %293 : vector<16x512xf32>
    %c384_173 = arith.constant 384 : index
    %c0_174 = arith.constant 0 : index
    %295 = vector.load %arg12[%c384_173, %c0_174] : memref<432x512xf32, #tpu.memory_space<vmem>>, vector<16x512xf32>
    tpu.vector_store %arg12[%c384_173, %c0_174], %294 {strides = array<i32>} : memref<432x512xf32, #tpu.memory_space<vmem>>, vector<16x512xf32>,
    %c496_i32_175 = arith.constant 496 : i32
    %296 = tpu.dynamic_rotate %264 by %c496_i32_175 dim 1 : vector<16x512xf32>, i32 -> vector<16x512xf32>
    %297 = vector.extract_strided_slice %0 {offsets = [7, 0], sizes = [1, 512], strides = [1, 1]} : vector<9x512xf32> to vector<1x512xf32>
    %298 = vector.broadcast %297 : vector<1x512xf32> to vector<16x512xf32>
    %299 = arith.mulf %296, %298 : vector<16x512xf32>
    %c400_176 = arith.constant 400 : index
    %c0_177 = arith.constant 0 : index
    %300 = vector.load %arg12[%c400_176, %c0_177] : memref<432x512xf32, #tpu.memory_space<vmem>>, vector<16x512xf32>
    tpu.vector_store %arg12[%c400_176, %c0_177], %299 {strides = array<i32>} : memref<432x512xf32, #tpu.memory_space<vmem>>, vector<16x512xf32>,
    %c495_i32_178 = arith.constant 495 : i32
    %301 = tpu.dynamic_rotate %264 by %c495_i32_178 dim 1 : vector<16x512xf32>, i32 -> vector<16x512xf32>
    %302 = vector.extract_strided_slice %0 {offsets = [8, 0], sizes = [1, 512], strides = [1, 1]} : vector<9x512xf32> to vector<1x512xf32>
    %303 = vector.broadcast %302 : vector<1x512xf32> to vector<16x512xf32>
    %304 = arith.mulf %301, %303 : vector<16x512xf32>
    %c416_179 = arith.constant 416 : index
    %c0_180 = arith.constant 0 : index
    %305 = vector.load %arg12[%c416_179, %c0_180] : memref<432x512xf32, #tpu.memory_space<vmem>>, vector<16x512xf32>
    tpu.vector_store %arg12[%c416_179, %c0_180], %304 {strides = array<i32>} : memref<432x512xf32, #tpu.memory_space<vmem>>, vector<16x512xf32>,
    %c0_181 = arith.constant 0 : index
    %c0_182 = arith.constant 0 : index
    %306 = vector.load %arg12[%c0_181, %c0_182] : memref<432x512xf32, #tpu.memory_space<vmem>>, vector<432x512xf32>
    %c1_183 = arith.constant 1 : index
    %c0_184 = arith.constant 0 : index
    %c0_185 = arith.constant 0 : index
    %307 = vector.load %arg5[%c1_183, %c0_184, %c0_185] : memref<3x16x432xf32, #tpu.memory_space<vmem>>, vector<1x16x432xf32>
    %308 = vector.shape_cast %307 : vector<1x16x432xf32> to vector<16x432xf32>
    %cst_186 = arith.constant dense<0.000000e+00> : vector<16x512xf32>
    %309 = tpu.matmul %308, %306, %cst_186 {dimension_numbers = #tpu.dot_dimension_numbers<[1], [0], [0], [1], [0, 0, 1, 1], [], []>} : vector<16x432xf32>, vector<432x512xf32>, vector<16x512xf32> -> vector<16x512xf32>
    %c5 = arith.constant 5 : index
    %c0_187 = arith.constant 0 : index
    %c0_188 = arith.constant 0 : index
    %310 = vector.load %arg6[%c5, %c0_187, %c0_188] : memref<9x16x1xf32, #tpu.memory_space<vmem>>, vector<1x16x1xf32>
    %311 = vector.shape_cast %310 : vector<1x16x1xf32> to vector<16x1xf32>
    %312 = vector.broadcast %311 : vector<16x1xf32> to vector<16x512xf32>
    %313 = arith.addf %309, %312 : vector<16x512xf32>
    %314 = arith.addf %313, %162 : vector<16x512xf32>
    %c32_189 = arith.constant 32 : index
    %c0_190 = arith.constant 0 : index
    %315 = vector.load %arg13[%c32_189, %c0_190] : memref<64x512xf32, #tpu.memory_space<vmem>>, vector<16x512xf32>
    tpu.vector_store %arg13[%c32_189, %c0_190], %314 {strides = array<i32>} : memref<64x512xf32, #tpu.memory_space<vmem>>, vector<16x512xf32>,
    %c0_191 = arith.constant 0 : index
    %c0_192 = arith.constant 0 : index
    %316 = vector.load %arg13[%c0_191, %c0_192] : memref<64x512xf32, #tpu.memory_space<vmem>>, vector<48x512xf32>
    %c0_193 = arith.constant 0 : index
    %c0_194 = arith.constant 0 : index
    %317 = vector.load %arg8[%c0_193, %c0_194] : memref<16x48xf32, #tpu.memory_space<vmem>>, vector<16x48xf32>
    %cst_195 = arith.constant dense<0.000000e+00> : vector<16x512xf32>
    %318 = tpu.matmul %317, %316, %cst_195 {dimension_numbers = #tpu.dot_dimension_numbers<[1], [0], [0], [1], [0, 0, 1, 1], [], []>} : vector<16x48xf32>, vector<48x512xf32>, vector<16x512xf32> -> vector<16x512xf32>
    %c1_196 = arith.constant 1 : index
    %c0_197 = arith.constant 0 : index
    %c0_198 = arith.constant 0 : index
    %319 = vector.load %arg10[%c1_196, %c0_197, %c0_198] : memref<3x16x1xf32, #tpu.memory_space<vmem>>, vector<1x16x1xf32>
    %320 = vector.shape_cast %319 : vector<1x16x1xf32> to vector<16x1xf32>
    %321 = vector.broadcast %320 : vector<16x1xf32> to vector<16x512xf32>
    %322 = arith.addf %318, %321 : vector<16x512xf32>
    %c17_i32_199 = arith.constant 17 : i32
    %323 = tpu.dynamic_rotate %322 by %c17_i32_199 dim 1 : vector<16x512xf32>, i32 -> vector<16x512xf32>
    %324 = vector.extract_strided_slice %0 {offsets = [0, 0], sizes = [1, 512], strides = [1, 1]} : vector<9x512xf32> to vector<1x512xf32>
    %325 = vector.broadcast %324 : vector<1x512xf32> to vector<16x512xf32>
    %326 = arith.mulf %323, %325 : vector<16x512xf32>
    %c0_200 = arith.constant 0 : index
    %c0_201 = arith.constant 0 : index
    %327 = vector.load %arg12[%c0_200, %c0_201] : memref<432x512xf32, #tpu.memory_space<vmem>>, vector<16x512xf32>
    tpu.vector_store %arg12[%c0_200, %c0_201], %326 {strides = array<i32>} : memref<432x512xf32, #tpu.memory_space<vmem>>, vector<16x512xf32>,
    %c16_i32_202 = arith.constant 16 : i32
    %328 = tpu.dynamic_rotate %322 by %c16_i32_202 dim 1 : vector<16x512xf32>, i32 -> vector<16x512xf32>
    %329 = vector.extract_strided_slice %0 {offsets = [1, 0], sizes = [1, 512], strides = [1, 1]} : vector<9x512xf32> to vector<1x512xf32>
    %330 = vector.broadcast %329 : vector<1x512xf32> to vector<16x512xf32>
    %331 = arith.mulf %328, %330 : vector<16x512xf32>
    %c16_203 = arith.constant 16 : index
    %c0_204 = arith.constant 0 : index
    %332 = vector.load %arg12[%c16_203, %c0_204] : memref<432x512xf32, #tpu.memory_space<vmem>>, vector<16x512xf32>
    tpu.vector_store %arg12[%c16_203, %c0_204], %331 {strides = array<i32>} : memref<432x512xf32, #tpu.memory_space<vmem>>, vector<16x512xf32>,
    %c15_i32_205 = arith.constant 15 : i32
    %333 = tpu.dynamic_rotate %322 by %c15_i32_205 dim 1 : vector<16x512xf32>, i32 -> vector<16x512xf32>
    %334 = vector.extract_strided_slice %0 {offsets = [2, 0], sizes = [1, 512], strides = [1, 1]} : vector<9x512xf32> to vector<1x512xf32>
    %335 = vector.broadcast %334 : vector<1x512xf32> to vector<16x512xf32>
    %336 = arith.mulf %333, %335 : vector<16x512xf32>
    %c32_206 = arith.constant 32 : index
    %c0_207 = arith.constant 0 : index
    %337 = vector.load %arg12[%c32_206, %c0_207] : memref<432x512xf32, #tpu.memory_space<vmem>>, vector<16x512xf32>
    tpu.vector_store %arg12[%c32_206, %c0_207], %336 {strides = array<i32>} : memref<432x512xf32, #tpu.memory_space<vmem>>, vector<16x512xf32>,
    %c1_i32_208 = arith.constant 1 : i32
    %338 = tpu.dynamic_rotate %322 by %c1_i32_208 dim 1 : vector<16x512xf32>, i32 -> vector<16x512xf32>
    %339 = vector.extract_strided_slice %0 {offsets = [3, 0], sizes = [1, 512], strides = [1, 1]} : vector<9x512xf32> to vector<1x512xf32>
    %340 = vector.broadcast %339 : vector<1x512xf32> to vector<16x512xf32>
    %341 = arith.mulf %338, %340 : vector<16x512xf32>
    %c48_209 = arith.constant 48 : index
    %c0_210 = arith.constant 0 : index
    %342 = vector.load %arg12[%c48_209, %c0_210] : memref<432x512xf32, #tpu.memory_space<vmem>>, vector<16x512xf32>
    tpu.vector_store %arg12[%c48_209, %c0_210], %341 {strides = array<i32>} : memref<432x512xf32, #tpu.memory_space<vmem>>, vector<16x512xf32>,
    %c64_211 = arith.constant 64 : index
    %c0_212 = arith.constant 0 : index
    %343 = vector.load %arg12[%c64_211, %c0_212] : memref<432x512xf32, #tpu.memory_space<vmem>>, vector<16x512xf32>
    tpu.vector_store %arg12[%c64_211, %c0_212], %322 {strides = array<i32>} : memref<432x512xf32, #tpu.memory_space<vmem>>, vector<16x512xf32>,
    %c511_i32_213 = arith.constant 511 : i32
    %344 = tpu.dynamic_rotate %322 by %c511_i32_213 dim 1 : vector<16x512xf32>, i32 -> vector<16x512xf32>
    %345 = vector.extract_strided_slice %0 {offsets = [5, 0], sizes = [1, 512], strides = [1, 1]} : vector<9x512xf32> to vector<1x512xf32>
    %346 = vector.broadcast %345 : vector<1x512xf32> to vector<16x512xf32>
    %347 = arith.mulf %344, %346 : vector<16x512xf32>
    %c80_214 = arith.constant 80 : index
    %c0_215 = arith.constant 0 : index
    %348 = vector.load %arg12[%c80_214, %c0_215] : memref<432x512xf32, #tpu.memory_space<vmem>>, vector<16x512xf32>
    tpu.vector_store %arg12[%c80_214, %c0_215], %347 {strides = array<i32>} : memref<432x512xf32, #tpu.memory_space<vmem>>, vector<16x512xf32>,
    %c497_i32_216 = arith.constant 497 : i32
    %349 = tpu.dynamic_rotate %322 by %c497_i32_216 dim 1 : vector<16x512xf32>, i32 -> vector<16x512xf32>
    %350 = vector.extract_strided_slice %0 {offsets = [6, 0], sizes = [1, 512], strides = [1, 1]} : vector<9x512xf32> to vector<1x512xf32>
    %351 = vector.broadcast %350 : vector<1x512xf32> to vector<16x512xf32>
    %352 = arith.mulf %349, %351 : vector<16x512xf32>
    %c96_217 = arith.constant 96 : index
    %c0_218 = arith.constant 0 : index
    %353 = vector.load %arg12[%c96_217, %c0_218] : memref<432x512xf32, #tpu.memory_space<vmem>>, vector<16x512xf32>
    tpu.vector_store %arg12[%c96_217, %c0_218], %352 {strides = array<i32>} : memref<432x512xf32, #tpu.memory_space<vmem>>, vector<16x512xf32>,
    %c496_i32_219 = arith.constant 496 : i32
    %354 = tpu.dynamic_rotate %322 by %c496_i32_219 dim 1 : vector<16x512xf32>, i32 -> vector<16x512xf32>
    %355 = vector.extract_strided_slice %0 {offsets = [7, 0], sizes = [1, 512], strides = [1, 1]} : vector<9x512xf32> to vector<1x512xf32>
    %356 = vector.broadcast %355 : vector<1x512xf32> to vector<16x512xf32>
    %357 = arith.mulf %354, %356 : vector<16x512xf32>
    %c112_220 = arith.constant 112 : index
    %c0_221 = arith.constant 0 : index
    %358 = vector.load %arg12[%c112_220, %c0_221] : memref<432x512xf32, #tpu.memory_space<vmem>>, vector<16x512xf32>
    tpu.vector_store %arg12[%c112_220, %c0_221], %357 {strides = array<i32>} : memref<432x512xf32, #tpu.memory_space<vmem>>, vector<16x512xf32>,
    %c495_i32_222 = arith.constant 495 : i32
    %359 = tpu.dynamic_rotate %322 by %c495_i32_222 dim 1 : vector<16x512xf32>, i32 -> vector<16x512xf32>
    %360 = vector.extract_strided_slice %0 {offsets = [8, 0], sizes = [1, 512], strides = [1, 1]} : vector<9x512xf32> to vector<1x512xf32>
    %361 = vector.broadcast %360 : vector<1x512xf32> to vector<16x512xf32>
    %362 = arith.mulf %359, %361 : vector<16x512xf32>
    %c128_223 = arith.constant 128 : index
    %c0_224 = arith.constant 0 : index
    %363 = vector.load %arg12[%c128_223, %c0_224] : memref<432x512xf32, #tpu.memory_space<vmem>>, vector<16x512xf32>
    tpu.vector_store %arg12[%c128_223, %c0_224], %362 {strides = array<i32>} : memref<432x512xf32, #tpu.memory_space<vmem>>, vector<16x512xf32>,
    %c0_225 = arith.constant 0 : index
    %c0_226 = arith.constant 0 : index
    %364 = vector.load %arg12[%c0_225, %c0_226] : memref<432x512xf32, #tpu.memory_space<vmem>>, vector<144x512xf32>
    %c2_227 = arith.constant 2 : index
    %c0_228 = arith.constant 0 : index
    %c0_229 = arith.constant 0 : index
    %365 = vector.load %arg3[%c2_227, %c0_228, %c0_229] : memref<3x16x144xf32, #tpu.memory_space<vmem>>, vector<1x16x144xf32>
    %366 = vector.shape_cast %365 : vector<1x16x144xf32> to vector<16x144xf32>
    %cst_230 = arith.constant dense<0.000000e+00> : vector<16x512xf32>
    %367 = tpu.matmul %366, %364, %cst_230 {dimension_numbers = #tpu.dot_dimension_numbers<[1], [0], [0], [1], [0, 0, 1, 1], [], []>} : vector<16x144xf32>, vector<144x512xf32>, vector<16x512xf32> -> vector<16x512xf32>
    %c6 = arith.constant 6 : index
    %c0_231 = arith.constant 0 : index
    %c0_232 = arith.constant 0 : index
    %368 = vector.load %arg6[%c6, %c0_231, %c0_232] : memref<9x16x1xf32, #tpu.memory_space<vmem>>, vector<1x16x1xf32>
    %369 = vector.shape_cast %368 : vector<1x16x1xf32> to vector<16x1xf32>
    %370 = vector.broadcast %369 : vector<16x1xf32> to vector<16x512xf32>
    %371 = arith.addf %367, %370 : vector<16x512xf32>
    %cst_233 = arith.constant 0.000000e+00 : f32
    %372 = vector.broadcast %cst_233 : f32 to vector<16x512xf32>
    %373 = arith.maximumf %371, %372 : vector<16x512xf32>
    %c17_i32_234 = arith.constant 17 : i32
    %374 = tpu.dynamic_rotate %373 by %c17_i32_234 dim 1 : vector<16x512xf32>, i32 -> vector<16x512xf32>
    %375 = vector.extract_strided_slice %0 {offsets = [0, 0], sizes = [1, 512], strides = [1, 1]} : vector<9x512xf32> to vector<1x512xf32>
    %376 = vector.broadcast %375 : vector<1x512xf32> to vector<16x512xf32>
    %377 = arith.mulf %374, %376 : vector<16x512xf32>
    %c144_235 = arith.constant 144 : index
    %c0_236 = arith.constant 0 : index
    %378 = vector.load %arg12[%c144_235, %c0_236] : memref<432x512xf32, #tpu.memory_space<vmem>>, vector<16x512xf32>
    tpu.vector_store %arg12[%c144_235, %c0_236], %377 {strides = array<i32>} : memref<432x512xf32, #tpu.memory_space<vmem>>, vector<16x512xf32>,
    %c16_i32_237 = arith.constant 16 : i32
    %379 = tpu.dynamic_rotate %373 by %c16_i32_237 dim 1 : vector<16x512xf32>, i32 -> vector<16x512xf32>
    %380 = vector.extract_strided_slice %0 {offsets = [1, 0], sizes = [1, 512], strides = [1, 1]} : vector<9x512xf32> to vector<1x512xf32>
    %381 = vector.broadcast %380 : vector<1x512xf32> to vector<16x512xf32>
    %382 = arith.mulf %379, %381 : vector<16x512xf32>
    %c160_238 = arith.constant 160 : index
    %c0_239 = arith.constant 0 : index
    %383 = vector.load %arg12[%c160_238, %c0_239] : memref<432x512xf32, #tpu.memory_space<vmem>>, vector<16x512xf32>
    tpu.vector_store %arg12[%c160_238, %c0_239], %382 {strides = array<i32>} : memref<432x512xf32, #tpu.memory_space<vmem>>, vector<16x512xf32>,
    %c15_i32_240 = arith.constant 15 : i32
    %384 = tpu.dynamic_rotate %373 by %c15_i32_240 dim 1 : vector<16x512xf32>, i32 -> vector<16x512xf32>
    %385 = vector.extract_strided_slice %0 {offsets = [2, 0], sizes = [1, 512], strides = [1, 1]} : vector<9x512xf32> to vector<1x512xf32>
    %386 = vector.broadcast %385 : vector<1x512xf32> to vector<16x512xf32>
    %387 = arith.mulf %384, %386 : vector<16x512xf32>
    %c176_241 = arith.constant 176 : index
    %c0_242 = arith.constant 0 : index
    %388 = vector.load %arg12[%c176_241, %c0_242] : memref<432x512xf32, #tpu.memory_space<vmem>>, vector<16x512xf32>
    tpu.vector_store %arg12[%c176_241, %c0_242], %387 {strides = array<i32>} : memref<432x512xf32, #tpu.memory_space<vmem>>, vector<16x512xf32>,
    %c1_i32_243 = arith.constant 1 : i32
    %389 = tpu.dynamic_rotate %373 by %c1_i32_243 dim 1 : vector<16x512xf32>, i32 -> vector<16x512xf32>
    %390 = vector.extract_strided_slice %0 {offsets = [3, 0], sizes = [1, 512], strides = [1, 1]} : vector<9x512xf32> to vector<1x512xf32>
    %391 = vector.broadcast %390 : vector<1x512xf32> to vector<16x512xf32>
    %392 = arith.mulf %389, %391 : vector<16x512xf32>
    %c192_244 = arith.constant 192 : index
    %c0_245 = arith.constant 0 : index
    %393 = vector.load %arg12[%c192_244, %c0_245] : memref<432x512xf32, #tpu.memory_space<vmem>>, vector<16x512xf32>
    tpu.vector_store %arg12[%c192_244, %c0_245], %392 {strides = array<i32>} : memref<432x512xf32, #tpu.memory_space<vmem>>, vector<16x512xf32>,
    %c208_246 = arith.constant 208 : index
    %c0_247 = arith.constant 0 : index
    %394 = vector.load %arg12[%c208_246, %c0_247] : memref<432x512xf32, #tpu.memory_space<vmem>>, vector<16x512xf32>
    tpu.vector_store %arg12[%c208_246, %c0_247], %373 {strides = array<i32>} : memref<432x512xf32, #tpu.memory_space<vmem>>, vector<16x512xf32>,
    %c511_i32_248 = arith.constant 511 : i32
    %395 = tpu.dynamic_rotate %373 by %c511_i32_248 dim 1 : vector<16x512xf32>, i32 -> vector<16x512xf32>
    %396 = vector.extract_strided_slice %0 {offsets = [5, 0], sizes = [1, 512], strides = [1, 1]} : vector<9x512xf32> to vector<1x512xf32>
    %397 = vector.broadcast %396 : vector<1x512xf32> to vector<16x512xf32>
    %398 = arith.mulf %395, %397 : vector<16x512xf32>
    %c224_249 = arith.constant 224 : index
    %c0_250 = arith.constant 0 : index
    %399 = vector.load %arg12[%c224_249, %c0_250] : memref<432x512xf32, #tpu.memory_space<vmem>>, vector<16x512xf32>
    tpu.vector_store %arg12[%c224_249, %c0_250], %398 {strides = array<i32>} : memref<432x512xf32, #tpu.memory_space<vmem>>, vector<16x512xf32>,
    %c497_i32_251 = arith.constant 497 : i32
    %400 = tpu.dynamic_rotate %373 by %c497_i32_251 dim 1 : vector<16x512xf32>, i32 -> vector<16x512xf32>
    %401 = vector.extract_strided_slice %0 {offsets = [6, 0], sizes = [1, 512], strides = [1, 1]} : vector<9x512xf32> to vector<1x512xf32>
    %402 = vector.broadcast %401 : vector<1x512xf32> to vector<16x512xf32>
    %403 = arith.mulf %400, %402 : vector<16x512xf32>
    %c240_252 = arith.constant 240 : index
    %c0_253 = arith.constant 0 : index
    %404 = vector.load %arg12[%c240_252, %c0_253] : memref<432x512xf32, #tpu.memory_space<vmem>>, vector<16x512xf32>
    tpu.vector_store %arg12[%c240_252, %c0_253], %403 {strides = array<i32>} : memref<432x512xf32, #tpu.memory_space<vmem>>, vector<16x512xf32>,
    %c496_i32_254 = arith.constant 496 : i32
    %405 = tpu.dynamic_rotate %373 by %c496_i32_254 dim 1 : vector<16x512xf32>, i32 -> vector<16x512xf32>
    %406 = vector.extract_strided_slice %0 {offsets = [7, 0], sizes = [1, 512], strides = [1, 1]} : vector<9x512xf32> to vector<1x512xf32>
    %407 = vector.broadcast %406 : vector<1x512xf32> to vector<16x512xf32>
    %408 = arith.mulf %405, %407 : vector<16x512xf32>
    %c256_255 = arith.constant 256 : index
    %c0_256 = arith.constant 0 : index
    %409 = vector.load %arg12[%c256_255, %c0_256] : memref<432x512xf32, #tpu.memory_space<vmem>>, vector<16x512xf32>
    tpu.vector_store %arg12[%c256_255, %c0_256], %408 {strides = array<i32>} : memref<432x512xf32, #tpu.memory_space<vmem>>, vector<16x512xf32>,
    %c495_i32_257 = arith.constant 495 : i32
    %410 = tpu.dynamic_rotate %373 by %c495_i32_257 dim 1 : vector<16x512xf32>, i32 -> vector<16x512xf32>
    %411 = vector.extract_strided_slice %0 {offsets = [8, 0], sizes = [1, 512], strides = [1, 1]} : vector<9x512xf32> to vector<1x512xf32>
    %412 = vector.broadcast %411 : vector<1x512xf32> to vector<16x512xf32>
    %413 = arith.mulf %410, %412 : vector<16x512xf32>
    %c272_258 = arith.constant 272 : index
    %c0_259 = arith.constant 0 : index
    %414 = vector.load %arg12[%c272_258, %c0_259] : memref<432x512xf32, #tpu.memory_space<vmem>>, vector<16x512xf32>
    tpu.vector_store %arg12[%c272_258, %c0_259], %413 {strides = array<i32>} : memref<432x512xf32, #tpu.memory_space<vmem>>, vector<16x512xf32>,
    %c0_260 = arith.constant 0 : index
    %c0_261 = arith.constant 0 : index
    %415 = vector.load %arg12[%c0_260, %c0_261] : memref<432x512xf32, #tpu.memory_space<vmem>>, vector<288x512xf32>
    %c2_262 = arith.constant 2 : index
    %c0_263 = arith.constant 0 : index
    %c0_264 = arith.constant 0 : index
    %416 = vector.load %arg4[%c2_262, %c0_263, %c0_264] : memref<3x16x288xf32, #tpu.memory_space<vmem>>, vector<1x16x288xf32>
    %417 = vector.shape_cast %416 : vector<1x16x288xf32> to vector<16x288xf32>
    %cst_265 = arith.constant dense<0.000000e+00> : vector<16x512xf32>
    %418 = tpu.matmul %417, %415, %cst_265 {dimension_numbers = #tpu.dot_dimension_numbers<[1], [0], [0], [1], [0, 0, 1, 1], [], []>} : vector<16x288xf32>, vector<288x512xf32>, vector<16x512xf32> -> vector<16x512xf32>
    %c7 = arith.constant 7 : index
    %c0_266 = arith.constant 0 : index
    %c0_267 = arith.constant 0 : index
    %419 = vector.load %arg6[%c7, %c0_266, %c0_267] : memref<9x16x1xf32, #tpu.memory_space<vmem>>, vector<1x16x1xf32>
    %420 = vector.shape_cast %419 : vector<1x16x1xf32> to vector<16x1xf32>
    %421 = vector.broadcast %420 : vector<16x1xf32> to vector<16x512xf32>
    %422 = arith.addf %418, %421 : vector<16x512xf32>
    %cst_268 = arith.constant 0.000000e+00 : f32
    %423 = vector.broadcast %cst_268 : f32 to vector<16x512xf32>
    %424 = arith.maximumf %422, %423 : vector<16x512xf32>
    %c17_i32_269 = arith.constant 17 : i32
    %425 = tpu.dynamic_rotate %424 by %c17_i32_269 dim 1 : vector<16x512xf32>, i32 -> vector<16x512xf32>
    %426 = vector.extract_strided_slice %0 {offsets = [0, 0], sizes = [1, 512], strides = [1, 1]} : vector<9x512xf32> to vector<1x512xf32>
    %427 = vector.broadcast %426 : vector<1x512xf32> to vector<16x512xf32>
    %428 = arith.mulf %425, %427 : vector<16x512xf32>
    %c288_270 = arith.constant 288 : index
    %c0_271 = arith.constant 0 : index
    %429 = vector.load %arg12[%c288_270, %c0_271] : memref<432x512xf32, #tpu.memory_space<vmem>>, vector<16x512xf32>
    tpu.vector_store %arg12[%c288_270, %c0_271], %428 {strides = array<i32>} : memref<432x512xf32, #tpu.memory_space<vmem>>, vector<16x512xf32>,
    %c16_i32_272 = arith.constant 16 : i32
    %430 = tpu.dynamic_rotate %424 by %c16_i32_272 dim 1 : vector<16x512xf32>, i32 -> vector<16x512xf32>
    %431 = vector.extract_strided_slice %0 {offsets = [1, 0], sizes = [1, 512], strides = [1, 1]} : vector<9x512xf32> to vector<1x512xf32>
    %432 = vector.broadcast %431 : vector<1x512xf32> to vector<16x512xf32>
    %433 = arith.mulf %430, %432 : vector<16x512xf32>
    %c304_273 = arith.constant 304 : index
    %c0_274 = arith.constant 0 : index
    %434 = vector.load %arg12[%c304_273, %c0_274] : memref<432x512xf32, #tpu.memory_space<vmem>>, vector<16x512xf32>
    tpu.vector_store %arg12[%c304_273, %c0_274], %433 {strides = array<i32>} : memref<432x512xf32, #tpu.memory_space<vmem>>, vector<16x512xf32>,
    %c15_i32_275 = arith.constant 15 : i32
    %435 = tpu.dynamic_rotate %424 by %c15_i32_275 dim 1 : vector<16x512xf32>, i32 -> vector<16x512xf32>
    %436 = vector.extract_strided_slice %0 {offsets = [2, 0], sizes = [1, 512], strides = [1, 1]} : vector<9x512xf32> to vector<1x512xf32>
    %437 = vector.broadcast %436 : vector<1x512xf32> to vector<16x512xf32>
    %438 = arith.mulf %435, %437 : vector<16x512xf32>
    %c320_276 = arith.constant 320 : index
    %c0_277 = arith.constant 0 : index
    %439 = vector.load %arg12[%c320_276, %c0_277] : memref<432x512xf32, #tpu.memory_space<vmem>>, vector<16x512xf32>
    tpu.vector_store %arg12[%c320_276, %c0_277], %438 {strides = array<i32>} : memref<432x512xf32, #tpu.memory_space<vmem>>, vector<16x512xf32>,
    %c1_i32_278 = arith.constant 1 : i32
    %440 = tpu.dynamic_rotate %424 by %c1_i32_278 dim 1 : vector<16x512xf32>, i32 -> vector<16x512xf32>
    %441 = vector.extract_strided_slice %0 {offsets = [3, 0], sizes = [1, 512], strides = [1, 1]} : vector<9x512xf32> to vector<1x512xf32>
    %442 = vector.broadcast %441 : vector<1x512xf32> to vector<16x512xf32>
    %443 = arith.mulf %440, %442 : vector<16x512xf32>
    %c336_279 = arith.constant 336 : index
    %c0_280 = arith.constant 0 : index
    %444 = vector.load %arg12[%c336_279, %c0_280] : memref<432x512xf32, #tpu.memory_space<vmem>>, vector<16x512xf32>
    tpu.vector_store %arg12[%c336_279, %c0_280], %443 {strides = array<i32>} : memref<432x512xf32, #tpu.memory_space<vmem>>, vector<16x512xf32>,
    %c352_281 = arith.constant 352 : index
    %c0_282 = arith.constant 0 : index
    %445 = vector.load %arg12[%c352_281, %c0_282] : memref<432x512xf32, #tpu.memory_space<vmem>>, vector<16x512xf32>
    tpu.vector_store %arg12[%c352_281, %c0_282], %424 {strides = array<i32>} : memref<432x512xf32, #tpu.memory_space<vmem>>, vector<16x512xf32>,
    %c511_i32_283 = arith.constant 511 : i32
    %446 = tpu.dynamic_rotate %424 by %c511_i32_283 dim 1 : vector<16x512xf32>, i32 -> vector<16x512xf32>
    %447 = vector.extract_strided_slice %0 {offsets = [5, 0], sizes = [1, 512], strides = [1, 1]} : vector<9x512xf32> to vector<1x512xf32>
    %448 = vector.broadcast %447 : vector<1x512xf32> to vector<16x512xf32>
    %449 = arith.mulf %446, %448 : vector<16x512xf32>
    %c368_284 = arith.constant 368 : index
    %c0_285 = arith.constant 0 : index
    %450 = vector.load %arg12[%c368_284, %c0_285] : memref<432x512xf32, #tpu.memory_space<vmem>>, vector<16x512xf32>
    tpu.vector_store %arg12[%c368_284, %c0_285], %449 {strides = array<i32>} : memref<432x512xf32, #tpu.memory_space<vmem>>, vector<16x512xf32>,
    %c497_i32_286 = arith.constant 497 : i32
    %451 = tpu.dynamic_rotate %424 by %c497_i32_286 dim 1 : vector<16x512xf32>, i32 -> vector<16x512xf32>
    %452 = vector.extract_strided_slice %0 {offsets = [6, 0], sizes = [1, 512], strides = [1, 1]} : vector<9x512xf32> to vector<1x512xf32>
    %453 = vector.broadcast %452 : vector<1x512xf32> to vector<16x512xf32>
    %454 = arith.mulf %451, %453 : vector<16x512xf32>
    %c384_287 = arith.constant 384 : index
    %c0_288 = arith.constant 0 : index
    %455 = vector.load %arg12[%c384_287, %c0_288] : memref<432x512xf32, #tpu.memory_space<vmem>>, vector<16x512xf32>
    tpu.vector_store %arg12[%c384_287, %c0_288], %454 {strides = array<i32>} : memref<432x512xf32, #tpu.memory_space<vmem>>, vector<16x512xf32>,
    %c496_i32_289 = arith.constant 496 : i32
    %456 = tpu.dynamic_rotate %424 by %c496_i32_289 dim 1 : vector<16x512xf32>, i32 -> vector<16x512xf32>
    %457 = vector.extract_strided_slice %0 {offsets = [7, 0], sizes = [1, 512], strides = [1, 1]} : vector<9x512xf32> to vector<1x512xf32>
    %458 = vector.broadcast %457 : vector<1x512xf32> to vector<16x512xf32>
    %459 = arith.mulf %456, %458 : vector<16x512xf32>
    %c400_290 = arith.constant 400 : index
    %c0_291 = arith.constant 0 : index
    %460 = vector.load %arg12[%c400_290, %c0_291] : memref<432x512xf32, #tpu.memory_space<vmem>>, vector<16x512xf32>
    tpu.vector_store %arg12[%c400_290, %c0_291], %459 {strides = array<i32>} : memref<432x512xf32, #tpu.memory_space<vmem>>, vector<16x512xf32>,
    %c495_i32_292 = arith.constant 495 : i32
    %461 = tpu.dynamic_rotate %424 by %c495_i32_292 dim 1 : vector<16x512xf32>, i32 -> vector<16x512xf32>
    %462 = vector.extract_strided_slice %0 {offsets = [8, 0], sizes = [1, 512], strides = [1, 1]} : vector<9x512xf32> to vector<1x512xf32>
    %463 = vector.broadcast %462 : vector<1x512xf32> to vector<16x512xf32>
    %464 = arith.mulf %461, %463 : vector<16x512xf32>
    %c416_293 = arith.constant 416 : index
    %c0_294 = arith.constant 0 : index
    %465 = vector.load %arg12[%c416_293, %c0_294] : memref<432x512xf32, #tpu.memory_space<vmem>>, vector<16x512xf32>
    tpu.vector_store %arg12[%c416_293, %c0_294], %464 {strides = array<i32>} : memref<432x512xf32, #tpu.memory_space<vmem>>, vector<16x512xf32>,
    %c0_295 = arith.constant 0 : index
    %c0_296 = arith.constant 0 : index
    %466 = vector.load %arg12[%c0_295, %c0_296] : memref<432x512xf32, #tpu.memory_space<vmem>>, vector<432x512xf32>
    %c2_297 = arith.constant 2 : index
    %c0_298 = arith.constant 0 : index
    %c0_299 = arith.constant 0 : index
    %467 = vector.load %arg5[%c2_297, %c0_298, %c0_299] : memref<3x16x432xf32, #tpu.memory_space<vmem>>, vector<1x16x432xf32>
    %468 = vector.shape_cast %467 : vector<1x16x432xf32> to vector<16x432xf32>
    %cst_300 = arith.constant dense<0.000000e+00> : vector<16x512xf32>
    %469 = tpu.matmul %468, %466, %cst_300 {dimension_numbers = #tpu.dot_dimension_numbers<[1], [0], [0], [1], [0, 0, 1, 1], [], []>} : vector<16x432xf32>, vector<432x512xf32>, vector<16x512xf32> -> vector<16x512xf32>
    %c8 = arith.constant 8 : index
    %c0_301 = arith.constant 0 : index
    %c0_302 = arith.constant 0 : index
    %470 = vector.load %arg6[%c8, %c0_301, %c0_302] : memref<9x16x1xf32, #tpu.memory_space<vmem>>, vector<1x16x1xf32>
    %471 = vector.shape_cast %470 : vector<1x16x1xf32> to vector<16x1xf32>
    %472 = vector.broadcast %471 : vector<16x1xf32> to vector<16x512xf32>
    %473 = arith.addf %469, %472 : vector<16x512xf32>
    %474 = arith.addf %473, %322 : vector<16x512xf32>
    %c48_303 = arith.constant 48 : index
    %c0_304 = arith.constant 0 : index
    %475 = vector.load %arg13[%c48_303, %c0_304] : memref<64x512xf32, #tpu.memory_space<vmem>>, vector<16x512xf32>
    tpu.vector_store %arg13[%c48_303, %c0_304], %474 {strides = array<i32>} : memref<64x512xf32, #tpu.memory_space<vmem>>, vector<16x512xf32>,
    %c0_305 = arith.constant 0 : index
    %c0_306 = arith.constant 0 : index
    %476 = vector.load %arg13[%c0_305, %c0_306] : memref<64x512xf32, #tpu.memory_space<vmem>>, vector<64x512xf32>
    %c0_307 = arith.constant 0 : index
    %c0_308 = arith.constant 0 : index
    %477 = vector.load %arg9[%c0_307, %c0_308] : memref<16x64xf32, #tpu.memory_space<vmem>>, vector<16x64xf32>
    %cst_309 = arith.constant dense<0.000000e+00> : vector<16x512xf32>
    %478 = tpu.matmul %477, %476, %cst_309 {dimension_numbers = #tpu.dot_dimension_numbers<[1], [0], [0], [1], [0, 0, 1, 1], [], []>} : vector<16x64xf32>, vector<64x512xf32>, vector<16x512xf32> -> vector<16x512xf32>
    %c2_310 = arith.constant 2 : index
    %c0_311 = arith.constant 0 : index
    %c0_312 = arith.constant 0 : index
    %479 = vector.load %arg10[%c2_310, %c0_311, %c0_312] : memref<3x16x1xf32, #tpu.memory_space<vmem>>, vector<1x16x1xf32>
    %480 = vector.shape_cast %479 : vector<1x16x1xf32> to vector<16x1xf32>
    %481 = vector.broadcast %480 : vector<16x1xf32> to vector<16x512xf32>
    %482 = arith.addf %478, %481 : vector<16x512xf32>
    %c0_313 = arith.constant 0 : index
    %c0_314 = arith.constant 0 : index
    %483 = vector.load %arg11[%c0_313, %c0_314] : memref<16x512xf32, #tpu.memory_space<vmem>>, vector<16x512xf32>
    tpu.vector_store %arg11[%c0_313, %c0_314], %482 {strides = array<i32>} : memref<16x512xf32, #tpu.memory_space<vmem>>, vector<16x512xf32>,
    return
  }
  func.func @transform_0(%arg0: i32) -> (i32, i32) {
    %c0_i32 = arith.constant 0 : i32
    %c0_i32_0 = arith.constant 0 : i32
    %c0_i32_1 = arith.constant 0 : i32
    return %c0_i32, %c0_i32_0 : i32, i32
  }
  func.func @transform_1(%arg0: i32) -> (i32, i32) {
    %c0_i32 = arith.constant 0 : i32
    %c0_i32_0 = arith.constant 0 : i32
    %c0_i32_1 = arith.constant 0 : i32
    return %c0_i32, %c0_i32_0 : i32, i32
  }
  func.func @transform_2(%arg0: i32) -> (i32, i32, i32) {
    %c0_i32 = arith.constant 0 : i32
    %c0_i32_0 = arith.constant 0 : i32
    %c0_i32_1 = arith.constant 0 : i32
    %c0_i32_2 = arith.constant 0 : i32
    return %c0_i32, %c0_i32_0, %c0_i32_1 : i32, i32, i32
  }
  func.func @transform_3(%arg0: i32) -> (i32, i32, i32) {
    %c0_i32 = arith.constant 0 : i32
    %c0_i32_0 = arith.constant 0 : i32
    %c0_i32_1 = arith.constant 0 : i32
    %c0_i32_2 = arith.constant 0 : i32
    return %c0_i32, %c0_i32_0, %c0_i32_1 : i32, i32, i32
  }
  func.func @transform_4(%arg0: i32) -> (i32, i32, i32) {
    %c0_i32 = arith.constant 0 : i32
    %c0_i32_0 = arith.constant 0 : i32
    %c0_i32_1 = arith.constant 0 : i32
    %c0_i32_2 = arith.constant 0 : i32
    return %c0_i32, %c0_i32_0, %c0_i32_1 : i32, i32, i32
  }
  func.func @transform_5(%arg0: i32) -> (i32, i32, i32) {
    %c0_i32 = arith.constant 0 : i32
    %c0_i32_0 = arith.constant 0 : i32
    %c0_i32_1 = arith.constant 0 : i32
    %c0_i32_2 = arith.constant 0 : i32
    return %c0_i32, %c0_i32_0, %c0_i32_1 : i32, i32, i32
  }
  func.func @transform_6(%arg0: i32) -> (i32, i32) {
    %c0_i32 = arith.constant 0 : i32
    %c0_i32_0 = arith.constant 0 : i32
    %c0_i32_1 = arith.constant 0 : i32
    return %c0_i32, %c0_i32_0 : i32, i32
  }
  func.func @transform_7(%arg0: i32) -> (i32, i32) {
    %c0_i32 = arith.constant 0 : i32
    %c0_i32_0 = arith.constant 0 : i32
    %c0_i32_1 = arith.constant 0 : i32
    return %c0_i32, %c0_i32_0 : i32, i32
  }
  func.func @transform_8(%arg0: i32) -> (i32, i32) {
    %c0_i32 = arith.constant 0 : i32
    %c0_i32_0 = arith.constant 0 : i32
    %c0_i32_1 = arith.constant 0 : i32
    return %c0_i32, %c0_i32_0 : i32, i32
  }
  func.func @transform_9(%arg0: i32) -> (i32, i32, i32) {
    %c0_i32 = arith.constant 0 : i32
    %c0_i32_0 = arith.constant 0 : i32
    %c0_i32_1 = arith.constant 0 : i32
    %c0_i32_2 = arith.constant 0 : i32
    return %c0_i32, %c0_i32_0, %c0_i32_1 : i32, i32, i32
  }
  func.func @transform_10(%arg0: i32) -> (i32, i32) {
    %c0_i32 = arith.constant 0 : i32
    %c0_i32_0 = arith.constant 0 : i32
    %c0_i32_1 = arith.constant 0 : i32
    return %c0_i32, %c0_i32_0 : i32, i32
  }
}

</mosaic_0001>

<llo_original>
// kernel: cascade_rdn_forward.1
$region0: #{cascade_rdn_forward.1}
  #allocation0 [shape = 'u32[]', space=smem, size = 0x4, offset = 0x4, fixed_abs, tag = 'smem constant byte address 0x4 - core index']
  #allocation1 [shape = 'u32[72,128]{1,0:T(1,128)}', space=vmem, size = 0x9000, scoped, tag = 'internal scratch']
  #allocation2 [shape = 'f32[432,512]{1,0:T(8,128)}', space=vmem, size = 0xd8000, scoped, tag = 'scratch operand']
  #allocation3 [shape = 'f32[64,512]{1,0:T(8,128)}', space=vmem, size = 0x20000, scoped, tag = 'scratch operand']
  %s0 = inlined_call_operand.vmem [shape: f32[16,512], index: 0, kind: input, shape index: {}]
  %s1 = inlined_call_operand.vmem [shape: f32[9,512], index: 1, kind: input, shape index: {}]
  %s2 = inlined_call_operand.vmem [shape: f32[3,16,144], index: 2, kind: input, shape index: {}]
  %s3 = inlined_call_operand.vmem [shape: f32[3,16,288], index: 3, kind: input, shape index: {}]
  %s4 = inlined_call_operand.vmem [shape: f32[3,16,432], index: 4, kind: input, shape index: {}]
  %s5 = inlined_call_operand.vmem [shape: f32[9,16,1], index: 5, kind: input, shape index: {}]
  %s6 = inlined_call_operand.vmem [shape: f32[16,32], index: 6, kind: input, shape index: {}]
  %s7 = inlined_call_operand.vmem [shape: f32[16,48], index: 7, kind: input, shape index: {}]
  %s8 = inlined_call_operand.vmem [shape: f32[16,64], index: 8, kind: input, shape index: {}]
  %s9 = inlined_call_operand.vmem [shape: f32[3,16,1], index: 9, kind: input, shape index: {}]
  %s10 = inlined_call_operand.vmem [shape: f32[16,512], index: 10, kind: output, shape index: {}]
  %s11 = sld [smem:[#allocation0]]
  $region50: #{cascade_rdn_forward.1} parent=0
    _
  %s13 = ssub.s32 1, %s11
  %s14 = scalar_select 0, %s13, %s11
  // Predicated region
  $region2: #{cascade_rdn_forward.1} parent=0 // pred_check
    _
  $region3: #{cascade_rdn_forward.1} parent=0 // pred_check_branch
    %16 = sbr.rel (0) target = $region5
  $region4: #{cascade_rdn_forward.1} parent=0 // pred_region
    _
  $region5: #{cascade_rdn_forward.1} parent=0 // pred_fallthru
    _
  // Predicated region
  $region6: #{cascade_rdn_forward.1} parent=0 // pred_check
    _
  $region7: #{cascade_rdn_forward.1} parent=0 // pred_check_branch
    %18 = sbr.rel (0) target = $region9
  $region8: #{cascade_rdn_forward.1} parent=0 // pred_region
    _
  $region9: #{cascade_rdn_forward.1} parent=0 // pred_fallthru
    _
  // Predicated region
  $region10: #{cascade_rdn_forward.1} parent=0 // pred_check
    _
  $region11: #{cascade_rdn_forward.1} parent=0 // pred_check_branch
    %20 = sbr.rel (0) target = $region13
  $region12: #{cascade_rdn_forward.1} parent=0 // pred_region
    _
  $region13: #{cascade_rdn_forward.1} parent=0 // pred_fallthru
    _
  // Predicated region
  $region14: #{cascade_rdn_forward.1} parent=0 // pred_check
    _
  $region15: #{cascade_rdn_forward.1} parent=0 // pred_check_branch
    %22 = sbr.rel (0) target = $region17
  $region16: #{cascade_rdn_forward.1} parent=0 // pred_region
    _
  $region17: #{cascade_rdn_forward.1} parent=0 // pred_fallthru
    _
  // Predicated region
  $region18: #{cascade_rdn_forward.1} parent=0 // pred_check
    _
  $region19: #{cascade_rdn_forward.1} parent=0 // pred_check_branch
    %24 = sbr.rel (0) target = $region21
  $region20: #{cascade_rdn_forward.1} parent=0 // pred_region
    _
  $region21: #{cascade_rdn_forward.1} parent=0 // pred_fallthru
    _
  // Predicated region
  $region22: #{cascade_rdn_forward.1} parent=0 // pred_check
    _
  $region23: #{cascade_rdn_forward.1} parent=0 // pred_check_branch
    %26 = sbr.rel (0) target = $region25
  $region24: #{cascade_rdn_forward.1} parent=0 // pred_region
    _
  $region25: #{cascade_rdn_forward.1} parent=0 // pred_fallthru
    _
  // Predicated region
  $region26: #{cascade_rdn_forward.1} parent=0 // pred_check
    _
  $region27: #{cascade_rdn_forward.1} parent=0 // pred_check_branch
    %28 = sbr.rel (0) target = $region29
  $region28: #{cascade_rdn_forward.1} parent=0 // pred_region
    _
  $region29: #{cascade_rdn_forward.1} parent=0 // pred_fallthru
    _
  // Predicated region
  $region30: #{cascade_rdn_forward.1} parent=0 // pred_check
    _
  $region31: #{cascade_rdn_forward.1} parent=0 // pred_check_branch
    %30 = sbr.rel (0) target = $region33
  $region32: #{cascade_rdn_forward.1} parent=0 // pred_region
    _
  $region33: #{cascade_rdn_forward.1} parent=0 // pred_fallthru
    _
  // Predicated region
  $region34: #{cascade_rdn_forward.1} parent=0 // pred_check
    _
  $region35: #{cascade_rdn_forward.1} parent=0 // pred_check_branch
    %32 = sbr.rel (0) target = $region37
  $region36: #{cascade_rdn_forward.1} parent=0 // pred_region
    _
  $region37: #{cascade_rdn_forward.1} parent=0 // pred_fallthru
    _
  // Predicated region
  $region38: #{cascade_rdn_forward.1} parent=0 // pred_check
    _
  $region39: #{cascade_rdn_forward.1} parent=0 // pred_check_branch
    %34 = sbr.rel (0) target = $region41
  $region40: #{cascade_rdn_forward.1} parent=0 // pred_region
    _
  $region41: #{cascade_rdn_forward.1} parent=0 // pred_fallthru
    _
  %v35 = vld [vmem:[%s1] sm:$0xff]
  %v36 = vld [vmem:[%s1 + $0x8] sm:$0xff]
  %v37 = vld [vmem:[%s1 + $0x10] sm:$0xff]
  %v38 = vld [vmem:[%s1 + $0x18] sm:$0xff]
  %v39 = vld [vmem:[%s1 + $0x20] sm:$0x1]
  %v40 = vld [vmem:[%s1 + $0x28] sm:$0x1]
  %v41 = vld [vmem:[%s1 + $0x30] sm:$0x1]
  %v42 = vld [vmem:[%s1 + $0x38] sm:$0x1]
  %v43 = vld [vmem:[%s0] sm:$0xff]
  %v44 = vld [vmem:[%s0 + $0x8] sm:$0xff]
  %v45 = vld [vmem:[%s0 + $0x10] sm:$0xff]
  %v46 = vld [vmem:[%s0 + $0x18] sm:$0xff]
  %v47 = vld [vmem:[%s0 + $0x20] sm:$0xff]
  %v48 = vld [vmem:[%s0 + $0x28] sm:$0xff]
  %v49 = vld [vmem:[%s0 + $0x30] sm:$0xff]
  %v50 = vld [vmem:[%s0 + $0x38] sm:$0xff]
  %51 = vst [vmem:[#allocation3] sm:$0xff] %v43
  %52 = vst [vmem:[#allocation3 + $0x8] sm:$0xff] %v44
  %53 = vst [vmem:[#allocation3 + $0x10] sm:$0xff] %v45
  %54 = vst [vmem:[#allocation3 + $0x18] sm:$0xff] %v46
  %55 = vst [vmem:[#allocation3 + $0x20] sm:$0xff] %v47
  %56 = vst [vmem:[#allocation3 + $0x28] sm:$0xff] %v48
  %57 = vst [vmem:[#allocation3 + $0x30] sm:$0xff] %v49
  %58 = vst [vmem:[#allocation3 + $0x38] sm:$0xff] %v50
  %59 = vrot.lane.b32.xlu0 %v43, 17
  %v60 = vpop.permute.xlu0 %59
  %61 = vrot.lane.b32.xlu0 %v47, 17
  %v62 = vpop.permute.xlu0 %61
  %63 = vrot.lane.b32.xlu0 %v44, 17
  %v64 = vpop.permute.xlu0 %63
  %65 = vrot.lane.b32.xlu0 %v48, 17
  %v66 = vpop.permute.xlu0 %65
  %67 = vrot.lane.b32.xlu0 %v45, 17
  %v68 = vpop.permute.xlu0 %67
  %69 = vrot.lane.b32.xlu0 %v49, 17
  %v70 = vpop.permute.xlu0 %69
  %71 = vrot.lane.b32.xlu0 %v46, 17
  %v72 = vpop.permute.xlu0 %71
  %73 = vrot.lane.b32.xlu0 %v50, 17
  %v74 = vpop.permute.xlu0 %73
  %v75 = vlaneseq
  %v76 = vand.u32 %v75, 127
  %vm77 = vcmp.lt.s32.totalorder %v76, 17
  %v78 = vsel %vm77, %v68, %v72
  %v79 = vsel %vm77, %v70, %v74
  %v80 = vsel %vm77, %v64, %v68
  %v81 = vsel %vm77, %v66, %v70
  %v82 = vsel %vm77, %v60, %v64
  %v83 = vsel %vm77, %v62, %v66
  %v84 = vsel %vm77, %v72, %v60
  %v85 = vsel %vm77, %v74, %v62
  %v86 = vperm.slane %v35, 0
  %v87 = vperm.slane %v36, 0
  %v88 = vperm.slane %v37, 0
  %v89 = vperm.slane %v38, 0
  %v90 = vmul.f32 %v84, %v86
  %v91 = vmul.f32 %v82, %v87
  %v92 = vmul.f32 %v80, %v88
  %v93 = vmul.f32 %v78, %v89
  %v94 = vmul.f32 %v85, %v86
  %v95 = vmul.f32 %v83, %v87
  %v96 = vmul.f32 %v81, %v88
  %v97 = vmul.f32 %v79, %v89
  %98 = vst [vmem:[#allocation2] sm:$0xff] %v90
  %99 = vst [vmem:[#allocation2 + $0x8] sm:$0xff] %v91
  %100 = vst [vmem:[#allocation2 + $0x10] sm:$0xff] %v92
  %101 = vst [vmem:[#allocation2 + $0x18] sm:$0xff] %v93
  %102 = vst [vmem:[#allocation2 + $0x20] sm:$0xff] %v94
  %103 = vst [vmem:[#allocation2 + $0x28] sm:$0xff] %v95
  %104 = vst [vmem:[#allocation2 + $0x30] sm:$0xff] %v96
  %105 = vst [vmem:[#allocation2 + $0x38] sm:$0xff] %v97
  %106 = vrot.lane.b32.xlu0 %v43, 16
  %v107 = vpop.permute.xlu0 %106
  %108 = vrot.lane.b32.xlu0 %v47, 16
  %v109 = vpop.permute.xlu0 %108
  %110 = vrot.lane.b32.xlu0 %v44, 16
  %v111 = vpop.permute.xlu0 %110
  %112 = vrot.lane.b32.xlu0 %v48, 16
  %v113 = vpop.permute.xlu0 %112
  %114 = vrot.lane.b32.xlu0 %v45, 16
  %v115 = vpop.permute.xlu0 %114
  %116 = vrot.lane.b32.xlu0 %v49, 16
  %v117 = vpop.permute.xlu0 %116
  %118 = vrot.lane.b32.xlu0 %v46, 16
  %v119 = vpop.permute.xlu0 %118
  %120 = vrot.lane.b32.xlu0 %v50, 16
  %v121 = vpop.permute.xlu0 %120
  %vm122 = vcmp.lt.s32.totalorder %v76, 16
  %v123 = vsel %vm122, %v115, %v119
  %v124 = vsel %vm122, %v117, %v121
  %v125 = vsel %vm122, %v111, %v115
  %v126 = vsel %vm122, %v113, %v117
  %v127 = vsel %vm122, %v107, %v111
  %v128 = vsel %vm122, %v109, %v113
  %v129 = vsel %vm122, %v119, %v107
  %v130 = vsel %vm122, %v121, %v109
  %v131 = vperm.slane %v35, 1
  %v132 = vperm.slane %v36, 1
  %v133 = vperm.slane %v37, 1
  %v134 = vperm.slane %v38, 1
  %v135 = vmul.f32 %v129, %v131
  %v136 = vmul.f32 %v127, %v132
  %v137 = vmul.f32 %v125, %v133
  %v138 = vmul.f32 %v123, %v134
  %v139 = vmul.f32 %v130, %v131
  %v140 = vmul.f32 %v128, %v132
  %v141 = vmul.f32 %v126, %v133
  %v142 = vmul.f32 %v124, %v134
  %143 = vst [vmem:[#allocation2 + $0x40] sm:$0xff] %v135
  %144 = vst [vmem:[#allocation2 + $0x48] sm:$0xff] %v136
  %145 = vst [vmem:[#allocation2 + $0x50] sm:$0xff] %v137
  %146 = vst [vmem:[#allocation2 + $0x58] sm:$0xff] %v138
  %147 = vst [vmem:[#allocation2 + $0x60] sm:$0xff] %v139
  %148 = vst [vmem:[#allocation2 + $0x68] sm:$0xff] %v140
  %149 = vst [vmem:[#allocation2 + $0x70] sm:$0xff] %v141
  %150 = vst [vmem:[#allocation2 + $0x78] sm:$0xff] %v142
  %151 = vrot.lane.b32.xlu0 %v43, 15
  %v152 = vpop.permute.xlu0 %151
  %153 = vrot.lane.b32.xlu0 %v47, 15
  %v154 = vpop.permute.xlu0 %153
  %155 = vrot.lane.b32.xlu0 %v44, 15
  %v156 = vpop.permute.xlu0 %155
  %157 = vrot.lane.b32.xlu0 %v48, 15
  %v158 = vpop.permute.xlu0 %157
  %159 = vrot.lane.b32.xlu0 %v45, 15
  %v160 = vpop.permute.xlu0 %159
  %161 = vrot.lane.b32.xlu0 %v49, 15
  %v162 = vpop.permute.xlu0 %161
  %163 = vrot.lane.b32.xlu0 %v46, 15
  %v164 = vpop.permute.xlu0 %163
  %165 = vrot.lane.b32.xlu0 %v50, 15
  %v166 = vpop.permute.xlu0 %165
  %vm167 = vcmp.lt.s32.totalorder %v76, 15
  %v168 = vsel %vm167, %v160, %v164
  %v169 = vsel %vm167, %v162, %v166
  %v170 = vsel %vm167, %v156, %v160
  %v171 = vsel %vm167, %v158, %v162
  %v172 = vsel %vm167, %v152, %v156
  %v173 = vsel %vm167, %v154, %v158
  %v174 = vsel %vm167, %v164, %v152
  %v175 = vsel %vm167, %v166, %v154
  %v176 = vperm.slane %v35, 2
  %v177 = vperm.slane %v36, 2
  %v178 = vperm.slane %v37, 2
  %v179 = vperm.slane %v38, 2
  %v180 = vmul.f32 %v174, %v176
  %v181 = vmul.f32 %v172, %v177
  %v182 = vmul.f32 %v170, %v178
  %v183 = vmul.f32 %v168, %v179
  %v184 = vmul.f32 %v175, %v176
  %v185 = vmul.f32 %v173, %v177
  %v186 = vmul.f32 %v171, %v178
  %v187 = vmul.f32 %v169, %v179
  %188 = vst [vmem:[#allocation2 + $0x80] sm:$0xff] %v180
  %189 = vst [vmem:[#allocation2 + $0x88] sm:$0xff] %v181
  %190 = vst [vmem:[#allocation2 + $0x90] sm:$0xff] %v182
  %191 = vst [vmem:[#allocation2 + $0x98] sm:$0xff] %v183
  %192 = vst [vmem:[#allocation2 + $0xa0] sm:$0xff] %v184
  %193 = vst [vmem:[#allocation2 + $0xa8] sm:$0xff] %v185
  %194 = vst [vmem:[#allocation2 + $0xb0] sm:$0xff] %v186
  %195 = vst [vmem:[#allocation2 + $0xb8] sm:$0xff] %v187
  %196 = vrot.lane.b32.xlu0 %v43, 1
  %v197 = vpop.permute.xlu0 %196
  %198 = vrot.lane.b32.xlu0 %v47, 1
  %v199 = vpop.permute.xlu0 %198
  %200 = vrot.lane.b32.xlu0 %v44, 1
  %v201 = vpop.permute.xlu0 %200
  %202 = vrot.lane.b32.xlu0 %v48, 1
  %v203 = vpop.permute.xlu0 %202
  %204 = vrot.lane.b32.xlu0 %v45, 1
  %v205 = vpop.permute.xlu0 %204
  %206 = vrot.lane.b32.xlu0 %v49, 1
  %v207 = vpop.permute.xlu0 %206
  %208 = vrot.lane.b32.xlu0 %v46, 1
  %v209 = vpop.permute.xlu0 %208
  %210 = vrot.lane.b32.xlu0 %v50, 1
  %v211 = vpop.permute.xlu0 %210
  %vm212 = vcmp.lt.s32.totalorder %v76, 1
  %v213 = vsel %vm212, %v205, %v209
  %v214 = vsel %vm212, %v207, %v211
  %v215 = vsel %vm212, %v201, %v205
  %v216 = vsel %vm212, %v203, %v207
  %v217 = vsel %vm212, %v197, %v201
  %v218 = vsel %vm212, %v199, %v203
  %v219 = vsel %vm212, %v209, %v197
  %v220 = vsel %vm212, %v211, %v199
  %v221 = vperm.slane %v35, 3
  %v222 = vperm.slane %v36, 3
  %v223 = vperm.slane %v37, 3
  %v224 = vperm.slane %v38, 3
  %v225 = vmul.f32 %v219, %v221
  %v226 = vmul.f32 %v217, %v222
  %v227 = vmul.f32 %v215, %v223
  %v228 = vmul.f32 %v213, %v224
  %v229 = vmul.f32 %v220, %v221
  %v230 = vmul.f32 %v218, %v222
  %v231 = vmul.f32 %v216, %v223
  %v232 = vmul.f32 %v214, %v224
  %233 = vst [vmem:[#allocation2 + $0xc0] sm:$0xff] %v225
  %234 = vst [vmem:[#allocation2 + $0xc8] sm:$0xff] %v226
  %235 = vst [vmem:[#allocation2 + $0xd0] sm:$0xff] %v227
  %236 = vst [vmem:[#allocation2 + $0xd8] sm:$0xff] %v228
  %237 = vst [vmem:[#allocation2 + $0xe0] sm:$0xff] %v229
  %238 = vst [vmem:[#allocation2 + $0xe8] sm:$0xff] %v230
  %239 = vst [vmem:[#allocation2 + $0xf0] sm:$0xff] %v231
  %240 = vst [vmem:[#allocation2 + $0xf8] sm:$0xff] %v232
  %241 = vst [vmem:[#allocation2 + $0x100] sm:$0xff] %v43
  %242 = vst [vmem:[#allocation2 + $0x108] sm:$0xff] %v44
  %243 = vst [vmem:[#allocation2 + $0x110] sm:$0xff] %v45
  %244 = vst [vmem:[#allocation2 + $0x118] sm:$0xff] %v46
  %245 = vst [vmem:[#allocation2 + $0x120] sm:$0xff] %v47
  %246 = vst [vmem:[#allocation2 + $0x128] sm:$0xff] %v48
  %247 = vst [vmem:[#allocation2 + $0x130] sm:$0xff] %v49
  %248 = vst [vmem:[#allocation2 + $0x138] sm:$0xff] %v50
  %249 = vrot.lane.b32.xlu0 %v43, 127
  %v250 = vpop.permute.xlu0 %249
  %251 = vrot.lane.b32.xlu0 %v47, 127
  %v252 = vpop.permute.xlu0 %251
  %253 = vrot.lane.b32.xlu0 %v44, 127
  %v254 = vpop.permute.xlu0 %253
  %255 = vrot.lane.b32.xlu0 %v48, 127
  %v256 = vpop.permute.xlu0 %255
  %257 = vrot.lane.b32.xlu0 %v45, 127
  %v258 = vpop.permute.xlu0 %257
  %259 = vrot.lane.b32.xlu0 %v49, 127
  %v260 = vpop.permute.xlu0 %259
  %261 = vrot.lane.b32.xlu0 %v46, 127
  %v262 = vpop.permute.xlu0 %261
  %263 = vrot.lane.b32.xlu0 %v50, 127
  %v264 = vpop.permute.xlu0 %263
  %vm265 = vcmp.lt.s32.totalorder %v76, 127
  %v266 = vsel %vm265, %v258, %v262
  %v267 = vsel %vm265, %v260, %v264
  %v268 = vsel %vm265, %v254, %v258
  %v269 = vsel %vm265, %v256, %v260
  %v270 = vsel %vm265, %v250, %v254
  %v271 = vsel %vm265, %v252, %v256
  %v272 = vsel %vm265, %v262, %v250
  %v273 = vsel %vm265, %v264, %v252
  %v274 = vperm.slane %v35, 5
  %v275 = vperm.slane %v36, 5
  %v276 = vperm.slane %v37, 5
  %v277 = vperm.slane %v38, 5
  %v278 = vmul.f32 %v270, %v274
  %v279 = vmul.f32 %v268, %v275
  %v280 = vmul.f32 %v266, %v276
  %v281 = vmul.f32 %v272, %v277
  %v282 = vmul.f32 %v271, %v274
  %v283 = vmul.f32 %v269, %v275
  %v284 = vmul.f32 %v267, %v276
  %v285 = vmul.f32 %v273, %v277
  %286 = vst [vmem:[#allocation2 + $0x140] sm:$0xff] %v278
  %287 = vst [vmem:[#allocation2 + $0x148] sm:$0xff] %v279
  %288 = vst [vmem:[#allocation2 + $0x150] sm:$0xff] %v280
  %289 = vst [vmem:[#allocation2 + $0x158] sm:$0xff] %v281
  %290 = vst [vmem:[#allocation2 + $0x160] sm:$0xff] %v282
  %291 = vst [vmem:[#allocation2 + $0x168] sm:$0xff] %v283
  %292 = vst [vmem:[#allocation2 + $0x170] sm:$0xff] %v284
  %293 = vst [vmem:[#allocation2 + $0x178] sm:$0xff] %v285
  %294 = vrot.lane.b32.xlu0 %v43, 113
  %v295 = vpop.permute.xlu0 %294
  %296 = vrot.lane.b32.xlu0 %v47, 113
  %v297 = vpop.permute.xlu0 %296
  %298 = vrot.lane.b32.xlu0 %v44, 113
  %v299 = vpop.permute.xlu0 %298
  %300 = vrot.lane.b32.xlu0 %v48, 113
  %v301 = vpop.permute.xlu0 %300
  %302 = vrot.lane.b32.xlu0 %v45, 113
  %v303 = vpop.permute.xlu0 %302
  %304 = vrot.lane.b32.xlu0 %v49, 113
  %v305 = vpop.permute.xlu0 %304
  %306 = vrot.lane.b32.xlu0 %v46, 113
  %v307 = vpop.permute.xlu0 %306
  %308 = vrot.lane.b32.xlu0 %v50, 113
  %v309 = vpop.permute.xlu0 %308
  %vm310 = vcmp.lt.s32.totalorder %v76, 113
  %v311 = vsel %vm310, %v303, %v307
  %v312 = vsel %vm310, %v305, %v309
  %v313 = vsel %vm310, %v299, %v303
  %v314 = vsel %vm310, %v301, %v305
  %v315 = vsel %vm310, %v295, %v299
  %v316 = vsel %vm310, %v297, %v301
  %v317 = vsel %vm310, %v307, %v295
  %v318 = vsel %vm310, %v309, %v297
  %v319 = vperm.slane %v35, 6
  %v320 = vperm.slane %v36, 6
  %v321 = vperm.slane %v37, 6
  %v322 = vperm.slane %v38, 6
  %v323 = vmul.f32 %v315, %v319
  %v324 = vmul.f32 %v313, %v320
  %v325 = vmul.f32 %v311, %v321
  %v326 = vmul.f32 %v317, %v322
  %v327 = vmul.f32 %v316, %v319
  %v328 = vmul.f32 %v314, %v320
  %v329 = vmul.f32 %v312, %v321
  %v330 = vmul.f32 %v318, %v322
  %331 = vst [vmem:[#allocation2 + $0x180] sm:$0xff] %v323
  %332 = vst [vmem:[#allocation2 + $0x188] sm:$0xff] %v324
  %333 = vst [vmem:[#allocation2 + $0x190] sm:$0xff] %v325
  %334 = vst [vmem:[#allocation2 + $0x198] sm:$0xff] %v326
  %335 = vst [vmem:[#allocation2 + $0x1a0] sm:$0xff] %v327
  %336 = vst [vmem:[#allocation2 + $0x1a8] sm:$0xff] %v328
  %337 = vst [vmem:[#allocation2 + $0x1b0] sm:$0xff] %v329
  %338 = vst [vmem:[#allocation2 + $0x1b8] sm:$0xff] %v330
  %339 = vrot.lane.b32.xlu0 %v43, 112
  %v340 = vpop.permute.xlu0 %339
  %341 = vrot.lane.b32.xlu0 %v47, 112
  %v342 = vpop.permute.xlu0 %341
  %343 = vrot.lane.b32.xlu0 %v44, 112
  %v344 = vpop.permute.xlu0 %343
  %345 = vrot.lane.b32.xlu0 %v48, 112
  %v346 = vpop.permute.xlu0 %345
  %347 = vrot.lane.b32.xlu0 %v45, 112
  %v348 = vpop.permute.xlu0 %347
  %349 = vrot.lane.b32.xlu0 %v49, 112
  %v350 = vpop.permute.xlu0 %349
  %351 = vrot.lane.b32.xlu0 %v46, 112
  %v352 = vpop.permute.xlu0 %351
  %353 = vrot.lane.b32.xlu0 %v50, 112
  %v354 = vpop.permute.xlu0 %353
  %vm355 = vcmp.lt.s32.totalorder %v76, 112
  %v356 = vsel %vm355, %v348, %v352
  %v357 = vsel %vm355, %v350, %v354
  %v358 = vsel %vm355, %v344, %v348
  %v359 = vsel %vm355, %v346, %v350
  %v360 = vsel %vm355, %v340, %v344
  %v361 = vsel %vm355, %v342, %v346
  %v362 = vsel %vm355, %v352, %v340
  %v363 = vsel %vm355, %v354, %v342
  %v364 = vperm.slane %v35, 7
  %v365 = vperm.slane %v36, 7
  %v366 = vperm.slane %v37, 7
  %v367 = vperm.slane %v38, 7
  %v368 = vmul.f32 %v360, %v364
  %v369 = vmul.f32 %v358, %v365
  %v370 = vmul.f32 %v356, %v366
  %v371 = vmul.f32 %v362, %v367
  %v372 = vmul.f32 %v361, %v364
  %v373 = vmul.f32 %v359, %v365
  %v374 = vmul.f32 %v357, %v366
  %v375 = vmul.f32 %v363, %v367
  %376 = vst [vmem:[#allocation2 + $0x1c0] sm:$0xff] %v368
  %377 = vst [vmem:[#allocation2 + $0x1c8] sm:$0xff] %v369
  %378 = vst [vmem:[#allocation2 + $0x1d0] sm:$0xff] %v370
  %379 = vst [vmem:[#allocation2 + $0x1d8] sm:$0xff] %v371
  %380 = vst [vmem:[#allocation2 + $0x1e0] sm:$0xff] %v372
  %381 = vst [vmem:[#allocation2 + $0x1e8] sm:$0xff] %v373
  %382 = vst [vmem:[#allocation2 + $0x1f0] sm:$0xff] %v374
  %383 = vst [vmem:[#allocation2 + $0x1f8] sm:$0xff] %v375
  %384 = vrot.lane.b32.xlu0 %v43, 111
  %v385 = vpop.permute.xlu0 %384
  %386 = vrot.lane.b32.xlu0 %v47, 111
  %v387 = vpop.permute.xlu0 %386
  %388 = vrot.lane.b32.xlu0 %v44, 111
  %v389 = vpop.permute.xlu0 %388
  %390 = vrot.lane.b32.xlu0 %v48, 111
  %v391 = vpop.permute.xlu0 %390
  %392 = vrot.lane.b32.xlu0 %v45, 111
  %v393 = vpop.permute.xlu0 %392
  %394 = vrot.lane.b32.xlu0 %v49, 111
  %v395 = vpop.permute.xlu0 %394
  %396 = vrot.lane.b32.xlu0 %v46, 111
  %v397 = vpop.permute.xlu0 %396
  %398 = vrot.lane.b32.xlu0 %v50, 111
  %v399 = vpop.permute.xlu0 %398
  %vm400 = vcmp.lt.s32.totalorder %v76, 111
  %v401 = vsel %vm400, %v393, %v397
  %v402 = vsel %vm400, %v395, %v399
  %v403 = vsel %vm400, %v389, %v393
  %v404 = vsel %vm400, %v391, %v395
  %v405 = vsel %vm400, %v385, %v389
  %v406 = vsel %vm400, %v387, %v391
  %v407 = vsel %vm400, %v397, %v385
  %v408 = vsel %vm400, %v399, %v387
  %v409 = vperm.slane %v39, 0
  %v410 = vperm.slane %v40, 0
  %v411 = vperm.slane %v41, 0
  %v412 = vperm.slane %v42, 0
  %v413 = vmul.f32 %v405, %v409
  %v414 = vmul.f32 %v403, %v410
  %v415 = vmul.f32 %v401, %v411
  %v416 = vmul.f32 %v407, %v412
  %v417 = vmul.f32 %v406, %v409
  %v418 = vmul.f32 %v404, %v410
  %v419 = vmul.f32 %v402, %v411
  %v420 = vmul.f32 %v408, %v412
  %421 = vst [vmem:[#allocation2 + $0x200] sm:$0xff] %v413
  %422 = vst [vmem:[#allocation2 + $0x208] sm:$0xff] %v414
  %423 = vst [vmem:[#allocation2 + $0x210] sm:$0xff] %v415
  %424 = vst [vmem:[#allocation2 + $0x218] sm:$0xff] %v416
  %425 = vst [vmem:[#allocation2 + $0x220] sm:$0xff] %v417
  %426 = vst [vmem:[#allocation2 + $0x228] sm:$0xff] %v418
  %427 = vst [vmem:[#allocation2 + $0x230] sm:$0xff] %v419
  %428 = vst [vmem:[#allocation2 + $0x238] sm:$0xff] %v420
  %v429 = vld [vmem:[#allocation2] sm:$0xff]
  %v430 = vld [vmem:[#allocation2 + $0x8] sm:$0xff]
  %v431 = vld [vmem:[#allocation2 + $0x10] sm:$0xff]
  %v432 = vld [vmem:[#allocation2 + $0x18] sm:$0xff]
  %v433 = vld [vmem:[#allocation2 + $0x20] sm:$0xff]
  %v434 = vld [vmem:[#allocation2 + $0x28] sm:$0xff]
  %v435 = vld [vmem:[#allocation2 + $0x30] sm:$0xff]
  %v436 = vld [vmem:[#allocation2 + $0x38] sm:$0xff]
  %v437 = vld [vmem:[#allocation2 + $0x40] sm:$0xff]
  %v438 = vld [vmem:[#allocation2 + $0x48] sm:$0xff]
  %v439 = vld [vmem:[#allocation2 + $0x50] sm:$0xff]
  %v440 = vld [vmem:[#allocation2 + $0x58] sm:$0xff]
  %v441 = vld [vmem:[#allocation2 + $0x60] sm:$0xff]
  %v442 = vld [vmem:[#allocation2 + $0x68] sm:$0xff]
  %v443 = vld [vmem:[#allocation2 + $0x70] sm:$0xff]
  %v444 = vld [vmem:[#allocation2 + $0x78] sm:$0xff]
  %v445 = vld [vmem:[#allocation2 + $0x80] sm:$0xff]
  %v446 = vld [vmem:[#allocation2 + $0x88] sm:$0xff]
  %v447 = vld [vmem:[#allocation2 + $0x90] sm:$0xff]
  %v448 = vld [vmem:[#allocation2 + $0x98] sm:$0xff]
  %v449 = vld [vmem:[#allocation2 + $0xa0] sm:$0xff]
  %v450 = vld [vmem:[#allocation2 + $0xa8] sm:$0xff]
  %v451 = vld [vmem:[#allocation2 + $0xb0] sm:$0xff]
  %v452 = vld [vmem:[#allocation2 + $0xb8] sm:$0xff]
  %v453 = vld [vmem:[#allocation2 + $0xc0] sm:$0xff]
  %v454 = vld [vmem:[#allocation2 + $0xc8] sm:$0xff]
  %v455 = vld [vmem:[#allocation2 + $0xd0] sm:$0xff]
  %v456 = vld [vmem:[#allocation2 + $0xd8] sm:$0xff]
  %v457 = vld [vmem:[#allocation2 + $0xe0] sm:$0xff]
  %v458 = vld [vmem:[#allocation2 + $0xe8] sm:$0xff]
  %v459 = vld [vmem:[#allocation2 + $0xf0] sm:$0xff]
  %v460 = vld [vmem:[#allocation2 + $0xf8] sm:$0xff]
  %v461 = vld [vmem:[#allocation2 + $0x100] sm:$0xff]
  %v462 = vld [vmem:[#allocation2 + $0x108] sm:$0xff]
  %v463 = vld [vmem:[#allocation2 + $0x110] sm:$0xff]
  %v464 = vld [vmem:[#allocation2 + $0x118] sm:$0xff]
  %v465 = vld [vmem:[#allocation2 + $0x120] sm:$0xff]
  %v466 = vld [vmem:[#allocation2 + $0x128] sm:$0xff]
  %v467 = vld [vmem:[#allocation2 + $0x130] sm:$0xff]
  %v468 = vld [vmem:[#allocation2 + $0x138] sm:$0xff]
  %v469 = vld [vmem:[#allocation2 + $0x140] sm:$0xff]
  %v470 = vld [vmem:[#allocation2 + $0x148] sm:$0xff]
  %v471 = vld [vmem:[#allocation2 + $0x150] sm:$0xff]
  %v472 = vld [vmem:[#allocation2 + $0x158] sm:$0xff]
  %v473 = vld [vmem:[#allocation2 + $0x160] sm:$0xff]
  %v474 = vld [vmem:[#allocation2 + $0x168] sm:$0xff]
  %v475 = vld [vmem:[#allocation2 + $0x170] sm:$0xff]
  %v476 = vld [vmem:[#allocation2 + $0x178] sm:$0xff]
  %v477 = vld [vmem:[#allocation2 + $0x180] sm:$0xff]
  %v478 = vld [vmem:[#allocation2 + $0x188] sm:$0xff]
  %v479 = vld [vmem:[#allocation2 + $0x190] sm:$0xff]
  %v480 = vld [vmem:[#allocation2 + $0x198] sm:$0xff]
  %v481 = vld [vmem:[#allocation2 + $0x1a0] sm:$0xff]
  %v482 = vld [vmem:[#allocation2 + $0x1a8] sm:$0xff]
  %v483 = vld [vmem:[#allocation2 + $0x1b0] sm:$0xff]
  %v484 = vld [vmem:[#allocation2 + $0x1b8] sm:$0xff]
  %v485 = vld [vmem:[#allocation2 + $0x1c0] sm:$0xff]
  %v486 = vld [vmem:[#allocation2 + $0x1c8] sm:$0xff]
  %v487 = vld [vmem:[#allocation2 + $0x1d0] sm:$0xff]
  %v488 = vld [vmem:[#allocation2 + $0x1d8] sm:$0xff]
  %v489 = vld [vmem:[#allocation2 + $0x1e0] sm:$0xff]
  %v490 = vld [vmem:[#allocation2 + $0x1e8] sm:$0xff]
  %v491 = vld [vmem:[#allocation2 + $0x1f0] sm:$0xff]
  %v492 = vld [vmem:[#allocation2 + $0x1f8] sm:$0xff]
  %v493 = vld [vmem:[#allocation2 + $0x200] sm:$0xff]
  %v494 = vld [vmem:[#allocation2 + $0x208] sm:$0xff]
  %v495 = vld [vmem:[#allocation2 + $0x210] sm:$0xff]
  %v496 = vld [vmem:[#allocation2 + $0x218] sm:$0xff]
  %v497 = vld [vmem:[#allocation2 + $0x220] sm:$0xff]
  %v498 = vld [vmem:[#allocation2 + $0x228] sm:$0xff]
  %v499 = vld [vmem:[#allocation2 + $0x230] sm:$0xff]
  %v500 = vld [vmem:[#allocation2 + $0x238] sm:$0xff]
  %v501 = vld [vmem:[%s2] sm:$0xff]
  %v502 = vld [vmem:[%s2 + $0x8] sm:$0xff]
  %v503 = vld [vmem:[%s2 + $0x10] sm:$0xff]
  %v504 = vld [vmem:[%s2 + $0x18] sm:$0xff]
  %v505 = vld [vmem:[%s5] sm:$0xff]
  %v506 = vld [vmem:[%s5 + $0x8] sm:$0xff]
  %508 = vset.pattern.permute.xlu0 0
  %509 = vperm.xlu0 %508, %v505
  %v510 = vpop.permute.xlu0 %509
  %513 = vset.pattern.permute.xlu0 0
  %514 = vperm.xlu0 %513, %v506
  %v515 = vpop.permute.xlu0 %514
  %vm517 = vcmask 130048
  %v519 = vsel %vm517, %v502, 0
  %v522 = vsel %vm517, %v504, 0
  %524 = vmatpush.msra.mxu0 %v489
  %525 = vmatpush.msra.mxu0 %v485
  %526 = vmatpush.msra.mxu0 %v481
  %527 = vmatpush.msra.mxu0 %v477
  %528 = vmatpush.msra.mxu0 %v473
  %529 = vmatpush.msra.mxu0 %v469
  %530 = vmatpush.msra.mxu0 %v465
  %531 = vmatpush.msra.mxu0 %v461
  %532 = vmatpush.msra.mxu0 %v457
  %533 = vmatpush.msra.mxu0 %v453
  %534 = vmatpush.msra.mxu0 %v449
  %535 = vmatpush.msra.mxu0 %v445
  %536 = vmatpush.msra.mxu0 %v441
  %537 = vmatpush.msra.mxu0 %v437
  %538 = vmatpush.msra.mxu0 %v433
  %539 = vmatpush.msra.mxu0 %v429
  %540 = vmatmul.f32.gmra.mxu0 %v501
  %v541 = vpop.f32.mrf.mxu0
  %v542 = vadd.f32 %v510, %v541
  %543 = vmatmul.f32.gmra.mxu0 %v503
  %v544 = vpop.f32.mrf.mxu0
  %v545 = vadd.f32 %v515, %v544
  %546 = vdwg.mxu0
  %547 = vmatpush.msra.mxu0 0.0
  %548 = vmatpush.msra.mxu0 0.0
  %549 = vmatpush.msra.mxu0 0.0
  %550 = vmatpush.msra.mxu0 0.0
  %551 = vmatpush.msra.mxu0 0.0
  %552 = vmatpush.msra.mxu0 0.0
  %553 = vmatpush.msra.mxu0 0.0
  %554 = vmatpush.msra.mxu0 0.0
  %555 = vmatpush.msra.mxu0 0.0
  %556 = vmatpush.msra.mxu0 0.0
  %557 = vmatpush.msra.mxu0 0.0
  %558 = vmatpush.msra.mxu0 0.0
  %559 = vmatpush.msra.mxu0 0.0
  %560 = vmatpush.msra.mxu0 0.0
  %561 = vmatpush.msra.mxu0 %v497
  %562 = vmatpush.msra.mxu0 %v493
  %563 = vmatmul.f32.gmra.mxu0 %v519
  %v564 = vpop.f32.mrf.mxu0
  %v565 = vadd.f32 %v542, %v564
  %566 = vmatmul.f32.gmra.mxu0 %v522
  %v567 = vpop.f32.mrf.mxu0
  %v568 = vadd.f32 %v545, %v567
  %569 = vdwg.mxu0
  %570 = vmatpush.msra.mxu0 %v490
  %571 = vmatpush.msra.mxu0 %v486
  %572 = vmatpush.msra.mxu0 %v482
  %573 = vmatpush.msra.mxu0 %v478
  %574 = vmatpush.msra.mxu0 %v474
  %575 = vmatpush.msra.mxu0 %v470
  %576 = vmatpush.msra.mxu0 %v466
  %577 = vmatpush.msra.mxu0 %v462
  %578 = vmatpush.msra.mxu0 %v458
  %579 = vmatpush.msra.mxu0 %v454
  %580 = vmatpush.msra.mxu0 %v450
  %581 = vmatpush.msra.mxu0 %v446
  %582 = vmatpush.msra.mxu0 %v442
  %583 = vmatpush.msra.mxu0 %v438
  %584 = vmatpush.msra.mxu0 %v434
  %585 = vmatpush.msra.mxu0 %v430
  %586 = vmatmul.f32.gmra.mxu0 %v501
  %v587 = vpop.f32.mrf.mxu0
  %v588 = vadd.f32 %v510, %v587
  %589 = vmatmul.f32.gmra.mxu0 %v503
  %v590 = vpop.f32.mrf.mxu0
  %v591 = vadd.f32 %v515, %v590
  %592 = vdwg.mxu0
  %593 = vmatpush.msra.mxu0 0.0
  %594 = vmatpush.msra.mxu0 0.0
  %595 = vmatpush.msra.mxu0 0.0
  %596 = vmatpush.msra.mxu0 0.0
  %597 = vmatpush.msra.mxu0 0.0
  %598 = vmatpush.msra.mxu0 0.0
  %599 = vmatpush.msra.mxu0 0.0
  %600 = vmatpush.msra.mxu0 0.0
  %601 = vmatpush.msra.mxu0 0.0
  %602 = vmatpush.msra.mxu0 0.0
  %603 = vmatpush.msra.mxu0 0.0
  %604 = vmatpush.msra.mxu0 0.0
  %605 = vmatpush.msra.mxu0 0.0
  %606 = vmatpush.msra.mxu0 0.0
  %607 = vmatpush.msra.mxu0 %v498
  %608 = vmatpush.msra.mxu0 %v494
  %609 = vmatmul.f32.gmra.mxu0 %v519
  %v610 = vpop.f32.mrf.mxu0
  %v611 = vadd.f32 %v588, %v610
  %612 = vmatmul.f32.gmra.mxu0 %v522
  %v613 = vpop.f32.mrf.mxu0
  %v614 = vadd.f32 %v591, %v613
  %615 = vdwg.mxu0
  %616 = vmatpush.msra.mxu0 %v491
  %617 = vmatpush.msra.mxu0 %v487
  %618 = vmatpush.msra.mxu0 %v483
  %619 = vmatpush.msra.mxu0 %v479
  %620 = vmatpush.msra.mxu0 %v475
  %621 = vmatpush.msra.mxu0 %v471
  %622 = vmatpush.msra.mxu0 %v467
  %623 = vmatpush.msra.mxu0 %v463
  %624 = vmatpush.msra.mxu0 %v459
  %625 = vmatpush.msra.mxu0 %v455
  %626 = vmatpush.msra.mxu0 %v451
  %627 = vmatpush.msra.mxu0 %v447
  %628 = vmatpush.msra.mxu0 %v443
  %629 = vmatpush.msra.mxu0 %v439
  %630 = vmatpush.msra.mxu0 %v435
  %631 = vmatpush.msra.mxu0 %v431
  %632 = vmatmul.f32.gmra.mxu0 %v501
  %v633 = vpop.f32.mrf.mxu0
  %v634 = vadd.f32 %v510, %v633
  %635 = vmatmul.f32.gmra.mxu0 %v503
  %v636 = vpop.f32.mrf.mxu0
  %v637 = vadd.f32 %v515, %v636
  %638 = vdwg.mxu0
  %639 = vmatpush.msra.mxu0 0.0
  %640 = vmatpush.msra.mxu0 0.0
  %641 = vmatpush.msra.mxu0 0.0
  %642 = vmatpush.msra.mxu0 0.0
  %643 = vmatpush.msra.mxu0 0.0
  %644 = vmatpush.msra.mxu0 0.0
  %645 = vmatpush.msra.mxu0 0.0
  %646 = vmatpush.msra.mxu0 0.0
  %647 = vmatpush.msra.mxu0 0.0
  %648 = vmatpush.msra.mxu0 0.0
  %649 = vmatpush.msra.mxu0 0.0
  %650 = vmatpush.msra.mxu0 0.0
  %651 = vmatpush.msra.mxu0 0.0
  %652 = vmatpush.msra.mxu0 0.0
  %653 = vmatpush.msra.mxu0 %v499
  %654 = vmatpush.msra.mxu0 %v495
  %655 = vmatmul.f32.gmra.mxu0 %v519
  %v656 = vpop.f32.mrf.mxu0
  %v657 = vadd.f32 %v634, %v656
  %658 = vmatmul.f32.gmra.mxu0 %v522
  %v659 = vpop.f32.mrf.mxu0
  %v660 = vadd.f32 %v637, %v659
  %661 = vdwg.mxu0
  %662 = vmatpush.msra.mxu0 %v492
  %663 = vmatpush.msra.mxu0 %v488
  %664 = vmatpush.msra.mxu0 %v484
  %665 = vmatpush.msra.mxu0 %v480
  %666 = vmatpush.msra.mxu0 %v476
  %667 = vmatpush.msra.mxu0 %v472
  %668 = vmatpush.msra.mxu0 %v468
  %669 = vmatpush.msra.mxu0 %v464
  %670 = vmatpush.msra.mxu0 %v460
  %671 = vmatpush.msra.mxu0 %v456
  %672 = vmatpush.msra.mxu0 %v452
  %673 = vmatpush.msra.mxu0 %v448
  %674 = vmatpush.msra.mxu0 %v444
  %675 = vmatpush.msra.mxu0 %v440
  %676 = vmatpush.msra.mxu0 %v436
  %677 = vmatpush.msra.mxu0 %v432
  %678 = vmatmul.f32.gmra.mxu0 %v501
  %v679 = vpop.f32.mrf.mxu0
  %v680 = vadd.f32 %v510, %v679
  %681 = vmatmul.f32.gmra.mxu0 %v503
  %v682 = vpop.f32.mrf.mxu0
  %v683 = vadd.f32 %v515, %v682
  %684 = vdwg.mxu0
  %685 = vmatpush.msra.mxu0 0.0
  %686 = vmatpush.msra.mxu0 0.0
  %687 = vmatpush.msra.mxu0 0.0
  %688 = vmatpush.msra.mxu0 0.0
  %689 = vmatpush.msra.mxu0 0.0
  %690 = vmatpush.msra.mxu0 0.0
  %691 = vmatpush.msra.mxu0 0.0
  %692 = vmatpush.msra.mxu0 0.0
  %693 = vmatpush.msra.mxu0 0.0
  %694 = vmatpush.msra.mxu0 0.0
  %695 = vmatpush.msra.mxu0 0.0
  %696 = vmatpush.msra.mxu0 0.0
  %697 = vmatpush.msra.mxu0 0.0
  %698 = vmatpush.msra.mxu0 0.0
  %699 = vmatpush.msra.mxu0 %v500
  %700 = vmatpush.msra.mxu0 %v496
  %701 = vmatmul.f32.gmra.mxu0 %v519
  %v702 = vpop.f32.mrf.mxu0
  %v703 = vadd.f32 %v680, %v702
  %704 = vmatmul.f32.gmra.mxu0 %v522
  %v705 = vpop.f32.mrf.mxu0
  %v706 = vadd.f32 %v683, %v705
  %707 = vdwg.mxu0
  %v708 = vmax.f32 %v565, 0.0
  %v709 = vmax.f32 %v611, 0.0
  %v710 = vmax.f32 %v657, 0.0
  %v711 = vmax.f32 %v703, 0.0
  %v712 = vmax.f32 %v568, 0.0
  %v713 = vmax.f32 %v614, 0.0
  %v714 = vmax.f32 %v660, 0.0
  %v715 = vmax.f32 %v706, 0.0
  %716 = vrot.lane.b32.xlu0 %v708, 17
  %v717 = vpop.permute.xlu0 %716
  %718 = vrot.lane.b32.xlu0 %v712, 17
  %v719 = vpop.permute.xlu0 %718
  %720 = vrot.lane.b32.xlu0 %v709, 17
  %v721 = vpop.permute.xlu0 %720
  %722 = vrot.lane.b32.xlu0 %v713, 17
  %v723 = vpop.permute.xlu0 %722
  %724 = vrot.lane.b32.xlu0 %v710, 17
  %v725 = vpop.permute.xlu0 %724
  %726 = vrot.lane.b32.xlu0 %v714, 17
  %v727 = vpop.permute.xlu0 %726
  %728 = vrot.lane.b32.xlu0 %v711, 17
  %v729 = vpop.permute.xlu0 %728
  %730 = vrot.lane.b32.xlu0 %v715, 17
  %v731 = vpop.permute.xlu0 %730
  %v732 = vsel %vm77, %v725, %v729
  %v733 = vsel %vm77, %v727, %v731
  %v734 = vsel %vm77, %v721, %v725
  %v735 = vsel %vm77, %v723, %v727
  %v736 = vsel %vm77, %v717, %v721
  %v737 = vsel %vm77, %v719, %v723
  %v738 = vsel %vm77, %v729, %v717
  %v739 = vsel %vm77, %v731, %v719
  %v740 = vmul.f32 %v738, %v86
  %v741 = vmul.f32 %v736, %v87
  %v742 = vmul.f32 %v734, %v88
  %v743 = vmul.f32 %v732, %v89
  %v744 = vmul.f32 %v739, %v86
  %v745 = vmul.f32 %v737, %v87
  %v746 = vmul.f32 %v735, %v88
  %v747 = vmul.f32 %v733, %v89
  %748 = vst [vmem:[#allocation2 + $0x240] sm:$0xff] %v740
  %749 = vst [vmem:[#allocation2 + $0x248] sm:$0xff] %v741
  %750 = vst [vmem:[#allocation2 + $0x250] sm:$0xff] %v742
  %751 = vst [vmem:[#allocation2 + $0x258] sm:$0xff] %v743
  %752 = vst [vmem:[#allocation2 + $0x260] sm:$0xff] %v744
  %753 = vst [vmem:[#allocation2 + $0x268] sm:$0xff] %v745
  %754 = vst [vmem:[#allocation2 + $0x270] sm:$0xff] %v746
  %755 = vst [vmem:[#allocation2 + $0x278] sm:$0xff] %v747
  %756 = vrot.lane.b32.xlu0 %v708, 16
  %v757 = vpop.permute.xlu0 %756
  %758 = vrot.lane.b32.xlu0 %v712, 16
  %v759 = vpop.permute.xlu0 %758
  %760 = vrot.lane.b32.xlu0 %v709, 16
  %v761 = vpop.permute.xlu0 %760
  %762 = vrot.lane.b32.xlu0 %v713, 16
  %v763 = vpop.permute.xlu0 %762
  %764 = vrot.lane.b32.xlu0 %v710, 16
  %v765 = vpop.permute.xlu0 %764
  %766 = vrot.lane.b32.xlu0 %v714, 16
  %v767 = vpop.permute.xlu0 %766
  %768 = vrot.lane.b32.xlu0 %v711, 16
  %v769 = vpop.permute.xlu0 %768
  %770 = vrot.lane.b32.xlu0 %v715, 16
  %v771 = vpop.permute.xlu0 %770
  %v772 = vsel %vm122, %v765, %v769
  %v773 = vsel %vm122, %v767, %v771
  %v774 = vsel %vm122, %v761, %v765
  %v775 = vsel %vm122, %v763, %v767
  %v776 = vsel %vm122, %v757, %v761
  %v777 = vsel %vm122, %v759, %v763
  %v778 = vsel %vm122, %v769, %v757
  %v779 = vsel %vm122, %v771, %v759
  %v780 = vmul.f32 %v778, %v131
  %v781 = vmul.f32 %v776, %v132
  %v782 = vmul.f32 %v774, %v133
  %v783 = vmul.f32 %v772, %v134
  %v784 = vmul.f32 %v779, %v131
  %v785 = vmul.f32 %v777, %v132
  %v786 = vmul.f32 %v775, %v133
  %v787 = vmul.f32 %v773, %v134
  %788 = vst [vmem:[#allocation2 + $0x280] sm:$0xff] %v780
  %789 = vst [vmem:[#allocation2 + $0x288] sm:$0xff] %v781
  %790 = vst [vmem:[#allocation2 + $0x290] sm:$0xff] %v782
  %791 = vst [vmem:[#allocation2 + $0x298] sm:$0xff] %v783
  %792 = vst [vmem:[#allocation2 + $0x2a0] sm:$0xff] %v784
  %793 = vst [vmem:[#allocation2 + $0x2a8] sm:$0xff] %v785
  %794 = vst [vmem:[#allocation2 + $0x2b0] sm:$0xff] %v786
  %795 = vst [vmem:[#allocation2 + $0x2b8] sm:$0xff] %v787
  %796 = vrot.lane.b32.xlu0 %v708, 15
  %v797 = vpop.permute.xlu0 %796
  %798 = vrot.lane.b32.xlu0 %v712, 15
  %v799 = vpop.permute.xlu0 %798
  %800 = vrot.lane.b32.xlu0 %v709, 15
  %v801 = vpop.permute.xlu0 %800
  %802 = vrot.lane.b32.xlu0 %v713, 15
  %v803 = vpop.permute.xlu0 %802
  %804 = vrot.lane.b32.xlu0 %v710, 15
  %v805 = vpop.permute.xlu0 %804
  %806 = vrot.lane.b32.xlu0 %v714, 15
  %v807 = vpop.permute.xlu0 %806
  %808 = vrot.lane.b32.xlu0 %v711, 15
  %v809 = vpop.permute.xlu0 %808
  %810 = vrot.lane.b32.xlu0 %v715, 15
  %v811 = vpop.permute.xlu0 %810
  %v812 = vsel %vm167, %v805, %v809
  %v813 = vsel %vm167, %v807, %v811
  %v814 = vsel %vm167, %v801, %v805
  %v815 = vsel %vm167, %v803, %v807
  %v816 = vsel %vm167, %v797, %v801
  %v817 = vsel %vm167, %v799, %v803
  %v818 = vsel %vm167, %v809, %v797
  %v819 = vsel %vm167, %v811, %v799
  %v820 = vmul.f32 %v818, %v176
  %v821 = vmul.f32 %v816, %v177
  %v822 = vmul.f32 %v814, %v178
  %v823 = vmul.f32 %v812, %v179
  %v824 = vmul.f32 %v819, %v176
  %v825 = vmul.f32 %v817, %v177
  %v826 = vmul.f32 %v815, %v178
  %v827 = vmul.f32 %v813, %v179
  %828 = vst [vmem:[#allocation2 + $0x2c0] sm:$0xff] %v820
  %829 = vst [vmem:[#allocation2 + $0x2c8] sm:$0xff] %v821
  %830 = vst [vmem:[#allocation2 + $0x2d0] sm:$0xff] %v822
  %831 = vst [vmem:[#allocation2 + $0x2d8] sm:$0xff] %v823
  %832 = vst [vmem:[#allocation2 + $0x2e0] sm:$0xff] %v824
  %833 = vst [vmem:[#allocation2 + $0x2e8] sm:$0xff] %v825
  %834 = vst [vmem:[#allocation2 + $0x2f0] sm:$0xff] %v826
  %835 = vst [vmem:[#allocation2 + $0x2f8] sm:$0xff] %v827
  %836 = vrot.lane.b32.xlu0 %v708, 1
  %v837 = vpop.permute.xlu0 %836
  %838 = vrot.lane.b32.xlu0 %v712, 1
  %v839 = vpop.permute.xlu0 %838
  %840 = vrot.lane.b32.xlu0 %v709, 1
  %v841 = vpop.permute.xlu0 %840
  %842 = vrot.lane.b32.xlu0 %v713, 1
  %v843 = vpop.permute.xlu0 %842
  %844 = vrot.lane.b32.xlu0 %v710, 1
  %v845 = vpop.permute.xlu0 %844
  %846 = vrot.lane.b32.xlu0 %v714, 1
  %v847 = vpop.permute.xlu0 %846
  %848 = vrot.lane.b32.xlu0 %v711, 1
  %v849 = vpop.permute.xlu0 %848
  %850 = vrot.lane.b32.xlu0 %v715, 1
  %v851 = vpop.permute.xlu0 %850
  %v852 = vsel %vm212, %v845, %v849
  %v853 = vsel %vm212, %v847, %v851
  %v854 = vsel %vm212, %v841, %v845
  %v855 = vsel %vm212, %v843, %v847
  %v856 = vsel %vm212, %v837, %v841
  %v857 = vsel %vm212, %v839, %v843
  %v858 = vsel %vm212, %v849, %v837
  %v859 = vsel %vm212, %v851, %v839
  %v860 = vmul.f32 %v858, %v221
  %v861 = vmul.f32 %v856, %v222
  %v862 = vmul.f32 %v854, %v223
  %v863 = vmul.f32 %v852, %v224
  %v864 = vmul.f32 %v859, %v221
  %v865 = vmul.f32 %v857, %v222
  %v866 = vmul.f32 %v855, %v223
  %v867 = vmul.f32 %v853, %v224
  %868 = vst [vmem:[#allocation2 + $0x300] sm:$0xff] %v860
  %869 = vst [vmem:[#allocation2 + $0x308] sm:$0xff] %v861
  %870 = vst [vmem:[#allocation2 + $0x310] sm:$0xff] %v862
  %871 = vst [vmem:[#allocation2 + $0x318] sm:$0xff] %v863
  %872 = vst [vmem:[#allocation2 + $0x320] sm:$0xff] %v864
  %873 = vst [vmem:[#allocation2 + $0x328] sm:$0xff] %v865
  %874 = vst [vmem:[#allocation2 + $0x330] sm:$0xff] %v866
  %875 = vst [vmem:[#allocation2 + $0x338] sm:$0xff] %v867
  %876 = vst [vmem:[#allocation2 + $0x340] sm:$0xff] %v708
  %877 = vst [vmem:[#allocation2 + $0x348] sm:$0xff] %v709
  %878 = vst [vmem:[#allocation2 + $0x350] sm:$0xff] %v710
  %879 = vst [vmem:[#allocation2 + $0x358] sm:$0xff] %v711
  %880 = vst [vmem:[#allocation2 + $0x360] sm:$0xff] %v712
  %881 = vst [vmem:[#allocation2 + $0x368] sm:$0xff] %v713
  %882 = vst [vmem:[#allocation2 + $0x370] sm:$0xff] %v714
  %883 = vst [vmem:[#allocation2 + $0x378] sm:$0xff] %v715
  %884 = vrot.lane.b32.xlu0 %v708, 127
  %v885 = vpop.permute.xlu0 %884
  %886 = vrot.lane.b32.xlu0 %v712, 127
  %v887 = vpop.permute.xlu0 %886
  %888 = vrot.lane.b32.xlu0 %v709, 127
  %v889 = vpop.permute.xlu0 %888
  %890 = vrot.lane.b32.xlu0 %v713, 127
  %v891 = vpop.permute.xlu0 %890
  %892 = vrot.lane.b32.xlu0 %v710, 127
  %v893 = vpop.permute.xlu0 %892
  %894 = vrot.lane.b32.xlu0 %v714, 127
  %v895 = vpop.permute.xlu0 %894
  %896 = vrot.lane.b32.xlu0 %v711, 127
  %v897 = vpop.permute.xlu0 %896
  %898 = vrot.lane.b32.xlu0 %v715, 127
  %v899 = vpop.permute.xlu0 %898
  %v900 = vsel %vm265, %v893, %v897
  %v901 = vsel %vm265, %v895, %v899
  %v902 = vsel %vm265, %v889, %v893
  %v903 = vsel %vm265, %v891, %v895
  %v904 = vsel %vm265, %v885, %v889
  %v905 = vsel %vm265, %v887, %v891
  %v906 = vsel %vm265, %v897, %v885
  %v907 = vsel %vm265, %v899, %v887
  %v908 = vmul.f32 %v904, %v274
  %v909 = vmul.f32 %v902, %v275
  %v910 = vmul.f32 %v900, %v276
  %v911 = vmul.f32 %v906, %v277
  %v912 = vmul.f32 %v905, %v274
  %v913 = vmul.f32 %v903, %v275
  %v914 = vmul.f32 %v901, %v276
  %v915 = vmul.f32 %v907, %v277
  %916 = vst [vmem:[#allocation2 + $0x380] sm:$0xff] %v908
  %917 = vst [vmem:[#allocation2 + $0x388] sm:$0xff] %v909
  %918 = vst [vmem:[#allocation2 + $0x390] sm:$0xff] %v910
  %919 = vst [vmem:[#allocation2 + $0x398] sm:$0xff] %v911
  %920 = vst [vmem:[#allocation2 + $0x3a0] sm:$0xff] %v912
  %921 = vst [vmem:[#allocation2 + $0x3a8] sm:$0xff] %v913
  %922 = vst [vmem:[#allocation2 + $0x3b0] sm:$0xff] %v914
  %923 = vst [vmem:[#allocation2 + $0x3b8] sm:$0xff] %v915
  %924 = vrot.lane.b32.xlu0 %v708, 113
  %v925 = vpop.permute.xlu0 %924
  %926 = vrot.lane.b32.xlu0 %v712, 113
  %v927 = vpop.permute.xlu0 %926
  %928 = vrot.lane.b32.xlu0 %v709, 113
  %v929 = vpop.permute.xlu0 %928
  %930 = vrot.lane.b32.xlu0 %v713, 113
  %v931 = vpop.permute.xlu0 %930
  %932 = vrot.lane.b32.xlu0 %v710, 113
  %v933 = vpop.permute.xlu0 %932
  %934 = vrot.lane.b32.xlu0 %v714, 113
  %v935 = vpop.permute.xlu0 %934
  %936 = vrot.lane.b32.xlu0 %v711, 113
  %v937 = vpop.permute.xlu0 %936
  %938 = vrot.lane.b32.xlu0 %v715, 113
  %v939 = vpop.permute.xlu0 %938
  %v940 = vsel %vm310, %v933, %v937
  %v941 = vsel %vm310, %v935, %v939
  %v942 = vsel %vm310, %v929, %v933
  %v943 = vsel %vm310, %v931, %v935
  %v944 = vsel %vm310, %v925, %v929
  %v945 = vsel %vm310, %v927, %v931
  %v946 = vsel %vm310, %v937, %v925
  %v947 = vsel %vm310, %v939, %v927
  %v948 = vmul.f32 %v944, %v319
  %v949 = vmul.f32 %v942, %v320
  %v950 = vmul.f32 %v940, %v321
  %v951 = vmul.f32 %v946, %v322
  %v952 = vmul.f32 %v945, %v319
  %v953 = vmul.f32 %v943, %v320
  %v954 = vmul.f32 %v941, %v321
  %v955 = vmul.f32 %v947, %v322
  %956 = vst [vmem:[#allocation2 + $0x3c0] sm:$0xff] %v948
  %957 = vst [vmem:[#allocation2 + $0x3c8] sm:$0xff] %v949
  %958 = vst [vmem:[#allocation2 + $0x3d0] sm:$0xff] %v950
  %959 = vst [vmem:[#allocation2 + $0x3d8] sm:$0xff] %v951
  %960 = vst [vmem:[#allocation2 + $0x3e0] sm:$0xff] %v952
  %961 = vst [vmem:[#allocation2 + $0x3e8] sm:$0xff] %v953
  %962 = vst [vmem:[#allocation2 + $0x3f0] sm:$0xff] %v954
  %963 = vst [vmem:[#allocation2 + $0x3f8] sm:$0xff] %v955
  %964 = vrot.lane.b32.xlu0 %v708, 112
  %v965 = vpop.permute.xlu0 %964
  %966 = vrot.lane.b32.xlu0 %v712, 112
  %v967 = vpop.permute.xlu0 %966
  %968 = vrot.lane.b32.xlu0 %v709, 112
  %v969 = vpop.permute.xlu0 %968
  %970 = vrot.lane.b32.xlu0 %v713, 112
  %v971 = vpop.permute.xlu0 %970
  %972 = vrot.lane.b32.xlu0 %v710, 112
  %v973 = vpop.permute.xlu0 %972
  %974 = vrot.lane.b32.xlu0 %v714, 112
  %v975 = vpop.permute.xlu0 %974
  %976 = vrot.lane.b32.xlu0 %v711, 112
  %v977 = vpop.permute.xlu0 %976
  %978 = vrot.lane.b32.xlu0 %v715, 112
  %v979 = vpop.permute.xlu0 %978
  %v980 = vsel %vm355, %v973, %v977
  %v981 = vsel %vm355, %v975, %v979
  %v982 = vsel %vm355, %v969, %v973
  %v983 = vsel %vm355, %v971, %v975
  %v984 = vsel %vm355, %v965, %v969
  %v985 = vsel %vm355, %v967, %v971
  %v986 = vsel %vm355, %v977, %v965
  %v987 = vsel %vm355, %v979, %v967
  %v988 = vmul.f32 %v984, %v364
  %v989 = vmul.f32 %v982, %v365
  %v990 = vmul.f32 %v980, %v366
  %v991 = vmul.f32 %v986, %v367
  %v992 = vmul.f32 %v985, %v364
  %v993 = vmul.f32 %v983, %v365
  %v994 = vmul.f32 %v981, %v366
  %v995 = vmul.f32 %v987, %v367
  %996 = vst [vmem:[#allocation2 + $0x400] sm:$0xff] %v988
  %997 = vst [vmem:[#allocation2 + $0x408] sm:$0xff] %v989
  %998 = vst [vmem:[#allocation2 + $0x410] sm:$0xff] %v990
  %999 = vst [vmem:[#allocation2 + $0x418] sm:$0xff] %v991
  %1000 = vst [vmem:[#allocation2 + $0x420] sm:$0xff] %v992
  %1001 = vst [vmem:[#allocation2 + $0x428] sm:$0xff] %v993
  %1002 = vst [vmem:[#allocation2 + $0x430] sm:$0xff] %v994
  %1003 = vst [vmem:[#allocation2 + $0x438] sm:$0xff] %v995
  %1004 = vrot.lane.b32.xlu0 %v708, 111
  %v1005 = vpop.permute.xlu0 %1004
  %1006 = vrot.lane.b32.xlu0 %v712, 111
  %v1007 = vpop.permute.xlu0 %1006
  %1008 = vrot.lane.b32.xlu0 %v709, 111
  %v1009 = vpop.permute.xlu0 %1008
  %1010 = vrot.lane.b32.xlu0 %v713, 111
  %v1011 = vpop.permute.xlu0 %1010
  %1012 = vrot.lane.b32.xlu0 %v710, 111
  %v1013 = vpop.permute.xlu0 %1012
  %1014 = vrot.lane.b32.xlu0 %v714, 111
  %v1015 = vpop.permute.xlu0 %1014
  %1016 = vrot.lane.b32.xlu0 %v711, 111
  %v1017 = vpop.permute.xlu0 %1016
  %1018 = vrot.lane.b32.xlu0 %v715, 111
  %v1019 = vpop.permute.xlu0 %1018
  %v1020 = vsel %vm400, %v1013, %v1017
  %v1021 = vsel %vm400, %v1015, %v1019
  %v1022 = vsel %vm400, %v1009, %v1013
  %v1023 = vsel %vm400, %v1011, %v1015
  %v1024 = vsel %vm400, %v1005, %v1009
  %v1025 = vsel %vm400, %v1007, %v1011
  %v1026 = vsel %vm400, %v1017, %v1005
  %v1027 = vsel %vm400, %v1019, %v1007
  %v1028 = vmul.f32 %v1024, %v409
  %v1029 = vmul.f32 %v1022, %v410
  %v1030 = vmul.f32 %v1020, %v411
  %v1031 = vmul.f32 %v1026, %v412
  %v1032 = vmul.f32 %v1025, %v409
  %v1033 = vmul.f32 %v1023, %v410
  %v1034 = vmul.f32 %v1021, %v411
  %v1035 = vmul.f32 %v1027, %v412
  %1036 = vst [vmem:[#allocation2 + $0x440] sm:$0xff] %v1028
  %1037 = vst [vmem:[#allocation2 + $0x448] sm:$0xff] %v1029
  %1038 = vst [vmem:[#allocation2 + $0x450] sm:$0xff] %v1030
  %1039 = vst [vmem:[#allocation2 + $0x458] sm:$0xff] %v1031
  %1040 = vst [vmem:[#allocation2 + $0x460] sm:$0xff] %v1032
  %1041 = vst [vmem:[#allocation2 + $0x468] sm:$0xff] %v1033
  %1042 = vst [vmem:[#allocation2 + $0x470] sm:$0xff] %v1034
  %1043 = vst [vmem:[#allocation2 + $0x478] sm:$0xff] %v1035
  %v1044 = vld [vmem:[#allocation2] sm:$0xff]
  %v1045 = vld [vmem:[#allocation2 + $0x8] sm:$0xff]
  %v1046 = vld [vmem:[#allocation2 + $0x10] sm:$0xff]
  %v1047 = vld [vmem:[#allocation2 + $0x18] sm:$0xff]
  %v1048 = vld [vmem:[#allocation2 + $0x20] sm:$0xff]
  %v1049 = vld [vmem:[#allocation2 + $0x28] sm:$0xff]
  %v1050 = vld [vmem:[#allocation2 + $0x30] sm:$0xff]
  %v1051 = vld [vmem:[#allocation2 + $0x38] sm:$0xff]
  %v1052 = vld [vmem:[#allocation2 + $0x40] sm:$0xff]
  %v1053 = vld [vmem:[#allocation2 + $0x48] sm:$0xff]
  %v1054 = vld [vmem:[#allocation2 + $0x50] sm:$0xff]
  %v1055 = vld [vmem:[#allocation2 + $0x58] sm:$0xff]
  %v1056 = vld [vmem:[#allocation2 + $0x60] sm:$0xff]
  %v1057 = vld [vmem:[#allocation2 + $0x68] sm:$0xff]
  %v1058 = vld [vmem:[#allocation2 + $0x70] sm:$0xff]
  %v1059 = vld [vmem:[#allocation2 + $0x78] sm:$0xff]
  %v1060 = vld [vmem:[#allocation2 + $0x80] sm:$0xff]
  %v1061 = vld [vmem:[#allocation2 + $0x88] sm:$0xff]
  %v1062 = vld [vmem:[#allocation2 + $0x90] sm:$0xff]
  %v1063 = vld [vmem:[#allocation2 + $0x98] sm:$0xff]
  %v1064 = vld [vmem:[#allocation2 + $0xa0] sm:$0xff]
  %v1065 = vld [vmem:[#allocation2 + $0xa8] sm:$0xff]
  %v1066 = vld [vmem:[#allocation2 + $0xb0] sm:$0xff]
  %v1067 = vld [vmem:[#allocation2 + $0xb8] sm:$0xff]
  %v1068 = vld [vmem:[#allocation2 + $0xc0] sm:$0xff]
  %v1069 = vld [vmem:[#allocation2 + $0xc8] sm:$0xff]
  %v1070 = vld [vmem:[#allocation2 + $0xd0] sm:$0xff]
  %v1071 = vld [vmem:[#allocation2 + $0xd8] sm:$0xff]
  %v1072 = vld [vmem:[#allocation2 + $0xe0] sm:$0xff]
  %v1073 = vld [vmem:[#allocation2 + $0xe8] sm:$0xff]
  %v1074 = vld [vmem:[#allocation2 + $0xf0] sm:$0xff]
  %v1075 = vld [vmem:[#allocation2 + $0xf8] sm:$0xff]
  %v1076 = vld [vmem:[#allocation2 + $0x100] sm:$0xff]
  %v1077 = vld [vmem:[#allocation2 + $0x108] sm:$0xff]
  %v1078 = vld [vmem:[#allocation2 + $0x110] sm:$0xff]
  %v1079 = vld [vmem:[#allocation2 + $0x118] sm:$0xff]
  %v1080 = vld [vmem:[#allocation2 + $0x120] sm:$0xff]
  %v1081 = vld [vmem:[#allocation2 + $0x128] sm:$0xff]
  %v1082 = vld [vmem:[#allocation2 + $0x130] sm:$0xff]
  %v1083 = vld [vmem:[#allocation2 + $0x138] sm:$0xff]
  %v1084 = vld [vmem:[#allocation2 + $0x140] sm:$0xff]
  %v1085 = vld [vmem:[#allocation2 + $0x148] sm:$0xff]
  %v1086 = vld [vmem:[#allocation2 + $0x150] sm:$0xff]
  %v1087 = vld [vmem:[#allocation2 + $0x158] sm:$0xff]
  %v1088 = vld [vmem:[#allocation2 + $0x160] sm:$0xff]
  %v1089 = vld [vmem:[#allocation2 + $0x168] sm:$0xff]
  %v1090 = vld [vmem:[#allocation2 + $0x170] sm:$0xff]
  %v1091 = vld [vmem:[#allocation2 + $0x178] sm:$0xff]
  %v1092 = vld [vmem:[#allocation2 + $0x180] sm:$0xff]
  %v1093 = vld [vmem:[#allocation2 + $0x188] sm:$0xff]
  %v1094 = vld [vmem:[#allocation2 + $0x190] sm:$0xff]
  %v1095 = vld [vmem:[#allocation2 + $0x198] sm:$0xff]
  %v1096 = vld [vmem:[#allocation2 + $0x1a0] sm:$0xff]
  %v1097 = vld [vmem:[#allocation2 + $0x1a8] sm:$0xff]
  %v1098 = vld [vmem:[#allocation2 + $0x1b0] sm:$0xff]
  %v1099 = vld [vmem:[#allocation2 + $0x1b8] sm:$0xff]
  %v1100 = vld [vmem:[#allocation2 + $0x1c0] sm:$0xff]
  %v1101 = vld [vmem:[#allocation2 + $0x1c8] sm:$0xff]
  %v1102 = vld [vmem:[#allocation2 + $0x1d0] sm:$0xff]
  %v1103 = vld [vmem:[#allocation2 + $0x1d8] sm:$0xff]
  %v1104 = vld [vmem:[#allocation2 + $0x1e0] sm:$0xff]
  %v1105 = vld [vmem:[#allocation2 + $0x1e8] sm:$0xff]
  %v1106 = vld [vmem:[#allocation2 + $0x1f0] sm:$0xff]
  %v1107 = vld [vmem:[#allocation2 + $0x1f8] sm:$0xff]
  %v1108 = vld [vmem:[#allocation2 + $0x200] sm:$0xff]
  %v1109 = vld [vmem:[#allocation2 + $0x208] sm:$0xff]
  %v1110 = vld [vmem:[#allocation2 + $0x210] sm:$0xff]
  %v1111 = vld [vmem:[#allocation2 + $0x218] sm:$0xff]
  %v1112 = vld [vmem:[#allocation2 + $0x220] sm:$0xff]
  %v1113 = vld [vmem:[#allocation2 + $0x228] sm:$0xff]
  %v1114 = vld [vmem:[#allocation2 + $0x230] sm:$0xff]
  %v1115 = vld [vmem:[#allocation2 + $0x238] sm:$0xff]
  %v1116 = vld [vmem:[#allocation2 + $0x240] sm:$0xff]
  %v1117 = vld [vmem:[#allocation2 + $0x248] sm:$0xff]
  %v1118 = vld [vmem:[#allocation2 + $0x250] sm:$0xff]
  %v1119 = vld [vmem:[#allocation2 + $0x258] sm:$0xff]
  %v1120 = vld [vmem:[#allocation2 + $0x260] sm:$0xff]
  %v1121 = vld [vmem:[#allocation2 + $0x268] sm:$0xff]
  %v1122 = vld [vmem:[#allocation2 + $0x270] sm:$0xff]
  %v1123 = vld [vmem:[#allocation2 + $0x278] sm:$0xff]
  %v1124 = vld [vmem:[#allocation2 + $0x280] sm:$0xff]
  %v1125 = vld [vmem:[#allocation2 + $0x288] sm:$0xff]
  %v1126 = vld [vmem:[#allocation2 + $0x290] sm:$0xff]
  %v1127 = vld [vmem:[#allocation2 + $0x298] sm:$0xff]
  %v1128 = vld [vmem:[#allocation2 + $0x2a0] sm:$0xff]
  %v1129 = vld [vmem:[#allocation2 + $0x2a8] sm:$0xff]
  %v1130 = vld [vmem:[#allocation2 + $0x2b0] sm:$0xff]
  %v1131 = vld [vmem:[#allocation2 + $0x2b8] sm:$0xff]
  %v1132 = vld [vmem:[#allocation2 + $0x2c0] sm:$0xff]
  %v1133 = vld [vmem:[#allocation2 + $0x2c8] sm:$0xff]
  %v1134 = vld [vmem:[#allocation2 + $0x2d0] sm:$0xff]
  %v1135 = vld [vmem:[#allocation2 + $0x2d8] sm:$0xff]
  %v1136 = vld [vmem:[#allocation2 + $0x2e0] sm:$0xff]
  %v1137 = vld [vmem:[#allocation2 + $0x2e8] sm:$0xff]
  %v1138 = vld [vmem:[#allocation2 + $0x2f0] sm:$0xff]
  %v1139 = vld [vmem:[#allocation2 + $0x2f8] sm:$0xff]
  %v1140 = vld [vmem:[#allocation2 + $0x300] sm:$0xff]
  %v1141 = vld [vmem:[#allocation2 + $0x308] sm:$0xff]
  %v1142 = vld [vmem:[#allocation2 + $0x310] sm:$0xff]
  %v1143 = vld [vmem:[#allocation2 + $0x318] sm:$0xff]
  %v1144 = vld [vmem:[#allocation2 + $0x320] sm:$0xff]
  %v1145 = vld [vmem:[#allocation2 + $0x328] sm:$0xff]
  %v1146 = vld [vmem:[#allocation2 + $0x330] sm:$0xff]
  %v1147 = vld [vmem:[#allocation2 + $0x338] sm:$0xff]
  %v1148 = vld [vmem:[#allocation2 + $0x340] sm:$0xff]
  %v1149 = vld [vmem:[#allocation2 + $0x348] sm:$0xff]
  %v1150 = vld [vmem:[#allocation2 + $0x350] sm:$0xff]
  %v1151 = vld [vmem:[#allocation2 + $0x358] sm:$0xff]
  %v1152 = vld [vmem:[#allocation2 + $0x360] sm:$0xff]
  %v1153 = vld [vmem:[#allocation2 + $0x368] sm:$0xff]
  %v1154 = vld [vmem:[#allocation2 + $0x370] sm:$0xff]
  %v1155 = vld [vmem:[#allocation2 + $0x378] sm:$0xff]
  %v1156 = vld [vmem:[#allocation2 + $0x380] sm:$0xff]
  %v1157 = vld [vmem:[#allocation2 + $0x388] sm:$0xff]
  %v1158 = vld [vmem:[#allocation2 + $0x390] sm:$0xff]
  %v1159 = vld [vmem:[#allocation2 + $0x398] sm:$0xff]
  %v1160 = vld [vmem:[#allocation2 + $0x3a0] sm:$0xff]
  %v1161 = vld [vmem:[#allocation2 + $0x3a8] sm:$0xff]
  %v1162 = vld [vmem:[#allocation2 + $0x3b0] sm:$0xff]
  %v1163 = vld [vmem:[#allocation2 + $0x3b8] sm:$0xff]
  %v1164 = vld [vmem:[#allocation2 + $0x3c0] sm:$0xff]
  %v1165 = vld [vmem:[#allocation2 + $0x3c8] sm:$0xff]
  %v1166 = vld [vmem:[#allocation2 + $0x3d0] sm:$0xff]
  %v1167 = vld [vmem:[#allocation2 + $0x3d8] sm:$0xff]
  %v1168 = vld [vmem:[#allocation2 + $0x3e0] sm:$0xff]
  %v1169 = vld [vmem:[#allocation2 + $0x3e8] sm:$0xff]
  %v1170 = vld [vmem:[#allocation2 + $0x3f0] sm:$0xff]
  %v1171 = vld [vmem:[#allocation2 + $0x3f8] sm:$0xff]
  %v1172 = vld [vmem:[#allocation2 + $0x400] sm:$0xff]
  %v1173 = vld [vmem:[#allocation2 + $0x408] sm:$0xff]
  %v1174 = vld [vmem:[#allocation2 + $0x410] sm:$0xff]
  %v1175 = vld [vmem:[#allocation2 + $0x418] sm:$0xff]
  %v1176 = vld [vmem:[#allocation2 + $0x420] sm:$0xff]
  %v1177 = vld [vmem:[#allocation2 + $0x428] sm:$0xff]
  %v1178 = vld [vmem:[#allocation2 + $0x430] sm:$0xff]
  %v1179 = vld [vmem:[#allocation2 + $0x438] sm:$0xff]
  %v1180 = vld [vmem:[#allocation2 + $0x440] sm:$0xff]
  %v1181 = vld [vmem:[#allocation2 + $0x448] sm:$0xff]
  %v1182 = vld [vmem:[#allocation2 + $0x450] sm:$0xff]
  %v1183 = vld [vmem:[#allocation2 + $0x458] sm:$0xff]
  %v1184 = vld [vmem:[#allocation2 + $0x460] sm:$0xff]
  %v1185 = vld [vmem:[#allocation2 + $0x468] sm:$0xff]
  %v1186 = vld [vmem:[#allocation2 + $0x470] sm:$0xff]
  %v1187 = vld [vmem:[#allocation2 + $0x478] sm:$0xff]
  %v1188 = vld [vmem:[%s3] sm:$0xff]
  %v1189 = vld [vmem:[%s3 + $0x8] sm:$0xff]
  %v1190 = vld [vmem:[%s3 + $0x10] sm:$0xff]
  %v1191 = vld [vmem:[%s3 + $0x18] sm:$0xff]
  %v1192 = vld [vmem:[%s3 + $0x20] sm:$0xff]
  %v1193 = vld [vmem:[%s3 + $0x28] sm:$0xff]
  %s1194 = scalar_lea.vmem %s5, 16
  %v1195 = vld [vmem:[%s1194] sm:$0xff]
  %v1196 = vld [vmem:[%s1194 + $0x8] sm:$0xff]
  %1198 = vset.pattern.permute.xlu0 0
  %1199 = vperm.xlu0 %1198, %v1195
  %v1200 = vpop.permute.xlu0 %1199
  %1203 = vset.pattern.permute.xlu0 0
  %1204 = vperm.xlu0 %1203, %v1196
  %v1205 = vpop.permute.xlu0 %1204
  %vm1207 = vcmask 261120
  %v1209 = vsel %vm1207, %v1190, 0
  %v1212 = vsel %vm1207, %v1193, 0
  %1214 = vmatpush.msra.mxu0 %v1104
  %1215 = vmatpush.msra.mxu0 %v1100
  %1216 = vmatpush.msra.mxu0 %v1096
  %1217 = vmatpush.msra.mxu0 %v1092
  %1218 = vmatpush.msra.mxu0 %v1088
  %1219 = vmatpush.msra.mxu0 %v1084
  %1220 = vmatpush.msra.mxu0 %v1080
  %1221 = vmatpush.msra.mxu0 %v1076
  %1222 = vmatpush.msra.mxu0 %v1072
  %1223 = vmatpush.msra.mxu0 %v1068
  %1224 = vmatpush.msra.mxu0 %v1064
  %1225 = vmatpush.msra.mxu0 %v1060
  %1226 = vmatpush.msra.mxu0 %v1056
  %1227 = vmatpush.msra.mxu0 %v1052
  %1228 = vmatpush.msra.mxu0 %v1048
  %1229 = vmatpush.msra.mxu0 %v1044
  %1230 = vmatmul.f32.gmra.mxu0 %v1188
  %v1231 = vpop.f32.mrf.mxu0
  %v1232 = vadd.f32 %v1200, %v1231
  %1233 = vmatmul.f32.gmra.mxu0 %v1191
  %v1234 = vpop.f32.mrf.mxu0
  %v1235 = vadd.f32 %v1205, %v1234
  %1236 = vdwg.mxu0
  %1237 = vmatpush.msra.mxu0 %v1168
  %1238 = vmatpush.msra.mxu0 %v1164
  %1239 = vmatpush.msra.mxu0 %v1160
  %1240 = vmatpush.msra.mxu0 %v1156
  %1241 = vmatpush.msra.mxu0 %v1152
  %1242 = vmatpush.msra.mxu0 %v1148
  %1243 = vmatpush.msra.mxu0 %v1144
  %1244 = vmatpush.msra.mxu0 %v1140
  %1245 = vmatpush.msra.mxu0 %v1136
  %1246 = vmatpush.msra.mxu0 %v1132
  %1247 = vmatpush.msra.mxu0 %v1128
  %1248 = vmatpush.msra.mxu0 %v1124
  %1249 = vmatpush.msra.mxu0 %v1120
  %1250 = vmatpush.msra.mxu0 %v1116
  %1251 = vmatpush.msra.mxu0 %v1112
  %1252 = vmatpush.msra.mxu0 %v1108
  %1253 = vmatmul.f32.gmra.mxu0 %v1189
  %v1254 = vpop.f32.mrf.mxu0
  %v1255 = vadd.f32 %v1232, %v1254
  %1256 = vmatmul.f32.gmra.mxu0 %v1192
  %v1257 = vpop.f32.mrf.mxu0
  %v1258 = vadd.f32 %v1235, %v1257
  %1259 = vdwg.mxu0
  %1260 = vmatpush.msra.mxu0 0.0
  %1261 = vmatpush.msra.mxu0 0.0
  %1262 = vmatpush.msra.mxu0 0.0
  %1263 = vmatpush.msra.mxu0 0.0
  %1264 = vmatpush.msra.mxu0 0.0
  %1265 = vmatpush.msra.mxu0 0.0
  %1266 = vmatpush.msra.mxu0 0.0
  %1267 = vmatpush.msra.mxu0 0.0
  %1268 = vmatpush.msra.mxu0 0.0
  %1269 = vmatpush.msra.mxu0 0.0
  %1270 = vmatpush.msra.mxu0 0.0
  %1271 = vmatpush.msra.mxu0 0.0
  %1272 = vmatpush.msra.mxu0 %v1184
  %1273 = vmatpush.msra.mxu0 %v1180
  %1274 = vmatpush.msra.mxu0 %v1176
  %1275 = vmatpush.msra.mxu0 %v1172
  %1276 = vmatmul.f32.gmra.mxu0 %v1209
  %v1277 = vpop.f32.mrf.mxu0
  %v1278 = vadd.f32 %v1255, %v1277
  %1279 = vmatmul.f32.gmra.mxu0 %v1212
  %v1280 = vpop.f32.mrf.mxu0
  %v1281 = vadd.f32 %v1258, %v1280
  %1282 = vdwg.mxu0
  %1283 = vmatpush.msra.mxu0 %v1105
  %1284 = vmatpush.msra.mxu0 %v1101
  %1285 = vmatpush.msra.mxu0 %v1097
  %1286 = vmatpush.msra.mxu0 %v1093
  %1287 = vmatpush.msra.mxu0 %v1089
  %1288 = vmatpush.msra.mxu0 %v1085
  %1289 = vmatpush.msra.mxu0 %v1081
  %1290 = vmatpush.msra.mxu0 %v1077
  %1291 = vmatpush.msra.mxu0 %v1073
  %1292 = vmatpush.msra.mxu0 %v1069
  %1293 = vmatpush.msra.mxu0 %v1065
  %1294 = vmatpush.msra.mxu0 %v1061
  %1295 = vmatpush.msra.mxu0 %v1057
  %1296 = vmatpush.msra.mxu0 %v1053
  %1297 = vmatpush.msra.mxu0 %v1049
  %1298 = vmatpush.msra.mxu0 %v1045
  %1299 = vmatmul.f32.gmra.mxu0 %v1188
  %v1300 = vpop.f32.mrf.mxu0
  %v1301 = vadd.f32 %v1200, %v1300
  %1302 = vmatmul.f32.gmra.mxu0 %v1191
  %v1303 = vpop.f32.mrf.mxu0
  %v1304 = vadd.f32 %v1205, %v1303
  %1305 = vdwg.mxu0
  %1306 = vmatpush.msra.mxu0 %v1169
  %1307 = vmatpush.msra.mxu0 %v1165
  %1308 = vmatpush.msra.mxu0 %v1161
  %1309 = vmatpush.msra.mxu0 %v1157
  %1310 = vmatpush.msra.mxu0 %v1153
  %1311 = vmatpush.msra.mxu0 %v1149
  %1312 = vmatpush.msra.mxu0 %v1145
  %1313 = vmatpush.msra.mxu0 %v1141
  %1314 = vmatpush.msra.mxu0 %v1137
  %1315 = vmatpush.msra.mxu0 %v1133
  %1316 = vmatpush.msra.mxu0 %v1129
  %1317 = vmatpush.msra.mxu0 %v1125
  %1318 = vmatpush.msra.mxu0 %v1121
  %1319 = vmatpush.msra.mxu0 %v1117
  %1320 = vmatpush.msra.mxu0 %v1113
  %1321 = vmatpush.msra.mxu0 %v1109
  %1322 = vmatmul.f32.gmra.mxu0 %v1189
  %v1323 = vpop.f32.mrf.mxu0
  %v1324 = vadd.f32 %v1301, %v1323
  %1325 = vmatmul.f32.gmra.mxu0 %v1192
  %v1326 = vpop.f32.mrf.mxu0
  %v1327 = vadd.f32 %v1304, %v1326
  %1328 = vdwg.mxu0
  %1329 = vmatpush.msra.mxu0 0.0
  %1330 = vmatpush.msra.mxu0 0.0
  %1331 = vmatpush.msra.mxu0 0.0
  %1332 = vmatpush.msra.mxu0 0.0
  %1333 = vmatpush.msra.mxu0 0.0
  %1334 = vmatpush.msra.mxu0 0.0
  %1335 = vmatpush.msra.mxu0 0.0
  %1336 = vmatpush.msra.mxu0 0.0
  %1337 = vmatpush.msra.mxu0 0.0
  %1338 = vmatpush.msra.mxu0 0.0
  %1339 = vmatpush.msra.mxu0 0.0
  %1340 = vmatpush.msra.mxu0 0.0
  %1341 = vmatpush.msra.mxu0 %v1185
  %1342 = vmatpush.msra.mxu0 %v1181
  %1343 = vmatpush.msra.mxu0 %v1177
  %1344 = vmatpush.msra.mxu0 %v1173
  %1345 = vmatmul.f32.gmra.mxu0 %v1209
  %v1346 = vpop.f32.mrf.mxu0
  %v1347 = vadd.f32 %v1324, %v1346
  %1348 = vmatmul.f32.gmra.mxu0 %v1212
  %v1349 = vpop.f32.mrf.mxu0
  %v1350 = vadd.f32 %v1327, %v1349
  %1351 = vdwg.mxu0
  %1352 = vmatpush.msra.mxu0 %v1106
  %1353 = vmatpush.msra.mxu0 %v1102
  %1354 = vmatpush.msra.mxu0 %v1098
  %1355 = vmatpush.msra.mxu0 %v1094
  %1356 = vmatpush.msra.mxu0 %v1090
  %1357 = vmatpush.msra.mxu0 %v1086
  %1358 = vmatpush.msra.mxu0 %v1082
  %1359 = vmatpush.msra.mxu0 %v1078
  %1360 = vmatpush.msra.mxu0 %v1074
  %1361 = vmatpush.msra.mxu0 %v1070
  %1362 = vmatpush.msra.mxu0 %v1066
  %1363 = vmatpush.msra.mxu0 %v1062
  %1364 = vmatpush.msra.mxu0 %v1058
  %1365 = vmatpush.msra.mxu0 %v1054
  %1366 = vmatpush.msra.mxu0 %v1050
  %1367 = vmatpush.msra.mxu0 %v1046
  %1368 = vmatmul.f32.gmra.mxu0 %v1188
  %v1369 = vpop.f32.mrf.mxu0
  %v1370 = vadd.f32 %v1200, %v1369
  %1371 = vmatmul.f32.gmra.mxu0 %v1191
  %v1372 = vpop.f32.mrf.mxu0
  %v1373 = vadd.f32 %v1205, %v1372
  %1374 = vdwg.mxu0
  %1375 = vmatpush.msra.mxu0 %v1170
  %1376 = vmatpush.msra.mxu0 %v1166
  %1377 = vmatpush.msra.mxu0 %v1162
  %1378 = vmatpush.msra.mxu0 %v1158
  %1379 = vmatpush.msra.mxu0 %v1154
  %1380 = vmatpush.msra.mxu0 %v1150
  %1381 = vmatpush.msra.mxu0 %v1146
  %1382 = vmatpush.msra.mxu0 %v1142
  %1383 = vmatpush.msra.mxu0 %v1138
  %1384 = vmatpush.msra.mxu0 %v1134
  %1385 = vmatpush.msra.mxu0 %v1130
  %1386 = vmatpush.msra.mxu0 %v1126
  %1387 = vmatpush.msra.mxu0 %v1122
  %1388 = vmatpush.msra.mxu0 %v1118
  %1389 = vmatpush.msra.mxu0 %v1114
  %1390 = vmatpush.msra.mxu0 %v1110
  %1391 = vmatmul.f32.gmra.mxu0 %v1189
  %v1392 = vpop.f32.mrf.mxu0
  %v1393 = vadd.f32 %v1370, %v1392
  %1394 = vmatmul.f32.gmra.mxu0 %v1192
  %v1395 = vpop.f32.mrf.mxu0
  %v1396 = vadd.f32 %v1373, %v1395
  %1397 = vdwg.mxu0
  %1398 = vmatpush.msra.mxu0 0.0
  %1399 = vmatpush.msra.mxu0 0.0
  %1400 = vmatpush.msra.mxu0 0.0
  %1401 = vmatpush.msra.mxu0 0.0
  %1402 = vmatpush.msra.mxu0 0.0
  %1403 = vmatpush.msra.mxu0 0.0
  %1404 = vmatpush.msra.mxu0 0.0
  %1405 = vmatpush.msra.mxu0 0.0
  %1406 = vmatpush.msra.mxu0 0.0
  %1407 = vmatpush.msra.mxu0 0.0
  %1408 = vmatpush.msra.mxu0 0.0
  %1409 = vmatpush.msra.mxu0 0.0
  %1410 = vmatpush.msra.mxu0 %v1186
  %1411 = vmatpush.msra.mxu0 %v1182
  %1412 = vmatpush.msra.mxu0 %v1178
  %1413 = vmatpush.msra.mxu0 %v1174
  %1414 = vmatmul.f32.gmra.mxu0 %v1209
  %v1415 = vpop.f32.mrf.mxu0
  %v1416 = vadd.f32 %v1393, %v1415
  %1417 = vmatmul.f32.gmra.mxu0 %v1212
  %v1418 = vpop.f32.mrf.mxu0
  %v1419 = vadd.f32 %v1396, %v1418
  %1420 = vdwg.mxu0
  %1421 = vmatpush.msra.mxu0 %v1107
  %1422 = vmatpush.msra.mxu0 %v1103
  %1423 = vmatpush.msra.mxu0 %v1099
  %1424 = vmatpush.msra.mxu0 %v1095
  %1425 = vmatpush.msra.mxu0 %v1091
  %1426 = vmatpush.msra.mxu0 %v1087
  %1427 = vmatpush.msra.mxu0 %v1083
  %1428 = vmatpush.msra.mxu0 %v1079
  %1429 = vmatpush.msra.mxu0 %v1075
  %1430 = vmatpush.msra.mxu0 %v1071
  %1431 = vmatpush.msra.mxu0 %v1067
  %1432 = vmatpush.msra.mxu0 %v1063
  %1433 = vmatpush.msra.mxu0 %v1059
  %1434 = vmatpush.msra.mxu0 %v1055
  %1435 = vmatpush.msra.mxu0 %v1051
  %1436 = vmatpush.msra.mxu0 %v1047
  %1437 = vmatmul.f32.gmra.mxu0 %v1188
  %v1438 = vpop.f32.mrf.mxu0
  %v1439 = vadd.f32 %v1200, %v1438
  %1440 = vmatmul.f32.gmra.mxu0 %v1191
  %v1441 = vpop.f32.mrf.mxu0
  %v1442 = vadd.f32 %v1205, %v1441
  %1443 = vdwg.mxu0
  %1444 = vmatpush.msra.mxu0 %v1171
  %1445 = vmatpush.msra.mxu0 %v1167
  %1446 = vmatpush.msra.mxu0 %v1163
  %1447 = vmatpush.msra.mxu0 %v1159
  %1448 = vmatpush.msra.mxu0 %v1155
  %1449 = vmatpush.msra.mxu0 %v1151
  %1450 = vmatpush.msra.mxu0 %v1147
  %1451 = vmatpush.msra.mxu0 %v1143
  %1452 = vmatpush.msra.mxu0 %v1139
  %1453 = vmatpush.msra.mxu0 %v1135
  %1454 = vmatpush.msra.mxu0 %v1131
  %1455 = vmatpush.msra.mxu0 %v1127
  %1456 = vmatpush.msra.mxu0 %v1123
  %1457 = vmatpush.msra.mxu0 %v1119
  %1458 = vmatpush.msra.mxu0 %v1115
  %1459 = vmatpush.msra.mxu0 %v1111
  %1460 = vmatmul.f32.gmra.mxu0 %v1189
  %v1461 = vpop.f32.mrf.mxu0
  %v1462 = vadd.f32 %v1439, %v1461
  %1463 = vmatmul.f32.gmra.mxu0 %v1192
  %v1464 = vpop.f32.mrf.mxu0
  %v1465 = vadd.f32 %v1442, %v1464
  %1466 = vdwg.mxu0
  %1467 = vmatpush.msra.mxu0 0.0
  %1468 = vmatpush.msra.mxu0 0.0
  %1469 = vmatpush.msra.mxu0 0.0
  %1470 = vmatpush.msra.mxu0 0.0
  %1471 = vmatpush.msra.mxu0 0.0
  %1472 = vmatpush.msra.mxu0 0.0
  %1473 = vmatpush.msra.mxu0 0.0
  %1474 = vmatpush.msra.mxu0 0.0
  %1475 = vmatpush.msra.mxu0 0.0
  %1476 = vmatpush.msra.mxu0 0.0
  %1477 = vmatpush.msra.mxu0 0.0
  %1478 = vmatpush.msra.mxu0 0.0
  %1479 = vmatpush.msra.mxu0 %v1187
  %1480 = vmatpush.msra.mxu0 %v1183
  %1481 = vmatpush.msra.mxu0 %v1179
  %1482 = vmatpush.msra.mxu0 %v1175
  %1483 = vmatmul.f32.gmra.mxu0 %v1209
  %v1484 = vpop.f32.mrf.mxu0
  %v1485 = vadd.f32 %v1462, %v1484
  %1486 = vmatmul.f32.gmra.mxu0 %v1212
  %v1487 = vpop.f32.mrf.mxu0
  %v1488 = vadd.f32 %v1465, %v1487
  %1489 = vdwg.mxu0
  %v1490 = vmax.f32 %v1278, 0.0
  %v1491 = vmax.f32 %v1347, 0.0
  %v1492 = vmax.f32 %v1416, 0.0
  %v1493 = vmax.f32 %v1485, 0.0
  %v1494 = vmax.f32 %v1281, 0.0
  %v1495 = vmax.f32 %v1350, 0.0
  %v1496 = vmax.f32 %v1419, 0.0
  %v1497 = vmax.f32 %v1488, 0.0
  %1498 = vrot.lane.b32.xlu0 %v1490, 17
  %v1499 = vpop.permute.xlu0 %1498
  %1500 = vrot.lane.b32.xlu0 %v1494, 17
  %v1501 = vpop.permute.xlu0 %1500
  %1502 = vrot.lane.b32.xlu0 %v1491, 17
  %v1503 = vpop.permute.xlu0 %1502
  %1504 = vrot.lane.b32.xlu0 %v1495, 17
  %v1505 = vpop.permute.xlu0 %1504
  %1506 = vrot.lane.b32.xlu0 %v1492, 17
  %v1507 = vpop.permute.xlu0 %1506
  %1508 = vrot.lane.b32.xlu0 %v1496, 17
  %v1509 = vpop.permute.xlu0 %1508
  %1510 = vrot.lane.b32.xlu0 %v1493, 17
  %v1511 = vpop.permute.xlu0 %1510
  %1512 = vrot.lane.b32.xlu0 %v1497, 17
  %v1513 = vpop.permute.xlu0 %1512
  %v1514 = vsel %vm77, %v1507, %v1511
  %v1515 = vsel %vm77, %v1509, %v1513
  %v1516 = vsel %vm77, %v1503, %v1507
  %v1517 = vsel %vm77, %v1505, %v1509
  %v1518 = vsel %vm77, %v1499, %v1503
  %v1519 = vsel %vm77, %v1501, %v1505
  %v1520 = vsel %vm77, %v1511, %v1499
  %v1521 = vsel %vm77, %v1513, %v1501
  %v1522 = vmul.f32 %v1520, %v86
  %v1523 = vmul.f32 %v1518, %v87
  %v1524 = vmul.f32 %v1516, %v88
  %v1525 = vmul.f32 %v1514, %v89
  %v1526 = vmul.f32 %v1521, %v86
  %v1527 = vmul.f32 %v1519, %v87
  %v1528 = vmul.f32 %v1517, %v88
  %v1529 = vmul.f32 %v1515, %v89
  %1530 = vst [vmem:[#allocation2 + $0x480] sm:$0xff] %v1522
  %1531 = vst [vmem:[#allocation2 + $0x488] sm:$0xff] %v1523
  %1532 = vst [vmem:[#allocation2 + $0x490] sm:$0xff] %v1524
  %1533 = vst [vmem:[#allocation2 + $0x498] sm:$0xff] %v1525
  %1534 = vst [vmem:[#allocation2 + $0x4a0] sm:$0xff] %v1526
  %1535 = vst [vmem:[#allocation2 + $0x4a8] sm:$0xff] %v1527
  %1536 = vst [vmem:[#allocation2 + $0x4b0] sm:$0xff] %v1528
  %1537 = vst [vmem:[#allocation2 + $0x4b8] sm:$0xff] %v1529
  %1538 = vrot.lane.b32.xlu0 %v1490, 16
  %v1539 = vpop.permute.xlu0 %1538
  %1540 = vrot.lane.b32.xlu0 %v1494, 16
  %v1541 = vpop.permute.xlu0 %1540
  %1542 = vrot.lane.b32.xlu0 %v1491, 16
  %v1543 = vpop.permute.xlu0 %1542
  %1544 = vrot.lane.b32.xlu0 %v1495, 16
  %v1545 = vpop.permute.xlu0 %1544
  %1546 = vrot.lane.b32.xlu0 %v1492, 16
  %v1547 = vpop.permute.xlu0 %1546
  %1548 = vrot.lane.b32.xlu0 %v1496, 16
  %v1549 = vpop.permute.xlu0 %1548
  %1550 = vrot.lane.b32.xlu0 %v1493, 16
  %v1551 = vpop.permute.xlu0 %1550
  %1552 = vrot.lane.b32.xlu0 %v1497, 16
  %v1553 = vpop.permute.xlu0 %1552
  %v1554 = vsel %vm122, %v1547, %v1551
  %v1555 = vsel %vm122, %v1549, %v1553
  %v1556 = vsel %vm122, %v1543, %v1547
  %v1557 = vsel %vm122, %v1545, %v1549
  %v1558 = vsel %vm122, %v1539, %v1543
  %v1559 = vsel %vm122, %v1541, %v1545
  %v1560 = vsel %vm122, %v1551, %v1539
  %v1561 = vsel %vm122, %v1553, %v1541
  %v1562 = vmul.f32 %v1560, %v131
  %v1563 = vmul.f32 %v1558, %v132
  %v1564 = vmul.f32 %v1556, %v133
  %v1565 = vmul.f32 %v1554, %v134
  %v1566 = vmul.f32 %v1561, %v131
  %v1567 = vmul.f32 %v1559, %v132
  %v1568 = vmul.f32 %v1557, %v133
  %v1569 = vmul.f32 %v1555, %v134
  %1570 = vst [vmem:[#allocation2 + $0x4c0] sm:$0xff] %v1562
  %1571 = vst [vmem:[#allocation2 + $0x4c8] sm:$0xff] %v1563
  %1572 = vst [vmem:[#allocation2 + $0x4d0] sm:$0xff] %v1564
  %1573 = vst [vmem:[#allocation2 + $0x4d8] sm:$0xff] %v1565
  %1574 = vst [vmem:[#allocation2 + $0x4e0] sm:$0xff] %v1566
  %1575 = vst [vmem:[#allocation2 + $0x4e8] sm:$0xff] %v1567
  %1576 = vst [vmem:[#allocation2 + $0x4f0] sm:$0xff] %v1568
  %1577 = vst [vmem:[#allocation2 + $0x4f8] sm:$0xff] %v1569
  %1578 = vrot.lane.b32.xlu0 %v1490, 15
  %v1579 = vpop.permute.xlu0 %1578
  %1580 = vrot.lane.b32.xlu0 %v1494, 15
  %v1581 = vpop.permute.xlu0 %1580
  %1582 = vrot.lane.b32.xlu0 %v1491, 15
  %v1583 = vpop.permute.xlu0 %1582
  %1584 = vrot.lane.b32.xlu0 %v1495, 15
  %v1585 = vpop.permute.xlu0 %1584
  %1586 = vrot.lane.b32.xlu0 %v1492, 15
  %v1587 = vpop.permute.xlu0 %1586
  %1588 = vrot.lane.b32.xlu0 %v1496, 15
  %v1589 = vpop.permute.xlu0 %1588
  %1590 = vrot.lane.b32.xlu0 %v1493, 15
  %v1591 = vpop.permute.xlu0 %1590
  %1592 = vrot.lane.b32.xlu0 %v1497, 15
  %v1593 = vpop.permute.xlu0 %1592
  %v1594 = vsel %vm167, %v1587, %v1591
  %v1595 = vsel %vm167, %v1589, %v1593
  %v1596 = vsel %vm167, %v1583, %v1587
  %v1597 = vsel %vm167, %v1585, %v1589
  %v1598 = vsel %vm167, %v1579, %v1583
  %v1599 = vsel %vm167, %v1581, %v1585
  %v1600 = vsel %vm167, %v1591, %v1579
  %v1601 = vsel %vm167, %v1593, %v1581
  %v1602 = vmul.f32 %v1600, %v176
  %v1603 = vmul.f32 %v1598, %v177
  %v1604 = vmul.f32 %v1596, %v178
  %v1605 = vmul.f32 %v1594, %v179
  %v1606 = vmul.f32 %v1601, %v176
  %v1607 = vmul.f32 %v1599, %v177
  %v1608 = vmul.f32 %v1597, %v178
  %v1609 = vmul.f32 %v1595, %v179
  %1610 = vst [vmem:[#allocation2 + $0x500] sm:$0xff] %v1602
  %1611 = vst [vmem:[#allocation2 + $0x508] sm:$0xff] %v1603
  %1612 = vst [vmem:[#allocation2 + $0x510] sm:$0xff] %v1604
  %1613 = vst [vmem:[#allocation2 + $0x518] sm:$0xff] %v1605
  %1614 = vst [vmem:[#allocation2 + $0x520] sm:$0xff] %v1606
  %1615 = vst [vmem:[#allocation2 + $0x528] sm:$0xff] %v1607
  %1616 = vst [vmem:[#allocation2 + $0x530] sm:$0xff] %v1608
  %1617 = vst [vmem:[#allocation2 + $0x538] sm:$0xff] %v1609
  %1618 = vrot.lane.b32.xlu0 %v1490, 1
  %v1619 = vpop.permute.xlu0 %1618
  %1620 = vrot.lane.b32.xlu0 %v1494, 1
  %v1621 = vpop.permute.xlu0 %1620
  %1622 = vrot.lane.b32.xlu0 %v1491, 1
  %v1623 = vpop.permute.xlu0 %1622
  %1624 = vrot.lane.b32.xlu0 %v1495, 1
  %v1625 = vpop.permute.xlu0 %1624
  %1626 = vrot.lane.b32.xlu0 %v1492, 1
  %v1627 = vpop.permute.xlu0 %1626
  %1628 = vrot.lane.b32.xlu0 %v1496, 1
  %v1629 = vpop.permute.xlu0 %1628
  %1630 = vrot.lane.b32.xlu0 %v1493, 1
  %v1631 = vpop.permute.xlu0 %1630
  %1632 = vrot.lane.b32.xlu0 %v1497, 1
  %v1633 = vpop.permute.xlu0 %1632
  %v1634 = vsel %vm212, %v1627, %v1631
  %v1635 = vsel %vm212, %v1629, %v1633
  %v1636 = vsel %vm212, %v1623, %v1627
  %v1637 = vsel %vm212, %v1625, %v1629
  %v1638 = vsel %vm212, %v1619, %v1623
  %v1639 = vsel %vm212, %v1621, %v1625
  %v1640 = vsel %vm212, %v1631, %v1619
  %v1641 = vsel %vm212, %v1633, %v1621
  %v1642 = vmul.f32 %v1640, %v221
  %v1643 = vmul.f32 %v1638, %v222
  %v1644 = vmul.f32 %v1636, %v223
  %v1645 = vmul.f32 %v1634, %v224
  %v1646 = vmul.f32 %v1641, %v221
  %v1647 = vmul.f32 %v1639, %v222
  %v1648 = vmul.f32 %v1637, %v223
  %v1649 = vmul.f32 %v1635, %v224
  %1650 = vst [vmem:[#allocation2 + $0x540] sm:$0xff] %v1642
  %1651 = vst [vmem:[#allocation2 + $0x548] sm:$0xff] %v1643
  %1652 = vst [vmem:[#allocation2 + $0x550] sm:$0xff] %v1644
  %1653 = vst [vmem:[#allocation2 + $0x558] sm:$0xff] %v1645
  %1654 = vst [vmem:[#allocation2 + $0x560] sm:$0xff] %v1646
  %1655 = vst [vmem:[#allocation2 + $0x568] sm:$0xff] %v1647
  %1656 = vst [vmem:[#allocation2 + $0x570] sm:$0xff] %v1648
  %1657 = vst [vmem:[#allocation2 + $0x578] sm:$0xff] %v1649
  %1658 = vst [vmem:[#allocation2 + $0x580] sm:$0xff] %v1490
  %1659 = vst [vmem:[#allocation2 + $0x588] sm:$0xff] %v1491
  %1660 = vst [vmem:[#allocation2 + $0x590] sm:$0xff] %v1492
  %1661 = vst [vmem:[#allocation2 + $0x598] sm:$0xff] %v1493
  %1662 = vst [vmem:[#allocation2 + $0x5a0] sm:$0xff] %v1494
  %1663 = vst [vmem:[#allocation2 + $0x5a8] sm:$0xff] %v1495
  %1664 = vst [vmem:[#allocation2 + $0x5b0] sm:$0xff] %v1496
  %1665 = vst [vmem:[#allocation2 + $0x5b8] sm:$0xff] %v1497
  %1666 = vrot.lane.b32.xlu0 %v1490, 127
  %v1667 = vpop.permute.xlu0 %1666
  %1668 = vrot.lane.b32.xlu0 %v1494, 127
  %v1669 = vpop.permute.xlu0 %1668
  %1670 = vrot.lane.b32.xlu0 %v1491, 127
  %v1671 = vpop.permute.xlu0 %1670
  %1672 = vrot.lane.b32.xlu0 %v1495, 127
  %v1673 = vpop.permute.xlu0 %1672
  %1674 = vrot.lane.b32.xlu0 %v1492, 127
  %v1675 = vpop.permute.xlu0 %1674
  %1676 = vrot.lane.b32.xlu0 %v1496, 127
  %v1677 = vpop.permute.xlu0 %1676
  %1678 = vrot.lane.b32.xlu0 %v1493, 127
  %v1679 = vpop.permute.xlu0 %1678
  %1680 = vrot.lane.b32.xlu0 %v1497, 127
  %v1681 = vpop.permute.xlu0 %1680
  %v1682 = vsel %vm265, %v1675, %v1679
  %v1683 = vsel %vm265, %v1677, %v1681
  %v1684 = vsel %vm265, %v1671, %v1675
  %v1685 = vsel %vm265, %v1673, %v1677
  %v1686 = vsel %vm265, %v1667, %v1671
  %v1687 = vsel %vm265, %v1669, %v1673
  %v1688 = vsel %vm265, %v1679, %v1667
  %v1689 = vsel %vm265, %v1681, %v1669
  %v1690 = vmul.f32 %v1686, %v274
  %v1691 = vmul.f32 %v1684, %v275
  %v1692 = vmul.f32 %v1682, %v276
  %v1693 = vmul.f32 %v1688, %v277
  %v1694 = vmul.f32 %v1687, %v274
  %v1695 = vmul.f32 %v1685, %v275
  %v1696 = vmul.f32 %v1683, %v276
  %v1697 = vmul.f32 %v1689, %v277
  %1698 = vst [vmem:[#allocation2 + $0x5c0] sm:$0xff] %v1690
  %1699 = vst [vmem:[#allocation2 + $0x5c8] sm:$0xff] %v1691
  %1700 = vst [vmem:[#allocation2 + $0x5d0] sm:$0xff] %v1692
  %1701 = vst [vmem:[#allocation2 + $0x5d8] sm:$0xff] %v1693
  %1702 = vst [vmem:[#allocation2 + $0x5e0] sm:$0xff] %v1694
  %1703 = vst [vmem:[#allocation2 + $0x5e8] sm:$0xff] %v1695
  %1704 = vst [vmem:[#allocation2 + $0x5f0] sm:$0xff] %v1696
  %1705 = vst [vmem:[#allocation2 + $0x5f8] sm:$0xff] %v1697
  %1706 = vrot.lane.b32.xlu0 %v1490, 113
  %v1707 = vpop.permute.xlu0 %1706
  %1708 = vrot.lane.b32.xlu0 %v1494, 113
  %v1709 = vpop.permute.xlu0 %1708
  %1710 = vrot.lane.b32.xlu0 %v1491, 113
  %v1711 = vpop.permute.xlu0 %1710
  %1712 = vrot.lane.b32.xlu0 %v1495, 113
  %v1713 = vpop.permute.xlu0 %1712
  %1714 = vrot.lane.b32.xlu0 %v1492, 113
  %v1715 = vpop.permute.xlu0 %1714
  %1716 = vrot.lane.b32.xlu0 %v1496, 113
  %v1717 = vpop.permute.xlu0 %1716
  %1718 = vrot.lane.b32.xlu0 %v1493, 113
  %v1719 = vpop.permute.xlu0 %1718
  %1720 = vrot.lane.b32.xlu0 %v1497, 113
  %v1721 = vpop.permute.xlu0 %1720
  %v1722 = vsel %vm310, %v1715, %v1719
  %v1723 = vsel %vm310, %v1717, %v1721
  %v1724 = vsel %vm310, %v1711, %v1715
  %v1725 = vsel %vm310, %v1713, %v1717
  %v1726 = vsel %vm310, %v1707, %v1711
  %v1727 = vsel %vm310, %v1709, %v1713
  %v1728 = vsel %vm310, %v1719, %v1707
  %v1729 = vsel %vm310, %v1721, %v1709
  %v1730 = vmul.f32 %v1726, %v319
  %v1731 = vmul.f32 %v1724, %v320
  %v1732 = vmul.f32 %v1722, %v321
  %v1733 = vmul.f32 %v1728, %v322
  %v1734 = vmul.f32 %v1727, %v319
  %v1735 = vmul.f32 %v1725, %v320
  %v1736 = vmul.f32 %v1723, %v321
  %v1737 = vmul.f32 %v1729, %v322
  %1738 = vst [vmem:[#allocation2 + $0x600] sm:$0xff] %v1730
  %1739 = vst [vmem:[#allocation2 + $0x608] sm:$0xff] %v1731
  %1740 = vst [vmem:[#allocation2 + $0x610] sm:$0xff] %v1732
  %1741 = vst [vmem:[#allocation2 + $0x618] sm:$0xff] %v1733
  %1742 = vst [vmem:[#allocation2 + $0x620] sm:$0xff] %v1734
  %1743 = vst [vmem:[#allocation2 + $0x628] sm:$0xff] %v1735
  %1744 = vst [vmem:[#allocation2 + $0x630] sm:$0xff] %v1736
  %1745 = vst [vmem:[#allocation2 + $0x638] sm:$0xff] %v1737
  %1746 = vrot.lane.b32.xlu0 %v1490, 112
  %v1747 = vpop.permute.xlu0 %1746
  %1748 = vrot.lane.b32.xlu0 %v1494, 112
  %v1749 = vpop.permute.xlu0 %1748
  %1750 = vrot.lane.b32.xlu0 %v1491, 112
  %v1751 = vpop.permute.xlu0 %1750
  %1752 = vrot.lane.b32.xlu0 %v1495, 112
  %v1753 = vpop.permute.xlu0 %1752
  %1754 = vrot.lane.b32.xlu0 %v1492, 112
  %v1755 = vpop.permute.xlu0 %1754
  %1756 = vrot.lane.b32.xlu0 %v1496, 112
  %v1757 = vpop.permute.xlu0 %1756
  %1758 = vrot.lane.b32.xlu0 %v1493, 112
  %v1759 = vpop.permute.xlu0 %1758
  %1760 = vrot.lane.b32.xlu0 %v1497, 112
  %v1761 = vpop.permute.xlu0 %1760
  %v1762 = vsel %vm355, %v1755, %v1759
  %v1763 = vsel %vm355, %v1757, %v1761
  %v1764 = vsel %vm355, %v1751, %v1755
  %v1765 = vsel %vm355, %v1753, %v1757
  %v1766 = vsel %vm355, %v1747, %v1751
  %v1767 = vsel %vm355, %v1749, %v1753
  %v1768 = vsel %vm355, %v1759, %v1747
  %v1769 = vsel %vm355, %v1761, %v1749
  %v1770 = vmul.f32 %v1766, %v364
  %v1771 = vmul.f32 %v1764, %v365
  %v1772 = vmul.f32 %v1762, %v366
  %v1773 = vmul.f32 %v1768, %v367
  %v1774 = vmul.f32 %v1767, %v364
  %v1775 = vmul.f32 %v1765, %v365
  %v1776 = vmul.f32 %v1763, %v366
  %v1777 = vmul.f32 %v1769, %v367
  %1778 = vst [vmem:[#allocation2 + $0x640] sm:$0xff] %v1770
  %1779 = vst [vmem:[#allocation2 + $0x648] sm:$0xff] %v1771
  %1780 = vst [vmem:[#allocation2 + $0x650] sm:$0xff] %v1772
  %1781 = vst [vmem:[#allocation2 + $0x658] sm:$0xff] %v1773
  %1782 = vst [vmem:[#allocation2 + $0x660] sm:$0xff] %v1774
  %1783 = vst [vmem:[#allocation2 + $0x668] sm:$0xff] %v1775
  %1784 = vst [vmem:[#allocation2 + $0x670] sm:$0xff] %v1776
  %1785 = vst [vmem:[#allocation2 + $0x678] sm:$0xff] %v1777
  %1786 = vrot.lane.b32.xlu0 %v1490, 111
  %v1787 = vpop.permute.xlu0 %1786
  %1788 = vrot.lane.b32.xlu0 %v1494, 111
  %v1789 = vpop.permute.xlu0 %1788
  %1790 = vrot.lane.b32.xlu0 %v1491, 111
  %v1791 = vpop.permute.xlu0 %1790
  %1792 = vrot.lane.b32.xlu0 %v1495, 111
  %v1793 = vpop.permute.xlu0 %1792
  %1794 = vrot.lane.b32.xlu0 %v1492, 111
  %v1795 = vpop.permute.xlu0 %1794
  %1796 = vrot.lane.b32.xlu0 %v1496, 111
  %v1797 = vpop.permute.xlu0 %1796
  %1798 = vrot.lane.b32.xlu0 %v1493, 111
  %v1799 = vpop.permute.xlu0 %1798
  %1800 = vrot.lane.b32.xlu0 %v1497, 111
  %v1801 = vpop.permute.xlu0 %1800
  %v1802 = vsel %vm400, %v1795, %v1799
  %v1803 = vsel %vm400, %v1797, %v1801
  %v1804 = vsel %vm400, %v1791, %v1795
  %v1805 = vsel %vm400, %v1793, %v1797
  %v1806 = vsel %vm400, %v1787, %v1791
  %v1807 = vsel %vm400, %v1789, %v1793
  %v1808 = vsel %vm400, %v1799, %v1787
  %v1809 = vsel %vm400, %v1801, %v1789
  %v1810 = vmul.f32 %v1806, %v409
  %v1811 = vmul.f32 %v1804, %v410
  %v1812 = vmul.f32 %v1802, %v411
  %v1813 = vmul.f32 %v1808, %v412
  %v1814 = vmul.f32 %v1807, %v409
  %v1815 = vmul.f32 %v1805, %v410
  %v1816 = vmul.f32 %v1803, %v411
  %v1817 = vmul.f32 %v1809, %v412
  %1818 = vst [vmem:[#allocation2 + $0x680] sm:$0xff] %v1810
  %1819 = vst [vmem:[#allocation2 + $0x688] sm:$0xff] %v1811
  %1820 = vst [vmem:[#allocation2 + $0x690] sm:$0xff] %v1812
  %1821 = vst [vmem:[#allocation2 + $0x698] sm:$0xff] %v1813
  %1822 = vst [vmem:[#allocation2 + $0x6a0] sm:$0xff] %v1814
  %1823 = vst [vmem:[#allocation2 + $0x6a8] sm:$0xff] %v1815
  %1824 = vst [vmem:[#allocation2 + $0x6b0] sm:$0xff] %v1816
  %1825 = vst [vmem:[#allocation2 + $0x6b8] sm:$0xff] %v1817
  %v1826 = vld [vmem:[#allocation2] sm:$0xff]
  %v1827 = vld [vmem:[#allocation2 + $0x8] sm:$0xff]
  %v1828 = vld [vmem:[#allocation2 + $0x10] sm:$0xff]
  %v1829 = vld [vmem:[#allocation2 + $0x18] sm:$0xff]
  %v1830 = vld [vmem:[#allocation2 + $0x20] sm:$0xff]
  %v1831 = vld [vmem:[#allocation2 + $0x28] sm:$0xff]
  %v1832 = vld [vmem:[#allocation2 + $0x30] sm:$0xff]
  %v1833 = vld [vmem:[#allocation2 + $0x38] sm:$0xff]
  %v1834 = vld [vmem:[#allocation2 + $0x40] sm:$0xff]
  %v1835 = vld [vmem:[#allocation2 + $0x48] sm:$0xff]
  %v1836 = vld [vmem:[#allocation2 + $0x50] sm:$0xff]
  %v1837 = vld [vmem:[#allocation2 + $0x58] sm:$0xff]
  %v1838 = vld [vmem:[#allocation2 + $0x60] sm:$0xff]
  %v1839 = vld [vmem:[#allocation2 + $0x68] sm:$0xff]
  %v1840 = vld [vmem:[#allocation2 + $0x70] sm:$0xff]
  %v1841 = vld [vmem:[#allocation2 + $0x78] sm:$0xff]
  %v1842 = vld [vmem:[#allocation2 + $0x80] sm:$0xff]
  %v1843 = vld [vmem:[#allocation2 + $0x88] sm:$0xff]
  %v1844 = vld [vmem:[#allocation2 + $0x90] sm:$0xff]
  %v1845 = vld [vmem:[#allocation2 + $0x98] sm:$0xff]
  %v1846 = vld [vmem:[#allocation2 + $0xa0] sm:$0xff]
  %v1847 = vld [vmem:[#allocation2 + $0xa8] sm:$0xff]
  %v1848 = vld [vmem:[#allocation2 + $0xb0] sm:$0xff]
  %v1849 = vld [vmem:[#allocation2 + $0xb8] sm:$0xff]
  %v1850 = vld [vmem:[#allocation2 + $0xc0] sm:$0xff]
  %v1851 = vld [vmem:[#allocation2 + $0xc8] sm:$0xff]
  %v1852 = vld [vmem:[#allocation2 + $0xd0] sm:$0xff]
  %v1853 = vld [vmem:[#allocation2 + $0xd8] sm:$0xff]
  %v1854 = vld [vmem:[#allocation2 + $0xe0] sm:$0xff]
  %v1855 = vld [vmem:[#allocation2 + $0xe8] sm:$0xff]
  %v1856 = vld [vmem:[#allocation2 + $0xf0] sm:$0xff]
  %v1857 = vld [vmem:[#allocation2 + $0xf8] sm:$0xff]
  %v1858 = vld [vmem:[#allocation2 + $0x100] sm:$0xff]
  %v1859 = vld [vmem:[#allocation2 + $0x108] sm:$0xff]
  %v1860 = vld [vmem:[#allocation2 + $0x110] sm:$0xff]
  %v1861 = vld [vmem:[#allocation2 + $0x118] sm:$0xff]
  %v1862 = vld [vmem:[#allocation2 + $0x120] sm:$0xff]
  %v1863 = vld [vmem:[#allocation2 + $0x128] sm:$0xff]
  %v1864 = vld [vmem:[#allocation2 + $0x130] sm:$0xff]
  %v1865 = vld [vmem:[#allocation2 + $0x138] sm:$0xff]
  %v1866 = vld [vmem:[#allocation2 + $0x140] sm:$0xff]
  %v1867 = vld [vmem:[#allocation2 + $0x148] sm:$0xff]
  %v1868 = vld [vmem:[#allocation2 + $0x150] sm:$0xff]
  %v1869 = vld [vmem:[#allocation2 + $0x158] sm:$0xff]
  %v1870 = vld [vmem:[#allocation2 + $0x160] sm:$0xff]
  %v1871 = vld [vmem:[#allocation2 + $0x168] sm:$0xff]
  %v1872 = vld [vmem:[#allocation2 + $0x170] sm:$0xff]
  %v1873 = vld [vmem:[#allocation2 + $0x178] sm:$0xff]
  %v1874 = vld [vmem:[#allocation2 + $0x180] sm:$0xff]
  %v1875 = vld [vmem:[#allocation2 + $0x188] sm:$0xff]
  %v1876 = vld [vmem:[#allocation2 + $0x190] sm:$0xff]
  %v1877 = vld [vmem:[#allocation2 + $0x198] sm:$0xff]
  %v1878 = vld [vmem:[#allocation2 + $0x1a0] sm:$0xff]
  %v1879 = vld [vmem:[#allocation2 + $0x1a8] sm:$0xff]
  %v1880 = vld [vmem:[#allocation2 + $0x1b0] sm:$0xff]
  %v1881 = vld [vmem:[#allocation2 + $0x1b8] sm:$0xff]
  %v1882 = vld [vmem:[#allocation2 + $0x1c0] sm:$0xff]
  %v1883 = vld [vmem:[#allocation2 + $0x1c8] sm:$0xff]
  %v1884 = vld [vmem:[#allocation2 + $0x1d0] sm:$0xff]
  %v1885 = vld [vmem:[#allocation2 + $0x1d8] sm:$0xff]
  %v1886 = vld [vmem:[#allocation2 + $0x1e0] sm:$0xff]
  %v1887 = vld [vmem:[#allocation2 + $0x1e8] sm:$0xff]
  %v1888 = vld [vmem:[#allocation2 + $0x1f0] sm:$0xff]
  %v1889 = vld [vmem:[#allocation2 + $0x1f8] sm:$0xff]
  %v1890 = vld [vmem:[#allocation2 + $0x200] sm:$0xff]
  %v1891 = vld [vmem:[#allocation2 + $0x208] sm:$0xff]
  %v1892 = vld [vmem:[#allocation2 + $0x210] sm:$0xff]
  %v1893 = vld [vmem:[#allocation2 + $0x218] sm:$0xff]
  %v1894 = vld [vmem:[#allocation2 + $0x220] sm:$0xff]
  %v1895 = vld [vmem:[#allocation2 + $0x228] sm:$0xff]
  %v1896 = vld [vmem:[#allocation2 + $0x230] sm:$0xff]
  %v1897 = vld [vmem:[#allocation2 + $0x238] sm:$0xff]
  %v1898 = vld [vmem:[#allocation2 + $0x240] sm:$0xff]
  %v1899 = vld [vmem:[#allocation2 + $0x248] sm:$0xff]
  %v1900 = vld [vmem:[#allocation2 + $0x250] sm:$0xff]
  %v1901 = vld [vmem:[#allocation2 + $0x258] sm:$0xff]
  %v1902 = vld [vmem:[#allocation2 + $0x260] sm:$0xff]
  %v1903 = vld [vmem:[#allocation2 + $0x268] sm:$0xff]
  %v1904 = vld [vmem:[#allocation2 + $0x270] sm:$0xff]
  %v1905 = vld [vmem:[#allocation2 + $0x278] sm:$0xff]
  %v1906 = vld [vmem:[#allocation2 + $0x280] sm:$0xff]
  %v1907 = vld [vmem:[#allocation2 + $0x288] sm:$0xff]
  %v1908 = vld [vmem:[#allocation2 + $0x290] sm:$0xff]
  %v1909 = vld [vmem:[#allocation2 + $0x298] sm:$0xff]
  %v1910 = vld [vmem:[#allocation2 + $0x2a0] sm:$0xff]
  %v1911 = vld [vmem:[#allocation2 + $0x2a8] sm:$0xff]
  %v1912 = vld [vmem:[#allocation2 + $0x2b0] sm:$0xff]
  %v1913 = vld [vmem:[#allocation2 + $0x2b8] sm:$0xff]
  %v1914 = vld [vmem:[#allocation2 + $0x2c0] sm:$0xff]
  %v1915 = vld [vmem:[#allocation2 + $0x2c8] sm:$0xff]
  %v1916 = vld [vmem:[#allocation2 + $0x2d0] sm:$0xff]
  %v1917 = vld [vmem:[#allocation2 + $0x2d8] sm:$0xff]
  %v1918 = vld [vmem:[#allocation2 + $0x2e0] sm:$0xff]
  %v1919 = vld [vmem:[#allocation2 + $0x2e8] sm:$0xff]
  %v1920 = vld [vmem:[#allocation2 + $0x2f0] sm:$0xff]
  %v1921 = vld [vmem:[#allocation2 + $0x2f8] sm:$0xff]
  %v1922 = vld [vmem:[#allocation2 + $0x300] sm:$0xff]
  %v1923 = vld [vmem:[#allocation2 + $0x308] sm:$0xff]
  %v1924 = vld [vmem:[#allocation2 + $0x310] sm:$0xff]
  %v1925 = vld [vmem:[#allocation2 + $0x318] sm:$0xff]
  %v1926 = vld [vmem:[#allocation2 + $0x320] sm:$0xff]
  %v1927 = vld [vmem:[#allocation2 + $0x328] sm:$0xff]
  %v1928 = vld [vmem:[#allocation2 + $0x330] sm:$0xff]
  %v1929 = vld [vmem:[#allocation2 + $0x338] sm:$0xff]
  %v1930 = vld [vmem:[#allocation2 + $0x340] sm:$0xff]
  %v1931 = vld [vmem:[#allocation2 + $0x348] sm:$0xff]
  %v1932 = vld [vmem:[#allocation2 + $0x350] sm:$0xff]
  %v1933 = vld [vmem:[#allocation2 + $0x358] sm:$0xff]
  %v1934 = vld [vmem:[#allocation2 + $0x360] sm:$0xff]
  %v1935 = vld [vmem:[#allocation2 + $0x368] sm:$0xff]
  %v1936 = vld [vmem:[#allocation2 + $0x370] sm:$0xff]
  %v1937 = vld [vmem:[#allocation2 + $0x378] sm:$0xff]
  %v1938 = vld [vmem:[#allocation2 + $0x380] sm:$0xff]
  %v1939 = vld [vmem:[#allocation2 + $0x388] sm:$0xff]
  %v1940 = vld [vmem:[#allocation2 + $0x390] sm:$0xff]
  %v1941 = vld [vmem:[#allocation2 + $0x398] sm:$0xff]
  %v1942 = vld [vmem:[#allocation2 + $0x3a0] sm:$0xff]
  %v1943 = vld [vmem:[#allocation2 + $0x3a8] sm:$0xff]
  %v1944 = vld [vmem:[#allocation2 + $0x3b0] sm:$0xff]
  %v1945 = vld [vmem:[#allocation2 + $0x3b8] sm:$0xff]
  %v1946 = vld [vmem:[#allocation2 + $0x3c0] sm:$0xff]
  %v1947 = vld [vmem:[#allocation2 + $0x3c8] sm:$0xff]
  %v1948 = vld [vmem:[#allocation2 + $0x3d0] sm:$0xff]
  %v1949 = vld [vmem:[#allocation2 + $0x3d8] sm:$0xff]
  %v1950 = vld [vmem:[#allocation2 + $0x3e0] sm:$0xff]
  %v1951 = vld [vmem:[#allocation2 + $0x3e8] sm:$0xff]
  %v1952 = vld [vmem:[#allocation2 + $0x3f0] sm:$0xff]
  %v1953 = vld [vmem:[#allocation2 + $0x3f8] sm:$0xff]
  %v1954 = vld [vmem:[#allocation2 + $0x400] sm:$0xff]
  %v1955 = vld [vmem:[#allocation2 + $0x408] sm:$0xff]
  %v1956 = vld [vmem:[#allocation2 + $0x410] sm:$0xff]
  %v1957 = vld [vmem:[#allocation2 + $0x418] sm:$0xff]
  %v1958 = vld [vmem:[#allocation2 + $0x420] sm:$0xff]
  %v1959 = vld [vmem:[#allocation2 + $0x428] sm:$0xff]
  %v1960 = vld [vmem:[#allocation2 + $0x430] sm:$0xff]
  %v1961 = vld [vmem:[#allocation2 + $0x438] sm:$0xff]
  %v1962 = vld [vmem:[#allocation2 + $0x440] sm:$0xff]
  %v1963 = vld [vmem:[#allocation2 + $0x448] sm:$0xff]
  %v1964 = vld [vmem:[#allocation2 + $0x450] sm:$0xff]
  %v1965 = vld [vmem:[#allocation2 + $0x458] sm:$0xff]
  %v1966 = vld [vmem:[#allocation2 + $0x460] sm:$0xff]
  %v1967 = vld [vmem:[#allocation2 + $0x468] sm:$0xff]
  %v1968 = vld [vmem:[#allocation2 + $0x470] sm:$0xff]
  %v1969 = vld [vmem:[#allocation2 + $0x478] sm:$0xff]
  %v1970 = vld [vmem:[#allocation2 + $0x480] sm:$0xff]
  %v1971 = vld [vmem:[#allocation2 + $0x488] sm:$0xff]
  %v1972 = vld [vmem:[#allocation2 + $0x490] sm:$0xff]
  %v1973 = vld [vmem:[#allocation2 + $0x498] sm:$0xff]
  %v1974 = vld [vmem:[#allocation2 + $0x4a0] sm:$0xff]
  %v1975 = vld [vmem:[#allocation2 + $0x4a8] sm:$0xff]
  %v1976 = vld [vmem:[#allocation2 + $0x4b0] sm:$0xff]
  %v1977 = vld [vmem:[#allocation2 + $0x4b8] sm:$0xff]
  %v1978 = vld [vmem:[#allocation2 + $0x4c0] sm:$0xff]
  %v1979 = vld [vmem:[#allocation2 + $0x4c8] sm:$0xff]
  %v1980 = vld [vmem:[#allocation2 + $0x4d0] sm:$0xff]
  %v1981 = vld [vmem:[#allocation2 + $0x4d8] sm:$0xff]
  %v1982 = vld [vmem:[#allocation2 + $0x4e0] sm:$0xff]
  %v1983 = vld [vmem:[#allocation2 + $0x4e8] sm:$0xff]
  %v1984 = vld [vmem:[#allocation2 + $0x4f0] sm:$0xff]
  %v1985 = vld [vmem:[#allocation2 + $0x4f8] sm:$0xff]
  %v1986 = vld [vmem:[#allocation2 + $0x500] sm:$0xff]
  %v1987 = vld [vmem:[#allocation2 + $0x508] sm:$0xff]
  %v1988 = vld [vmem:[#allocation2 + $0x510] sm:$0xff]
  %v1989 = vld [vmem:[#allocation2 + $0x518] sm:$0xff]
  %v1990 = vld [vmem:[#allocation2 + $0x520] sm:$0xff]
  %v1991 = vld [vmem:[#allocation2 + $0x528] sm:$0xff]
  %v1992 = vld [vmem:[#allocation2 + $0x530] sm:$0xff]
  %v1993 = vld [vmem:[#allocation2 + $0x538] sm:$0xff]
  %v1994 = vld [vmem:[#allocation2 + $0x540] sm:$0xff]
  %v1995 = vld [vmem:[#allocation2 + $0x548] sm:$0xff]
  %v1996 = vld [vmem:[#allocation2 + $0x550] sm:$0xff]
  %v1997 = vld [vmem:[#allocation2 + $0x558] sm:$0xff]
  %v1998 = vld [vmem:[#allocation2 + $0x560] sm:$0xff]
  %v1999 = vld [vmem:[#allocation2 + $0x568] sm:$0xff]
  %v2000 = vld [vmem:[#allocation2 + $0x570] sm:$0xff]
  %v2001 = vld [vmem:[#allocation2 + $0x578] sm:$0xff]
  %v2002 = vld [vmem:[#allocation2 + $0x580] sm:$0xff]
  %v2003 = vld [vmem:[#allocation2 + $0x588] sm:$0xff]
  %v2004 = vld [vmem:[#allocation2 + $0x590] sm:$0xff]
  %v2005 = vld [vmem:[#allocation2 + $0x598] sm:$0xff]
  %v2006 = vld [vmem:[#allocation2 + $0x5a0] sm:$0xff]
  %v2007 = vld [vmem:[#allocation2 + $0x5a8] sm:$0xff]
  %v2008 = vld [vmem:[#allocation2 + $0x5b0] sm:$0xff]
  %v2009 = vld [vmem:[#allocation2 + $0x5b8] sm:$0xff]
  %v2010 = vld [vmem:[#allocation2 + $0x5c0] sm:$0xff]
  %v2011 = vld [vmem:[#allocation2 + $0x5c8] sm:$0xff]
  %v2012 = vld [vmem:[#allocation2 + $0x5d0] sm:$0xff]
  %v2013 = vld [vmem:[#allocation2 + $0x5d8] sm:$0xff]
  %v2014 = vld [vmem:[#allocation2 + $0x5e0] sm:$0xff]
  %v2015 = vld [vmem:[#allocation2 + $0x5e8] sm:$0xff]
  %v2016 = vld [vmem:[#allocation2 + $0x5f0] sm:$0xff]
  %v2017 = vld [vmem:[#allocation2 + $0x5f8] sm:$0xff]
  %v2018 = vld [vmem:[#allocation2 + $0x600] sm:$0xff]
  %v2019 = vld [vmem:[#allocation2 + $0x608] sm:$0xff]
  %v2020 = vld [vmem:[#allocation2 + $0x610] sm:$0xff]
  %v2021 = vld [vmem:[#allocation2 + $0x618] sm:$0xff]
  %v2022 = vld [vmem:[#allocation2 + $0x620] sm:$0xff]
  %v2023 = vld [vmem:[#allocation2 + $0x628] sm:$0xff]
  %v2024 = vld [vmem:[#allocation2 + $0x630] sm:$0xff]
  %v2025 = vld [vmem:[#allocation2 + $0x638] sm:$0xff]
  %v2026 = vld [vmem:[#allocation2 + $0x640] sm:$0xff]
  %v2027 = vld [vmem:[#allocation2 + $0x648] sm:$0xff]
  %v2028 = vld [vmem:[#allocation2 + $0x650] sm:$0xff]
  %v2029 = vld [vmem:[#allocation2 + $0x658] sm:$0xff]
  %v2030 = vld [vmem:[#allocation2 + $0x660] sm:$0xff]
  %v2031 = vld [vmem:[#allocation2 + $0x668] sm:$0xff]
  %v2032 = vld [vmem:[#allocation2 + $0x670] sm:$0xff]
  %v2033 = vld [vmem:[#allocation2 + $0x678] sm:$0xff]
  %v2034 = vld [vmem:[#allocation2 + $0x680] sm:$0xff]
  %v2035 = vld [vmem:[#allocation2 + $0x688] sm:$0xff]
  %v2036 = vld [vmem:[#allocation2 + $0x690] sm:$0xff]
  %v2037 = vld [vmem:[#allocation2 + $0x698] sm:$0xff]
  %v2038 = vld [vmem:[#allocation2 + $0x6a0] sm:$0xff]
  %v2039 = vld [vmem:[#allocation2 + $0x6a8] sm:$0xff]
  %v2040 = vld [vmem:[#allocation2 + $0x6b0] sm:$0xff]
  %v2041 = vld [vmem:[#allocation2 + $0x6b8] sm:$0xff]
  %v2042 = vld [vmem:[%s4] sm:$0xff]
  %v2043 = vld [vmem:[%s4 + $0x8] sm:$0xff]
  %v2044 = vld [vmem:[%s4 + $0x10] sm:$0xff]
  %v2045 = vld [vmem:[%s4 + $0x18] sm:$0xff]
  %v2046 = vld [vmem:[%s4 + $0x20] sm:$0xff]
  %v2047 = vld [vmem:[%s4 + $0x28] sm:$0xff]
  %v2048 = vld [vmem:[%s4 + $0x30] sm:$0xff]
  %v2049 = vld [vmem:[%s4 + $0x38] sm:$0xff]
  %s2050 = scalar_lea.vmem %s5, 32
  %v2051 = vld [vmem:[%s2050] sm:$0xff]
  %v2052 = vld [vmem:[%s2050 + $0x8] sm:$0xff]
  %2054 = vset.pattern.permute.xlu0 0
  %2055 = vperm.xlu0 %2054, %v2051
  %v2056 = vpop.permute.xlu0 %2055
  %2059 = vset.pattern.permute.xlu0 0
  %2060 = vperm.xlu0 %2059, %v2052
  %v2061 = vpop.permute.xlu0 %2060
  %vm2063 = vcmask 392192
  %v2065 = vsel %vm2063, %v2045, 0
  %v2068 = vsel %vm2063, %v2049, 0
  %2070 = vmatpush.msra.mxu0 %v1886
  %2071 = vmatpush.msra.mxu0 %v1882
  %2072 = vmatpush.msra.mxu0 %v1878
  %2073 = vmatpush.msra.mxu0 %v1874
  %2074 = vmatpush.msra.mxu0 %v1870
  %2075 = vmatpush.msra.mxu0 %v1866
  %2076 = vmatpush.msra.mxu0 %v1862
  %2077 = vmatpush.msra.mxu0 %v1858
  %2078 = vmatpush.msra.mxu0 %v1854
  %2079 = vmatpush.msra.mxu0 %v1850
  %2080 = vmatpush.msra.mxu0 %v1846
  %2081 = vmatpush.msra.mxu0 %v1842
  %2082 = vmatpush.msra.mxu0 %v1838
  %2083 = vmatpush.msra.mxu0 %v1834
  %2084 = vmatpush.msra.mxu0 %v1830
  %2085 = vmatpush.msra.mxu0 %v1826
  %2086 = vmatmul.f32.gmra.mxu0 %v2042
  %v2087 = vpop.f32.mrf.mxu0
  %v2088 = vadd.f32 %v2056, %v2087
  %2089 = vmatmul.f32.gmra.mxu0 %v2046
  %v2090 = vpop.f32.mrf.mxu0
  %v2091 = vadd.f32 %v2061, %v2090
  %2092 = vdwg.mxu0
  %2093 = vmatpush.msra.mxu0 %v1950
  %2094 = vmatpush.msra.mxu0 %v1946
  %2095 = vmatpush.msra.mxu0 %v1942
  %2096 = vmatpush.msra.mxu0 %v1938
  %2097 = vmatpush.msra.mxu0 %v1934
  %2098 = vmatpush.msra.mxu0 %v1930
  %2099 = vmatpush.msra.mxu0 %v1926
  %2100 = vmatpush.msra.mxu0 %v1922
  %2101 = vmatpush.msra.mxu0 %v1918
  %2102 = vmatpush.msra.mxu0 %v1914
  %2103 = vmatpush.msra.mxu0 %v1910
  %2104 = vmatpush.msra.mxu0 %v1906
  %2105 = vmatpush.msra.mxu0 %v1902
  %2106 = vmatpush.msra.mxu0 %v1898
  %2107 = vmatpush.msra.mxu0 %v1894
  %2108 = vmatpush.msra.mxu0 %v1890
  %2109 = vmatmul.f32.gmra.mxu0 %v2043
  %v2110 = vpop.f32.mrf.mxu0
  %v2111 = vadd.f32 %v2088, %v2110
  %2112 = vmatmul.f32.gmra.mxu0 %v2047
  %v2113 = vpop.f32.mrf.mxu0
  %v2114 = vadd.f32 %v2091, %v2113
  %2115 = vdwg.mxu0
  %2116 = vmatpush.msra.mxu0 %v2014
  %2117 = vmatpush.msra.mxu0 %v2010
  %2118 = vmatpush.msra.mxu0 %v2006
  %2119 = vmatpush.msra.mxu0 %v2002
  %2120 = vmatpush.msra.mxu0 %v1998
  %2121 = vmatpush.msra.mxu0 %v1994
  %2122 = vmatpush.msra.mxu0 %v1990
  %2123 = vmatpush.msra.mxu0 %v1986
  %2124 = vmatpush.msra.mxu0 %v1982
  %2125 = vmatpush.msra.mxu0 %v1978
  %2126 = vmatpush.msra.mxu0 %v1974
  %2127 = vmatpush.msra.mxu0 %v1970
  %2128 = vmatpush.msra.mxu0 %v1966
  %2129 = vmatpush.msra.mxu0 %v1962
  %2130 = vmatpush.msra.mxu0 %v1958
  %2131 = vmatpush.msra.mxu0 %v1954
  %2132 = vmatmul.f32.gmra.mxu0 %v2044
  %v2133 = vpop.f32.mrf.mxu0
  %v2134 = vadd.f32 %v2111, %v2133
  %2135 = vmatmul.f32.gmra.mxu0 %v2048
  %v2136 = vpop.f32.mrf.mxu0
  %v2137 = vadd.f32 %v2114, %v2136
  %2138 = vdwg.mxu0
  %2139 = vmatpush.msra.mxu0 0.0
  %2140 = vmatpush.msra.mxu0 0.0
  %2141 = vmatpush.msra.mxu0 0.0
  %2142 = vmatpush.msra.mxu0 0.0
  %2143 = vmatpush.msra.mxu0 0.0
  %2144 = vmatpush.msra.mxu0 0.0
  %2145 = vmatpush.msra.mxu0 0.0
  %2146 = vmatpush.msra.mxu0 0.0
  %2147 = vmatpush.msra.mxu0 0.0
  %2148 = vmatpush.msra.mxu0 0.0
  %2149 = vmatpush.msra.mxu0 %v2038
  %2150 = vmatpush.msra.mxu0 %v2034
  %2151 = vmatpush.msra.mxu0 %v2030
  %2152 = vmatpush.msra.mxu0 %v2026
  %2153 = vmatpush.msra.mxu0 %v2022
  %2154 = vmatpush.msra.mxu0 %v2018
  %2155 = vmatmul.f32.gmra.mxu0 %v2065
  %v2156 = vpop.f32.mrf.mxu0
  %v2157 = vadd.f32 %v2134, %v2156
  %2158 = vmatmul.f32.gmra.mxu0 %v2068
  %v2159 = vpop.f32.mrf.mxu0
  %v2160 = vadd.f32 %v2137, %v2159
  %2161 = vdwg.mxu0
  %2162 = vmatpush.msra.mxu0 %v1887
  %2163 = vmatpush.msra.mxu0 %v1883
  %2164 = vmatpush.msra.mxu0 %v1879
  %2165 = vmatpush.msra.mxu0 %v1875
  %2166 = vmatpush.msra.mxu0 %v1871
  %2167 = vmatpush.msra.mxu0 %v1867
  %2168 = vmatpush.msra.mxu0 %v1863
  %2169 = vmatpush.msra.mxu0 %v1859
  %2170 = vmatpush.msra.mxu0 %v1855
  %2171 = vmatpush.msra.mxu0 %v1851
  %2172 = vmatpush.msra.mxu0 %v1847
  %2173 = vmatpush.msra.mxu0 %v1843
  %2174 = vmatpush.msra.mxu0 %v1839
  %2175 = vmatpush.msra.mxu0 %v1835
  %2176 = vmatpush.msra.mxu0 %v1831
  %2177 = vmatpush.msra.mxu0 %v1827
  %2178 = vmatmul.f32.gmra.mxu0 %v2042
  %v2179 = vpop.f32.mrf.mxu0
  %v2180 = vadd.f32 %v2056, %v2179
  %2181 = vmatmul.f32.gmra.mxu0 %v2046
  %v2182 = vpop.f32.mrf.mxu0
  %v2183 = vadd.f32 %v2061, %v2182
  %2184 = vdwg.mxu0
  %2185 = vmatpush.msra.mxu0 %v1951
  %2186 = vmatpush.msra.mxu0 %v1947
  %2187 = vmatpush.msra.mxu0 %v1943
  %2188 = vmatpush.msra.mxu0 %v1939
  %2189 = vmatpush.msra.mxu0 %v1935
  %2190 = vmatpush.msra.mxu0 %v1931
  %2191 = vmatpush.msra.mxu0 %v1927
  %2192 = vmatpush.msra.mxu0 %v1923
  %2193 = vmatpush.msra.mxu0 %v1919
  %2194 = vmatpush.msra.mxu0 %v1915
  %2195 = vmatpush.msra.mxu0 %v1911
  %2196 = vmatpush.msra.mxu0 %v1907
  %2197 = vmatpush.msra.mxu0 %v1903
  %2198 = vmatpush.msra.mxu0 %v1899
  %2199 = vmatpush.msra.mxu0 %v1895
  %2200 = vmatpush.msra.mxu0 %v1891
  %2201 = vmatmul.f32.gmra.mxu0 %v2043
  %v2202 = vpop.f32.mrf.mxu0
  %v2203 = vadd.f32 %v2180, %v2202
  %2204 = vmatmul.f32.gmra.mxu0 %v2047
  %v2205 = vpop.f32.mrf.mxu0
  %v2206 = vadd.f32 %v2183, %v2205
  %2207 = vdwg.mxu0
  %2208 = vmatpush.msra.mxu0 %v2015
  %2209 = vmatpush.msra.mxu0 %v2011
  %2210 = vmatpush.msra.mxu0 %v2007
  %2211 = vmatpush.msra.mxu0 %v2003
  %2212 = vmatpush.msra.mxu0 %v1999
  %2213 = vmatpush.msra.mxu0 %v1995
  %2214 = vmatpush.msra.mxu0 %v1991
  %2215 = vmatpush.msra.mxu0 %v1987
  %2216 = vmatpush.msra.mxu0 %v1983
  %2217 = vmatpush.msra.mxu0 %v1979
  %2218 = vmatpush.msra.mxu0 %v1975
  %2219 = vmatpush.msra.mxu0 %v1971
  %2220 = vmatpush.msra.mxu0 %v1967
  %2221 = vmatpush.msra.mxu0 %v1963
  %2222 = vmatpush.msra.mxu0 %v1959
  %2223 = vmatpush.msra.mxu0 %v1955
  %2224 = vmatmul.f32.gmra.mxu0 %v2044
  %v2225 = vpop.f32.mrf.mxu0
  %v2226 = vadd.f32 %v2203, %v2225
  %2227 = vmatmul.f32.gmra.mxu0 %v2048
  %v2228 = vpop.f32.mrf.mxu0
  %v2229 = vadd.f32 %v2206, %v2228
  %2230 = vdwg.mxu0
  %2231 = vmatpush.msra.mxu0 0.0
  %2232 = vmatpush.msra.mxu0 0.0
  %2233 = vmatpush.msra.mxu0 0.0
  %2234 = vmatpush.msra.mxu0 0.0
  %2235 = vmatpush.msra.mxu0 0.0
  %2236 = vmatpush.msra.mxu0 0.0
  %2237 = vmatpush.msra.mxu0 0.0
  %2238 = vmatpush.msra.mxu0 0.0
  %2239 = vmatpush.msra.mxu0 0.0
  %2240 = vmatpush.msra.mxu0 0.0
  %2241 = vmatpush.msra.mxu0 %v2039
  %2242 = vmatpush.msra.mxu0 %v2035
  %2243 = vmatpush.msra.mxu0 %v2031
  %2244 = vmatpush.msra.mxu0 %v2027
  %2245 = vmatpush.msra.mxu0 %v2023
  %2246 = vmatpush.msra.mxu0 %v2019
  %2247 = vmatmul.f32.gmra.mxu0 %v2065
  %v2248 = vpop.f32.mrf.mxu0
  %v2249 = vadd.f32 %v2226, %v2248
  %2250 = vmatmul.f32.gmra.mxu0 %v2068
  %v2251 = vpop.f32.mrf.mxu0
  %v2252 = vadd.f32 %v2229, %v2251
  %2253 = vdwg.mxu0
  %2254 = vmatpush.msra.mxu0 %v1888
  %2255 = vmatpush.msra.mxu0 %v1884
  %2256 = vmatpush.msra.mxu0 %v1880
  %2257 = vmatpush.msra.mxu0 %v1876
  %2258 = vmatpush.msra.mxu0 %v1872
  %2259 = vmatpush.msra.mxu0 %v1868
  %2260 = vmatpush.msra.mxu0 %v1864
  %2261 = vmatpush.msra.mxu0 %v1860
  %2262 = vmatpush.msra.mxu0 %v1856
  %2263 = vmatpush.msra.mxu0 %v1852
  %2264 = vmatpush.msra.mxu0 %v1848
  %2265 = vmatpush.msra.mxu0 %v1844
  %2266 = vmatpush.msra.mxu0 %v1840
  %2267 = vmatpush.msra.mxu0 %v1836
  %2268 = vmatpush.msra.mxu0 %v1832
  %2269 = vmatpush.msra.mxu0 %v1828
  %2270 = vmatmul.f32.gmra.mxu0 %v2042
  %v2271 = vpop.f32.mrf.mxu0
  %v2272 = vadd.f32 %v2056, %v2271
  %2273 = vmatmul.f32.gmra.mxu0 %v2046
  %v2274 = vpop.f32.mrf.mxu0
  %v2275 = vadd.f32 %v2061, %v2274
  %2276 = vdwg.mxu0
  %2277 = vmatpush.msra.mxu0 %v1952
  %2278 = vmatpush.msra.mxu0 %v1948
  %2279 = vmatpush.msra.mxu0 %v1944
  %2280 = vmatpush.msra.mxu0 %v1940
  %2281 = vmatpush.msra.mxu0 %v1936
  %2282 = vmatpush.msra.mxu0 %v1932
  %2283 = vmatpush.msra.mxu0 %v1928
  %2284 = vmatpush.msra.mxu0 %v1924
  %2285 = vmatpush.msra.mxu0 %v1920
  %2286 = vmatpush.msra.mxu0 %v1916
  %2287 = vmatpush.msra.mxu0 %v1912
  %2288 = vmatpush.msra.mxu0 %v1908
  %2289 = vmatpush.msra.mxu0 %v1904
  %2290 = vmatpush.msra.mxu0 %v1900
  %2291 = vmatpush.msra.mxu0 %v1896
  %2292 = vmatpush.msra.mxu0 %v1892
  %2293 = vmatmul.f32.gmra.mxu0 %v2043
  %v2294 = vpop.f32.mrf.mxu0
  %v2295 = vadd.f32 %v2272, %v2294
  %2296 = vmatmul.f32.gmra.mxu0 %v2047
  %v2297 = vpop.f32.mrf.mxu0
  %v2298 = vadd.f32 %v2275, %v2297
  %2299 = vdwg.mxu0
  %2300 = vmatpush.msra.mxu0 %v2016
  %2301 = vmatpush.msra.mxu0 %v2012
  %2302 = vmatpush.msra.mxu0 %v2008
  %2303 = vmatpush.msra.mxu0 %v2004
  %2304 = vmatpush.msra.mxu0 %v2000
  %2305 = vmatpush.msra.mxu0 %v1996
  %2306 = vmatpush.msra.mxu0 %v1992
  %2307 = vmatpush.msra.mxu0 %v1988
  %2308 = vmatpush.msra.mxu0 %v1984
  %2309 = vmatpush.msra.mxu0 %v1980
  %2310 = vmatpush.msra.mxu0 %v1976
  %2311 = vmatpush.msra.mxu0 %v1972
  %2312 = vmatpush.msra.mxu0 %v1968
  %2313 = vmatpush.msra.mxu0 %v1964
  %2314 = vmatpush.msra.mxu0 %v1960
  %2315 = vmatpush.msra.mxu0 %v1956
  %2316 = vmatmul.f32.gmra.mxu0 %v2044
  %v2317 = vpop.f32.mrf.mxu0
  %v2318 = vadd.f32 %v2295, %v2317
  %2319 = vmatmul.f32.gmra.mxu0 %v2048
  %v2320 = vpop.f32.mrf.mxu0
  %v2321 = vadd.f32 %v2298, %v2320
  %2322 = vdwg.mxu0
  %2323 = vmatpush.msra.mxu0 0.0
  %2324 = vmatpush.msra.mxu0 0.0
  %2325 = vmatpush.msra.mxu0 0.0
  %2326 = vmatpush.msra.mxu0 0.0
  %2327 = vmatpush.msra.mxu0 0.0
  %2328 = vmatpush.msra.mxu0 0.0
  %2329 = vmatpush.msra.mxu0 0.0
  %2330 = vmatpush.msra.mxu0 0.0
  %2331 = vmatpush.msra.mxu0 0.0
  %2332 = vmatpush.msra.mxu0 0.0
  %2333 = vmatpush.msra.mxu0 %v2040
  %2334 = vmatpush.msra.mxu0 %v2036
  %2335 = vmatpush.msra.mxu0 %v2032
  %2336 = vmatpush.msra.mxu0 %v2028
  %2337 = vmatpush.msra.mxu0 %v2024
  %2338 = vmatpush.msra.mxu0 %v2020
  %2339 = vmatmul.f32.gmra.mxu0 %v2065
  %v2340 = vpop.f32.mrf.mxu0
  %v2341 = vadd.f32 %v2318, %v2340
  %2342 = vmatmul.f32.gmra.mxu0 %v2068
  %v2343 = vpop.f32.mrf.mxu0
  %v2344 = vadd.f32 %v2321, %v2343
  %2345 = vdwg.mxu0
  %2346 = vmatpush.msra.mxu0 %v1889
  %2347 = vmatpush.msra.mxu0 %v1885
  %2348 = vmatpush.msra.mxu0 %v1881
  %2349 = vmatpush.msra.mxu0 %v1877
  %2350 = vmatpush.msra.mxu0 %v1873
  %2351 = vmatpush.msra.mxu0 %v1869
  %2352 = vmatpush.msra.mxu0 %v1865
  %2353 = vmatpush.msra.mxu0 %v1861
  %2354 = vmatpush.msra.mxu0 %v1857
  %2355 = vmatpush.msra.mxu0 %v1853
  %2356 = vmatpush.msra.mxu0 %v1849
  %2357 = vmatpush.msra.mxu0 %v1845
  %2358 = vmatpush.msra.mxu0 %v1841
  %2359 = vmatpush.msra.mxu0 %v1837
  %2360 = vmatpush.msra.mxu0 %v1833
  %2361 = vmatpush.msra.mxu0 %v1829
  %2362 = vmatmul.f32.gmra.mxu0 %v2042
  %v2363 = vpop.f32.mrf.mxu0
  %v2364 = vadd.f32 %v2056, %v2363
  %2365 = vmatmul.f32.gmra.mxu0 %v2046
  %v2366 = vpop.f32.mrf.mxu0
  %v2367 = vadd.f32 %v2061, %v2366
  %2368 = vdwg.mxu0
  %2369 = vmatpush.msra.mxu0 %v1953
  %2370 = vmatpush.msra.mxu0 %v1949
  %2371 = vmatpush.msra.mxu0 %v1945
  %2372 = vmatpush.msra.mxu0 %v1941
  %2373 = vmatpush.msra.mxu0 %v1937
  %2374 = vmatpush.msra.mxu0 %v1933
  %2375 = vmatpush.msra.mxu0 %v1929
  %2376 = vmatpush.msra.mxu0 %v1925
  %2377 = vmatpush.msra.mxu0 %v1921
  %2378 = vmatpush.msra.mxu0 %v1917
  %2379 = vmatpush.msra.mxu0 %v1913
  %2380 = vmatpush.msra.mxu0 %v1909
  %2381 = vmatpush.msra.mxu0 %v1905
  %2382 = vmatpush.msra.mxu0 %v1901
  %2383 = vmatpush.msra.mxu0 %v1897
  %2384 = vmatpush.msra.mxu0 %v1893
  %2385 = vmatmul.f32.gmra.mxu0 %v2043
  %v2386 = vpop.f32.mrf.mxu0
  %v2387 = vadd.f32 %v2364, %v2386
  %2388 = vmatmul.f32.gmra.mxu0 %v2047
  %v2389 = vpop.f32.mrf.mxu0
  %v2390 = vadd.f32 %v2367, %v2389
  %2391 = vdwg.mxu0
  %2392 = vmatpush.msra.mxu0 %v2017
  %2393 = vmatpush.msra.mxu0 %v2013
  %2394 = vmatpush.msra.mxu0 %v2009
  %2395 = vmatpush.msra.mxu0 %v2005
  %2396 = vmatpush.msra.mxu0 %v2001
  %2397 = vmatpush.msra.mxu0 %v1997
  %2398 = vmatpush.msra.mxu0 %v1993
  %2399 = vmatpush.msra.mxu0 %v1989
  %2400 = vmatpush.msra.mxu0 %v1985
  %2401 = vmatpush.msra.mxu0 %v1981
  %2402 = vmatpush.msra.mxu0 %v1977
  %2403 = vmatpush.msra.mxu0 %v1973
  %2404 = vmatpush.msra.mxu0 %v1969
  %2405 = vmatpush.msra.mxu0 %v1965
  %2406 = vmatpush.msra.mxu0 %v1961
  %2407 = vmatpush.msra.mxu0 %v1957
  %2408 = vmatmul.f32.gmra.mxu0 %v2044
  %v2409 = vpop.f32.mrf.mxu0
  %v2410 = vadd.f32 %v2387, %v2409
  %2411 = vmatmul.f32.gmra.mxu0 %v2048
  %v2412 = vpop.f32.mrf.mxu0
  %v2413 = vadd.f32 %v2390, %v2412
  %2414 = vdwg.mxu0
  %2415 = vmatpush.msra.mxu0 0.0
  %2416 = vmatpush.msra.mxu0 0.0
  %2417 = vmatpush.msra.mxu0 0.0
  %2418 = vmatpush.msra.mxu0 0.0
  %2419 = vmatpush.msra.mxu0 0.0
  %2420 = vmatpush.msra.mxu0 0.0
  %2421 = vmatpush.msra.mxu0 0.0
  %2422 = vmatpush.msra.mxu0 0.0
  %2423 = vmatpush.msra.mxu0 0.0
  %2424 = vmatpush.msra.mxu0 0.0
  %2425 = vmatpush.msra.mxu0 %v2041
  %2426 = vmatpush.msra.mxu0 %v2037
  %2427 = vmatpush.msra.mxu0 %v2033
  %2428 = vmatpush.msra.mxu0 %v2029
  %2429 = vmatpush.msra.mxu0 %v2025
  %2430 = vmatpush.msra.mxu0 %v2021
  %2431 = vmatmul.f32.gmra.mxu0 %v2065
  %v2432 = vpop.f32.mrf.mxu0
  %v2433 = vadd.f32 %v2410, %v2432
  %2434 = vmatmul.f32.gmra.mxu0 %v2068
  %v2435 = vpop.f32.mrf.mxu0
  %v2436 = vadd.f32 %v2413, %v2435
  %2437 = vdwg.mxu0
  %v2438 = vadd.f32 %v2157, %v43
  %v2439 = vadd.f32 %v2249, %v44
  %v2440 = vadd.f32 %v2341, %v45
  %v2441 = vadd.f32 %v2433, %v46
  %v2442 = vadd.f32 %v2160, %v47
  %v2443 = vadd.f32 %v2252, %v48
  %v2444 = vadd.f32 %v2344, %v49
  %v2445 = vadd.f32 %v2436, %v50
  %2446 = vst [vmem:[#allocation3 + $0x40] sm:$0xff] %v2438
  %2447 = vst [vmem:[#allocation3 + $0x48] sm:$0xff] %v2439
  %2448 = vst [vmem:[#allocation3 + $0x50] sm:$0xff] %v2440
  %2449 = vst [vmem:[#allocation3 + $0x58] sm:$0xff] %v2441
  %2450 = vst [vmem:[#allocation3 + $0x60] sm:$0xff] %v2442
  %2451 = vst [vmem:[#allocation3 + $0x68] sm:$0xff] %v2443
  %2452 = vst [vmem:[#allocation3 + $0x70] sm:$0xff] %v2444
  %2453 = vst [vmem:[#allocation3 + $0x78] sm:$0xff] %v2445
  %v2454 = vld [vmem:[#allocation3] sm:$0xff]
  %v2455 = vld [vmem:[#allocation3 + $0x8] sm:$0xff]
  %v2456 = vld [vmem:[#allocation3 + $0x10] sm:$0xff]
  %v2457 = vld [vmem:[#allocation3 + $0x18] sm:$0xff]
  %v2458 = vld [vmem:[#allocation3 + $0x20] sm:$0xff]
  %v2459 = vld [vmem:[#allocation3 + $0x28] sm:$0xff]
  %v2460 = vld [vmem:[#allocation3 + $0x30] sm:$0xff]
  %v2461 = vld [vmem:[#allocation3 + $0x38] sm:$0xff]
  %v2462 = vld [vmem:[#allocation3 + $0x40] sm:$0xff]
  %v2463 = vld [vmem:[#allocation3 + $0x48] sm:$0xff]
  %v2464 = vld [vmem:[#allocation3 + $0x50] sm:$0xff]
  %v2465 = vld [vmem:[#allocation3 + $0x58] sm:$0xff]
  %v2466 = vld [vmem:[#allocation3 + $0x60] sm:$0xff]
  %v2467 = vld [vmem:[#allocation3 + $0x68] sm:$0xff]
  %v2468 = vld [vmem:[#allocation3 + $0x70] sm:$0xff]
  %v2469 = vld [vmem:[#allocation3 + $0x78] sm:$0xff]
  %v2470 = vld [vmem:[%s6] sm:$0xff]
  %v2471 = vld [vmem:[%s6 + $0x8] sm:$0xff]
  %v2472 = vld [vmem:[%s9] sm:$0xff]
  %v2473 = vld [vmem:[%s9 + $0x8] sm:$0xff]
  %2475 = vset.pattern.permute.xlu0 0
  %2476 = vperm.xlu0 %2475, %v2472
  %v2477 = vpop.permute.xlu0 %2476
  %2480 = vset.pattern.permute.xlu0 0
  %2481 = vperm.xlu0 %2480, %v2473
  %v2482 = vpop.permute.xlu0 %2481
  %v2485 = vsel %vm1207, %v2470, 0
  %v2488 = vsel %vm1207, %v2471, 0
  %2490 = vmatpush.msra.mxu0 0.0
  %2491 = vmatpush.msra.mxu0 0.0
  %2492 = vmatpush.msra.mxu0 0.0
  %2493 = vmatpush.msra.mxu0 0.0
  %2494 = vmatpush.msra.mxu0 0.0
  %2495 = vmatpush.msra.mxu0 0.0
  %2496 = vmatpush.msra.mxu0 0.0
  %2497 = vmatpush.msra.mxu0 0.0
  %2498 = vmatpush.msra.mxu0 0.0
  %2499 = vmatpush.msra.mxu0 0.0
  %2500 = vmatpush.msra.mxu0 0.0
  %2501 = vmatpush.msra.mxu0 0.0
  %2502 = vmatpush.msra.mxu0 %v2466
  %2503 = vmatpush.msra.mxu0 %v2462
  %2504 = vmatpush.msra.mxu0 %v2458
  %2505 = vmatpush.msra.mxu0 %v2454
  %2506 = vmatmul.f32.gmra.mxu0 %v2485
  %v2507 = vpop.f32.mrf.mxu0
  %v2508 = vadd.f32 %v2477, %v2507
  %2509 = vmatmul.f32.gmra.mxu0 %v2488
  %v2510 = vpop.f32.mrf.mxu0
  %v2511 = vadd.f32 %v2482, %v2510
  %2512 = vdwg.mxu0
  %2513 = vmatpush.msra.mxu0 0.0
  %2514 = vmatpush.msra.mxu0 0.0
  %2515 = vmatpush.msra.mxu0 0.0
  %2516 = vmatpush.msra.mxu0 0.0
  %2517 = vmatpush.msra.mxu0 0.0
  %2518 = vmatpush.msra.mxu0 0.0
  %2519 = vmatpush.msra.mxu0 0.0
  %2520 = vmatpush.msra.mxu0 0.0
  %2521 = vmatpush.msra.mxu0 0.0
  %2522 = vmatpush.msra.mxu0 0.0
  %2523 = vmatpush.msra.mxu0 0.0
  %2524 = vmatpush.msra.mxu0 0.0
  %2525 = vmatpush.msra.mxu0 %v2467
  %2526 = vmatpush.msra.mxu0 %v2463
  %2527 = vmatpush.msra.mxu0 %v2459
  %2528 = vmatpush.msra.mxu0 %v2455
  %2529 = vmatmul.f32.gmra.mxu0 %v2485
  %v2530 = vpop.f32.mrf.mxu0
  %v2531 = vadd.f32 %v2477, %v2530
  %2532 = vmatmul.f32.gmra.mxu0 %v2488
  %v2533 = vpop.f32.mrf.mxu0
  %v2534 = vadd.f32 %v2482, %v2533
  %2535 = vdwg.mxu0
  %2536 = vmatpush.msra.mxu0 0.0
  %2537 = vmatpush.msra.mxu0 0.0
  %2538 = vmatpush.msra.mxu0 0.0
  %2539 = vmatpush.msra.mxu0 0.0
  %2540 = vmatpush.msra.mxu0 0.0
  %2541 = vmatpush.msra.mxu0 0.0
  %2542 = vmatpush.msra.mxu0 0.0
  %2543 = vmatpush.msra.mxu0 0.0
  %2544 = vmatpush.msra.mxu0 0.0
  %2545 = vmatpush.msra.mxu0 0.0
  %2546 = vmatpush.msra.mxu0 0.0
  %2547 = vmatpush.msra.mxu0 0.0
  %2548 = vmatpush.msra.mxu0 %v2468
  %2549 = vmatpush.msra.mxu0 %v2464
  %2550 = vmatpush.msra.mxu0 %v2460
  %2551 = vmatpush.msra.mxu0 %v2456
  %2552 = vmatmul.f32.gmra.mxu0 %v2485
  %v2553 = vpop.f32.mrf.mxu0
  %v2554 = vadd.f32 %v2477, %v2553
  %2555 = vmatmul.f32.gmra.mxu0 %v2488
  %v2556 = vpop.f32.mrf.mxu0
  %v2557 = vadd.f32 %v2482, %v2556
  %2558 = vdwg.mxu0
  %2559 = vmatpush.msra.mxu0 0.0
  %2560 = vmatpush.msra.mxu0 0.0
  %2561 = vmatpush.msra.mxu0 0.0
  %2562 = vmatpush.msra.mxu0 0.0
  %2563 = vmatpush.msra.mxu0 0.0
  %2564 = vmatpush.msra.mxu0 0.0
  %2565 = vmatpush.msra.mxu0 0.0
  %2566 = vmatpush.msra.mxu0 0.0
  %2567 = vmatpush.msra.mxu0 0.0
  %2568 = vmatpush.msra.mxu0 0.0
  %2569 = vmatpush.msra.mxu0 0.0
  %2570 = vmatpush.msra.mxu0 0.0
  %2571 = vmatpush.msra.mxu0 %v2469
  %2572 = vmatpush.msra.mxu0 %v2465
  %2573 = vmatpush.msra.mxu0 %v2461
  %2574 = vmatpush.msra.mxu0 %v2457
  %2575 = vmatmul.f32.gmra.mxu0 %v2485
  %v2576 = vpop.f32.mrf.mxu0
  %v2577 = vadd.f32 %v2477, %v2576
  %2578 = vmatmul.f32.gmra.mxu0 %v2488
  %v2579 = vpop.f32.mrf.mxu0
  %v2580 = vadd.f32 %v2482, %v2579
  %2581 = vdwg.mxu0
  %2582 = vrot.lane.b32.xlu0 %v2508, 17
  %v2583 = vpop.permute.xlu0 %2582
  %2584 = vrot.lane.b32.xlu0 %v2511, 17
  %v2585 = vpop.permute.xlu0 %2584
  %2586 = vrot.lane.b32.xlu0 %v2531, 17
  %v2587 = vpop.permute.xlu0 %2586
  %2588 = vrot.lane.b32.xlu0 %v2534, 17
  %v2589 = vpop.permute.xlu0 %2588
  %2590 = vrot.lane.b32.xlu0 %v2554, 17
  %v2591 = vpop.permute.xlu0 %2590
  %2592 = vrot.lane.b32.xlu0 %v2557, 17
  %v2593 = vpop.permute.xlu0 %2592
  %2594 = vrot.lane.b32.xlu0 %v2577, 17
  %v2595 = vpop.permute.xlu0 %2594
  %2596 = vrot.lane.b32.xlu0 %v2580, 17
  %v2597 = vpop.permute.xlu0 %2596
  %v2598 = vsel %vm77, %v2591, %v2595
  %v2599 = vsel %vm77, %v2593, %v2597
  %v2600 = vsel %vm77, %v2587, %v2591
  %v2601 = vsel %vm77, %v2589, %v2593
  %v2602 = vsel %vm77, %v2583, %v2587
  %v2603 = vsel %vm77, %v2585, %v2589
  %v2604 = vsel %vm77, %v2595, %v2583
  %v2605 = vsel %vm77, %v2597, %v2585
  %v2606 = vmul.f32 %v2604, %v86
  %v2607 = vmul.f32 %v2602, %v87
  %v2608 = vmul.f32 %v2600, %v88
  %v2609 = vmul.f32 %v2598, %v89
  %v2610 = vmul.f32 %v2605, %v86
  %v2611 = vmul.f32 %v2603, %v87
  %v2612 = vmul.f32 %v2601, %v88
  %v2613 = vmul.f32 %v2599, %v89
  %2614 = vst [vmem:[#allocation2] sm:$0xff] %v2606
  %2615 = vst [vmem:[#allocation2 + $0x8] sm:$0xff] %v2607
  %2616 = vst [vmem:[#allocation2 + $0x10] sm:$0xff] %v2608
  %2617 = vst [vmem:[#allocation2 + $0x18] sm:$0xff] %v2609
  %2618 = vst [vmem:[#allocation2 + $0x20] sm:$0xff] %v2610
  %2619 = vst [vmem:[#allocation2 + $0x28] sm:$0xff] %v2611
  %2620 = vst [vmem:[#allocation2 + $0x30] sm:$0xff] %v2612
  %2621 = vst [vmem:[#allocation2 + $0x38] sm:$0xff] %v2613
  %2622 = vrot.lane.b32.xlu0 %v2508, 16
  %v2623 = vpop.permute.xlu0 %2622
  %2624 = vrot.lane.b32.xlu0 %v2511, 16
  %v2625 = vpop.permute.xlu0 %2624
  %2626 = vrot.lane.b32.xlu0 %v2531, 16
  %v2627 = vpop.permute.xlu0 %2626
  %2628 = vrot.lane.b32.xlu0 %v2534, 16
  %v2629 = vpop.permute.xlu0 %2628
  %2630 = vrot.lane.b32.xlu0 %v2554, 16
  %v2631 = vpop.permute.xlu0 %2630
  %2632 = vrot.lane.b32.xlu0 %v2557, 16
  %v2633 = vpop.permute.xlu0 %2632
  %2634 = vrot.lane.b32.xlu0 %v2577, 16
  %v2635 = vpop.permute.xlu0 %2634
  %2636 = vrot.lane.b32.xlu0 %v2580, 16
  %v2637 = vpop.permute.xlu0 %2636
  %v2638 = vsel %vm122, %v2631, %v2635
  %v2639 = vsel %vm122, %v2633, %v2637
  %v2640 = vsel %vm122, %v2627, %v2631
  %v2641 = vsel %vm122, %v2629, %v2633
  %v2642 = vsel %vm122, %v2623, %v2627
  %v2643 = vsel %vm122, %v2625, %v2629
  %v2644 = vsel %vm122, %v2635, %v2623
  %v2645 = vsel %vm122, %v2637, %v2625
  %v2646 = vmul.f32 %v2644, %v131
  %v2647 = vmul.f32 %v2642, %v132
  %v2648 = vmul.f32 %v2640, %v133
  %v2649 = vmul.f32 %v2638, %v134
  %v2650 = vmul.f32 %v2645, %v131
  %v2651 = vmul.f32 %v2643, %v132
  %v2652 = vmul.f32 %v2641, %v133
  %v2653 = vmul.f32 %v2639, %v134
  %2654 = vst [vmem:[#allocation2 + $0x40] sm:$0xff] %v2646
  %2655 = vst [vmem:[#allocation2 + $0x48] sm:$0xff] %v2647
  %2656 = vst [vmem:[#allocation2 + $0x50] sm:$0xff] %v2648
  %2657 = vst [vmem:[#allocation2 + $0x58] sm:$0xff] %v2649
  %2658 = vst [vmem:[#allocation2 + $0x60] sm:$0xff] %v2650
  %2659 = vst [vmem:[#allocation2 + $0x68] sm:$0xff] %v2651
  %2660 = vst [vmem:[#allocation2 + $0x70] sm:$0xff] %v2652
  %2661 = vst [vmem:[#allocation2 + $0x78] sm:$0xff] %v2653
  %2662 = vrot.lane.b32.xlu0 %v2508, 15
  %v2663 = vpop.permute.xlu0 %2662
  %2664 = vrot.lane.b32.xlu0 %v2511, 15
  %v2665 = vpop.permute.xlu0 %2664
  %2666 = vrot.lane.b32.xlu0 %v2531, 15
  %v2667 = vpop.permute.xlu0 %2666
  %2668 = vrot.lane.b32.xlu0 %v2534, 15
  %v2669 = vpop.permute.xlu0 %2668
  %2670 = vrot.lane.b32.xlu0 %v2554, 15
  %v2671 = vpop.permute.xlu0 %2670
  %2672 = vrot.lane.b32.xlu0 %v2557, 15
  %v2673 = vpop.permute.xlu0 %2672
  %2674 = vrot.lane.b32.xlu0 %v2577, 15
  %v2675 = vpop.permute.xlu0 %2674
  %2676 = vrot.lane.b32.xlu0 %v2580, 15
  %v2677 = vpop.permute.xlu0 %2676
  %v2678 = vsel %vm167, %v2671, %v2675
  %v2679 = vsel %vm167, %v2673, %v2677
  %v2680 = vsel %vm167, %v2667, %v2671
  %v2681 = vsel %vm167, %v2669, %v2673
  %v2682 = vsel %vm167, %v2663, %v2667
  %v2683 = vsel %vm167, %v2665, %v2669
  %v2684 = vsel %vm167, %v2675, %v2663
  %v2685 = vsel %vm167, %v2677, %v2665
  %v2686 = vmul.f32 %v2684, %v176
  %v2687 = vmul.f32 %v2682, %v177
  %v2688 = vmul.f32 %v2680, %v178
  %v2689 = vmul.f32 %v2678, %v179
  %v2690 = vmul.f32 %v2685, %v176
  %v2691 = vmul.f32 %v2683, %v177
  %v2692 = vmul.f32 %v2681, %v178
  %v2693 = vmul.f32 %v2679, %v179
  %2694 = vst [vmem:[#allocation2 + $0x80] sm:$0xff] %v2686
  %2695 = vst [vmem:[#allocation2 + $0x88] sm:$0xff] %v2687
  %2696 = vst [vmem:[#allocation2 + $0x90] sm:$0xff] %v2688
  %2697 = vst [vmem:[#allocation2 + $0x98] sm:$0xff] %v2689
  %2698 = vst [vmem:[#allocation2 + $0xa0] sm:$0xff] %v2690
  %2699 = vst [vmem:[#allocation2 + $0xa8] sm:$0xff] %v2691
  %2700 = vst [vmem:[#allocation2 + $0xb0] sm:$0xff] %v2692
  %2701 = vst [vmem:[#allocation2 + $0xb8] sm:$0xff] %v2693
  %2702 = vrot.lane.b32.xlu0 %v2508, 1
  %v2703 = vpop.permute.xlu0 %2702
  %2704 = vrot.lane.b32.xlu0 %v2511, 1
  %v2705 = vpop.permute.xlu0 %2704
  %2706 = vrot.lane.b32.xlu0 %v2531, 1
  %v2707 = vpop.permute.xlu0 %2706
  %2708 = vrot.lane.b32.xlu0 %v2534, 1
  %v2709 = vpop.permute.xlu0 %2708
  %2710 = vrot.lane.b32.xlu0 %v2554, 1
  %v2711 = vpop.permute.xlu0 %2710
  %2712 = vrot.lane.b32.xlu0 %v2557, 1
  %v2713 = vpop.permute.xlu0 %2712
  %2714 = vrot.lane.b32.xlu0 %v2577, 1
  %v2715 = vpop.permute.xlu0 %2714
  %2716 = vrot.lane.b32.xlu0 %v2580, 1
  %v2717 = vpop.permute.xlu0 %2716
  %v2718 = vsel %vm212, %v2711, %v2715
  %v2719 = vsel %vm212, %v2713, %v2717
  %v2720 = vsel %vm212, %v2707, %v2711
  %v2721 = vsel %vm212, %v2709, %v2713
  %v2722 = vsel %vm212, %v2703, %v2707
  %v2723 = vsel %vm212, %v2705, %v2709
  %v2724 = vsel %vm212, %v2715, %v2703
  %v2725 = vsel %vm212, %v2717, %v2705
  %v2726 = vmul.f32 %v2724, %v221
  %v2727 = vmul.f32 %v2722, %v222
  %v2728 = vmul.f32 %v2720, %v223
  %v2729 = vmul.f32 %v2718, %v224
  %v2730 = vmul.f32 %v2725, %v221
  %v2731 = vmul.f32 %v2723, %v222
  %v2732 = vmul.f32 %v2721, %v223
  %v2733 = vmul.f32 %v2719, %v224
  %2734 = vst [vmem:[#allocation2 + $0xc0] sm:$0xff] %v2726
  %2735 = vst [vmem:[#allocation2 + $0xc8] sm:$0xff] %v2727
  %2736 = vst [vmem:[#allocation2 + $0xd0] sm:$0xff] %v2728
  %2737 = vst [vmem:[#allocation2 + $0xd8] sm:$0xff] %v2729
  %2738 = vst [vmem:[#allocation2 + $0xe0] sm:$0xff] %v2730
  %2739 = vst [vmem:[#allocation2 + $0xe8] sm:$0xff] %v2731
  %2740 = vst [vmem:[#allocation2 + $0xf0] sm:$0xff] %v2732
  %2741 = vst [vmem:[#allocation2 + $0xf8] sm:$0xff] %v2733
  %2742 = vst [vmem:[#allocation2 + $0x100] sm:$0xff] %v2508
  %2743 = vst [vmem:[#allocation2 + $0x108] sm:$0xff] %v2531
  %2744 = vst [vmem:[#allocation2 + $0x110] sm:$0xff] %v2554
  %2745 = vst [vmem:[#allocation2 + $0x118] sm:$0xff] %v2577
  %2746 = vst [vmem:[#allocation2 + $0x120] sm:$0xff] %v2511
  %2747 = vst [vmem:[#allocation2 + $0x128] sm:$0xff] %v2534
  %2748 = vst [vmem:[#allocation2 + $0x130] sm:$0xff] %v2557
  %2749 = vst [vmem:[#allocation2 + $0x138] sm:$0xff] %v2580
  %2750 = vrot.lane.b32.xlu0 %v2508, 127
  %v2751 = vpop.permute.xlu0 %2750
  %2752 = vrot.lane.b32.xlu0 %v2511, 127
  %v2753 = vpop.permute.xlu0 %2752
  %2754 = vrot.lane.b32.xlu0 %v2531, 127
  %v2755 = vpop.permute.xlu0 %2754
  %2756 = vrot.lane.b32.xlu0 %v2534, 127
  %v2757 = vpop.permute.xlu0 %2756
  %2758 = vrot.lane.b32.xlu0 %v2554, 127
  %v2759 = vpop.permute.xlu0 %2758
  %2760 = vrot.lane.b32.xlu0 %v2557, 127
  %v2761 = vpop.permute.xlu0 %2760
  %2762 = vrot.lane.b32.xlu0 %v2577, 127
  %v2763 = vpop.permute.xlu0 %2762
  %2764 = vrot.lane.b32.xlu0 %v2580, 127
  %v2765 = vpop.permute.xlu0 %2764
  %v2766 = vsel %vm265, %v2759, %v2763
  %v2767 = vsel %vm265, %v2761, %v2765
  %v2768 = vsel %vm265, %v2755, %v2759
  %v2769 = vsel %vm265, %v2757, %v2761
  %v2770 = vsel %vm265, %v2751, %v2755
  %v2771 = vsel %vm265, %v2753, %v2757
  %v2772 = vsel %vm265, %v2763, %v2751
  %v2773 = vsel %vm265, %v2765, %v2753
  %v2774 = vmul.f32 %v2770, %v274
  %v2775 = vmul.f32 %v2768, %v275
  %v2776 = vmul.f32 %v2766, %v276
  %v2777 = vmul.f32 %v2772, %v277
  %v2778 = vmul.f32 %v2771, %v274
  %v2779 = vmul.f32 %v2769, %v275
  %v2780 = vmul.f32 %v2767, %v276
  %v2781 = vmul.f32 %v2773, %v277
  %2782 = vst [vmem:[#allocation2 + $0x140] sm:$0xff] %v2774
  %2783 = vst [vmem:[#allocation2 + $0x148] sm:$0xff] %v2775
  %2784 = vst [vmem:[#allocation2 + $0x150] sm:$0xff] %v2776
  %2785 = vst [vmem:[#allocation2 + $0x158] sm:$0xff] %v2777
  %2786 = vst [vmem:[#allocation2 + $0x160] sm:$0xff] %v2778
  %2787 = vst [vmem:[#allocation2 + $0x168] sm:$0xff] %v2779
  %2788 = vst [vmem:[#allocation2 + $0x170] sm:$0xff] %v2780
  %2789 = vst [vmem:[#allocation2 + $0x178] sm:$0xff] %v2781
  %2790 = vrot.lane.b32.xlu0 %v2508, 113
  %v2791 = vpop.permute.xlu0 %2790
  %2792 = vrot.lane.b32.xlu0 %v2511, 113
  %v2793 = vpop.permute.xlu0 %2792
  %2794 = vrot.lane.b32.xlu0 %v2531, 113
  %v2795 = vpop.permute.xlu0 %2794
  %2796 = vrot.lane.b32.xlu0 %v2534, 113
  %v2797 = vpop.permute.xlu0 %2796
  %2798 = vrot.lane.b32.xlu0 %v2554, 113
  %v2799 = vpop.permute.xlu0 %2798
  %2800 = vrot.lane.b32.xlu0 %v2557, 113
  %v2801 = vpop.permute.xlu0 %2800
  %2802 = vrot.lane.b32.xlu0 %v2577, 113
  %v2803 = vpop.permute.xlu0 %2802
  %2804 = vrot.lane.b32.xlu0 %v2580, 113
  %v2805 = vpop.permute.xlu0 %2804
  %v2806 = vsel %vm310, %v2799, %v2803
  %v2807 = vsel %vm310, %v2801, %v2805
  %v2808 = vsel %vm310, %v2795, %v2799
  %v2809 = vsel %vm310, %v2797, %v2801
  %v2810 = vsel %vm310, %v2791, %v2795
  %v2811 = vsel %vm310, %v2793, %v2797
  %v2812 = vsel %vm310, %v2803, %v2791
  %v2813 = vsel %vm310, %v2805, %v2793
  %v2814 = vmul.f32 %v2810, %v319
  %v2815 = vmul.f32 %v2808, %v320
  %v2816 = vmul.f32 %v2806, %v321
  %v2817 = vmul.f32 %v2812, %v322
  %v2818 = vmul.f32 %v2811, %v319
  %v2819 = vmul.f32 %v2809, %v320
  %v2820 = vmul.f32 %v2807, %v321
  %v2821 = vmul.f32 %v2813, %v322
  %2822 = vst [vmem:[#allocation2 + $0x180] sm:$0xff] %v2814
  %2823 = vst [vmem:[#allocation2 + $0x188] sm:$0xff] %v2815
  %2824 = vst [vmem:[#allocation2 + $0x190] sm:$0xff] %v2816
  %2825 = vst [vmem:[#allocation2 + $0x198] sm:$0xff] %v2817
  %2826 = vst [vmem:[#allocation2 + $0x1a0] sm:$0xff] %v2818
  %2827 = vst [vmem:[#allocation2 + $0x1a8] sm:$0xff] %v2819
  %2828 = vst [vmem:[#allocation2 + $0x1b0] sm:$0xff] %v2820
  %2829 = vst [vmem:[#allocation2 + $0x1b8] sm:$0xff] %v2821
  %2830 = vrot.lane.b32.xlu0 %v2508, 112
  %v2831 = vpop.permute.xlu0 %2830
  %2832 = vrot.lane.b32.xlu0 %v2511, 112
  %v2833 = vpop.permute.xlu0 %2832
  %2834 = vrot.lane.b32.xlu0 %v2531, 112
  %v2835 = vpop.permute.xlu0 %2834
  %2836 = vrot.lane.b32.xlu0 %v2534, 112
  %v2837 = vpop.permute.xlu0 %2836
  %2838 = vrot.lane.b32.xlu0 %v2554, 112
  %v2839 = vpop.permute.xlu0 %2838
  %2840 = vrot.lane.b32.xlu0 %v2557, 112
  %v2841 = vpop.permute.xlu0 %2840
  %2842 = vrot.lane.b32.xlu0 %v2577, 112
  %v2843 = vpop.permute.xlu0 %2842
  %2844 = vrot.lane.b32.xlu0 %v2580, 112
  %v2845 = vpop.permute.xlu0 %2844
  %v2846 = vsel %vm355, %v2839, %v2843
  %v2847 = vsel %vm355, %v2841, %v2845
  %v2848 = vsel %vm355, %v2835, %v2839
  %v2849 = vsel %vm355, %v2837, %v2841
  %v2850 = vsel %vm355, %v2831, %v2835
  %v2851 = vsel %vm355, %v2833, %v2837
  %v2852 = vsel %vm355, %v2843, %v2831
  %v2853 = vsel %vm355, %v2845, %v2833
  %v2854 = vmul.f32 %v2850, %v364
  %v2855 = vmul.f32 %v2848, %v365
  %v2856 = vmul.f32 %v2846, %v366
  %v2857 = vmul.f32 %v2852, %v367
  %v2858 = vmul.f32 %v2851, %v364
  %v2859 = vmul.f32 %v2849, %v365
  %v2860 = vmul.f32 %v2847, %v366
  %v2861 = vmul.f32 %v2853, %v367
  %2862 = vst [vmem:[#allocation2 + $0x1c0] sm:$0xff] %v2854
  %2863 = vst [vmem:[#allocation2 + $0x1c8] sm:$0xff] %v2855
  %2864 = vst [vmem:[#allocation2 + $0x1d0] sm:$0xff] %v2856
  %2865 = vst [vmem:[#allocation2 + $0x1d8] sm:$0xff] %v2857
  %2866 = vst [vmem:[#allocation2 + $0x1e0] sm:$0xff] %v2858
  %2867 = vst [vmem:[#allocation2 + $0x1e8] sm:$0xff] %v2859
  %2868 = vst [vmem:[#allocation2 + $0x1f0] sm:$0xff] %v2860
  %2869 = vst [vmem:[#allocation2 + $0x1f8] sm:$0xff] %v2861
  %2870 = vrot.lane.b32.xlu0 %v2508, 111
  %v2871 = vpop.permute.xlu0 %2870
  %2872 = vrot.lane.b32.xlu0 %v2511, 111
  %v2873 = vpop.permute.xlu0 %2872
  %2874 = vrot.lane.b32.xlu0 %v2531, 111
  %v2875 = vpop.permute.xlu0 %2874
  %2876 = vrot.lane.b32.xlu0 %v2534, 111
  %v2877 = vpop.permute.xlu0 %2876
  %2878 = vrot.lane.b32.xlu0 %v2554, 111
  %v2879 = vpop.permute.xlu0 %2878
  %2880 = vrot.lane.b32.xlu0 %v2557, 111
  %v2881 = vpop.permute.xlu0 %2880
  %2882 = vrot.lane.b32.xlu0 %v2577, 111
  %v2883 = vpop.permute.xlu0 %2882
  %2884 = vrot.lane.b32.xlu0 %v2580, 111
  %v2885 = vpop.permute.xlu0 %2884
  %v2886 = vsel %vm400, %v2879, %v2883
  %v2887 = vsel %vm400, %v2881, %v2885
  %v2888 = vsel %vm400, %v2875, %v2879
  %v2889 = vsel %vm400, %v2877, %v2881
  %v2890 = vsel %vm400, %v2871, %v2875
  %v2891 = vsel %vm400, %v2873, %v2877
  %v2892 = vsel %vm400, %v2883, %v2871
  %v2893 = vsel %vm400, %v2885, %v2873
  %v2894 = vmul.f32 %v2890, %v409
  %v2895 = vmul.f32 %v2888, %v410
  %v2896 = vmul.f32 %v2886, %v411
  %v2897 = vmul.f32 %v2892, %v412
  %v2898 = vmul.f32 %v2891, %v409
  %v2899 = vmul.f32 %v2889, %v410
  %v2900 = vmul.f32 %v2887, %v411
  %v2901 = vmul.f32 %v2893, %v412
  %2902 = vst [vmem:[#allocation2 + $0x200] sm:$0xff] %v2894
  %2903 = vst [vmem:[#allocation2 + $0x208] sm:$0xff] %v2895
  %2904 = vst [vmem:[#allocation2 + $0x210] sm:$0xff] %v2896
  %2905 = vst [vmem:[#allocation2 + $0x218] sm:$0xff] %v2897
  %2906 = vst [vmem:[#allocation2 + $0x220] sm:$0xff] %v2898
  %2907 = vst [vmem:[#allocation2 + $0x228] sm:$0xff] %v2899
  %2908 = vst [vmem:[#allocation2 + $0x230] sm:$0xff] %v2900
  %2909 = vst [vmem:[#allocation2 + $0x238] sm:$0xff] %v2901
  %v2910 = vld [vmem:[#allocation2] sm:$0xff]
  %v2911 = vld [vmem:[#allocation2 + $0x8] sm:$0xff]
  %v2912 = vld [vmem:[#allocation2 + $0x10] sm:$0xff]
  %v2913 = vld [vmem:[#allocation2 + $0x18] sm:$0xff]
  %v2914 = vld [vmem:[#allocation2 + $0x20] sm:$0xff]
  %v2915 = vld [vmem:[#allocation2 + $0x28] sm:$0xff]
  %v2916 = vld [vmem:[#allocation2 + $0x30] sm:$0xff]
  %v2917 = vld [vmem:[#allocation2 + $0x38] sm:$0xff]
  %v2918 = vld [vmem:[#allocation2 + $0x40] sm:$0xff]
  %v2919 = vld [vmem:[#allocation2 + $0x48] sm:$0xff]
  %v2920 = vld [vmem:[#allocation2 + $0x50] sm:$0xff]
  %v2921 = vld [vmem:[#allocation2 + $0x58] sm:$0xff]
  %v2922 = vld [vmem:[#allocation2 + $0x60] sm:$0xff]
  %v2923 = vld [vmem:[#allocation2 + $0x68] sm:$0xff]
  %v2924 = vld [vmem:[#allocation2 + $0x70] sm:$0xff]
  %v2925 = vld [vmem:[#allocation2 + $0x78] sm:$0xff]
  %v2926 = vld [vmem:[#allocation2 + $0x80] sm:$0xff]
  %v2927 = vld [vmem:[#allocation2 + $0x88] sm:$0xff]
  %v2928 = vld [vmem:[#allocation2 + $0x90] sm:$0xff]
  %v2929 = vld [vmem:[#allocation2 + $0x98] sm:$0xff]
  %v2930 = vld [vmem:[#allocation2 + $0xa0] sm:$0xff]
  %v2931 = vld [vmem:[#allocation2 + $0xa8] sm:$0xff]
  %v2932 = vld [vmem:[#allocation2 + $0xb0] sm:$0xff]
  %v2933 = vld [vmem:[#allocation2 + $0xb8] sm:$0xff]
  %v2934 = vld [vmem:[#allocation2 + $0xc0] sm:$0xff]
  %v2935 = vld [vmem:[#allocation2 + $0xc8] sm:$0xff]
  %v2936 = vld [vmem:[#allocation2 + $0xd0] sm:$0xff]
  %v2937 = vld [vmem:[#allocation2 + $0xd8] sm:$0xff]
  %v2938 = vld [vmem:[#allocation2 + $0xe0] sm:$0xff]
  %v2939 = vld [vmem:[#allocation2 + $0xe8] sm:$0xff]
  %v2940 = vld [vmem:[#allocation2 + $0xf0] sm:$0xff]
  %v2941 = vld [vmem:[#allocation2 + $0xf8] sm:$0xff]
  %v2942 = vld [vmem:[#allocation2 + $0x100] sm:$0xff]
  %v2943 = vld [vmem:[#allocation2 + $0x108] sm:$0xff]
  %v2944 = vld [vmem:[#allocation2 + $0x110] sm:$0xff]
  %v2945 = vld [vmem:[#allocation2 + $0x118] sm:$0xff]
  %v2946 = vld [vmem:[#allocation2 + $0x120] sm:$0xff]
  %v2947 = vld [vmem:[#allocation2 + $0x128] sm:$0xff]
  %v2948 = vld [vmem:[#allocation2 + $0x130] sm:$0xff]
  %v2949 = vld [vmem:[#allocation2 + $0x138] sm:$0xff]
  %v2950 = vld [vmem:[#allocation2 + $0x140] sm:$0xff]
  %v2951 = vld [vmem:[#allocation2 + $0x148] sm:$0xff]
  %v2952 = vld [vmem:[#allocation2 + $0x150] sm:$0xff]
  %v2953 = vld [vmem:[#allocation2 + $0x158] sm:$0xff]
  %v2954 = vld [vmem:[#allocation2 + $0x160] sm:$0xff]
  %v2955 = vld [vmem:[#allocation2 + $0x168] sm:$0xff]
  %v2956 = vld [vmem:[#allocation2 + $0x170] sm:$0xff]
  %v2957 = vld [vmem:[#allocation2 + $0x178] sm:$0xff]
  %v2958 = vld [vmem:[#allocation2 + $0x180] sm:$0xff]
  %v2959 = vld [vmem:[#allocation2 + $0x188] sm:$0xff]
  %v2960 = vld [vmem:[#allocation2 + $0x190] sm:$0xff]
  %v2961 = vld [vmem:[#allocation2 + $0x198] sm:$0xff]
  %v2962 = vld [vmem:[#allocation2 + $0x1a0] sm:$0xff]
  %v2963 = vld [vmem:[#allocation2 + $0x1a8] sm:$0xff]
  %v2964 = vld [vmem:[#allocation2 + $0x1b0] sm:$0xff]
  %v2965 = vld [vmem:[#allocation2 + $0x1b8] sm:$0xff]
  %v2966 = vld [vmem:[#allocation2 + $0x1c0] sm:$0xff]
  %v2967 = vld [vmem:[#allocation2 + $0x1c8] sm:$0xff]
  %v2968 = vld [vmem:[#allocation2 + $0x1d0] sm:$0xff]
  %v2969 = vld [vmem:[#allocation2 + $0x1d8] sm:$0xff]
  %v2970 = vld [vmem:[#allocation2 + $0x1e0] sm:$0xff]
  %v2971 = vld [vmem:[#allocation2 + $0x1e8] sm:$0xff]
  %v2972 = vld [vmem:[#allocation2 + $0x1f0] sm:$0xff]
  %v2973 = vld [vmem:[#allocation2 + $0x1f8] sm:$0xff]
  %v2974 = vld [vmem:[#allocation2 + $0x200] sm:$0xff]
  %v2975 = vld [vmem:[#allocation2 + $0x208] sm:$0xff]
  %v2976 = vld [vmem:[#allocation2 + $0x210] sm:$0xff]
  %v2977 = vld [vmem:[#allocation2 + $0x218] sm:$0xff]
  %v2978 = vld [vmem:[#allocation2 + $0x220] sm:$0xff]
  %v2979 = vld [vmem:[#allocation2 + $0x228] sm:$0xff]
  %v2980 = vld [vmem:[#allocation2 + $0x230] sm:$0xff]
  %v2981 = vld [vmem:[#allocation2 + $0x238] sm:$0xff]
  %s2982 = scalar_lea.vmem %s2, 32
  %v2983 = vld [vmem:[%s2982] sm:$0xff]
  %v2984 = vld [vmem:[%s2982 + $0x8] sm:$0xff]
  %v2985 = vld [vmem:[%s2982 + $0x10] sm:$0xff]
  %v2986 = vld [vmem:[%s2982 + $0x18] sm:$0xff]
  %s2987 = scalar_lea.vmem %s5, 48
  %v2988 = vld [vmem:[%s2987] sm:$0xff]
  %v2989 = vld [vmem:[%s2987 + $0x8] sm:$0xff]
  %2991 = vset.pattern.permute.xlu0 0
  %2992 = vperm.xlu0 %2991, %v2988
  %v2993 = vpop.permute.xlu0 %2992
  %2996 = vset.pattern.permute.xlu0 0
  %2997 = vperm.xlu0 %2996, %v2989
  %v2998 = vpop.permute.xlu0 %2997
  %v3001 = vsel %vm517, %v2984, 0
  %v3004 = vsel %vm517, %v2986, 0
  %3006 = vmatpush.msra.mxu0 %v2970
  %3007 = vmatpush.msra.mxu0 %v2966
  %3008 = vmatpush.msra.mxu0 %v2962
  %3009 = vmatpush.msra.mxu0 %v2958
  %3010 = vmatpush.msra.mxu0 %v2954
  %3011 = vmatpush.msra.mxu0 %v2950
  %3012 = vmatpush.msra.mxu0 %v2946
  %3013 = vmatpush.msra.mxu0 %v2942
  %3014 = vmatpush.msra.mxu0 %v2938
  %3015 = vmatpush.msra.mxu0 %v2934
  %3016 = vmatpush.msra.mxu0 %v2930
  %3017 = vmatpush.msra.mxu0 %v2926
  %3018 = vmatpush.msra.mxu0 %v2922
  %3019 = vmatpush.msra.mxu0 %v2918
  %3020 = vmatpush.msra.mxu0 %v2914
  %3021 = vmatpush.msra.mxu0 %v2910
  %3022 = vmatmul.f32.gmra.mxu0 %v2983
  %v3023 = vpop.f32.mrf.mxu0
  %v3024 = vadd.f32 %v2993, %v3023
  %3025 = vmatmul.f32.gmra.mxu0 %v2985
  %v3026 = vpop.f32.mrf.mxu0
  %v3027 = vadd.f32 %v2998, %v3026
  %3028 = vdwg.mxu0
  %3029 = vmatpush.msra.mxu0 0.0
  %3030 = vmatpush.msra.mxu0 0.0
  %3031 = vmatpush.msra.mxu0 0.0
  %3032 = vmatpush.msra.mxu0 0.0
  %3033 = vmatpush.msra.mxu0 0.0
  %3034 = vmatpush.msra.mxu0 0.0
  %3035 = vmatpush.msra.mxu0 0.0
  %3036 = vmatpush.msra.mxu0 0.0
  %3037 = vmatpush.msra.mxu0 0.0
  %3038 = vmatpush.msra.mxu0 0.0
  %3039 = vmatpush.msra.mxu0 0.0
  %3040 = vmatpush.msra.mxu0 0.0
  %3041 = vmatpush.msra.mxu0 0.0
  %3042 = vmatpush.msra.mxu0 0.0
  %3043 = vmatpush.msra.mxu0 %v2978
  %3044 = vmatpush.msra.mxu0 %v2974
  %3045 = vmatmul.f32.gmra.mxu0 %v3001
  %v3046 = vpop.f32.mrf.mxu0
  %v3047 = vadd.f32 %v3024, %v3046
  %3048 = vmatmul.f32.gmra.mxu0 %v3004
  %v3049 = vpop.f32.mrf.mxu0
  %v3050 = vadd.f32 %v3027, %v3049
  %3051 = vdwg.mxu0
  %3052 = vmatpush.msra.mxu0 %v2971
  %3053 = vmatpush.msra.mxu0 %v2967
  %3054 = vmatpush.msra.mxu0 %v2963
  %3055 = vmatpush.msra.mxu0 %v2959
  %3056 = vmatpush.msra.mxu0 %v2955
  %3057 = vmatpush.msra.mxu0 %v2951
  %3058 = vmatpush.msra.mxu0 %v2947
  %3059 = vmatpush.msra.mxu0 %v2943
  %3060 = vmatpush.msra.mxu0 %v2939
  %3061 = vmatpush.msra.mxu0 %v2935
  %3062 = vmatpush.msra.mxu0 %v2931
  %3063 = vmatpush.msra.mxu0 %v2927
  %3064 = vmatpush.msra.mxu0 %v2923
  %3065 = vmatpush.msra.mxu0 %v2919
  %3066 = vmatpush.msra.mxu0 %v2915
  %3067 = vmatpush.msra.mxu0 %v2911
  %3068 = vmatmul.f32.gmra.mxu0 %v2983
  %v3069 = vpop.f32.mrf.mxu0
  %v3070 = vadd.f32 %v2993, %v3069
  %3071 = vmatmul.f32.gmra.mxu0 %v2985
  %v3072 = vpop.f32.mrf.mxu0
  %v3073 = vadd.f32 %v2998, %v3072
  %3074 = vdwg.mxu0
  %3075 = vmatpush.msra.mxu0 0.0
  %3076 = vmatpush.msra.mxu0 0.0
  %3077 = vmatpush.msra.mxu0 0.0
  %3078 = vmatpush.msra.mxu0 0.0
  %3079 = vmatpush.msra.mxu0 0.0
  %3080 = vmatpush.msra.mxu0 0.0
  %3081 = vmatpush.msra.mxu0 0.0
  %3082 = vmatpush.msra.mxu0 0.0
  %3083 = vmatpush.msra.mxu0 0.0
  %3084 = vmatpush.msra.mxu0 0.0
  %3085 = vmatpush.msra.mxu0 0.0
  %3086 = vmatpush.msra.mxu0 0.0
  %3087 = vmatpush.msra.mxu0 0.0
  %3088 = vmatpush.msra.mxu0 0.0
  %3089 = vmatpush.msra.mxu0 %v2979
  %3090 = vmatpush.msra.mxu0 %v2975
  %3091 = vmatmul.f32.gmra.mxu0 %v3001
  %v3092 = vpop.f32.mrf.mxu0
  %v3093 = vadd.f32 %v3070, %v3092
  %3094 = vmatmul.f32.gmra.mxu0 %v3004
  %v3095 = vpop.f32.mrf.mxu0
  %v3096 = vadd.f32 %v3073, %v3095
  %3097 = vdwg.mxu0
  %3098 = vmatpush.msra.mxu0 %v2972
  %3099 = vmatpush.msra.mxu0 %v2968
  %3100 = vmatpush.msra.mxu0 %v2964
  %3101 = vmatpush.msra.mxu0 %v2960
  %3102 = vmatpush.msra.mxu0 %v2956
  %3103 = vmatpush.msra.mxu0 %v2952
  %3104 = vmatpush.msra.mxu0 %v2948
  %3105 = vmatpush.msra.mxu0 %v2944
  %3106 = vmatpush.msra.mxu0 %v2940
  %3107 = vmatpush.msra.mxu0 %v2936
  %3108 = vmatpush.msra.mxu0 %v2932
  %3109 = vmatpush.msra.mxu0 %v2928
  %3110 = vmatpush.msra.mxu0 %v2924
  %3111 = vmatpush.msra.mxu0 %v2920
  %3112 = vmatpush.msra.mxu0 %v2916
  %3113 = vmatpush.msra.mxu0 %v2912
  %3114 = vmatmul.f32.gmra.mxu0 %v2983
  %v3115 = vpop.f32.mrf.mxu0
  %v3116 = vadd.f32 %v2993, %v3115
  %3117 = vmatmul.f32.gmra.mxu0 %v2985
  %v3118 = vpop.f32.mrf.mxu0
  %v3119 = vadd.f32 %v2998, %v3118
  %3120 = vdwg.mxu0
  %3121 = vmatpush.msra.mxu0 0.0
  %3122 = vmatpush.msra.mxu0 0.0
  %3123 = vmatpush.msra.mxu0 0.0
  %3124 = vmatpush.msra.mxu0 0.0
  %3125 = vmatpush.msra.mxu0 0.0
  %3126 = vmatpush.msra.mxu0 0.0
  %3127 = vmatpush.msra.mxu0 0.0
  %3128 = vmatpush.msra.mxu0 0.0
  %3129 = vmatpush.msra.mxu0 0.0
  %3130 = vmatpush.msra.mxu0 0.0
  %3131 = vmatpush.msra.mxu0 0.0
  %3132 = vmatpush.msra.mxu0 0.0
  %3133 = vmatpush.msra.mxu0 0.0
  %3134 = vmatpush.msra.mxu0 0.0
  %3135 = vmatpush.msra.mxu0 %v2980
  %3136 = vmatpush.msra.mxu0 %v2976
  %3137 = vmatmul.f32.gmra.mxu0 %v3001
  %v3138 = vpop.f32.mrf.mxu0
  %v3139 = vadd.f32 %v3116, %v3138
  %3140 = vmatmul.f32.gmra.mxu0 %v3004
  %v3141 = vpop.f32.mrf.mxu0
  %v3142 = vadd.f32 %v3119, %v3141
  %3143 = vdwg.mxu0
  %3144 = vmatpush.msra.mxu0 %v2973
  %3145 = vmatpush.msra.mxu0 %v2969
  %3146 = vmatpush.msra.mxu0 %v2965
  %3147 = vmatpush.msra.mxu0 %v2961
  %3148 = vmatpush.msra.mxu0 %v2957
  %3149 = vmatpush.msra.mxu0 %v2953
  %3150 = vmatpush.msra.mxu0 %v2949
  %3151 = vmatpush.msra.mxu0 %v2945
  %3152 = vmatpush.msra.mxu0 %v2941
  %3153 = vmatpush.msra.mxu0 %v2937
  %3154 = vmatpush.msra.mxu0 %v2933
  %3155 = vmatpush.msra.mxu0 %v2929
  %3156 = vmatpush.msra.mxu0 %v2925
  %3157 = vmatpush.msra.mxu0 %v2921
  %3158 = vmatpush.msra.mxu0 %v2917
  %3159 = vmatpush.msra.mxu0 %v2913
  %3160 = vmatmul.f32.gmra.mxu0 %v2983
  %v3161 = vpop.f32.mrf.mxu0
  %v3162 = vadd.f32 %v2993, %v3161
  %3163 = vmatmul.f32.gmra.mxu0 %v2985
  %v3164 = vpop.f32.mrf.mxu0
  %v3165 = vadd.f32 %v2998, %v3164
  %3166 = vdwg.mxu0
  %3167 = vmatpush.msra.mxu0 0.0
  %3168 = vmatpush.msra.mxu0 0.0
  %3169 = vmatpush.msra.mxu0 0.0
  %3170 = vmatpush.msra.mxu0 0.0
  %3171 = vmatpush.msra.mxu0 0.0
  %3172 = vmatpush.msra.mxu0 0.0
  %3173 = vmatpush.msra.mxu0 0.0
  %3174 = vmatpush.msra.mxu0 0.0
  %3175 = vmatpush.msra.mxu0 0.0
  %3176 = vmatpush.msra.mxu0 0.0
  %3177 = vmatpush.msra.mxu0 0.0
  %3178 = vmatpush.msra.mxu0 0.0
  %3179 = vmatpush.msra.mxu0 0.0
  %3180 = vmatpush.msra.mxu0 0.0
  %3181 = vmatpush.msra.mxu0 %v2981
  %3182 = vmatpush.msra.mxu0 %v2977
  %3183 = vmatmul.f32.gmra.mxu0 %v3001
  %v3184 = vpop.f32.mrf.mxu0
  %v3185 = vadd.f32 %v3162, %v3184
  %3186 = vmatmul.f32.gmra.mxu0 %v3004
  %v3187 = vpop.f32.mrf.mxu0
  %v3188 = vadd.f32 %v3165, %v3187
  %3189 = vdwg.mxu0
  %v3190 = vmax.f32 %v3047, 0.0
  %v3191 = vmax.f32 %v3093, 0.0
  %v3192 = vmax.f32 %v3139, 0.0
  %v3193 = vmax.f32 %v3185, 0.0
  %v3194 = vmax.f32 %v3050, 0.0
  %v3195 = vmax.f32 %v3096, 0.0
  %v3196 = vmax.f32 %v3142, 0.0
  %v3197 = vmax.f32 %v3188, 0.0
  %3198 = vrot.lane.b32.xlu0 %v3190, 17
  %v3199 = vpop.permute.xlu0 %3198
  %3200 = vrot.lane.b32.xlu0 %v3194, 17
  %v3201 = vpop.permute.xlu0 %3200
  %3202 = vrot.lane.b32.xlu0 %v3191, 17
  %v3203 = vpop.permute.xlu0 %3202
  %3204 = vrot.lane.b32.xlu0 %v3195, 17
  %v3205 = vpop.permute.xlu0 %3204
  %3206 = vrot.lane.b32.xlu0 %v3192, 17
  %v3207 = vpop.permute.xlu0 %3206
  %3208 = vrot.lane.b32.xlu0 %v3196, 17
  %v3209 = vpop.permute.xlu0 %3208
  %3210 = vrot.lane.b32.xlu0 %v3193, 17
  %v3211 = vpop.permute.xlu0 %3210
  %3212 = vrot.lane.b32.xlu0 %v3197, 17
  %v3213 = vpop.permute.xlu0 %3212
  %v3214 = vsel %vm77, %v3207, %v3211
  %v3215 = vsel %vm77, %v3209, %v3213
  %v3216 = vsel %vm77, %v3203, %v3207
  %v3217 = vsel %vm77, %v3205, %v3209
  %v3218 = vsel %vm77, %v3199, %v3203
  %v3219 = vsel %vm77, %v3201, %v3205
  %v3220 = vsel %vm77, %v3211, %v3199
  %v3221 = vsel %vm77, %v3213, %v3201
  %v3222 = vmul.f32 %v3220, %v86
  %v3223 = vmul.f32 %v3218, %v87
  %v3224 = vmul.f32 %v3216, %v88
  %v3225 = vmul.f32 %v3214, %v89
  %v3226 = vmul.f32 %v3221, %v86
  %v3227 = vmul.f32 %v3219, %v87
  %v3228 = vmul.f32 %v3217, %v88
  %v3229 = vmul.f32 %v3215, %v89
  %3230 = vst [vmem:[#allocation2 + $0x240] sm:$0xff] %v3222
  %3231 = vst [vmem:[#allocation2 + $0x248] sm:$0xff] %v3223
  %3232 = vst [vmem:[#allocation2 + $0x250] sm:$0xff] %v3224
  %3233 = vst [vmem:[#allocation2 + $0x258] sm:$0xff] %v3225
  %3234 = vst [vmem:[#allocation2 + $0x260] sm:$0xff] %v3226
  %3235 = vst [vmem:[#allocation2 + $0x268] sm:$0xff] %v3227
  %3236 = vst [vmem:[#allocation2 + $0x270] sm:$0xff] %v3228
  %3237 = vst [vmem:[#allocation2 + $0x278] sm:$0xff] %v3229
  %3238 = vrot.lane.b32.xlu0 %v3190, 16
  %v3239 = vpop.permute.xlu0 %3238
  %3240 = vrot.lane.b32.xlu0 %v3194, 16
  %v3241 = vpop.permute.xlu0 %3240
  %3242 = vrot.lane.b32.xlu0 %v3191, 16
  %v3243 = vpop.permute.xlu0 %3242
  %3244 = vrot.lane.b32.xlu0 %v3195, 16
  %v3245 = vpop.permute.xlu0 %3244
  %3246 = vrot.lane.b32.xlu0 %v3192, 16
  %v3247 = vpop.permute.xlu0 %3246
  %3248 = vrot.lane.b32.xlu0 %v3196, 16
  %v3249 = vpop.permute.xlu0 %3248
  %3250 = vrot.lane.b32.xlu0 %v3193, 16
  %v3251 = vpop.permute.xlu0 %3250
  %3252 = vrot.lane.b32.xlu0 %v3197, 16
  %v3253 = vpop.permute.xlu0 %3252
  %v3254 = vsel %vm122, %v3247, %v3251
  %v3255 = vsel %vm122, %v3249, %v3253
  %v3256 = vsel %vm122, %v3243, %v3247
  %v3257 = vsel %vm122, %v3245, %v3249
  %v3258 = vsel %vm122, %v3239, %v3243
  %v3259 = vsel %vm122, %v3241, %v3245
  %v3260 = vsel %vm122, %v3251, %v3239
  %v3261 = vsel %vm122, %v3253, %v3241
  %v3262 = vmul.f32 %v3260, %v131
  %v3263 = vmul.f32 %v3258, %v132
  %v3264 = vmul.f32 %v3256, %v133
  %v3265 = vmul.f32 %v3254, %v134
  %v3266 = vmul.f32 %v3261, %v131
  %v3267 = vmul.f32 %v3259, %v132
  %v3268 = vmul.f32 %v3257, %v133
  %v3269 = vmul.f32 %v3255, %v134
  %3270 = vst [vmem:[#allocation2 + $0x280] sm:$0xff] %v3262
  %3271 = vst [vmem:[#allocation2 + $0x288] sm:$0xff] %v3263
  %3272 = vst [vmem:[#allocation2 + $0x290] sm:$0xff] %v3264
  %3273 = vst [vmem:[#allocation2 + $0x298] sm:$0xff] %v3265
  %3274 = vst [vmem:[#allocation2 + $0x2a0] sm:$0xff] %v3266
  %3275 = vst [vmem:[#allocation2 + $0x2a8] sm:$0xff] %v3267
  %3276 = vst [vmem:[#allocation2 + $0x2b0] sm:$0xff] %v3268
  %3277 = vst [vmem:[#allocation2 + $0x2b8] sm:$0xff] %v3269
  %3278 = vrot.lane.b32.xlu0 %v3190, 15
  %v3279 = vpop.permute.xlu0 %3278
  %3280 = vrot.lane.b32.xlu0 %v3194, 15
  %v3281 = vpop.permute.xlu0 %3280
  %3282 = vrot.lane.b32.xlu0 %v3191, 15
  %v3283 = vpop.permute.xlu0 %3282
  %3284 = vrot.lane.b32.xlu0 %v3195, 15
  %v3285 = vpop.permute.xlu0 %3284
  %3286 = vrot.lane.b32.xlu0 %v3192, 15
  %v3287 = vpop.permute.xlu0 %3286
  %3288 = vrot.lane.b32.xlu0 %v3196, 15
  %v3289 = vpop.permute.xlu0 %3288
  %3290 = vrot.lane.b32.xlu0 %v3193, 15
  %v3291 = vpop.permute.xlu0 %3290
  %3292 = vrot.lane.b32.xlu0 %v3197, 15
  %v3293 = vpop.permute.xlu0 %3292
  %v3294 = vsel %vm167, %v3287, %v3291
  %v3295 = vsel %vm167, %v3289, %v3293
  %v3296 = vsel %vm167, %v3283, %v3287
  %v3297 = vsel %vm167, %v3285, %v3289
  %v3298 = vsel %vm167, %v3279, %v3283
  %v3299 = vsel %vm167, %v3281, %v3285
  %v3300 = vsel %vm167, %v3291, %v3279
  %v3301 = vsel %vm167, %v3293, %v3281
  %v3302 = vmul.f32 %v3300, %v176
  %v3303 = vmul.f32 %v3298, %v177
  %v3304 = vmul.f32 %v3296, %v178
  %v3305 = vmul.f32 %v3294, %v179
  %v3306 = vmul.f32 %v3301, %v176
  %v3307 = vmul.f32 %v3299, %v177
  %v3308 = vmul.f32 %v3297, %v178
  %v3309 = vmul.f32 %v3295, %v179
  %3310 = vst [vmem:[#allocation2 + $0x2c0] sm:$0xff] %v3302
  %3311 = vst [vmem:[#allocation2 + $0x2c8] sm:$0xff] %v3303
  %3312 = vst [vmem:[#allocation2 + $0x2d0] sm:$0xff] %v3304
  %3313 = vst [vmem:[#allocation2 + $0x2d8] sm:$0xff] %v3305
  %3314 = vst [vmem:[#allocation2 + $0x2e0] sm:$0xff] %v3306
  %3315 = vst [vmem:[#allocation2 + $0x2e8] sm:$0xff] %v3307
  %3316 = vst [vmem:[#allocation2 + $0x2f0] sm:$0xff] %v3308
  %3317 = vst [vmem:[#allocation2 + $0x2f8] sm:$0xff] %v3309
  %3318 = vrot.lane.b32.xlu0 %v3190, 1
  %v3319 = vpop.permute.xlu0 %3318
  %3320 = vrot.lane.b32.xlu0 %v3194, 1
  %v3321 = vpop.permute.xlu0 %3320
  %3322 = vrot.lane.b32.xlu0 %v3191, 1
  %v3323 = vpop.permute.xlu0 %3322
  %3324 = vrot.lane.b32.xlu0 %v3195, 1
  %v3325 = vpop.permute.xlu0 %3324
  %3326 = vrot.lane.b32.xlu0 %v3192, 1
  %v3327 = vpop.permute.xlu0 %3326
  %3328 = vrot.lane.b32.xlu0 %v3196, 1
  %v3329 = vpop.permute.xlu0 %3328
  %3330 = vrot.lane.b32.xlu0 %v3193, 1
  %v3331 = vpop.permute.xlu0 %3330
  %3332 = vrot.lane.b32.xlu0 %v3197, 1
  %v3333 = vpop.permute.xlu0 %3332
  %v3334 = vsel %vm212, %v3327, %v3331
  %v3335 = vsel %vm212, %v3329, %v3333
  %v3336 = vsel %vm212, %v3323, %v3327
  %v3337 = vsel %vm212, %v3325, %v3329
  %v3338 = vsel %vm212, %v3319, %v3323
  %v3339 = vsel %vm212, %v3321, %v3325
  %v3340 = vsel %vm212, %v3331, %v3319
  %v3341 = vsel %vm212, %v3333, %v3321
  %v3342 = vmul.f32 %v3340, %v221
  %v3343 = vmul.f32 %v3338, %v222
  %v3344 = vmul.f32 %v3336, %v223
  %v3345 = vmul.f32 %v3334, %v224
  %v3346 = vmul.f32 %v3341, %v221
  %v3347 = vmul.f32 %v3339, %v222
  %v3348 = vmul.f32 %v3337, %v223
  %v3349 = vmul.f32 %v3335, %v224
  %3350 = vst [vmem:[#allocation2 + $0x300] sm:$0xff] %v3342
  %3351 = vst [vmem:[#allocation2 + $0x308] sm:$0xff] %v3343
  %3352 = vst [vmem:[#allocation2 + $0x310] sm:$0xff] %v3344
  %3353 = vst [vmem:[#allocation2 + $0x318] sm:$0xff] %v3345
  %3354 = vst [vmem:[#allocation2 + $0x320] sm:$0xff] %v3346
  %3355 = vst [vmem:[#allocation2 + $0x328] sm:$0xff] %v3347
  %3356 = vst [vmem:[#allocation2 + $0x330] sm:$0xff] %v3348
  %3357 = vst [vmem:[#allocation2 + $0x338] sm:$0xff] %v3349
  %3358 = vst [vmem:[#allocation2 + $0x340] sm:$0xff] %v3190
  %3359 = vst [vmem:[#allocation2 + $0x348] sm:$0xff] %v3191
  %3360 = vst [vmem:[#allocation2 + $0x350] sm:$0xff] %v3192
  %3361 = vst [vmem:[#allocation2 + $0x358] sm:$0xff] %v3193
  %3362 = vst [vmem:[#allocation2 + $0x360] sm:$0xff] %v3194
  %3363 = vst [vmem:[#allocation2 + $0x368] sm:$0xff] %v3195
  %3364 = vst [vmem:[#allocation2 + $0x370] sm:$0xff] %v3196
  %3365 = vst [vmem:[#allocation2 + $0x378] sm:$0xff] %v3197
  %3366 = vrot.lane.b32.xlu0 %v3190, 127
  %v3367 = vpop.permute.xlu0 %3366
  %3368 = vrot.lane.b32.xlu0 %v3194, 127
  %v3369 = vpop.permute.xlu0 %3368
  %3370 = vrot.lane.b32.xlu0 %v3191, 127
  %v3371 = vpop.permute.xlu0 %3370
  %3372 = vrot.lane.b32.xlu0 %v3195, 127
  %v3373 = vpop.permute.xlu0 %3372
  %3374 = vrot.lane.b32.xlu0 %v3192, 127
  %v3375 = vpop.permute.xlu0 %3374
  %3376 = vrot.lane.b32.xlu0 %v3196, 127
  %v3377 = vpop.permute.xlu0 %3376
  %3378 = vrot.lane.b32.xlu0 %v3193, 127
  %v3379 = vpop.permute.xlu0 %3378
  %3380 = vrot.lane.b32.xlu0 %v3197, 127
  %v3381 = vpop.permute.xlu0 %3380
  %v3382 = vsel %vm265, %v3375, %v3379
  %v3383 = vsel %vm265, %v3377, %v3381
  %v3384 = vsel %vm265, %v3371, %v3375
  %v3385 = vsel %vm265, %v3373, %v3377
  %v3386 = vsel %vm265, %v3367, %v3371
  %v3387 = vsel %vm265, %v3369, %v3373
  %v3388 = vsel %vm265, %v3379, %v3367
  %v3389 = vsel %vm265, %v3381, %v3369
  %v3390 = vmul.f32 %v3386, %v274
  %v3391 = vmul.f32 %v3384, %v275
  %v3392 = vmul.f32 %v3382, %v276
  %v3393 = vmul.f32 %v3388, %v277
  %v3394 = vmul.f32 %v3387, %v274
  %v3395 = vmul.f32 %v3385, %v275
  %v3396 = vmul.f32 %v3383, %v276
  %v3397 = vmul.f32 %v3389, %v277
  %3398 = vst [vmem:[#allocation2 + $0x380] sm:$0xff] %v3390
  %3399 = vst [vmem:[#allocation2 + $0x388] sm:$0xff] %v3391
  %3400 = vst [vmem:[#allocation2 + $0x390] sm:$0xff] %v3392
  %3401 = vst [vmem:[#allocation2 + $0x398] sm:$0xff] %v3393
  %3402 = vst [vmem:[#allocation2 + $0x3a0] sm:$0xff] %v3394
  %3403 = vst [vmem:[#allocation2 + $0x3a8] sm:$0xff] %v3395
  %3404 = vst [vmem:[#allocation2 + $0x3b0] sm:$0xff] %v3396
  %3405 = vst [vmem:[#allocation2 + $0x3b8] sm:$0xff] %v3397
  %3406 = vrot.lane.b32.xlu0 %v3190, 113
  %v3407 = vpop.permute.xlu0 %3406
  %3408 = vrot.lane.b32.xlu0 %v3194, 113
  %v3409 = vpop.permute.xlu0 %3408
  %3410 = vrot.lane.b32.xlu0 %v3191, 113
  %v3411 = vpop.permute.xlu0 %3410
  %3412 = vrot.lane.b32.xlu0 %v3195, 113
  %v3413 = vpop.permute.xlu0 %3412
  %3414 = vrot.lane.b32.xlu0 %v3192, 113
  %v3415 = vpop.permute.xlu0 %3414
  %3416 = vrot.lane.b32.xlu0 %v3196, 113
  %v3417 = vpop.permute.xlu0 %3416
  %3418 = vrot.lane.b32.xlu0 %v3193, 113
  %v3419 = vpop.permute.xlu0 %3418
  %3420 = vrot.lane.b32.xlu0 %v3197, 113
  %v3421 = vpop.permute.xlu0 %3420
  %v3422 = vsel %vm310, %v3415, %v3419
  %v3423 = vsel %vm310, %v3417, %v3421
  %v3424 = vsel %vm310, %v3411, %v3415
  %v3425 = vsel %vm310, %v3413, %v3417
  %v3426 = vsel %vm310, %v3407, %v3411
  %v3427 = vsel %vm310, %v3409, %v3413
  %v3428 = vsel %vm310, %v3419, %v3407
  %v3429 = vsel %vm310, %v3421, %v3409
  %v3430 = vmul.f32 %v3426, %v319
  %v3431 = vmul.f32 %v3424, %v320
  %v3432 = vmul.f32 %v3422, %v321
  %v3433 = vmul.f32 %v3428, %v322
  %v3434 = vmul.f32 %v3427, %v319
  %v3435 = vmul.f32 %v3425, %v320
  %v3436 = vmul.f32 %v3423, %v321
  %v3437 = vmul.f32 %v3429, %v322
  %3438 = vst [vmem:[#allocation2 + $0x3c0] sm:$0xff] %v3430
  %3439 = vst [vmem:[#allocation2 + $0x3c8] sm:$0xff] %v3431
  %3440 = vst [vmem:[#allocation2 + $0x3d0] sm:$0xff] %v3432
  %3441 = vst [vmem:[#allocation2 + $0x3d8] sm:$0xff] %v3433
  %3442 = vst [vmem:[#allocation2 + $0x3e0] sm:$0xff] %v3434
  %3443 = vst [vmem:[#allocation2 + $0x3e8] sm:$0xff] %v3435
  %3444 = vst [vmem:[#allocation2 + $0x3f0] sm:$0xff] %v3436
  %3445 = vst [vmem:[#allocation2 + $0x3f8] sm:$0xff] %v3437
  %3446 = vrot.lane.b32.xlu0 %v3190, 112
  %v3447 = vpop.permute.xlu0 %3446
  %3448 = vrot.lane.b32.xlu0 %v3194, 112
  %v3449 = vpop.permute.xlu0 %3448
  %3450 = vrot.lane.b32.xlu0 %v3191, 112
  %v3451 = vpop.permute.xlu0 %3450
  %3452 = vrot.lane.b32.xlu0 %v3195, 112
  %v3453 = vpop.permute.xlu0 %3452
  %3454 = vrot.lane.b32.xlu0 %v3192, 112
  %v3455 = vpop.permute.xlu0 %3454
  %3456 = vrot.lane.b32.xlu0 %v3196, 112
  %v3457 = vpop.permute.xlu0 %3456
  %3458 = vrot.lane.b32.xlu0 %v3193, 112
  %v3459 = vpop.permute.xlu0 %3458
  %3460 = vrot.lane.b32.xlu0 %v3197, 112
  %v3461 = vpop.permute.xlu0 %3460
  %v3462 = vsel %vm355, %v3455, %v3459
  %v3463 = vsel %vm355, %v3457, %v3461
  %v3464 = vsel %vm355, %v3451, %v3455
  %v3465 = vsel %vm355, %v3453, %v3457
  %v3466 = vsel %vm355, %v3447, %v3451
  %v3467 = vsel %vm355, %v3449, %v3453
  %v3468 = vsel %vm355, %v3459, %v3447
  %v3469 = vsel %vm355, %v3461, %v3449
  %v3470 = vmul.f32 %v3466, %v364
  %v3471 = vmul.f32 %v3464, %v365
  %v3472 = vmul.f32 %v3462, %v366
  %v3473 = vmul.f32 %v3468, %v367
  %v3474 = vmul.f32 %v3467, %v364
  %v3475 = vmul.f32 %v3465, %v365
  %v3476 = vmul.f32 %v3463, %v366
  %v3477 = vmul.f32 %v3469, %v367
  %3478 = vst [vmem:[#allocation2 + $0x400] sm:$0xff] %v3470
  %3479 = vst [vmem:[#allocation2 + $0x408] sm:$0xff] %v3471
  %3480 = vst [vmem:[#allocation2 + $0x410] sm:$0xff] %v3472
  %3481 = vst [vmem:[#allocation2 + $0x418] sm:$0xff] %v3473
  %3482 = vst [vmem:[#allocation2 + $0x420] sm:$0xff] %v3474
  %3483 = vst [vmem:[#allocation2 + $0x428] sm:$0xff] %v3475
  %3484 = vst [vmem:[#allocation2 + $0x430] sm:$0xff] %v3476
  %3485 = vst [vmem:[#allocation2 + $0x438] sm:$0xff] %v3477
  %3486 = vrot.lane.b32.xlu0 %v3190, 111
  %v3487 = vpop.permute.xlu0 %3486
  %3488 = vrot.lane.b32.xlu0 %v3194, 111
  %v3489 = vpop.permute.xlu0 %3488
  %3490 = vrot.lane.b32.xlu0 %v3191, 111
  %v3491 = vpop.permute.xlu0 %3490
  %3492 = vrot.lane.b32.xlu0 %v3195, 111
  %v3493 = vpop.permute.xlu0 %3492
  %3494 = vrot.lane.b32.xlu0 %v3192, 111
  %v3495 = vpop.permute.xlu0 %3494
  %3496 = vrot.lane.b32.xlu0 %v3196, 111
  %v3497 = vpop.permute.xlu0 %3496
  %3498 = vrot.lane.b32.xlu0 %v3193, 111
  %v3499 = vpop.permute.xlu0 %3498
  %3500 = vrot.lane.b32.xlu0 %v3197, 111
  %v3501 = vpop.permute.xlu0 %3500
  %v3502 = vsel %vm400, %v3495, %v3499
  %v3503 = vsel %vm400, %v3497, %v3501
  %v3504 = vsel %vm400, %v3491, %v3495
  %v3505 = vsel %vm400, %v3493, %v3497
  %v3506 = vsel %vm400, %v3487, %v3491
  %v3507 = vsel %vm400, %v3489, %v3493
  %v3508 = vsel %vm400, %v3499, %v3487
  %v3509 = vsel %vm400, %v3501, %v3489
  %v3510 = vmul.f32 %v3506, %v409
  %v3511 = vmul.f32 %v3504, %v410
  %v3512 = vmul.f32 %v3502, %v411
  %v3513 = vmul.f32 %v3508, %v412
  %v3514 = vmul.f32 %v3507, %v409
  %v3515 = vmul.f32 %v3505, %v410
  %v3516 = vmul.f32 %v3503, %v411
  %v3517 = vmul.f32 %v3509, %v412
  %3518 = vst [vmem:[#allocation2 + $0x440] sm:$0xff] %v3510
  %3519 = vst [vmem:[#allocation2 + $0x448] sm:$0xff] %v3511
  %3520 = vst [vmem:[#allocation2 + $0x450] sm:$0xff] %v3512
  %3521 = vst [vmem:[#allocation2 + $0x458] sm:$0xff] %v3513
  %3522 = vst [vmem:[#allocation2 + $0x460] sm:$0xff] %v3514
  %3523 = vst [vmem:[#allocation2 + $0x468] sm:$0xff] %v3515
  %3524 = vst [vmem:[#allocation2 + $0x470] sm:$0xff] %v3516
  %3525 = vst [vmem:[#allocation2 + $0x478] sm:$0xff] %v3517
  %v3526 = vld [vmem:[#allocation2] sm:$0xff]
  %v3527 = vld [vmem:[#allocation2 + $0x8] sm:$0xff]
  %v3528 = vld [vmem:[#allocation2 + $0x10] sm:$0xff]
  %v3529 = vld [vmem:[#allocation2 + $0x18] sm:$0xff]
  %v3530 = vld [vmem:[#allocation2 + $0x20] sm:$0xff]
  %v3531 = vld [vmem:[#allocation2 + $0x28] sm:$0xff]
  %v3532 = vld [vmem:[#allocation2 + $0x30] sm:$0xff]
  %v3533 = vld [vmem:[#allocation2 + $0x38] sm:$0xff]
  %v3534 = vld [vmem:[#allocation2 + $0x40] sm:$0xff]
  %v3535 = vld [vmem:[#allocation2 + $0x48] sm:$0xff]
  %v3536 = vld [vmem:[#allocation2 + $0x50] sm:$0xff]
  %v3537 = vld [vmem:[#allocation2 + $0x58] sm:$0xff]
  %v3538 = vld [vmem:[#allocation2 + $0x60] sm:$0xff]
  %v3539 = vld [vmem:[#allocation2 + $0x68] sm:$0xff]
  %v3540 = vld [vmem:[#allocation2 + $0x70] sm:$0xff]
  %v3541 = vld [vmem:[#allocation2 + $0x78] sm:$0xff]
  %v3542 = vld [vmem:[#allocation2 + $0x80] sm:$0xff]
  %v3543 = vld [vmem:[#allocation2 + $0x88] sm:$0xff]
  %v3544 = vld [vmem:[#allocation2 + $0x90] sm:$0xff]
  %v3545 = vld [vmem:[#allocation2 + $0x98] sm:$0xff]
  %v3546 = vld [vmem:[#allocation2 + $0xa0] sm:$0xff]
  %v3547 = vld [vmem:[#allocation2 + $0xa8] sm:$0xff]
  %v3548 = vld [vmem:[#allocation2 + $0xb0] sm:$0xff]
  %v3549 = vld [vmem:[#allocation2 + $0xb8] sm:$0xff]
  %v3550 = vld [vmem:[#allocation2 + $0xc0] sm:$0xff]
  %v3551 = vld [vmem:[#allocation2 + $0xc8] sm:$0xff]
  %v3552 = vld [vmem:[#allocation2 + $0xd0] sm:$0xff]
  %v3553 = vld [vmem:[#allocation2 + $0xd8] sm:$0xff]
  %v3554 = vld [vmem:[#allocation2 + $0xe0] sm:$0xff]
  %v3555 = vld [vmem:[#allocation2 + $0xe8] sm:$0xff]
  %v3556 = vld [vmem:[#allocation2 + $0xf0] sm:$0xff]
  %v3557 = vld [vmem:[#allocation2 + $0xf8] sm:$0xff]
  %v3558 = vld [vmem:[#allocation2 + $0x100] sm:$0xff]
  %v3559 = vld [vmem:[#allocation2 + $0x108] sm:$0xff]
  %v3560 = vld [vmem:[#allocation2 + $0x110] sm:$0xff]
  %v3561 = vld [vmem:[#allocation2 + $0x118] sm:$0xff]
  %v3562 = vld [vmem:[#allocation2 + $0x120] sm:$0xff]
  %v3563 = vld [vmem:[#allocation2 + $0x128] sm:$0xff]
  %v3564 = vld [vmem:[#allocation2 + $0x130] sm:$0xff]
  %v3565 = vld [vmem:[#allocation2 + $0x138] sm:$0xff]
  %v3566 = vld [vmem:[#allocation2 + $0x140] sm:$0xff]
  %v3567 = vld [vmem:[#allocation2 + $0x148] sm:$0xff]
  %v3568 = vld [vmem:[#allocation2 + $0x150] sm:$0xff]
  %v3569 = vld [vmem:[#allocation2 + $0x158] sm:$0xff]
  %v3570 = vld [vmem:[#allocation2 + $0x160] sm:$0xff]
  %v3571 = vld [vmem:[#allocation2 + $0x168] sm:$0xff]
  %v3572 = vld [vmem:[#allocation2 + $0x170] sm:$0xff]
  %v3573 = vld [vmem:[#allocation2 + $0x178] sm:$0xff]
  %v3574 = vld [vmem:[#allocation2 + $0x180] sm:$0xff]
  %v3575 = vld [vmem:[#allocation2 + $0x188] sm:$0xff]
  %v3576 = vld [vmem:[#allocation2 + $0x190] sm:$0xff]
  %v3577 = vld [vmem:[#allocation2 + $0x198] sm:$0xff]
  %v3578 = vld [vmem:[#allocation2 + $0x1a0] sm:$0xff]
  %v3579 = vld [vmem:[#allocation2 + $0x1a8] sm:$0xff]
  %v3580 = vld [vmem:[#allocation2 + $0x1b0] sm:$0xff]
  %v3581 = vld [vmem:[#allocation2 + $0x1b8] sm:$0xff]
  %v3582 = vld [vmem:[#allocation2 + $0x1c0] sm:$0xff]
  %v3583 = vld [vmem:[#allocation2 + $0x1c8] sm:$0xff]
  %v3584 = vld [vmem:[#allocation2 + $0x1d0] sm:$0xff]
  %v3585 = vld [vmem:[#allocation2 + $0x1d8] sm:$0xff]
  %v3586 = vld [vmem:[#allocation2 + $0x1e0] sm:$0xff]
  %v3587 = vld [vmem:[#allocation2 + $0x1e8] sm:$0xff]
  %v3588 = vld [vmem:[#allocation2 + $0x1f0] sm:$0xff]
  %v3589 = vld [vmem:[#allocation2 + $0x1f8] sm:$0xff]
  %v3590 = vld [vmem:[#allocation2 + $0x200] sm:$0xff]
  %v3591 = vld [vmem:[#allocation2 + $0x208] sm:$0xff]
  %v3592 = vld [vmem:[#allocation2 + $0x210] sm:$0xff]
  %v3593 = vld [vmem:[#allocation2 + $0x218] sm:$0xff]
  %v3594 = vld [vmem:[#allocation2 + $0x220] sm:$0xff]
  %v3595 = vld [vmem:[#allocation2 + $0x228] sm:$0xff]
  %v3596 = vld [vmem:[#allocation2 + $0x230] sm:$0xff]
  %v3597 = vld [vmem:[#allocation2 + $0x238] sm:$0xff]
  %v3598 = vld [vmem:[#allocation2 + $0x240] sm:$0xff]
  %v3599 = vld [vmem:[#allocation2 + $0x248] sm:$0xff]
  %v3600 = vld [vmem:[#allocation2 + $0x250] sm:$0xff]
  %v3601 = vld [vmem:[#allocation2 + $0x258] sm:$0xff]
  %v3602 = vld [vmem:[#allocation2 + $0x260] sm:$0xff]
  %v3603 = vld [vmem:[#allocation2 + $0x268] sm:$0xff]
  %v3604 = vld [vmem:[#allocation2 + $0x270] sm:$0xff]
  %v3605 = vld [vmem:[#allocation2 + $0x278] sm:$0xff]
  %v3606 = vld [vmem:[#allocation2 + $0x280] sm:$0xff]
  %v3607 = vld [vmem:[#allocation2 + $0x288] sm:$0xff]
  %v3608 = vld [vmem:[#allocation2 + $0x290] sm:$0xff]
  %v3609 = vld [vmem:[#allocation2 + $0x298] sm:$0xff]
  %v3610 = vld [vmem:[#allocation2 + $0x2a0] sm:$0xff]
  %v3611 = vld [vmem:[#allocation2 + $0x2a8] sm:$0xff]
  %v3612 = vld [vmem:[#allocation2 + $0x2b0] sm:$0xff]
  %v3613 = vld [vmem:[#allocation2 + $0x2b8] sm:$0xff]
  %v3614 = vld [vmem:[#allocation2 + $0x2c0] sm:$0xff]
  %v3615 = vld [vmem:[#allocation2 + $0x2c8] sm:$0xff]
  %v3616 = vld [vmem:[#allocation2 + $0x2d0] sm:$0xff]
  %v3617 = vld [vmem:[#allocation2 + $0x2d8] sm:$0xff]
  %v3618 = vld [vmem:[#allocation2 + $0x2e0] sm:$0xff]
  %v3619 = vld [vmem:[#allocation2 + $0x2e8] sm:$0xff]
  %v3620 = vld [vmem:[#allocation2 + $0x2f0] sm:$0xff]
  %v3621 = vld [vmem:[#allocation2 + $0x2f8] sm:$0xff]
  %v3622 = vld [vmem:[#allocation2 + $0x300] sm:$0xff]
  %v3623 = vld [vmem:[#allocation2 + $0x308] sm:$0xff]
  %v3624 = vld [vmem:[#allocation2 + $0x310] sm:$0xff]
  %v3625 = vld [vmem:[#allocation2 + $0x318] sm:$0xff]
  %v3626 = vld [vmem:[#allocation2 + $0x320] sm:$0xff]
  %v3627 = vld [vmem:[#allocation2 + $0x328] sm:$0xff]
  %v3628 = vld [vmem:[#allocation2 + $0x330] sm:$0xff]
  %v3629 = vld [vmem:[#allocation2 + $0x338] sm:$0xff]
  %v3630 = vld [vmem:[#allocation2 + $0x340] sm:$0xff]
  %v3631 = vld [vmem:[#allocation2 + $0x348] sm:$0xff]
  %v3632 = vld [vmem:[#allocation2 + $0x350] sm:$0xff]
  %v3633 = vld [vmem:[#allocation2 + $0x358] sm:$0xff]
  %v3634 = vld [vmem:[#allocation2 + $0x360] sm:$0xff]
  %v3635 = vld [vmem:[#allocation2 + $0x368] sm:$0xff]
  %v3636 = vld [vmem:[#allocation2 + $0x370] sm:$0xff]
  %v3637 = vld [vmem:[#allocation2 + $0x378] sm:$0xff]
  %v3638 = vld [vmem:[#allocation2 + $0x380] sm:$0xff]
  %v3639 = vld [vmem:[#allocation2 + $0x388] sm:$0xff]
  %v3640 = vld [vmem:[#allocation2 + $0x390] sm:$0xff]
  %v3641 = vld [vmem:[#allocation2 + $0x398] sm:$0xff]
  %v3642 = vld [vmem:[#allocation2 + $0x3a0] sm:$0xff]
  %v3643 = vld [vmem:[#allocation2 + $0x3a8] sm:$0xff]
  %v3644 = vld [vmem:[#allocation2 + $0x3b0] sm:$0xff]
  %v3645 = vld [vmem:[#allocation2 + $0x3b8] sm:$0xff]
  %v3646 = vld [vmem:[#allocation2 + $0x3c0] sm:$0xff]
  %v3647 = vld [vmem:[#allocation2 + $0x3c8] sm:$0xff]
  %v3648 = vld [vmem:[#allocation2 + $0x3d0] sm:$0xff]
  %v3649 = vld [vmem:[#allocation2 + $0x3d8] sm:$0xff]
  %v3650 = vld [vmem:[#allocation2 + $0x3e0] sm:$0xff]
  %v3651 = vld [vmem:[#allocation2 + $0x3e8] sm:$0xff]
  %v3652 = vld [vmem:[#allocation2 + $0x3f0] sm:$0xff]
  %v3653 = vld [vmem:[#allocation2 + $0x3f8] sm:$0xff]
  %v3654 = vld [vmem:[#allocation2 + $0x400] sm:$0xff]
  %v3655 = vld [vmem:[#allocation2 + $0x408] sm:$0xff]
  %v3656 = vld [vmem:[#allocation2 + $0x410] sm:$0xff]
  %v3657 = vld [vmem:[#allocation2 + $0x418] sm:$0xff]
  %v3658 = vld [vmem:[#allocation2 + $0x420] sm:$0xff]
  %v3659 = vld [vmem:[#allocation2 + $0x428] sm:$0xff]
  %v3660 = vld [vmem:[#allocation2 + $0x430] sm:$0xff]
  %v3661 = vld [vmem:[#allocation2 + $0x438] sm:$0xff]
  %v3662 = vld [vmem:[#allocation2 + $0x440] sm:$0xff]
  %v3663 = vld [vmem:[#allocation2 + $0x448] sm:$0xff]
  %v3664 = vld [vmem:[#allocation2 + $0x450] sm:$0xff]
  %v3665 = vld [vmem:[#allocation2 + $0x458] sm:$0xff]
  %v3666 = vld [vmem:[#allocation2 + $0x460] sm:$0xff]
  %v3667 = vld [vmem:[#allocation2 + $0x468] sm:$0xff]
  %v3668 = vld [vmem:[#allocation2 + $0x470] sm:$0xff]
  %v3669 = vld [vmem:[#allocation2 + $0x478] sm:$0xff]
  %s3670 = scalar_lea.vmem %s3, 48
  %v3671 = vld [vmem:[%s3670] sm:$0xff]
  %v3672 = vld [vmem:[%s3670 + $0x8] sm:$0xff]
  %v3673 = vld [vmem:[%s3670 + $0x10] sm:$0xff]
  %v3674 = vld [vmem:[%s3670 + $0x18] sm:$0xff]
  %v3675 = vld [vmem:[%s3670 + $0x20] sm:$0xff]
  %v3676 = vld [vmem:[%s3670 + $0x28] sm:$0xff]
  %s3677 = scalar_lea.vmem %s5, 64
  %v3678 = vld [vmem:[%s3677] sm:$0xff]
  %v3679 = vld [vmem:[%s3677 + $0x8] sm:$0xff]
  %3681 = vset.pattern.permute.xlu0 0
  %3682 = vperm.xlu0 %3681, %v3678
  %v3683 = vpop.permute.xlu0 %3682
  %3686 = vset.pattern.permute.xlu0 0
  %3687 = vperm.xlu0 %3686, %v3679
  %v3688 = vpop.permute.xlu0 %3687
  %v3691 = vsel %vm1207, %v3673, 0
  %v3694 = vsel %vm1207, %v3676, 0
  %3696 = vmatpush.msra.mxu0 %v3586
  %3697 = vmatpush.msra.mxu0 %v3582
  %3698 = vmatpush.msra.mxu0 %v3578
  %3699 = vmatpush.msra.mxu0 %v3574
  %3700 = vmatpush.msra.mxu0 %v3570
  %3701 = vmatpush.msra.mxu0 %v3566
  %3702 = vmatpush.msra.mxu0 %v3562
  %3703 = vmatpush.msra.mxu0 %v3558
  %3704 = vmatpush.msra.mxu0 %v3554
  %3705 = vmatpush.msra.mxu0 %v3550
  %3706 = vmatpush.msra.mxu0 %v3546
  %3707 = vmatpush.msra.mxu0 %v3542
  %3708 = vmatpush.msra.mxu0 %v3538
  %3709 = vmatpush.msra.mxu0 %v3534
  %3710 = vmatpush.msra.mxu0 %v3530
  %3711 = vmatpush.msra.mxu0 %v3526
  %3712 = vmatmul.f32.gmra.mxu0 %v3671
  %v3713 = vpop.f32.mrf.mxu0
  %v3714 = vadd.f32 %v3683, %v3713
  %3715 = vmatmul.f32.gmra.mxu0 %v3674
  %v3716 = vpop.f32.mrf.mxu0
  %v3717 = vadd.f32 %v3688, %v3716
  %3718 = vdwg.mxu0
  %3719 = vmatpush.msra.mxu0 %v3650
  %3720 = vmatpush.msra.mxu0 %v3646
  %3721 = vmatpush.msra.mxu0 %v3642
  %3722 = vmatpush.msra.mxu0 %v3638
  %3723 = vmatpush.msra.mxu0 %v3634
  %3724 = vmatpush.msra.mxu0 %v3630
  %3725 = vmatpush.msra.mxu0 %v3626
  %3726 = vmatpush.msra.mxu0 %v3622
  %3727 = vmatpush.msra.mxu0 %v3618
  %3728 = vmatpush.msra.mxu0 %v3614
  %3729 = vmatpush.msra.mxu0 %v3610
  %3730 = vmatpush.msra.mxu0 %v3606
  %3731 = vmatpush.msra.mxu0 %v3602
  %3732 = vmatpush.msra.mxu0 %v3598
  %3733 = vmatpush.msra.mxu0 %v3594
  %3734 = vmatpush.msra.mxu0 %v3590
  %3735 = vmatmul.f32.gmra.mxu0 %v3672
  %v3736 = vpop.f32.mrf.mxu0
  %v3737 = vadd.f32 %v3714, %v3736
  %3738 = vmatmul.f32.gmra.mxu0 %v3675
  %v3739 = vpop.f32.mrf.mxu0
  %v3740 = vadd.f32 %v3717, %v3739
  %3741 = vdwg.mxu0
  %3742 = vmatpush.msra.mxu0 0.0
  %3743 = vmatpush.msra.mxu0 0.0
  %3744 = vmatpush.msra.mxu0 0.0
  %3745 = vmatpush.msra.mxu0 0.0
  %3746 = vmatpush.msra.mxu0 0.0
  %3747 = vmatpush.msra.mxu0 0.0
  %3748 = vmatpush.msra.mxu0 0.0
  %3749 = vmatpush.msra.mxu0 0.0
  %3750 = vmatpush.msra.mxu0 0.0
  %3751 = vmatpush.msra.mxu0 0.0
  %3752 = vmatpush.msra.mxu0 0.0
  %3753 = vmatpush.msra.mxu0 0.0
  %3754 = vmatpush.msra.mxu0 %v3666
  %3755 = vmatpush.msra.mxu0 %v3662
  %3756 = vmatpush.msra.mxu0 %v3658
  %3757 = vmatpush.msra.mxu0 %v3654
  %3758 = vmatmul.f32.gmra.mxu0 %v3691
  %v3759 = vpop.f32.mrf.mxu0
  %v3760 = vadd.f32 %v3737, %v3759
  %3761 = vmatmul.f32.gmra.mxu0 %v3694
  %v3762 = vpop.f32.mrf.mxu0
  %v3763 = vadd.f32 %v3740, %v3762
  %3764 = vdwg.mxu0
  %3765 = vmatpush.msra.mxu0 %v3587
  %3766 = vmatpush.msra.mxu0 %v3583
  %3767 = vmatpush.msra.mxu0 %v3579
  %3768 = vmatpush.msra.mxu0 %v3575
  %3769 = vmatpush.msra.mxu0 %v3571
  %3770 = vmatpush.msra.mxu0 %v3567
  %3771 = vmatpush.msra.mxu0 %v3563
  %3772 = vmatpush.msra.mxu0 %v3559
  %3773 = vmatpush.msra.mxu0 %v3555
  %3774 = vmatpush.msra.mxu0 %v3551
  %3775 = vmatpush.msra.mxu0 %v3547
  %3776 = vmatpush.msra.mxu0 %v3543
  %3777 = vmatpush.msra.mxu0 %v3539
  %3778 = vmatpush.msra.mxu0 %v3535
  %3779 = vmatpush.msra.mxu0 %v3531
  %3780 = vmatpush.msra.mxu0 %v3527
  %3781 = vmatmul.f32.gmra.mxu0 %v3671
  %v3782 = vpop.f32.mrf.mxu0
  %v3783 = vadd.f32 %v3683, %v3782
  %3784 = vmatmul.f32.gmra.mxu0 %v3674
  %v3785 = vpop.f32.mrf.mxu0
  %v3786 = vadd.f32 %v3688, %v3785
  %3787 = vdwg.mxu0
  %3788 = vmatpush.msra.mxu0 %v3651
  %3789 = vmatpush.msra.mxu0 %v3647
  %3790 = vmatpush.msra.mxu0 %v3643
  %3791 = vmatpush.msra.mxu0 %v3639
  %3792 = vmatpush.msra.mxu0 %v3635
  %3793 = vmatpush.msra.mxu0 %v3631
  %3794 = vmatpush.msra.mxu0 %v3627
  %3795 = vmatpush.msra.mxu0 %v3623
  %3796 = vmatpush.msra.mxu0 %v3619
  %3797 = vmatpush.msra.mxu0 %v3615
  %3798 = vmatpush.msra.mxu0 %v3611
  %3799 = vmatpush.msra.mxu0 %v3607
  %3800 = vmatpush.msra.mxu0 %v3603
  %3801 = vmatpush.msra.mxu0 %v3599
  %3802 = vmatpush.msra.mxu0 %v3595
  %3803 = vmatpush.msra.mxu0 %v3591
  %3804 = vmatmul.f32.gmra.mxu0 %v3672
  %v3805 = vpop.f32.mrf.mxu0
  %v3806 = vadd.f32 %v3783, %v3805
  %3807 = vmatmul.f32.gmra.mxu0 %v3675
  %v3808 = vpop.f32.mrf.mxu0
  %v3809 = vadd.f32 %v3786, %v3808
  %3810 = vdwg.mxu0
  %3811 = vmatpush.msra.mxu0 0.0
  %3812 = vmatpush.msra.mxu0 0.0
  %3813 = vmatpush.msra.mxu0 0.0
  %3814 = vmatpush.msra.mxu0 0.0
  %3815 = vmatpush.msra.mxu0 0.0
  %3816 = vmatpush.msra.mxu0 0.0
  %3817 = vmatpush.msra.mxu0 0.0
  %3818 = vmatpush.msra.mxu0 0.0
  %3819 = vmatpush.msra.mxu0 0.0
  %3820 = vmatpush.msra.mxu0 0.0
  %3821 = vmatpush.msra.mxu0 0.0
  %3822 = vmatpush.msra.mxu0 0.0
  %3823 = vmatpush.msra.mxu0 %v3667
  %3824 = vmatpush.msra.mxu0 %v3663
  %3825 = vmatpush.msra.mxu0 %v3659
  %3826 = vmatpush.msra.mxu0 %v3655
  %3827 = vmatmul.f32.gmra.mxu0 %v3691
  %v3828 = vpop.f32.mrf.mxu0
  %v3829 = vadd.f32 %v3806, %v3828
  %3830 = vmatmul.f32.gmra.mxu0 %v3694
  %v3831 = vpop.f32.mrf.mxu0
  %v3832 = vadd.f32 %v3809, %v3831
  %3833 = vdwg.mxu0
  %3834 = vmatpush.msra.mxu0 %v3588
  %3835 = vmatpush.msra.mxu0 %v3584
  %3836 = vmatpush.msra.mxu0 %v3580
  %3837 = vmatpush.msra.mxu0 %v3576
  %3838 = vmatpush.msra.mxu0 %v3572
  %3839 = vmatpush.msra.mxu0 %v3568
  %3840 = vmatpush.msra.mxu0 %v3564
  %3841 = vmatpush.msra.mxu0 %v3560
  %3842 = vmatpush.msra.mxu0 %v3556
  %3843 = vmatpush.msra.mxu0 %v3552
  %3844 = vmatpush.msra.mxu0 %v3548
  %3845 = vmatpush.msra.mxu0 %v3544
  %3846 = vmatpush.msra.mxu0 %v3540
  %3847 = vmatpush.msra.mxu0 %v3536
  %3848 = vmatpush.msra.mxu0 %v3532
  %3849 = vmatpush.msra.mxu0 %v3528
  %3850 = vmatmul.f32.gmra.mxu0 %v3671
  %v3851 = vpop.f32.mrf.mxu0
  %v3852 = vadd.f32 %v3683, %v3851
  %3853 = vmatmul.f32.gmra.mxu0 %v3674
  %v3854 = vpop.f32.mrf.mxu0
  %v3855 = vadd.f32 %v3688, %v3854
  %3856 = vdwg.mxu0
  %3857 = vmatpush.msra.mxu0 %v3652
  %3858 = vmatpush.msra.mxu0 %v3648
  %3859 = vmatpush.msra.mxu0 %v3644
  %3860 = vmatpush.msra.mxu0 %v3640
  %3861 = vmatpush.msra.mxu0 %v3636
  %3862 = vmatpush.msra.mxu0 %v3632
  %3863 = vmatpush.msra.mxu0 %v3628
  %3864 = vmatpush.msra.mxu0 %v3624
  %3865 = vmatpush.msra.mxu0 %v3620
  %3866 = vmatpush.msra.mxu0 %v3616
  %3867 = vmatpush.msra.mxu0 %v3612
  %3868 = vmatpush.msra.mxu0 %v3608
  %3869 = vmatpush.msra.mxu0 %v3604
  %3870 = vmatpush.msra.mxu0 %v3600
  %3871 = vmatpush.msra.mxu0 %v3596
  %3872 = vmatpush.msra.mxu0 %v3592
  %3873 = vmatmul.f32.gmra.mxu0 %v3672
  %v3874 = vpop.f32.mrf.mxu0
  %v3875 = vadd.f32 %v3852, %v3874
  %3876 = vmatmul.f32.gmra.mxu0 %v3675
  %v3877 = vpop.f32.mrf.mxu0
  %v3878 = vadd.f32 %v3855, %v3877
  %3879 = vdwg.mxu0
  %3880 = vmatpush.msra.mxu0 0.0
  %3881 = vmatpush.msra.mxu0 0.0
  %3882 = vmatpush.msra.mxu0 0.0
  %3883 = vmatpush.msra.mxu0 0.0
  %3884 = vmatpush.msra.mxu0 0.0
  %3885 = vmatpush.msra.mxu0 0.0
  %3886 = vmatpush.msra.mxu0 0.0
  %3887 = vmatpush.msra.mxu0 0.0
  %3888 = vmatpush.msra.mxu0 0.0
  %3889 = vmatpush.msra.mxu0 0.0
  %3890 = vmatpush.msra.mxu0 0.0
  %3891 = vmatpush.msra.mxu0 0.0
  %3892 = vmatpush.msra.mxu0 %v3668
  %3893 = vmatpush.msra.mxu0 %v3664
  %3894 = vmatpush.msra.mxu0 %v3660
  %3895 = vmatpush.msra.mxu0 %v3656
  %3896 = vmatmul.f32.gmra.mxu0 %v3691
  %v3897 = vpop.f32.mrf.mxu0
  %v3898 = vadd.f32 %v3875, %v3897
  %3899 = vmatmul.f32.gmra.mxu0 %v3694
  %v3900 = vpop.f32.mrf.mxu0
  %v3901 = vadd.f32 %v3878, %v3900
  %3902 = vdwg.mxu0
  %3903 = vmatpush.msra.mxu0 %v3589
  %3904 = vmatpush.msra.mxu0 %v3585
  %3905 = vmatpush.msra.mxu0 %v3581
  %3906 = vmatpush.msra.mxu0 %v3577
  %3907 = vmatpush.msra.mxu0 %v3573
  %3908 = vmatpush.msra.mxu0 %v3569
  %3909 = vmatpush.msra.mxu0 %v3565
  %3910 = vmatpush.msra.mxu0 %v3561
  %3911 = vmatpush.msra.mxu0 %v3557
  %3912 = vmatpush.msra.mxu0 %v3553
  %3913 = vmatpush.msra.mxu0 %v3549
  %3914 = vmatpush.msra.mxu0 %v3545
  %3915 = vmatpush.msra.mxu0 %v3541
  %3916 = vmatpush.msra.mxu0 %v3537
  %3917 = vmatpush.msra.mxu0 %v3533
  %3918 = vmatpush.msra.mxu0 %v3529
  %3919 = vmatmul.f32.gmra.mxu0 %v3671
  %v3920 = vpop.f32.mrf.mxu0
  %v3921 = vadd.f32 %v3683, %v3920
  %3922 = vmatmul.f32.gmra.mxu0 %v3674
  %v3923 = vpop.f32.mrf.mxu0
  %v3924 = vadd.f32 %v3688, %v3923
  %3925 = vdwg.mxu0
  %3926 = vmatpush.msra.mxu0 %v3653
  %3927 = vmatpush.msra.mxu0 %v3649
  %3928 = vmatpush.msra.mxu0 %v3645
  %3929 = vmatpush.msra.mxu0 %v3641
  %3930 = vmatpush.msra.mxu0 %v3637
  %3931 = vmatpush.msra.mxu0 %v3633
  %3932 = vmatpush.msra.mxu0 %v3629
  %3933 = vmatpush.msra.mxu0 %v3625
  %3934 = vmatpush.msra.mxu0 %v3621
  %3935 = vmatpush.msra.mxu0 %v3617
  %3936 = vmatpush.msra.mxu0 %v3613
  %3937 = vmatpush.msra.mxu0 %v3609
  %3938 = vmatpush.msra.mxu0 %v3605
  %3939 = vmatpush.msra.mxu0 %v3601
  %3940 = vmatpush.msra.mxu0 %v3597
  %3941 = vmatpush.msra.mxu0 %v3593
  %3942 = vmatmul.f32.gmra.mxu0 %v3672
  %v3943 = vpop.f32.mrf.mxu0
  %v3944 = vadd.f32 %v3921, %v3943
  %3945 = vmatmul.f32.gmra.mxu0 %v3675
  %v3946 = vpop.f32.mrf.mxu0
  %v3947 = vadd.f32 %v3924, %v3946
  %3948 = vdwg.mxu0
  %3949 = vmatpush.msra.mxu0 0.0
  %3950 = vmatpush.msra.mxu0 0.0
  %3951 = vmatpush.msra.mxu0 0.0
  %3952 = vmatpush.msra.mxu0 0.0
  %3953 = vmatpush.msra.mxu0 0.0
  %3954 = vmatpush.msra.mxu0 0.0
  %3955 = vmatpush.msra.mxu0 0.0
  %3956 = vmatpush.msra.mxu0 0.0
  %3957 = vmatpush.msra.mxu0 0.0
  %3958 = vmatpush.msra.mxu0 0.0
  %3959 = vmatpush.msra.mxu0 0.0
  %3960 = vmatpush.msra.mxu0 0.0
  %3961 = vmatpush.msra.mxu0 %v3669
  %3962 = vmatpush.msra.mxu0 %v3665
  %3963 = vmatpush.msra.mxu0 %v3661
  %3964 = vmatpush.msra.mxu0 %v3657
  %3965 = vmatmul.f32.gmra.mxu0 %v3691
  %v3966 = vpop.f32.mrf.mxu0
  %v3967 = vadd.f32 %v3944, %v3966
  %3968 = vmatmul.f32.gmra.mxu0 %v3694
  %v3969 = vpop.f32.mrf.mxu0
  %v3970 = vadd.f32 %v3947, %v3969
  %3971 = vdwg.mxu0
  %v3972 = vmax.f32 %v3760, 0.0
  %v3973 = vmax.f32 %v3829, 0.0
  %v3974 = vmax.f32 %v3898, 0.0
  %v3975 = vmax.f32 %v3967, 0.0
  %v3976 = vmax.f32 %v3763, 0.0
  %v3977 = vmax.f32 %v3832, 0.0
  %v3978 = vmax.f32 %v3901, 0.0
  %v3979 = vmax.f32 %v3970, 0.0
  %3980 = vrot.lane.b32.xlu0 %v3972, 17
  %v3981 = vpop.permute.xlu0 %3980
  %3982 = vrot.lane.b32.xlu0 %v3976, 17
  %v3983 = vpop.permute.xlu0 %3982
  %3984 = vrot.lane.b32.xlu0 %v3973, 17
  %v3985 = vpop.permute.xlu0 %3984
  %3986 = vrot.lane.b32.xlu0 %v3977, 17
  %v3987 = vpop.permute.xlu0 %3986
  %3988 = vrot.lane.b32.xlu0 %v3974, 17
  %v3989 = vpop.permute.xlu0 %3988
  %3990 = vrot.lane.b32.xlu0 %v3978, 17
  %v3991 = vpop.permute.xlu0 %3990
  %3992 = vrot.lane.b32.xlu0 %v3975, 17
  %v3993 = vpop.permute.xlu0 %3992
  %3994 = vrot.lane.b32.xlu0 %v3979, 17
  %v3995 = vpop.permute.xlu0 %3994
  %v3996 = vsel %vm77, %v3989, %v3993
  %v3997 = vsel %vm77, %v3991, %v3995
  %v3998 = vsel %vm77, %v3985, %v3989
  %v3999 = vsel %vm77, %v3987, %v3991
  %v4000 = vsel %vm77, %v3981, %v3985
  %v4001 = vsel %vm77, %v3983, %v3987
  %v4002 = vsel %vm77, %v3993, %v3981
  %v4003 = vsel %vm77, %v3995, %v3983
  %v4004 = vmul.f32 %v4002, %v86
  %v4005 = vmul.f32 %v4000, %v87
  %v4006 = vmul.f32 %v3998, %v88
  %v4007 = vmul.f32 %v3996, %v89
  %v4008 = vmul.f32 %v4003, %v86
  %v4009 = vmul.f32 %v4001, %v87
  %v4010 = vmul.f32 %v3999, %v88
  %v4011 = vmul.f32 %v3997, %v89
  %4012 = vst [vmem:[#allocation2 + $0x480] sm:$0xff] %v4004
  %4013 = vst [vmem:[#allocation2 + $0x488] sm:$0xff] %v4005
  %4014 = vst [vmem:[#allocation2 + $0x490] sm:$0xff] %v4006
  %4015 = vst [vmem:[#allocation2 + $0x498] sm:$0xff] %v4007
  %4016 = vst [vmem:[#allocation2 + $0x4a0] sm:$0xff] %v4008
  %4017 = vst [vmem:[#allocation2 + $0x4a8] sm:$0xff] %v4009
  %4018 = vst [vmem:[#allocation2 + $0x4b0] sm:$0xff] %v4010
  %4019 = vst [vmem:[#allocation2 + $0x4b8] sm:$0xff] %v4011
  %4020 = vrot.lane.b32.xlu0 %v3972, 16
  %v4021 = vpop.permute.xlu0 %4020
  %4022 = vrot.lane.b32.xlu0 %v3976, 16
  %v4023 = vpop.permute.xlu0 %4022
  %4024 = vrot.lane.b32.xlu0 %v3973, 16
  %v4025 = vpop.permute.xlu0 %4024
  %4026 = vrot.lane.b32.xlu0 %v3977, 16
  %v4027 = vpop.permute.xlu0 %4026
  %4028 = vrot.lane.b32.xlu0 %v3974, 16
  %v4029 = vpop.permute.xlu0 %4028
  %4030 = vrot.lane.b32.xlu0 %v3978, 16
  %v4031 = vpop.permute.xlu0 %4030
  %4032 = vrot.lane.b32.xlu0 %v3975, 16
  %v4033 = vpop.permute.xlu0 %4032
  %4034 = vrot.lane.b32.xlu0 %v3979, 16
  %v4035 = vpop.permute.xlu0 %4034
  %v4036 = vsel %vm122, %v4029, %v4033
  %v4037 = vsel %vm122, %v4031, %v4035
  %v4038 = vsel %vm122, %v4025, %v4029
  %v4039 = vsel %vm122, %v4027, %v4031
  %v4040 = vsel %vm122, %v4021, %v4025
  %v4041 = vsel %vm122, %v4023, %v4027
  %v4042 = vsel %vm122, %v4033, %v4021
  %v4043 = vsel %vm122, %v4035, %v4023
  %v4044 = vmul.f32 %v4042, %v131
  %v4045 = vmul.f32 %v4040, %v132
  %v4046 = vmul.f32 %v4038, %v133
  %v4047 = vmul.f32 %v4036, %v134
  %v4048 = vmul.f32 %v4043, %v131
  %v4049 = vmul.f32 %v4041, %v132
  %v4050 = vmul.f32 %v4039, %v133
  %v4051 = vmul.f32 %v4037, %v134
  %4052 = vst [vmem:[#allocation2 + $0x4c0] sm:$0xff] %v4044
  %4053 = vst [vmem:[#allocation2 + $0x4c8] sm:$0xff] %v4045
  %4054 = vst [vmem:[#allocation2 + $0x4d0] sm:$0xff] %v4046
  %4055 = vst [vmem:[#allocation2 + $0x4d8] sm:$0xff] %v4047
  %4056 = vst [vmem:[#allocation2 + $0x4e0] sm:$0xff] %v4048
  %4057 = vst [vmem:[#allocation2 + $0x4e8] sm:$0xff] %v4049
  %4058 = vst [vmem:[#allocation2 + $0x4f0] sm:$0xff] %v4050
  %4059 = vst [vmem:[#allocation2 + $0x4f8] sm:$0xff] %v4051
  %4060 = vrot.lane.b32.xlu0 %v3972, 15
  %v4061 = vpop.permute.xlu0 %4060
  %4062 = vrot.lane.b32.xlu0 %v3976, 15
  %v4063 = vpop.permute.xlu0 %4062
  %4064 = vrot.lane.b32.xlu0 %v3973, 15
  %v4065 = vpop.permute.xlu0 %4064
  %4066 = vrot.lane.b32.xlu0 %v3977, 15
  %v4067 = vpop.permute.xlu0 %4066
  %4068 = vrot.lane.b32.xlu0 %v3974, 15
  %v4069 = vpop.permute.xlu0 %4068
  %4070 = vrot.lane.b32.xlu0 %v3978, 15
  %v4071 = vpop.permute.xlu0 %4070
  %4072 = vrot.lane.b32.xlu0 %v3975, 15
  %v4073 = vpop.permute.xlu0 %4072
  %4074 = vrot.lane.b32.xlu0 %v3979, 15
  %v4075 = vpop.permute.xlu0 %4074
  %v4076 = vsel %vm167, %v4069, %v4073
  %v4077 = vsel %vm167, %v4071, %v4075
  %v4078 = vsel %vm167, %v4065, %v4069
  %v4079 = vsel %vm167, %v4067, %v4071
  %v4080 = vsel %vm167, %v4061, %v4065
  %v4081 = vsel %vm167, %v4063, %v4067
  %v4082 = vsel %vm167, %v4073, %v4061
  %v4083 = vsel %vm167, %v4075, %v4063
  %v4084 = vmul.f32 %v4082, %v176
  %v4085 = vmul.f32 %v4080, %v177
  %v4086 = vmul.f32 %v4078, %v178
  %v4087 = vmul.f32 %v4076, %v179
  %v4088 = vmul.f32 %v4083, %v176
  %v4089 = vmul.f32 %v4081, %v177
  %v4090 = vmul.f32 %v4079, %v178
  %v4091 = vmul.f32 %v4077, %v179
  %4092 = vst [vmem:[#allocation2 + $0x500] sm:$0xff] %v4084
  %4093 = vst [vmem:[#allocation2 + $0x508] sm:$0xff] %v4085
  %4094 = vst [vmem:[#allocation2 + $0x510] sm:$0xff] %v4086
  %4095 = vst [vmem:[#allocation2 + $0x518] sm:$0xff] %v4087
  %4096 = vst [vmem:[#allocation2 + $0x520] sm:$0xff] %v4088
  %4097 = vst [vmem:[#allocation2 + $0x528] sm:$0xff] %v4089
  %4098 = vst [vmem:[#allocation2 + $0x530] sm:$0xff] %v4090
  %4099 = vst [vmem:[#allocation2 + $0x538] sm:$0xff] %v4091
  %4100 = vrot.lane.b32.xlu0 %v3972, 1
  %v4101 = vpop.permute.xlu0 %4100
  %4102 = vrot.lane.b32.xlu0 %v3976, 1
  %v4103 = vpop.permute.xlu0 %4102
  %4104 = vrot.lane.b32.xlu0 %v3973, 1
  %v4105 = vpop.permute.xlu0 %4104
  %4106 = vrot.lane.b32.xlu0 %v3977, 1
  %v4107 = vpop.permute.xlu0 %4106
  %4108 = vrot.lane.b32.xlu0 %v3974, 1
  %v4109 = vpop.permute.xlu0 %4108
  %4110 = vrot.lane.b32.xlu0 %v3978, 1
  %v4111 = vpop.permute.xlu0 %4110
  %4112 = vrot.lane.b32.xlu0 %v3975, 1
  %v4113 = vpop.permute.xlu0 %4112
  %4114 = vrot.lane.b32.xlu0 %v3979, 1
  %v4115 = vpop.permute.xlu0 %4114
  %v4116 = vsel %vm212, %v4109, %v4113
  %v4117 = vsel %vm212, %v4111, %v4115
  %v4118 = vsel %vm212, %v4105, %v4109
  %v4119 = vsel %vm212, %v4107, %v4111
  %v4120 = vsel %vm212, %v4101, %v4105
  %v4121 = vsel %vm212, %v4103, %v4107
  %v4122 = vsel %vm212, %v4113, %v4101
  %v4123 = vsel %vm212, %v4115, %v4103
  %v4124 = vmul.f32 %v4122, %v221
  %v4125 = vmul.f32 %v4120, %v222
  %v4126 = vmul.f32 %v4118, %v223
  %v4127 = vmul.f32 %v4116, %v224
  %v4128 = vmul.f32 %v4123, %v221
  %v4129 = vmul.f32 %v4121, %v222
  %v4130 = vmul.f32 %v4119, %v223
  %v4131 = vmul.f32 %v4117, %v224
  %4132 = vst [vmem:[#allocation2 + $0x540] sm:$0xff] %v4124
  %4133 = vst [vmem:[#allocation2 + $0x548] sm:$0xff] %v4125
  %4134 = vst [vmem:[#allocation2 + $0x550] sm:$0xff] %v4126
  %4135 = vst [vmem:[#allocation2 + $0x558] sm:$0xff] %v4127
  %4136 = vst [vmem:[#allocation2 + $0x560] sm:$0xff] %v4128
  %4137 = vst [vmem:[#allocation2 + $0x568] sm:$0xff] %v4129
  %4138 = vst [vmem:[#allocation2 + $0x570] sm:$0xff] %v4130
  %4139 = vst [vmem:[#allocation2 + $0x578] sm:$0xff] %v4131
  %4140 = vst [vmem:[#allocation2 + $0x580] sm:$0xff] %v3972
  %4141 = vst [vmem:[#allocation2 + $0x588] sm:$0xff] %v3973
  %4142 = vst [vmem:[#allocation2 + $0x590] sm:$0xff] %v3974
  %4143 = vst [vmem:[#allocation2 + $0x598] sm:$0xff] %v3975
  %4144 = vst [vmem:[#allocation2 + $0x5a0] sm:$0xff] %v3976
  %4145 = vst [vmem:[#allocation2 + $0x5a8] sm:$0xff] %v3977
  %4146 = vst [vmem:[#allocation2 + $0x5b0] sm:$0xff] %v3978
  %4147 = vst [vmem:[#allocation2 + $0x5b8] sm:$0xff] %v3979
  %4148 = vrot.lane.b32.xlu0 %v3972, 127
  %v4149 = vpop.permute.xlu0 %4148
  %4150 = vrot.lane.b32.xlu0 %v3976, 127
  %v4151 = vpop.permute.xlu0 %4150
  %4152 = vrot.lane.b32.xlu0 %v3973, 127
  %v4153 = vpop.permute.xlu0 %4152
  %4154 = vrot.lane.b32.xlu0 %v3977, 127
  %v4155 = vpop.permute.xlu0 %4154
  %4156 = vrot.lane.b32.xlu0 %v3974, 127
  %v4157 = vpop.permute.xlu0 %4156
  %4158 = vrot.lane.b32.xlu0 %v3978, 127
  %v4159 = vpop.permute.xlu0 %4158
  %4160 = vrot.lane.b32.xlu0 %v3975, 127
  %v4161 = vpop.permute.xlu0 %4160
  %4162 = vrot.lane.b32.xlu0 %v3979, 127
  %v4163 = vpop.permute.xlu0 %4162
  %v4164 = vsel %vm265, %v4157, %v4161
  %v4165 = vsel %vm265, %v4159, %v4163
  %v4166 = vsel %vm265, %v4153, %v4157
  %v4167 = vsel %vm265, %v4155, %v4159
  %v4168 = vsel %vm265, %v4149, %v4153
  %v4169 = vsel %vm265, %v4151, %v4155
  %v4170 = vsel %vm265, %v4161, %v4149
  %v4171 = vsel %vm265, %v4163, %v4151
  %v4172 = vmul.f32 %v4168, %v274
  %v4173 = vmul.f32 %v4166, %v275
  %v4174 = vmul.f32 %v4164, %v276
  %v4175 = vmul.f32 %v4170, %v277
  %v4176 = vmul.f32 %v4169, %v274
  %v4177 = vmul.f32 %v4167, %v275
  %v4178 = vmul.f32 %v4165, %v276
  %v4179 = vmul.f32 %v4171, %v277
  %4180 = vst [vmem:[#allocation2 + $0x5c0] sm:$0xff] %v4172
  %4181 = vst [vmem:[#allocation2 + $0x5c8] sm:$0xff] %v4173
  %4182 = vst [vmem:[#allocation2 + $0x5d0] sm:$0xff] %v4174
  %4183 = vst [vmem:[#allocation2 + $0x5d8] sm:$0xff] %v4175
  %4184 = vst [vmem:[#allocation2 + $0x5e0] sm:$0xff] %v4176
  %4185 = vst [vmem:[#allocation2 + $0x5e8] sm:$0xff] %v4177
  %4186 = vst [vmem:[#allocation2 + $0x5f0] sm:$0xff] %v4178
  %4187 = vst [vmem:[#allocation2 + $0x5f8] sm:$0xff] %v4179
  %4188 = vrot.lane.b32.xlu0 %v3972, 113
  %v4189 = vpop.permute.xlu0 %4188
  %4190 = vrot.lane.b32.xlu0 %v3976, 113
  %v4191 = vpop.permute.xlu0 %4190
  %4192 = vrot.lane.b32.xlu0 %v3973, 113
  %v4193 = vpop.permute.xlu0 %4192
  %4194 = vrot.lane.b32.xlu0 %v3977, 113
  %v4195 = vpop.permute.xlu0 %4194
  %4196 = vrot.lane.b32.xlu0 %v3974, 113
  %v4197 = vpop.permute.xlu0 %4196
  %4198 = vrot.lane.b32.xlu0 %v3978, 113
  %v4199 = vpop.permute.xlu0 %4198
  %4200 = vrot.lane.b32.xlu0 %v3975, 113
  %v4201 = vpop.permute.xlu0 %4200
  %4202 = vrot.lane.b32.xlu0 %v3979, 113
  %v4203 = vpop.permute.xlu0 %4202
  %v4204 = vsel %vm310, %v4197, %v4201
  %v4205 = vsel %vm310, %v4199, %v4203
  %v4206 = vsel %vm310, %v4193, %v4197
  %v4207 = vsel %vm310, %v4195, %v4199
  %v4208 = vsel %vm310, %v4189, %v4193
  %v4209 = vsel %vm310, %v4191, %v4195
  %v4210 = vsel %vm310, %v4201, %v4189
  %v4211 = vsel %vm310, %v4203, %v4191
  %v4212 = vmul.f32 %v4208, %v319
  %v4213 = vmul.f32 %v4206, %v320
  %v4214 = vmul.f32 %v4204, %v321
  %v4215 = vmul.f32 %v4210, %v322
  %v4216 = vmul.f32 %v4209, %v319
  %v4217 = vmul.f32 %v4207, %v320
  %v4218 = vmul.f32 %v4205, %v321
  %v4219 = vmul.f32 %v4211, %v322
  %4220 = vst [vmem:[#allocation2 + $0x600] sm:$0xff] %v4212
  %4221 = vst [vmem:[#allocation2 + $0x608] sm:$0xff] %v4213
  %4222 = vst [vmem:[#allocation2 + $0x610] sm:$0xff] %v4214
  %4223 = vst [vmem:[#allocation2 + $0x618] sm:$0xff] %v4215
  %4224 = vst [vmem:[#allocation2 + $0x620] sm:$0xff] %v4216
  %4225 = vst [vmem:[#allocation2 + $0x628] sm:$0xff] %v4217
  %4226 = vst [vmem:[#allocation2 + $0x630] sm:$0xff] %v4218
  %4227 = vst [vmem:[#allocation2 + $0x638] sm:$0xff] %v4219
  %4228 = vrot.lane.b32.xlu0 %v3972, 112
  %v4229 = vpop.permute.xlu0 %4228
  %4230 = vrot.lane.b32.xlu0 %v3976, 112
  %v4231 = vpop.permute.xlu0 %4230
  %4232 = vrot.lane.b32.xlu0 %v3973, 112
  %v4233 = vpop.permute.xlu0 %4232
  %4234 = vrot.lane.b32.xlu0 %v3977, 112
  %v4235 = vpop.permute.xlu0 %4234
  %4236 = vrot.lane.b32.xlu0 %v3974, 112
  %v4237 = vpop.permute.xlu0 %4236
  %4238 = vrot.lane.b32.xlu0 %v3978, 112
  %v4239 = vpop.permute.xlu0 %4238
  %4240 = vrot.lane.b32.xlu0 %v3975, 112
  %v4241 = vpop.permute.xlu0 %4240
  %4242 = vrot.lane.b32.xlu0 %v3979, 112
  %v4243 = vpop.permute.xlu0 %4242
  %v4244 = vsel %vm355, %v4237, %v4241
  %v4245 = vsel %vm355, %v4239, %v4243
  %v4246 = vsel %vm355, %v4233, %v4237
  %v4247 = vsel %vm355, %v4235, %v4239
  %v4248 = vsel %vm355, %v4229, %v4233
  %v4249 = vsel %vm355, %v4231, %v4235
  %v4250 = vsel %vm355, %v4241, %v4229
  %v4251 = vsel %vm355, %v4243, %v4231
  %v4252 = vmul.f32 %v4248, %v364
  %v4253 = vmul.f32 %v4246, %v365
  %v4254 = vmul.f32 %v4244, %v366
  %v4255 = vmul.f32 %v4250, %v367
  %v4256 = vmul.f32 %v4249, %v364
  %v4257 = vmul.f32 %v4247, %v365
  %v4258 = vmul.f32 %v4245, %v366
  %v4259 = vmul.f32 %v4251, %v367
  %4260 = vst [vmem:[#allocation2 + $0x640] sm:$0xff] %v4252
  %4261 = vst [vmem:[#allocation2 + $0x648] sm:$0xff] %v4253
  %4262 = vst [vmem:[#allocation2 + $0x650] sm:$0xff] %v4254
  %4263 = vst [vmem:[#allocation2 + $0x658] sm:$0xff] %v4255
  %4264 = vst [vmem:[#allocation2 + $0x660] sm:$0xff] %v4256
  %4265 = vst [vmem:[#allocation2 + $0x668] sm:$0xff] %v4257
  %4266 = vst [vmem:[#allocation2 + $0x670] sm:$0xff] %v4258
  %4267 = vst [vmem:[#allocation2 + $0x678] sm:$0xff] %v4259
  %4268 = vrot.lane.b32.xlu0 %v3972, 111
  %v4269 = vpop.permute.xlu0 %4268
  %4270 = vrot.lane.b32.xlu0 %v3976, 111
  %v4271 = vpop.permute.xlu0 %4270
  %4272 = vrot.lane.b32.xlu0 %v3973, 111
  %v4273 = vpop.permute.xlu0 %4272
  %4274 = vrot.lane.b32.xlu0 %v3977, 111
  %v4275 = vpop.permute.xlu0 %4274
  %4276 = vrot.lane.b32.xlu0 %v3974, 111
  %v4277 = vpop.permute.xlu0 %4276
  %4278 = vrot.lane.b32.xlu0 %v3978, 111
  %v4279 = vpop.permute.xlu0 %4278
  %4280 = vrot.lane.b32.xlu0 %v3975, 111
  %v4281 = vpop.permute.xlu0 %4280
  %4282 = vrot.lane.b32.xlu0 %v3979, 111
  %v4283 = vpop.permute.xlu0 %4282
  %v4284 = vsel %vm400, %v4277, %v4281
  %v4285 = vsel %vm400, %v4279, %v4283
  %v4286 = vsel %vm400, %v4273, %v4277
  %v4287 = vsel %vm400, %v4275, %v4279
  %v4288 = vsel %vm400, %v4269, %v4273
  %v4289 = vsel %vm400, %v4271, %v4275
  %v4290 = vsel %vm400, %v4281, %v4269
  %v4291 = vsel %vm400, %v4283, %v4271
  %v4292 = vmul.f32 %v4288, %v409
  %v4293 = vmul.f32 %v4286, %v410
  %v4294 = vmul.f32 %v4284, %v411
  %v4295 = vmul.f32 %v4290, %v412
  %v4296 = vmul.f32 %v4289, %v409
  %v4297 = vmul.f32 %v4287, %v410
  %v4298 = vmul.f32 %v4285, %v411
  %v4299 = vmul.f32 %v4291, %v412
  %4300 = vst [vmem:[#allocation2 + $0x680] sm:$0xff] %v4292
  %4301 = vst [vmem:[#allocation2 + $0x688] sm:$0xff] %v4293
  %4302 = vst [vmem:[#allocation2 + $0x690] sm:$0xff] %v4294
  %4303 = vst [vmem:[#allocation2 + $0x698] sm:$0xff] %v4295
  %4304 = vst [vmem:[#allocation2 + $0x6a0] sm:$0xff] %v4296
  %4305 = vst [vmem:[#allocation2 + $0x6a8] sm:$0xff] %v4297
  %4306 = vst [vmem:[#allocation2 + $0x6b0] sm:$0xff] %v4298
  %4307 = vst [vmem:[#allocation2 + $0x6b8] sm:$0xff] %v4299
  %v4308 = vld [vmem:[#allocation2] sm:$0xff]
  %v4309 = vld [vmem:[#allocation2 + $0x8] sm:$0xff]
  %v4310 = vld [vmem:[#allocation2 + $0x10] sm:$0xff]
  %v4311 = vld [vmem:[#allocation2 + $0x18] sm:$0xff]
  %v4312 = vld [vmem:[#allocation2 + $0x20] sm:$0xff]
  %v4313 = vld [vmem:[#allocation2 + $0x28] sm:$0xff]
  %v4314 = vld [vmem:[#allocation2 + $0x30] sm:$0xff]
  %v4315 = vld [vmem:[#allocation2 + $0x38] sm:$0xff]
  %v4316 = vld [vmem:[#allocation2 + $0x40] sm:$0xff]
  %v4317 = vld [vmem:[#allocation2 + $0x48] sm:$0xff]
  %v4318 = vld [vmem:[#allocation2 + $0x50] sm:$0xff]
  %v4319 = vld [vmem:[#allocation2 + $0x58] sm:$0xff]
  %v4320 = vld [vmem:[#allocation2 + $0x60] sm:$0xff]
  %v4321 = vld [vmem:[#allocation2 + $0x68] sm:$0xff]
  %v4322 = vld [vmem:[#allocation2 + $0x70] sm:$0xff]
  %v4323 = vld [vmem:[#allocation2 + $0x78] sm:$0xff]
  %v4324 = vld [vmem:[#allocation2 + $0x80] sm:$0xff]
  %v4325 = vld [vmem:[#allocation2 + $0x88] sm:$0xff]
  %v4326 = vld [vmem:[#allocation2 + $0x90] sm:$0xff]
  %v4327 = vld [vmem:[#allocation2 + $0x98] sm:$0xff]
  %v4328 = vld [vmem:[#allocation2 + $0xa0] sm:$0xff]
  %v4329 = vld [vmem:[#allocation2 + $0xa8] sm:$0xff]
  %v4330 = vld [vmem:[#allocation2 + $0xb0] sm:$0xff]
  %v4331 = vld [vmem:[#allocation2 + $0xb8] sm:$0xff]
  %v4332 = vld [vmem:[#allocation2 + $0xc0] sm:$0xff]
  %v4333 = vld [vmem:[#allocation2 + $0xc8] sm:$0xff]
  %v4334 = vld [vmem:[#allocation2 + $0xd0] sm:$0xff]
  %v4335 = vld [vmem:[#allocation2 + $0xd8] sm:$0xff]
  %v4336 = vld [vmem:[#allocation2 + $0xe0] sm:$0xff]
  %v4337 = vld [vmem:[#allocation2 + $0xe8] sm:$0xff]
  %v4338 = vld [vmem:[#allocation2 + $0xf0] sm:$0xff]
  %v4339 = vld [vmem:[#allocation2 + $0xf8] sm:$0xff]
  %v4340 = vld [vmem:[#allocation2 + $0x100] sm:$0xff]
  %v4341 = vld [vmem:[#allocation2 + $0x108] sm:$0xff]
  %v4342 = vld [vmem:[#allocation2 + $0x110] sm:$0xff]
  %v4343 = vld [vmem:[#allocation2 + $0x118] sm:$0xff]
  %v4344 = vld [vmem:[#allocation2 + $0x120] sm:$0xff]
  %v4345 = vld [vmem:[#allocation2 + $0x128] sm:$0xff]
  %v4346 = vld [vmem:[#allocation2 + $0x130] sm:$0xff]
  %v4347 = vld [vmem:[#allocation2 + $0x138] sm:$0xff]
  %v4348 = vld [vmem:[#allocation2 + $0x140] sm:$0xff]
  %v4349 = vld [vmem:[#allocation2 + $0x148] sm:$0xff]
  %v4350 = vld [vmem:[#allocation2 + $0x150] sm:$0xff]
  %v4351 = vld [vmem:[#allocation2 + $0x158] sm:$0xff]
  %v4352 = vld [vmem:[#allocation2 + $0x160] sm:$0xff]
  %v4353 = vld [vmem:[#allocation2 + $0x168] sm:$0xff]
  %v4354 = vld [vmem:[#allocation2 + $0x170] sm:$0xff]
  %v4355 = vld [vmem:[#allocation2 + $0x178] sm:$0xff]
  %v4356 = vld [vmem:[#allocation2 + $0x180] sm:$0xff]
  %v4357 = vld [vmem:[#allocation2 + $0x188] sm:$0xff]
  %v4358 = vld [vmem:[#allocation2 + $0x190] sm:$0xff]
  %v4359 = vld [vmem:[#allocation2 + $0x198] sm:$0xff]
  %v4360 = vld [vmem:[#allocation2 + $0x1a0] sm:$0xff]
  %v4361 = vld [vmem:[#allocation2 + $0x1a8] sm:$0xff]
  %v4362 = vld [vmem:[#allocation2 + $0x1b0] sm:$0xff]
  %v4363 = vld [vmem:[#allocation2 + $0x1b8] sm:$0xff]
  %v4364 = vld [vmem:[#allocation2 + $0x1c0] sm:$0xff]
  %v4365 = vld [vmem:[#allocation2 + $0x1c8] sm:$0xff]
  %v4366 = vld [vmem:[#allocation2 + $0x1d0] sm:$0xff]
  %v4367 = vld [vmem:[#allocation2 + $0x1d8] sm:$0xff]
  %v4368 = vld [vmem:[#allocation2 + $0x1e0] sm:$0xff]
  %v4369 = vld [vmem:[#allocation2 + $0x1e8] sm:$0xff]
  %v4370 = vld [vmem:[#allocation2 + $0x1f0] sm:$0xff]
  %v4371 = vld [vmem:[#allocation2 + $0x1f8] sm:$0xff]
  %v4372 = vld [vmem:[#allocation2 + $0x200] sm:$0xff]
  %v4373 = vld [vmem:[#allocation2 + $0x208] sm:$0xff]
  %v4374 = vld [vmem:[#allocation2 + $0x210] sm:$0xff]
  %v4375 = vld [vmem:[#allocation2 + $0x218] sm:$0xff]
  %v4376 = vld [vmem:[#allocation2 + $0x220] sm:$0xff]
  %v4377 = vld [vmem:[#allocation2 + $0x228] sm:$0xff]
  %v4378 = vld [vmem:[#allocation2 + $0x230] sm:$0xff]
  %v4379 = vld [vmem:[#allocation2 + $0x238] sm:$0xff]
  %v4380 = vld [vmem:[#allocation2 + $0x240] sm:$0xff]
  %v4381 = vld [vmem:[#allocation2 + $0x248] sm:$0xff]
  %v4382 = vld [vmem:[#allocation2 + $0x250] sm:$0xff]
  %v4383 = vld [vmem:[#allocation2 + $0x258] sm:$0xff]
  %v4384 = vld [vmem:[#allocation2 + $0x260] sm:$0xff]
  %v4385 = vld [vmem:[#allocation2 + $0x268] sm:$0xff]
  %v4386 = vld [vmem:[#allocation2 + $0x270] sm:$0xff]
  %v4387 = vld [vmem:[#allocation2 + $0x278] sm:$0xff]
  %v4388 = vld [vmem:[#allocation2 + $0x280] sm:$0xff]
  %v4389 = vld [vmem:[#allocation2 + $0x288] sm:$0xff]
  %v4390 = vld [vmem:[#allocation2 + $0x290] sm:$0xff]
  %v4391 = vld [vmem:[#allocation2 + $0x298] sm:$0xff]
  %v4392 = vld [vmem:[#allocation2 + $0x2a0] sm:$0xff]
  %v4393 = vld [vmem:[#allocation2 + $0x2a8] sm:$0xff]
  %v4394 = vld [vmem:[#allocation2 + $0x2b0] sm:$0xff]
  %v4395 = vld [vmem:[#allocation2 + $0x2b8] sm:$0xff]
  %v4396 = vld [vmem:[#allocation2 + $0x2c0] sm:$0xff]
  %v4397 = vld [vmem:[#allocation2 + $0x2c8] sm:$0xff]
  %v4398 = vld [vmem:[#allocation2 + $0x2d0] sm:$0xff]
  %v4399 = vld [vmem:[#allocation2 + $0x2d8] sm:$0xff]
  %v4400 = vld [vmem:[#allocation2 + $0x2e0] sm:$0xff]
  %v4401 = vld [vmem:[#allocation2 + $0x2e8] sm:$0xff]
  %v4402 = vld [vmem:[#allocation2 + $0x2f0] sm:$0xff]
  %v4403 = vld [vmem:[#allocation2 + $0x2f8] sm:$0xff]
  %v4404 = vld [vmem:[#allocation2 + $0x300] sm:$0xff]
  %v4405 = vld [vmem:[#allocation2 + $0x308] sm:$0xff]
  %v4406 = vld [vmem:[#allocation2 + $0x310] sm:$0xff]
  %v4407 = vld [vmem:[#allocation2 + $0x318] sm:$0xff]
  %v4408 = vld [vmem:[#allocation2 + $0x320] sm:$0xff]
  %v4409 = vld [vmem:[#allocation2 + $0x328] sm:$0xff]
  %v4410 = vld [vmem:[#allocation2 + $0x330] sm:$0xff]
  %v4411 = vld [vmem:[#allocation2 + $0x338] sm:$0xff]
  %v4412 = vld [vmem:[#allocation2 + $0x340] sm:$0xff]
  %v4413 = vld [vmem:[#allocation2 + $0x348] sm:$0xff]
  %v4414 = vld [vmem:[#allocation2 + $0x350] sm:$0xff]
  %v4415 = vld [vmem:[#allocation2 + $0x358] sm:$0xff]
  %v4416 = vld [vmem:[#allocation2 + $0x360] sm:$0xff]
  %v4417 = vld [vmem:[#allocation2 + $0x368] sm:$0xff]
  %v4418 = vld [vmem:[#allocation2 + $0x370] sm:$0xff]
  %v4419 = vld [vmem:[#allocation2 + $0x378] sm:$0xff]
  %v4420 = vld [vmem:[#allocation2 + $0x380] sm:$0xff]
  %v4421 = vld [vmem:[#allocation2 + $0x388] sm:$0xff]
  %v4422 = vld [vmem:[#allocation2 + $0x390] sm:$0xff]
  %v4423 = vld [vmem:[#allocation2 + $0x398] sm:$0xff]
  %v4424 = vld [vmem:[#allocation2 + $0x3a0] sm:$0xff]
  %v4425 = vld [vmem:[#allocation2 + $0x3a8] sm:$0xff]
  %v4426 = vld [vmem:[#allocation2 + $0x3b0] sm:$0xff]
  %v4427 = vld [vmem:[#allocation2 + $0x3b8] sm:$0xff]
  %v4428 = vld [vmem:[#allocation2 + $0x3c0] sm:$0xff]
  %v4429 = vld [vmem:[#allocation2 + $0x3c8] sm:$0xff]
  %v4430 = vld [vmem:[#allocation2 + $0x3d0] sm:$0xff]
  %v4431 = vld [vmem:[#allocation2 + $0x3d8] sm:$0xff]
  %v4432 = vld [vmem:[#allocation2 + $0x3e0] sm:$0xff]
  %v4433 = vld [vmem:[#allocation2 + $0x3e8] sm:$0xff]
  %v4434 = vld [vmem:[#allocation2 + $0x3f0] sm:$0xff]
  %v4435 = vld [vmem:[#allocation2 + $0x3f8] sm:$0xff]
  %v4436 = vld [vmem:[#allocation2 + $0x400] sm:$0xff]
  %v4437 = vld [vmem:[#allocation2 + $0x408] sm:$0xff]
  %v4438 = vld [vmem:[#allocation2 + $0x410] sm:$0xff]
  %v4439 = vld [vmem:[#allocation2 + $0x418] sm:$0xff]
  %v4440 = vld [vmem:[#allocation2 + $0x420] sm:$0xff]
  %v4441 = vld [vmem:[#allocation2 + $0x428] sm:$0xff]
  %v4442 = vld [vmem:[#allocation2 + $0x430] sm:$0xff]
  %v4443 = vld [vmem:[#allocation2 + $0x438] sm:$0xff]
  %v4444 = vld [vmem:[#allocation2 + $0x440] sm:$0xff]
  %v4445 = vld [vmem:[#allocation2 + $0x448] sm:$0xff]
  %v4446 = vld [vmem:[#allocation2 + $0x450] sm:$0xff]
  %v4447 = vld [vmem:[#allocation2 + $0x458] sm:$0xff]
  %v4448 = vld [vmem:[#allocation2 + $0x460] sm:$0xff]
  %v4449 = vld [vmem:[#allocation2 + $0x468] sm:$0xff]
  %v4450 = vld [vmem:[#allocation2 + $0x470] sm:$0xff]
  %v4451 = vld [vmem:[#allocation2 + $0x478] sm:$0xff]
  %v4452 = vld [vmem:[#allocation2 + $0x480] sm:$0xff]
  %v4453 = vld [vmem:[#allocation2 + $0x488] sm:$0xff]
  %v4454 = vld [vmem:[#allocation2 + $0x490] sm:$0xff]
  %v4455 = vld [vmem:[#allocation2 + $0x498] sm:$0xff]
  %v4456 = vld [vmem:[#allocation2 + $0x4a0] sm:$0xff]
  %v4457 = vld [vmem:[#allocation2 + $0x4a8] sm:$0xff]
  %v4458 = vld [vmem:[#allocation2 + $0x4b0] sm:$0xff]
  %v4459 = vld [vmem:[#allocation2 + $0x4b8] sm:$0xff]
  %v4460 = vld [vmem:[#allocation2 + $0x4c0] sm:$0xff]
  %v4461 = vld [vmem:[#allocation2 + $0x4c8] sm:$0xff]
  %v4462 = vld [vmem:[#allocation2 + $0x4d0] sm:$0xff]
  %v4463 = vld [vmem:[#allocation2 + $0x4d8] sm:$0xff]
  %v4464 = vld [vmem:[#allocation2 + $0x4e0] sm:$0xff]
  %v4465 = vld [vmem:[#allocation2 + $0x4e8] sm:$0xff]
  %v4466 = vld [vmem:[#allocation2 + $0x4f0] sm:$0xff]
  %v4467 = vld [vmem:[#allocation2 + $0x4f8] sm:$0xff]
  %v4468 = vld [vmem:[#allocation2 + $0x500] sm:$0xff]
  %v4469 = vld [vmem:[#allocation2 + $0x508] sm:$0xff]
  %v4470 = vld [vmem:[#allocation2 + $0x510] sm:$0xff]
  %v4471 = vld [vmem:[#allocation2 + $0x518] sm:$0xff]
  %v4472 = vld [vmem:[#allocation2 + $0x520] sm:$0xff]
  %v4473 = vld [vmem:[#allocation2 + $0x528] sm:$0xff]
  %v4474 = vld [vmem:[#allocation2 + $0x530] sm:$0xff]
  %v4475 = vld [vmem:[#allocation2 + $0x538] sm:$0xff]
  %v4476 = vld [vmem:[#allocation2 + $0x540] sm:$0xff]
  %v4477 = vld [vmem:[#allocation2 + $0x548] sm:$0xff]
  %v4478 = vld [vmem:[#allocation2 + $0x550] sm:$0xff]
  %v4479 = vld [vmem:[#allocation2 + $0x558] sm:$0xff]
  %v4480 = vld [vmem:[#allocation2 + $0x560] sm:$0xff]
  %v4481 = vld [vmem:[#allocation2 + $0x568] sm:$0xff]
  %v4482 = vld [vmem:[#allocation2 + $0x570] sm:$0xff]
  %v4483 = vld [vmem:[#allocation2 + $0x578] sm:$0xff]
  %v4484 = vld [vmem:[#allocation2 + $0x580] sm:$0xff]
  %v4485 = vld [vmem:[#allocation2 + $0x588] sm:$0xff]
  %v4486 = vld [vmem:[#allocation2 + $0x590] sm:$0xff]
  %v4487 = vld [vmem:[#allocation2 + $0x598] sm:$0xff]
  %v4488 = vld [vmem:[#allocation2 + $0x5a0] sm:$0xff]
  %v4489 = vld [vmem:[#allocation2 + $0x5a8] sm:$0xff]
  %v4490 = vld [vmem:[#allocation2 + $0x5b0] sm:$0xff]
  %v4491 = vld [vmem:[#allocation2 + $0x5b8] sm:$0xff]
  %v4492 = vld [vmem:[#allocation2 + $0x5c0] sm:$0xff]
  %v4493 = vld [vmem:[#allocation2 + $0x5c8] sm:$0xff]
  %v4494 = vld [vmem:[#allocation2 + $0x5d0] sm:$0xff]
  %v4495 = vld [vmem:[#allocation2 + $0x5d8] sm:$0xff]
  %v4496 = vld [vmem:[#allocation2 + $0x5e0] sm:$0xff]
  %v4497 = vld [vmem:[#allocation2 + $0x5e8] sm:$0xff]
  %v4498 = vld [vmem:[#allocation2 + $0x5f0] sm:$0xff]
  %v4499 = vld [vmem:[#allocation2 + $0x5f8] sm:$0xff]
  %v4500 = vld [vmem:[#allocation2 + $0x600] sm:$0xff]
  %v4501 = vld [vmem:[#allocation2 + $0x608] sm:$0xff]
  %v4502 = vld [vmem:[#allocation2 + $0x610] sm:$0xff]
  %v4503 = vld [vmem:[#allocation2 + $0x618] sm:$0xff]
  %v4504 = vld [vmem:[#allocation2 + $0x620] sm:$0xff]
  %v4505 = vld [vmem:[#allocation2 + $0x628] sm:$0xff]
  %v4506 = vld [vmem:[#allocation2 + $0x630] sm:$0xff]
  %v4507 = vld [vmem:[#allocation2 + $0x638] sm:$0xff]
  %v4508 = vld [vmem:[#allocation2 + $0x640] sm:$0xff]
  %v4509 = vld [vmem:[#allocation2 + $0x648] sm:$0xff]
  %v4510 = vld [vmem:[#allocation2 + $0x650] sm:$0xff]
  %v4511 = vld [vmem:[#allocation2 + $0x658] sm:$0xff]
  %v4512 = vld [vmem:[#allocation2 + $0x660] sm:$0xff]
  %v4513 = vld [vmem:[#allocation2 + $0x668] sm:$0xff]
  %v4514 = vld [vmem:[#allocation2 + $0x670] sm:$0xff]
  %v4515 = vld [vmem:[#allocation2 + $0x678] sm:$0xff]
  %v4516 = vld [vmem:[#allocation2 + $0x680] sm:$0xff]
  %v4517 = vld [vmem:[#allocation2 + $0x688] sm:$0xff]
  %v4518 = vld [vmem:[#allocation2 + $0x690] sm:$0xff]
  %v4519 = vld [vmem:[#allocation2 + $0x698] sm:$0xff]
  %v4520 = vld [vmem:[#allocation2 + $0x6a0] sm:$0xff]
  %v4521 = vld [vmem:[#allocation2 + $0x6a8] sm:$0xff]
  %v4522 = vld [vmem:[#allocation2 + $0x6b0] sm:$0xff]
  %v4523 = vld [vmem:[#allocation2 + $0x6b8] sm:$0xff]
  %s4524 = scalar_lea.vmem %s4, 64
  %v4525 = vld [vmem:[%s4524] sm:$0xff]
  %v4526 = vld [vmem:[%s4524 + $0x8] sm:$0xff]
  %v4527 = vld [vmem:[%s4524 + $0x10] sm:$0xff]
  %v4528 = vld [vmem:[%s4524 + $0x18] sm:$0xff]
  %v4529 = vld [vmem:[%s4524 + $0x20] sm:$0xff]
  %v4530 = vld [vmem:[%s4524 + $0x28] sm:$0xff]
  %v4531 = vld [vmem:[%s4524 + $0x30] sm:$0xff]
  %v4532 = vld [vmem:[%s4524 + $0x38] sm:$0xff]
  %s4533 = scalar_lea.vmem %s5, 80
  %v4534 = vld [vmem:[%s4533] sm:$0xff]
  %v4535 = vld [vmem:[%s4533 + $0x8] sm:$0xff]
  %4537 = vset.pattern.permute.xlu0 0
  %4538 = vperm.xlu0 %4537, %v4534
  %v4539 = vpop.permute.xlu0 %4538
  %4542 = vset.pattern.permute.xlu0 0
  %4543 = vperm.xlu0 %4542, %v4535
  %v4544 = vpop.permute.xlu0 %4543
  %v4547 = vsel %vm2063, %v4528, 0
  %v4550 = vsel %vm2063, %v4532, 0
  %4552 = vmatpush.msra.mxu0 %v4368
  %4553 = vmatpush.msra.mxu0 %v4364
  %4554 = vmatpush.msra.mxu0 %v4360
  %4555 = vmatpush.msra.mxu0 %v4356
  %4556 = vmatpush.msra.mxu0 %v4352
  %4557 = vmatpush.msra.mxu0 %v4348
  %4558 = vmatpush.msra.mxu0 %v4344
  %4559 = vmatpush.msra.mxu0 %v4340
  %4560 = vmatpush.msra.mxu0 %v4336
  %4561 = vmatpush.msra.mxu0 %v4332
  %4562 = vmatpush.msra.mxu0 %v4328
  %4563 = vmatpush.msra.mxu0 %v4324
  %4564 = vmatpush.msra.mxu0 %v4320
  %4565 = vmatpush.msra.mxu0 %v4316
  %4566 = vmatpush.msra.mxu0 %v4312
  %4567 = vmatpush.msra.mxu0 %v4308
  %4568 = vmatmul.f32.gmra.mxu0 %v4525
  %v4569 = vpop.f32.mrf.mxu0
  %v4570 = vadd.f32 %v4539, %v4569
  %4571 = vmatmul.f32.gmra.mxu0 %v4529
  %v4572 = vpop.f32.mrf.mxu0
  %v4573 = vadd.f32 %v4544, %v4572
  %4574 = vdwg.mxu0
  %4575 = vmatpush.msra.mxu0 %v4432
  %4576 = vmatpush.msra.mxu0 %v4428
  %4577 = vmatpush.msra.mxu0 %v4424
  %4578 = vmatpush.msra.mxu0 %v4420
  %4579 = vmatpush.msra.mxu0 %v4416
  %4580 = vmatpush.msra.mxu0 %v4412
  %4581 = vmatpush.msra.mxu0 %v4408
  %4582 = vmatpush.msra.mxu0 %v4404
  %4583 = vmatpush.msra.mxu0 %v4400
  %4584 = vmatpush.msra.mxu0 %v4396
  %4585 = vmatpush.msra.mxu0 %v4392
  %4586 = vmatpush.msra.mxu0 %v4388
  %4587 = vmatpush.msra.mxu0 %v4384
  %4588 = vmatpush.msra.mxu0 %v4380
  %4589 = vmatpush.msra.mxu0 %v4376
  %4590 = vmatpush.msra.mxu0 %v4372
  %4591 = vmatmul.f32.gmra.mxu0 %v4526
  %v4592 = vpop.f32.mrf.mxu0
  %v4593 = vadd.f32 %v4570, %v4592
  %4594 = vmatmul.f32.gmra.mxu0 %v4530
  %v4595 = vpop.f32.mrf.mxu0
  %v4596 = vadd.f32 %v4573, %v4595
  %4597 = vdwg.mxu0
  %4598 = vmatpush.msra.mxu0 %v4496
  %4599 = vmatpush.msra.mxu0 %v4492
  %4600 = vmatpush.msra.mxu0 %v4488
  %4601 = vmatpush.msra.mxu0 %v4484
  %4602 = vmatpush.msra.mxu0 %v4480
  %4603 = vmatpush.msra.mxu0 %v4476
  %4604 = vmatpush.msra.mxu0 %v4472
  %4605 = vmatpush.msra.mxu0 %v4468
  %4606 = vmatpush.msra.mxu0 %v4464
  %4607 = vmatpush.msra.mxu0 %v4460
  %4608 = vmatpush.msra.mxu0 %v4456
  %4609 = vmatpush.msra.mxu0 %v4452
  %4610 = vmatpush.msra.mxu0 %v4448
  %4611 = vmatpush.msra.mxu0 %v4444
  %4612 = vmatpush.msra.mxu0 %v4440
  %4613 = vmatpush.msra.mxu0 %v4436
  %4614 = vmatmul.f32.gmra.mxu0 %v4527
  %v4615 = vpop.f32.mrf.mxu0
  %v4616 = vadd.f32 %v4593, %v4615
  %4617 = vmatmul.f32.gmra.mxu0 %v4531
  %v4618 = vpop.f32.mrf.mxu0
  %v4619 = vadd.f32 %v4596, %v4618
  %4620 = vdwg.mxu0
  %4621 = vmatpush.msra.mxu0 0.0
  %4622 = vmatpush.msra.mxu0 0.0
  %4623 = vmatpush.msra.mxu0 0.0
  %4624 = vmatpush.msra.mxu0 0.0
  %4625 = vmatpush.msra.mxu0 0.0
  %4626 = vmatpush.msra.mxu0 0.0
  %4627 = vmatpush.msra.mxu0 0.0
  %4628 = vmatpush.msra.mxu0 0.0
  %4629 = vmatpush.msra.mxu0 0.0
  %4630 = vmatpush.msra.mxu0 0.0
  %4631 = vmatpush.msra.mxu0 %v4520
  %4632 = vmatpush.msra.mxu0 %v4516
  %4633 = vmatpush.msra.mxu0 %v4512
  %4634 = vmatpush.msra.mxu0 %v4508
  %4635 = vmatpush.msra.mxu0 %v4504
  %4636 = vmatpush.msra.mxu0 %v4500
  %4637 = vmatmul.f32.gmra.mxu0 %v4547
  %v4638 = vpop.f32.mrf.mxu0
  %v4639 = vadd.f32 %v4616, %v4638
  %4640 = vmatmul.f32.gmra.mxu0 %v4550
  %v4641 = vpop.f32.mrf.mxu0
  %v4642 = vadd.f32 %v4619, %v4641
  %4643 = vdwg.mxu0
  %4644 = vmatpush.msra.mxu0 %v4369
  %4645 = vmatpush.msra.mxu0 %v4365
  %4646 = vmatpush.msra.mxu0 %v4361
  %4647 = vmatpush.msra.mxu0 %v4357
  %4648 = vmatpush.msra.mxu0 %v4353
  %4649 = vmatpush.msra.mxu0 %v4349
  %4650 = vmatpush.msra.mxu0 %v4345
  %4651 = vmatpush.msra.mxu0 %v4341
  %4652 = vmatpush.msra.mxu0 %v4337
  %4653 = vmatpush.msra.mxu0 %v4333
  %4654 = vmatpush.msra.mxu0 %v4329
  %4655 = vmatpush.msra.mxu0 %v4325
  %4656 = vmatpush.msra.mxu0 %v4321
  %4657 = vmatpush.msra.mxu0 %v4317
  %4658 = vmatpush.msra.mxu0 %v4313
  %4659 = vmatpush.msra.mxu0 %v4309
  %4660 = vmatmul.f32.gmra.mxu0 %v4525
  %v4661 = vpop.f32.mrf.mxu0
  %v4662 = vadd.f32 %v4539, %v4661
  %4663 = vmatmul.f32.gmra.mxu0 %v4529
  %v4664 = vpop.f32.mrf.mxu0
  %v4665 = vadd.f32 %v4544, %v4664
  %4666 = vdwg.mxu0
  %4667 = vmatpush.msra.mxu0 %v4433
  %4668 = vmatpush.msra.mxu0 %v4429
  %4669 = vmatpush.msra.mxu0 %v4425
  %4670 = vmatpush.msra.mxu0 %v4421
  %4671 = vmatpush.msra.mxu0 %v4417
  %4672 = vmatpush.msra.mxu0 %v4413
  %4673 = vmatpush.msra.mxu0 %v4409
  %4674 = vmatpush.msra.mxu0 %v4405
  %4675 = vmatpush.msra.mxu0 %v4401
  %4676 = vmatpush.msra.mxu0 %v4397
  %4677 = vmatpush.msra.mxu0 %v4393
  %4678 = vmatpush.msra.mxu0 %v4389
  %4679 = vmatpush.msra.mxu0 %v4385
  %4680 = vmatpush.msra.mxu0 %v4381
  %4681 = vmatpush.msra.mxu0 %v4377
  %4682 = vmatpush.msra.mxu0 %v4373
  %4683 = vmatmul.f32.gmra.mxu0 %v4526
  %v4684 = vpop.f32.mrf.mxu0
  %v4685 = vadd.f32 %v4662, %v4684
  %4686 = vmatmul.f32.gmra.mxu0 %v4530
  %v4687 = vpop.f32.mrf.mxu0
  %v4688 = vadd.f32 %v4665, %v4687
  %4689 = vdwg.mxu0
  %4690 = vmatpush.msra.mxu0 %v4497
  %4691 = vmatpush.msra.mxu0 %v4493
  %4692 = vmatpush.msra.mxu0 %v4489
  %4693 = vmatpush.msra.mxu0 %v4485
  %4694 = vmatpush.msra.mxu0 %v4481
  %4695 = vmatpush.msra.mxu0 %v4477
  %4696 = vmatpush.msra.mxu0 %v4473
  %4697 = vmatpush.msra.mxu0 %v4469
  %4698 = vmatpush.msra.mxu0 %v4465
  %4699 = vmatpush.msra.mxu0 %v4461
  %4700 = vmatpush.msra.mxu0 %v4457
  %4701 = vmatpush.msra.mxu0 %v4453
  %4702 = vmatpush.msra.mxu0 %v4449
  %4703 = vmatpush.msra.mxu0 %v4445
  %4704 = vmatpush.msra.mxu0 %v4441
  %4705 = vmatpush.msra.mxu0 %v4437
  %4706 = vmatmul.f32.gmra.mxu0 %v4527
  %v4707 = vpop.f32.mrf.mxu0
  %v4708 = vadd.f32 %v4685, %v4707
  %4709 = vmatmul.f32.gmra.mxu0 %v4531
  %v4710 = vpop.f32.mrf.mxu0
  %v4711 = vadd.f32 %v4688, %v4710
  %4712 = vdwg.mxu0
  %4713 = vmatpush.msra.mxu0 0.0
  %4714 = vmatpush.msra.mxu0 0.0
  %4715 = vmatpush.msra.mxu0 0.0
  %4716 = vmatpush.msra.mxu0 0.0
  %4717 = vmatpush.msra.mxu0 0.0
  %4718 = vmatpush.msra.mxu0 0.0
  %4719 = vmatpush.msra.mxu0 0.0
  %4720 = vmatpush.msra.mxu0 0.0
  %4721 = vmatpush.msra.mxu0 0.0
  %4722 = vmatpush.msra.mxu0 0.0
  %4723 = vmatpush.msra.mxu0 %v4521
  %4724 = vmatpush.msra.mxu0 %v4517
  %4725 = vmatpush.msra.mxu0 %v4513
  %4726 = vmatpush.msra.mxu0 %v4509
  %4727 = vmatpush.msra.mxu0 %v4505
  %4728 = vmatpush.msra.mxu0 %v4501
  %4729 = vmatmul.f32.gmra.mxu0 %v4547
  %v4730 = vpop.f32.mrf.mxu0
  %v4731 = vadd.f32 %v4708, %v4730
  %4732 = vmatmul.f32.gmra.mxu0 %v4550
  %v4733 = vpop.f32.mrf.mxu0
  %v4734 = vadd.f32 %v4711, %v4733
  %4735 = vdwg.mxu0
  %4736 = vmatpush.msra.mxu0 %v4370
  %4737 = vmatpush.msra.mxu0 %v4366
  %4738 = vmatpush.msra.mxu0 %v4362
  %4739 = vmatpush.msra.mxu0 %v4358
  %4740 = vmatpush.msra.mxu0 %v4354
  %4741 = vmatpush.msra.mxu0 %v4350
  %4742 = vmatpush.msra.mxu0 %v4346
  %4743 = vmatpush.msra.mxu0 %v4342
  %4744 = vmatpush.msra.mxu0 %v4338
  %4745 = vmatpush.msra.mxu0 %v4334
  %4746 = vmatpush.msra.mxu0 %v4330
  %4747 = vmatpush.msra.mxu0 %v4326
  %4748 = vmatpush.msra.mxu0 %v4322
  %4749 = vmatpush.msra.mxu0 %v4318
  %4750 = vmatpush.msra.mxu0 %v4314
  %4751 = vmatpush.msra.mxu0 %v4310
  %4752 = vmatmul.f32.gmra.mxu0 %v4525
  %v4753 = vpop.f32.mrf.mxu0
  %v4754 = vadd.f32 %v4539, %v4753
  %4755 = vmatmul.f32.gmra.mxu0 %v4529
  %v4756 = vpop.f32.mrf.mxu0
  %v4757 = vadd.f32 %v4544, %v4756
  %4758 = vdwg.mxu0
  %4759 = vmatpush.msra.mxu0 %v4434
  %4760 = vmatpush.msra.mxu0 %v4430
  %4761 = vmatpush.msra.mxu0 %v4426
  %4762 = vmatpush.msra.mxu0 %v4422
  %4763 = vmatpush.msra.mxu0 %v4418
  %4764 = vmatpush.msra.mxu0 %v4414
  %4765 = vmatpush.msra.mxu0 %v4410
  %4766 = vmatpush.msra.mxu0 %v4406
  %4767 = vmatpush.msra.mxu0 %v4402
  %4768 = vmatpush.msra.mxu0 %v4398
  %4769 = vmatpush.msra.mxu0 %v4394
  %4770 = vmatpush.msra.mxu0 %v4390
  %4771 = vmatpush.msra.mxu0 %v4386
  %4772 = vmatpush.msra.mxu0 %v4382
  %4773 = vmatpush.msra.mxu0 %v4378
  %4774 = vmatpush.msra.mxu0 %v4374
  %4775 = vmatmul.f32.gmra.mxu0 %v4526
  %v4776 = vpop.f32.mrf.mxu0
  %v4777 = vadd.f32 %v4754, %v4776
  %4778 = vmatmul.f32.gmra.mxu0 %v4530
  %v4779 = vpop.f32.mrf.mxu0
  %v4780 = vadd.f32 %v4757, %v4779
  %4781 = vdwg.mxu0
  %4782 = vmatpush.msra.mxu0 %v4498
  %4783 = vmatpush.msra.mxu0 %v4494
  %4784 = vmatpush.msra.mxu0 %v4490
  %4785 = vmatpush.msra.mxu0 %v4486
  %4786 = vmatpush.msra.mxu0 %v4482
  %4787 = vmatpush.msra.mxu0 %v4478
  %4788 = vmatpush.msra.mxu0 %v4474
  %4789 = vmatpush.msra.mxu0 %v4470
  %4790 = vmatpush.msra.mxu0 %v4466
  %4791 = vmatpush.msra.mxu0 %v4462
  %4792 = vmatpush.msra.mxu0 %v4458
  %4793 = vmatpush.msra.mxu0 %v4454
  %4794 = vmatpush.msra.mxu0 %v4450
  %4795 = vmatpush.msra.mxu0 %v4446
  %4796 = vmatpush.msra.mxu0 %v4442
  %4797 = vmatpush.msra.mxu0 %v4438
  %4798 = vmatmul.f32.gmra.mxu0 %v4527
  %v4799 = vpop.f32.mrf.mxu0
  %v4800 = vadd.f32 %v4777, %v4799
  %4801 = vmatmul.f32.gmra.mxu0 %v4531
  %v4802 = vpop.f32.mrf.mxu0
  %v4803 = vadd.f32 %v4780, %v4802
  %4804 = vdwg.mxu0
  %4805 = vmatpush.msra.mxu0 0.0
  %4806 = vmatpush.msra.mxu0 0.0
  %4807 = vmatpush.msra.mxu0 0.0
  %4808 = vmatpush.msra.mxu0 0.0
  %4809 = vmatpush.msra.mxu0 0.0
  %4810 = vmatpush.msra.mxu0 0.0
  %4811 = vmatpush.msra.mxu0 0.0
  %4812 = vmatpush.msra.mxu0 0.0
  %4813 = vmatpush.msra.mxu0 0.0
  %4814 = vmatpush.msra.mxu0 0.0
  %4815 = vmatpush.msra.mxu0 %v4522
  %4816 = vmatpush.msra.mxu0 %v4518
  %4817 = vmatpush.msra.mxu0 %v4514
  %4818 = vmatpush.msra.mxu0 %v4510
  %4819 = vmatpush.msra.mxu0 %v4506
  %4820 = vmatpush.msra.mxu0 %v4502
  %4821 = vmatmul.f32.gmra.mxu0 %v4547
  %v4822 = vpop.f32.mrf.mxu0
  %v4823 = vadd.f32 %v4800, %v4822
  %4824 = vmatmul.f32.gmra.mxu0 %v4550
  %v4825 = vpop.f32.mrf.mxu0
  %v4826 = vadd.f32 %v4803, %v4825
  %4827 = vdwg.mxu0
  %4828 = vmatpush.msra.mxu0 %v4371
  %4829 = vmatpush.msra.mxu0 %v4367
  %4830 = vmatpush.msra.mxu0 %v4363
  %4831 = vmatpush.msra.mxu0 %v4359
  %4832 = vmatpush.msra.mxu0 %v4355
  %4833 = vmatpush.msra.mxu0 %v4351
  %4834 = vmatpush.msra.mxu0 %v4347
  %4835 = vmatpush.msra.mxu0 %v4343
  %4836 = vmatpush.msra.mxu0 %v4339
  %4837 = vmatpush.msra.mxu0 %v4335
  %4838 = vmatpush.msra.mxu0 %v4331
  %4839 = vmatpush.msra.mxu0 %v4327
  %4840 = vmatpush.msra.mxu0 %v4323
  %4841 = vmatpush.msra.mxu0 %v4319
  %4842 = vmatpush.msra.mxu0 %v4315
  %4843 = vmatpush.msra.mxu0 %v4311
  %4844 = vmatmul.f32.gmra.mxu0 %v4525
  %v4845 = vpop.f32.mrf.mxu0
  %v4846 = vadd.f32 %v4539, %v4845
  %4847 = vmatmul.f32.gmra.mxu0 %v4529
  %v4848 = vpop.f32.mrf.mxu0
  %v4849 = vadd.f32 %v4544, %v4848
  %4850 = vdwg.mxu0
  %4851 = vmatpush.msra.mxu0 %v4435
  %4852 = vmatpush.msra.mxu0 %v4431
  %4853 = vmatpush.msra.mxu0 %v4427
  %4854 = vmatpush.msra.mxu0 %v4423
  %4855 = vmatpush.msra.mxu0 %v4419
  %4856 = vmatpush.msra.mxu0 %v4415
  %4857 = vmatpush.msra.mxu0 %v4411
  %4858 = vmatpush.msra.mxu0 %v4407
  %4859 = vmatpush.msra.mxu0 %v4403
  %4860 = vmatpush.msra.mxu0 %v4399
  %4861 = vmatpush.msra.mxu0 %v4395
  %4862 = vmatpush.msra.mxu0 %v4391
  %4863 = vmatpush.msra.mxu0 %v4387
  %4864 = vmatpush.msra.mxu0 %v4383
  %4865 = vmatpush.msra.mxu0 %v4379
  %4866 = vmatpush.msra.mxu0 %v4375
  %4867 = vmatmul.f32.gmra.mxu0 %v4526
  %v4868 = vpop.f32.mrf.mxu0
  %v4869 = vadd.f32 %v4846, %v4868
  %4870 = vmatmul.f32.gmra.mxu0 %v4530
  %v4871 = vpop.f32.mrf.mxu0
  %v4872 = vadd.f32 %v4849, %v4871
  %4873 = vdwg.mxu0
  %4874 = vmatpush.msra.mxu0 %v4499
  %4875 = vmatpush.msra.mxu0 %v4495
  %4876 = vmatpush.msra.mxu0 %v4491
  %4877 = vmatpush.msra.mxu0 %v4487
  %4878 = vmatpush.msra.mxu0 %v4483
  %4879 = vmatpush.msra.mxu0 %v4479
  %4880 = vmatpush.msra.mxu0 %v4475
  %4881 = vmatpush.msra.mxu0 %v4471
  %4882 = vmatpush.msra.mxu0 %v4467
  %4883 = vmatpush.msra.mxu0 %v4463
  %4884 = vmatpush.msra.mxu0 %v4459
  %4885 = vmatpush.msra.mxu0 %v4455
  %4886 = vmatpush.msra.mxu0 %v4451
  %4887 = vmatpush.msra.mxu0 %v4447
  %4888 = vmatpush.msra.mxu0 %v4443
  %4889 = vmatpush.msra.mxu0 %v4439
  %4890 = vmatmul.f32.gmra.mxu0 %v4527
  %v4891 = vpop.f32.mrf.mxu0
  %v4892 = vadd.f32 %v4869, %v4891
  %4893 = vmatmul.f32.gmra.mxu0 %v4531
  %v4894 = vpop.f32.mrf.mxu0
  %v4895 = vadd.f32 %v4872, %v4894
  %4896 = vdwg.mxu0
  %4897 = vmatpush.msra.mxu0 0.0
  %4898 = vmatpush.msra.mxu0 0.0
  %4899 = vmatpush.msra.mxu0 0.0
  %4900 = vmatpush.msra.mxu0 0.0
  %4901 = vmatpush.msra.mxu0 0.0
  %4902 = vmatpush.msra.mxu0 0.0
  %4903 = vmatpush.msra.mxu0 0.0
  %4904 = vmatpush.msra.mxu0 0.0
  %4905 = vmatpush.msra.mxu0 0.0
  %4906 = vmatpush.msra.mxu0 0.0
  %4907 = vmatpush.msra.mxu0 %v4523
  %4908 = vmatpush.msra.mxu0 %v4519
  %4909 = vmatpush.msra.mxu0 %v4515
  %4910 = vmatpush.msra.mxu0 %v4511
  %4911 = vmatpush.msra.mxu0 %v4507
  %4912 = vmatpush.msra.mxu0 %v4503
  %4913 = vmatmul.f32.gmra.mxu0 %v4547
  %v4914 = vpop.f32.mrf.mxu0
  %v4915 = vadd.f32 %v4892, %v4914
  %4916 = vmatmul.f32.gmra.mxu0 %v4550
  %v4917 = vpop.f32.mrf.mxu0
  %v4918 = vadd.f32 %v4895, %v4917
  %4919 = vdwg.mxu0
  %v4920 = vadd.f32 %v4639, %v2508
  %v4921 = vadd.f32 %v4731, %v2531
  %v4922 = vadd.f32 %v4823, %v2554
  %v4923 = vadd.f32 %v4915, %v2577
  %v4924 = vadd.f32 %v4642, %v2511
  %v4925 = vadd.f32 %v4734, %v2534
  %v4926 = vadd.f32 %v4826, %v2557
  %v4927 = vadd.f32 %v4918, %v2580
  %4928 = vst [vmem:[#allocation3 + $0x80] sm:$0xff] %v4920
  %4929 = vst [vmem:[#allocation3 + $0x88] sm:$0xff] %v4921
  %4930 = vst [vmem:[#allocation3 + $0x90] sm:$0xff] %v4922
  %4931 = vst [vmem:[#allocation3 + $0x98] sm:$0xff] %v4923
  %4932 = vst [vmem:[#allocation3 + $0xa0] sm:$0xff] %v4924
  %4933 = vst [vmem:[#allocation3 + $0xa8] sm:$0xff] %v4925
  %4934 = vst [vmem:[#allocation3 + $0xb0] sm:$0xff] %v4926
  %4935 = vst [vmem:[#allocation3 + $0xb8] sm:$0xff] %v4927
  %v4936 = vld [vmem:[#allocation3] sm:$0xff]
  %v4937 = vld [vmem:[#allocation3 + $0x8] sm:$0xff]
  %v4938 = vld [vmem:[#allocation3 + $0x10] sm:$0xff]
  %v4939 = vld [vmem:[#allocation3 + $0x18] sm:$0xff]
  %v4940 = vld [vmem:[#allocation3 + $0x20] sm:$0xff]
  %v4941 = vld [vmem:[#allocation3 + $0x28] sm:$0xff]
  %v4942 = vld [vmem:[#allocation3 + $0x30] sm:$0xff]
  %v4943 = vld [vmem:[#allocation3 + $0x38] sm:$0xff]
  %v4944 = vld [vmem:[#allocation3 + $0x40] sm:$0xff]
  %v4945 = vld [vmem:[#allocation3 + $0x48] sm:$0xff]
  %v4946 = vld [vmem:[#allocation3 + $0x50] sm:$0xff]
  %v4947 = vld [vmem:[#allocation3 + $0x58] sm:$0xff]
  %v4948 = vld [vmem:[#allocation3 + $0x60] sm:$0xff]
  %v4949 = vld [vmem:[#allocation3 + $0x68] sm:$0xff]
  %v4950 = vld [vmem:[#allocation3 + $0x70] sm:$0xff]
  %v4951 = vld [vmem:[#allocation3 + $0x78] sm:$0xff]
  %v4952 = vld [vmem:[#allocation3 + $0x80] sm:$0xff]
  %v4953 = vld [vmem:[#allocation3 + $0x88] sm:$0xff]
  %v4954 = vld [vmem:[#allocation3 + $0x90] sm:$0xff]
  %v4955 = vld [vmem:[#allocation3 + $0x98] sm:$0xff]
  %v4956 = vld [vmem:[#allocation3 + $0xa0] sm:$0xff]
  %v4957 = vld [vmem:[#allocation3 + $0xa8] sm:$0xff]
  %v4958 = vld [vmem:[#allocation3 + $0xb0] sm:$0xff]
  %v4959 = vld [vmem:[#allocation3 + $0xb8] sm:$0xff]
  %v4960 = vld [vmem:[%s7] sm:$0xff]
  %v4961 = vld [vmem:[%s7 + $0x8] sm:$0xff]
  %s4962 = scalar_lea.vmem %s9, 16
  %v4963 = vld [vmem:[%s4962] sm:$0xff]
  %v4964 = vld [vmem:[%s4962 + $0x8] sm:$0xff]
  %4966 = vset.pattern.permute.xlu0 0
  %4967 = vperm.xlu0 %4966, %v4963
  %v4968 = vpop.permute.xlu0 %4967
  %4971 = vset.pattern.permute.xlu0 0
  %4972 = vperm.xlu0 %4971, %v4964
  %v4973 = vpop.permute.xlu0 %4972
  %v4976 = vsel %vm2063, %v4960, 0
  %v4979 = vsel %vm2063, %v4961, 0
  %4981 = vmatpush.msra.mxu0 0.0
  %4982 = vmatpush.msra.mxu0 0.0
  %4983 = vmatpush.msra.mxu0 0.0
  %4984 = vmatpush.msra.mxu0 0.0
  %4985 = vmatpush.msra.mxu0 0.0
  %4986 = vmatpush.msra.mxu0 0.0
  %4987 = vmatpush.msra.mxu0 0.0
  %4988 = vmatpush.msra.mxu0 0.0
  %4989 = vmatpush.msra.mxu0 0.0
  %4990 = vmatpush.msra.mxu0 0.0
  %4991 = vmatpush.msra.mxu0 %v4956
  %4992 = vmatpush.msra.mxu0 %v4952
  %4993 = vmatpush.msra.mxu0 %v4948
  %4994 = vmatpush.msra.mxu0 %v4944
  %4995 = vmatpush.msra.mxu0 %v4940
  %4996 = vmatpush.msra.mxu0 %v4936
  %4997 = vmatmul.f32.gmra.mxu0 %v4976
  %v4998 = vpop.f32.mrf.mxu0
  %v4999 = vadd.f32 %v4968, %v4998
  %5000 = vmatmul.f32.gmra.mxu0 %v4979
  %v5001 = vpop.f32.mrf.mxu0
  %v5002 = vadd.f32 %v4973, %v5001
  %5003 = vdwg.mxu0
  %5004 = vmatpush.msra.mxu0 0.0
  %5005 = vmatpush.msra.mxu0 0.0
  %5006 = vmatpush.msra.mxu0 0.0
  %5007 = vmatpush.msra.mxu0 0.0
  %5008 = vmatpush.msra.mxu0 0.0
  %5009 = vmatpush.msra.mxu0 0.0
  %5010 = vmatpush.msra.mxu0 0.0
  %5011 = vmatpush.msra.mxu0 0.0
  %5012 = vmatpush.msra.mxu0 0.0
  %5013 = vmatpush.msra.mxu0 0.0
  %5014 = vmatpush.msra.mxu0 %v4957
  %5015 = vmatpush.msra.mxu0 %v4953
  %5016 = vmatpush.msra.mxu0 %v4949
  %5017 = vmatpush.msra.mxu0 %v4945
  %5018 = vmatpush.msra.mxu0 %v4941
  %5019 = vmatpush.msra.mxu0 %v4937
  %5020 = vmatmul.f32.gmra.mxu0 %v4976
  %v5021 = vpop.f32.mrf.mxu0
  %v5022 = vadd.f32 %v4968, %v5021
  %5023 = vmatmul.f32.gmra.mxu0 %v4979
  %v5024 = vpop.f32.mrf.mxu0
  %v5025 = vadd.f32 %v4973, %v5024
  %5026 = vdwg.mxu0
  %5027 = vmatpush.msra.mxu0 0.0
  %5028 = vmatpush.msra.mxu0 0.0
  %5029 = vmatpush.msra.mxu0 0.0
  %5030 = vmatpush.msra.mxu0 0.0
  %5031 = vmatpush.msra.mxu0 0.0
  %5032 = vmatpush.msra.mxu0 0.0
  %5033 = vmatpush.msra.mxu0 0.0
  %5034 = vmatpush.msra.mxu0 0.0
  %5035 = vmatpush.msra.mxu0 0.0
  %5036 = vmatpush.msra.mxu0 0.0
  %5037 = vmatpush.msra.mxu0 %v4958
  %5038 = vmatpush.msra.mxu0 %v4954
  %5039 = vmatpush.msra.mxu0 %v4950
  %5040 = vmatpush.msra.mxu0 %v4946
  %5041 = vmatpush.msra.mxu0 %v4942
  %5042 = vmatpush.msra.mxu0 %v4938
  %5043 = vmatmul.f32.gmra.mxu0 %v4976
  %v5044 = vpop.f32.mrf.mxu0
  %v5045 = vadd.f32 %v4968, %v5044
  %5046 = vmatmul.f32.gmra.mxu0 %v4979
  %v5047 = vpop.f32.mrf.mxu0
  %v5048 = vadd.f32 %v4973, %v5047
  %5049 = vdwg.mxu0
  %5050 = vmatpush.msra.mxu0 0.0
  %5051 = vmatpush.msra.mxu0 0.0
  %5052 = vmatpush.msra.mxu0 0.0
  %5053 = vmatpush.msra.mxu0 0.0
  %5054 = vmatpush.msra.mxu0 0.0
  %5055 = vmatpush.msra.mxu0 0.0
  %5056 = vmatpush.msra.mxu0 0.0
  %5057 = vmatpush.msra.mxu0 0.0
  %5058 = vmatpush.msra.mxu0 0.0
  %5059 = vmatpush.msra.mxu0 0.0
  %5060 = vmatpush.msra.mxu0 %v4959
  %5061 = vmatpush.msra.mxu0 %v4955
  %5062 = vmatpush.msra.mxu0 %v4951
  %5063 = vmatpush.msra.mxu0 %v4947
  %5064 = vmatpush.msra.mxu0 %v4943
  %5065 = vmatpush.msra.mxu0 %v4939
  %5066 = vmatmul.f32.gmra.mxu0 %v4976
  %v5067 = vpop.f32.mrf.mxu0
  %v5068 = vadd.f32 %v4968, %v5067
  %5069 = vmatmul.f32.gmra.mxu0 %v4979
  %v5070 = vpop.f32.mrf.mxu0
  %v5071 = vadd.f32 %v4973, %v5070
  %5072 = vdwg.mxu0
  %5073 = vrot.lane.b32.xlu0 %v4999, 17
  %v5074 = vpop.permute.xlu0 %5073
  %5075 = vrot.lane.b32.xlu0 %v5002, 17
  %v5076 = vpop.permute.xlu0 %5075
  %5077 = vrot.lane.b32.xlu0 %v5022, 17
  %v5078 = vpop.permute.xlu0 %5077
  %5079 = vrot.lane.b32.xlu0 %v5025, 17
  %v5080 = vpop.permute.xlu0 %5079
  %5081 = vrot.lane.b32.xlu0 %v5045, 17
  %v5082 = vpop.permute.xlu0 %5081
  %5083 = vrot.lane.b32.xlu0 %v5048, 17
  %v5084 = vpop.permute.xlu0 %5083
  %5085 = vrot.lane.b32.xlu0 %v5068, 17
  %v5086 = vpop.permute.xlu0 %5085
  %5087 = vrot.lane.b32.xlu0 %v5071, 17
  %v5088 = vpop.permute.xlu0 %5087
  %v5089 = vsel %vm77, %v5082, %v5086
  %v5090 = vsel %vm77, %v5084, %v5088
  %v5091 = vsel %vm77, %v5078, %v5082
  %v5092 = vsel %vm77, %v5080, %v5084
  %v5093 = vsel %vm77, %v5074, %v5078
  %v5094 = vsel %vm77, %v5076, %v5080
  %v5095 = vsel %vm77, %v5086, %v5074
  %v5096 = vsel %vm77, %v5088, %v5076
  %v5097 = vmul.f32 %v5095, %v86
  %v5098 = vmul.f32 %v5093, %v87
  %v5099 = vmul.f32 %v5091, %v88
  %v5100 = vmul.f32 %v5089, %v89
  %v5101 = vmul.f32 %v5096, %v86
  %v5102 = vmul.f32 %v5094, %v87
  %v5103 = vmul.f32 %v5092, %v88
  %v5104 = vmul.f32 %v5090, %v89
  %5105 = vst [vmem:[#allocation2] sm:$0xff] %v5097
  %5106 = vst [vmem:[#allocation2 + $0x8] sm:$0xff] %v5098
  %5107 = vst [vmem:[#allocation2 + $0x10] sm:$0xff] %v5099
  %5108 = vst [vmem:[#allocation2 + $0x18] sm:$0xff] %v5100
  %5109 = vst [vmem:[#allocation2 + $0x20] sm:$0xff] %v5101
  %5110 = vst [vmem:[#allocation2 + $0x28] sm:$0xff] %v5102
  %5111 = vst [vmem:[#allocation2 + $0x30] sm:$0xff] %v5103
  %5112 = vst [vmem:[#allocation2 + $0x38] sm:$0xff] %v5104
  %5113 = vrot.lane.b32.xlu0 %v4999, 16
  %v5114 = vpop.permute.xlu0 %5113
  %5115 = vrot.lane.b32.xlu0 %v5002, 16
  %v5116 = vpop.permute.xlu0 %5115
  %5117 = vrot.lane.b32.xlu0 %v5022, 16
  %v5118 = vpop.permute.xlu0 %5117
  %5119 = vrot.lane.b32.xlu0 %v5025, 16
  %v5120 = vpop.permute.xlu0 %5119
  %5121 = vrot.lane.b32.xlu0 %v5045, 16
  %v5122 = vpop.permute.xlu0 %5121
  %5123 = vrot.lane.b32.xlu0 %v5048, 16
  %v5124 = vpop.permute.xlu0 %5123
  %5125 = vrot.lane.b32.xlu0 %v5068, 16
  %v5126 = vpop.permute.xlu0 %5125
  %5127 = vrot.lane.b32.xlu0 %v5071, 16
  %v5128 = vpop.permute.xlu0 %5127
  %v5129 = vsel %vm122, %v5122, %v5126
  %v5130 = vsel %vm122, %v5124, %v5128
  %v5131 = vsel %vm122, %v5118, %v5122
  %v5132 = vsel %vm122, %v5120, %v5124
  %v5133 = vsel %vm122, %v5114, %v5118
  %v5134 = vsel %vm122, %v5116, %v5120
  %v5135 = vsel %vm122, %v5126, %v5114
  %v5136 = vsel %vm122, %v5128, %v5116
  %v5137 = vmul.f32 %v5135, %v131
  %v5138 = vmul.f32 %v5133, %v132
  %v5139 = vmul.f32 %v5131, %v133
  %v5140 = vmul.f32 %v5129, %v134
  %v5141 = vmul.f32 %v5136, %v131
  %v5142 = vmul.f32 %v5134, %v132
  %v5143 = vmul.f32 %v5132, %v133
  %v5144 = vmul.f32 %v5130, %v134
  %5145 = vst [vmem:[#allocation2 + $0x40] sm:$0xff] %v5137
  %5146 = vst [vmem:[#allocation2 + $0x48] sm:$0xff] %v5138
  %5147 = vst [vmem:[#allocation2 + $0x50] sm:$0xff] %v5139
  %5148 = vst [vmem:[#allocation2 + $0x58] sm:$0xff] %v5140
  %5149 = vst [vmem:[#allocation2 + $0x60] sm:$0xff] %v5141
  %5150 = vst [vmem:[#allocation2 + $0x68] sm:$0xff] %v5142
  %5151 = vst [vmem:[#allocation2 + $0x70] sm:$0xff] %v5143
  %5152 = vst [vmem:[#allocation2 + $0x78] sm:$0xff] %v5144
  %5153 = vrot.lane.b32.xlu0 %v4999, 15
  %v5154 = vpop.permute.xlu0 %5153
  %5155 = vrot.lane.b32.xlu0 %v5002, 15
  %v5156 = vpop.permute.xlu0 %5155
  %5157 = vrot.lane.b32.xlu0 %v5022, 15
  %v5158 = vpop.permute.xlu0 %5157
  %5159 = vrot.lane.b32.xlu0 %v5025, 15
  %v5160 = vpop.permute.xlu0 %5159
  %5161 = vrot.lane.b32.xlu0 %v5045, 15
  %v5162 = vpop.permute.xlu0 %5161
  %5163 = vrot.lane.b32.xlu0 %v5048, 15
  %v5164 = vpop.permute.xlu0 %5163
  %5165 = vrot.lane.b32.xlu0 %v5068, 15
  %v5166 = vpop.permute.xlu0 %5165
  %5167 = vrot.lane.b32.xlu0 %v5071, 15
  %v5168 = vpop.permute.xlu0 %5167
  %v5169 = vsel %vm167, %v5162, %v5166
  %v5170 = vsel %vm167, %v5164, %v5168
  %v5171 = vsel %vm167, %v5158, %v5162
  %v5172 = vsel %vm167, %v5160, %v5164
  %v5173 = vsel %vm167, %v5154, %v5158
  %v5174 = vsel %vm167, %v5156, %v5160
  %v5175 = vsel %vm167, %v5166, %v5154
  %v5176 = vsel %vm167, %v5168, %v5156
  %v5177 = vmul.f32 %v5175, %v176
  %v5178 = vmul.f32 %v5173, %v177
  %v5179 = vmul.f32 %v5171, %v178
  %v5180 = vmul.f32 %v5169, %v179
  %v5181 = vmul.f32 %v5176, %v176
  %v5182 = vmul.f32 %v5174, %v177
  %v5183 = vmul.f32 %v5172, %v178
  %v5184 = vmul.f32 %v5170, %v179
  %5185 = vst [vmem:[#allocation2 + $0x80] sm:$0xff] %v5177
  %5186 = vst [vmem:[#allocation2 + $0x88] sm:$0xff] %v5178
  %5187 = vst [vmem:[#allocation2 + $0x90] sm:$0xff] %v5179
  %5188 = vst [vmem:[#allocation2 + $0x98] sm:$0xff] %v5180
  %5189 = vst [vmem:[#allocation2 + $0xa0] sm:$0xff] %v5181
  %5190 = vst [vmem:[#allocation2 + $0xa8] sm:$0xff] %v5182
  %5191 = vst [vmem:[#allocation2 + $0xb0] sm:$0xff] %v5183
  %5192 = vst [vmem:[#allocation2 + $0xb8] sm:$0xff] %v5184
  %5193 = vrot.lane.b32.xlu0 %v4999, 1
  %v5194 = vpop.permute.xlu0 %5193
  %5195 = vrot.lane.b32.xlu0 %v5002, 1
  %v5196 = vpop.permute.xlu0 %5195
  %5197 = vrot.lane.b32.xlu0 %v5022, 1
  %v5198 = vpop.permute.xlu0 %5197
  %5199 = vrot.lane.b32.xlu0 %v5025, 1
  %v5200 = vpop.permute.xlu0 %5199
  %5201 = vrot.lane.b32.xlu0 %v5045, 1
  %v5202 = vpop.permute.xlu0 %5201
  %5203 = vrot.lane.b32.xlu0 %v5048, 1
  %v5204 = vpop.permute.xlu0 %5203
  %5205 = vrot.lane.b32.xlu0 %v5068, 1
  %v5206 = vpop.permute.xlu0 %5205
  %5207 = vrot.lane.b32.xlu0 %v5071, 1
  %v5208 = vpop.permute.xlu0 %5207
  %v5209 = vsel %vm212, %v5202, %v5206
  %v5210 = vsel %vm212, %v5204, %v5208
  %v5211 = vsel %vm212, %v5198, %v5202
  %v5212 = vsel %vm212, %v5200, %v5204
  %v5213 = vsel %vm212, %v5194, %v5198
  %v5214 = vsel %vm212, %v5196, %v5200
  %v5215 = vsel %vm212, %v5206, %v5194
  %v5216 = vsel %vm212, %v5208, %v5196
  %v5217 = vmul.f32 %v5215, %v221
  %v5218 = vmul.f32 %v5213, %v222
  %v5219 = vmul.f32 %v5211, %v223
  %v5220 = vmul.f32 %v5209, %v224
  %v5221 = vmul.f32 %v5216, %v221
  %v5222 = vmul.f32 %v5214, %v222
  %v5223 = vmul.f32 %v5212, %v223
  %v5224 = vmul.f32 %v5210, %v224
  %5225 = vst [vmem:[#allocation2 + $0xc0] sm:$0xff] %v5217
  %5226 = vst [vmem:[#allocation2 + $0xc8] sm:$0xff] %v5218
  %5227 = vst [vmem:[#allocation2 + $0xd0] sm:$0xff] %v5219
  %5228 = vst [vmem:[#allocation2 + $0xd8] sm:$0xff] %v5220
  %5229 = vst [vmem:[#allocation2 + $0xe0] sm:$0xff] %v5221
  %5230 = vst [vmem:[#allocation2 + $0xe8] sm:$0xff] %v5222
  %5231 = vst [vmem:[#allocation2 + $0xf0] sm:$0xff] %v5223
  %5232 = vst [vmem:[#allocation2 + $0xf8] sm:$0xff] %v5224
  %5233 = vst [vmem:[#allocation2 + $0x100] sm:$0xff] %v4999
  %5234 = vst [vmem:[#allocation2 + $0x108] sm:$0xff] %v5022
  %5235 = vst [vmem:[#allocation2 + $0x110] sm:$0xff] %v5045
  %5236 = vst [vmem:[#allocation2 + $0x118] sm:$0xff] %v5068
  %5237 = vst [vmem:[#allocation2 + $0x120] sm:$0xff] %v5002
  %5238 = vst [vmem:[#allocation2 + $0x128] sm:$0xff] %v5025
  %5239 = vst [vmem:[#allocation2 + $0x130] sm:$0xff] %v5048
  %5240 = vst [vmem:[#allocation2 + $0x138] sm:$0xff] %v5071
  %5241 = vrot.lane.b32.xlu0 %v4999, 127
  %v5242 = vpop.permute.xlu0 %5241
  %5243 = vrot.lane.b32.xlu0 %v5002, 127
  %v5244 = vpop.permute.xlu0 %5243
  %5245 = vrot.lane.b32.xlu0 %v5022, 127
  %v5246 = vpop.permute.xlu0 %5245
  %5247 = vrot.lane.b32.xlu0 %v5025, 127
  %v5248 = vpop.permute.xlu0 %5247
  %5249 = vrot.lane.b32.xlu0 %v5045, 127
  %v5250 = vpop.permute.xlu0 %5249
  %5251 = vrot.lane.b32.xlu0 %v5048, 127
  %v5252 = vpop.permute.xlu0 %5251
  %5253 = vrot.lane.b32.xlu0 %v5068, 127
  %v5254 = vpop.permute.xlu0 %5253
  %5255 = vrot.lane.b32.xlu0 %v5071, 127
  %v5256 = vpop.permute.xlu0 %5255
  %v5257 = vsel %vm265, %v5250, %v5254
  %v5258 = vsel %vm265, %v5252, %v5256
  %v5259 = vsel %vm265, %v5246, %v5250
  %v5260 = vsel %vm265, %v5248, %v5252
  %v5261 = vsel %vm265, %v5242, %v5246
  %v5262 = vsel %vm265, %v5244, %v5248
  %v5263 = vsel %vm265, %v5254, %v5242
  %v5264 = vsel %vm265, %v5256, %v5244
  %v5265 = vmul.f32 %v5261, %v274
  %v5266 = vmul.f32 %v5259, %v275
  %v5267 = vmul.f32 %v5257, %v276
  %v5268 = vmul.f32 %v5263, %v277
  %v5269 = vmul.f32 %v5262, %v274
  %v5270 = vmul.f32 %v5260, %v275
  %v5271 = vmul.f32 %v5258, %v276
  %v5272 = vmul.f32 %v5264, %v277
  %5273 = vst [vmem:[#allocation2 + $0x140] sm:$0xff] %v5265
  %5274 = vst [vmem:[#allocation2 + $0x148] sm:$0xff] %v5266
  %5275 = vst [vmem:[#allocation2 + $0x150] sm:$0xff] %v5267
  %5276 = vst [vmem:[#allocation2 + $0x158] sm:$0xff] %v5268
  %5277 = vst [vmem:[#allocation2 + $0x160] sm:$0xff] %v5269
  %5278 = vst [vmem:[#allocation2 + $0x168] sm:$0xff] %v5270
  %5279 = vst [vmem:[#allocation2 + $0x170] sm:$0xff] %v5271
  %5280 = vst [vmem:[#allocation2 + $0x178] sm:$0xff] %v5272
  %5281 = vrot.lane.b32.xlu0 %v4999, 113
  %v5282 = vpop.permute.xlu0 %5281
  %5283 = vrot.lane.b32.xlu0 %v5002, 113
  %v5284 = vpop.permute.xlu0 %5283
  %5285 = vrot.lane.b32.xlu0 %v5022, 113
  %v5286 = vpop.permute.xlu0 %5285
  %5287 = vrot.lane.b32.xlu0 %v5025, 113
  %v5288 = vpop.permute.xlu0 %5287
  %5289 = vrot.lane.b32.xlu0 %v5045, 113
  %v5290 = vpop.permute.xlu0 %5289
  %5291 = vrot.lane.b32.xlu0 %v5048, 113
  %v5292 = vpop.permute.xlu0 %5291
  %5293 = vrot.lane.b32.xlu0 %v5068, 113
  %v5294 = vpop.permute.xlu0 %5293
  %5295 = vrot.lane.b32.xlu0 %v5071, 113
  %v5296 = vpop.permute.xlu0 %5295
  %v5297 = vsel %vm310, %v5290, %v5294
  %v5298 = vsel %vm310, %v5292, %v5296
  %v5299 = vsel %vm310, %v5286, %v5290
  %v5300 = vsel %vm310, %v5288, %v5292
  %v5301 = vsel %vm310, %v5282, %v5286
  %v5302 = vsel %vm310, %v5284, %v5288
  %v5303 = vsel %vm310, %v5294, %v5282
  %v5304 = vsel %vm310, %v5296, %v5284
  %v5305 = vmul.f32 %v5301, %v319
  %v5306 = vmul.f32 %v5299, %v320
  %v5307 = vmul.f32 %v5297, %v321
  %v5308 = vmul.f32 %v5303, %v322
  %v5309 = vmul.f32 %v5302, %v319
  %v5310 = vmul.f32 %v5300, %v320
  %v5311 = vmul.f32 %v5298, %v321
  %v5312 = vmul.f32 %v5304, %v322
  %5313 = vst [vmem:[#allocation2 + $0x180] sm:$0xff] %v5305
  %5314 = vst [vmem:[#allocation2 + $0x188] sm:$0xff] %v5306
  %5315 = vst [vmem:[#allocation2 + $0x190] sm:$0xff] %v5307
  %5316 = vst [vmem:[#allocation2 + $0x198] sm:$0xff] %v5308
  %5317 = vst [vmem:[#allocation2 + $0x1a0] sm:$0xff] %v5309
  %5318 = vst [vmem:[#allocation2 + $0x1a8] sm:$0xff] %v5310
  %5319 = vst [vmem:[#allocation2 + $0x1b0] sm:$0xff] %v5311
  %5320 = vst [vmem:[#allocation2 + $0x1b8] sm:$0xff] %v5312
  %5321 = vrot.lane.b32.xlu0 %v4999, 112
  %v5322 = vpop.permute.xlu0 %5321
  %5323 = vrot.lane.b32.xlu0 %v5002, 112
  %v5324 = vpop.permute.xlu0 %5323
  %5325 = vrot.lane.b32.xlu0 %v5022, 112
  %v5326 = vpop.permute.xlu0 %5325
  %5327 = vrot.lane.b32.xlu0 %v5025, 112
  %v5328 = vpop.permute.xlu0 %5327
  %5329 = vrot.lane.b32.xlu0 %v5045, 112
  %v5330 = vpop.permute.xlu0 %5329
  %5331 = vrot.lane.b32.xlu0 %v5048, 112
  %v5332 = vpop.permute.xlu0 %5331
  %5333 = vrot.lane.b32.xlu0 %v5068, 112
  %v5334 = vpop.permute.xlu0 %5333
  %5335 = vrot.lane.b32.xlu0 %v5071, 112
  %v5336 = vpop.permute.xlu0 %5335
  %v5337 = vsel %vm355, %v5330, %v5334
  %v5338 = vsel %vm355, %v5332, %v5336
  %v5339 = vsel %vm355, %v5326, %v5330
  %v5340 = vsel %vm355, %v5328, %v5332
  %v5341 = vsel %vm355, %v5322, %v5326
  %v5342 = vsel %vm355, %v5324, %v5328
  %v5343 = vsel %vm355, %v5334, %v5322
  %v5344 = vsel %vm355, %v5336, %v5324
  %v5345 = vmul.f32 %v5341, %v364
  %v5346 = vmul.f32 %v5339, %v365
  %v5347 = vmul.f32 %v5337, %v366
  %v5348 = vmul.f32 %v5343, %v367
  %v5349 = vmul.f32 %v5342, %v364
  %v5350 = vmul.f32 %v5340, %v365
  %v5351 = vmul.f32 %v5338, %v366
  %v5352 = vmul.f32 %v5344, %v367
  %5353 = vst [vmem:[#allocation2 + $0x1c0] sm:$0xff] %v5345
  %5354 = vst [vmem:[#allocation2 + $0x1c8] sm:$0xff] %v5346
  %5355 = vst [vmem:[#allocation2 + $0x1d0] sm:$0xff] %v5347
  %5356 = vst [vmem:[#allocation2 + $0x1d8] sm:$0xff] %v5348
  %5357 = vst [vmem:[#allocation2 + $0x1e0] sm:$0xff] %v5349
  %5358 = vst [vmem:[#allocation2 + $0x1e8] sm:$0xff] %v5350
  %5359 = vst [vmem:[#allocation2 + $0x1f0] sm:$0xff] %v5351
  %5360 = vst [vmem:[#allocation2 + $0x1f8] sm:$0xff] %v5352
  %5361 = vrot.lane.b32.xlu0 %v4999, 111
  %v5362 = vpop.permute.xlu0 %5361
  %5363 = vrot.lane.b32.xlu0 %v5002, 111
  %v5364 = vpop.permute.xlu0 %5363
  %5365 = vrot.lane.b32.xlu0 %v5022, 111
  %v5366 = vpop.permute.xlu0 %5365
  %5367 = vrot.lane.b32.xlu0 %v5025, 111
  %v5368 = vpop.permute.xlu0 %5367
  %5369 = vrot.lane.b32.xlu0 %v5045, 111
  %v5370 = vpop.permute.xlu0 %5369
  %5371 = vrot.lane.b32.xlu0 %v5048, 111
  %v5372 = vpop.permute.xlu0 %5371
  %5373 = vrot.lane.b32.xlu0 %v5068, 111
  %v5374 = vpop.permute.xlu0 %5373
  %5375 = vrot.lane.b32.xlu0 %v5071, 111
  %v5376 = vpop.permute.xlu0 %5375
  %v5377 = vsel %vm400, %v5370, %v5374
  %v5378 = vsel %vm400, %v5372, %v5376
  %v5379 = vsel %vm400, %v5366, %v5370
  %v5380 = vsel %vm400, %v5368, %v5372
  %v5381 = vsel %vm400, %v5362, %v5366
  %v5382 = vsel %vm400, %v5364, %v5368
  %v5383 = vsel %vm400, %v5374, %v5362
  %v5384 = vsel %vm400, %v5376, %v5364
  %v5385 = vmul.f32 %v5381, %v409
  %v5386 = vmul.f32 %v5379, %v410
  %v5387 = vmul.f32 %v5377, %v411
  %v5388 = vmul.f32 %v5383, %v412
  %v5389 = vmul.f32 %v5382, %v409
  %v5390 = vmul.f32 %v5380, %v410
  %v5391 = vmul.f32 %v5378, %v411
  %v5392 = vmul.f32 %v5384, %v412
  %5393 = vst [vmem:[#allocation2 + $0x200] sm:$0xff] %v5385
  %5394 = vst [vmem:[#allocation2 + $0x208] sm:$0xff] %v5386
  %5395 = vst [vmem:[#allocation2 + $0x210] sm:$0xff] %v5387
  %5396 = vst [vmem:[#allocation2 + $0x218] sm:$0xff] %v5388
  %5397 = vst [vmem:[#allocation2 + $0x220] sm:$0xff] %v5389
  %5398 = vst [vmem:[#allocation2 + $0x228] sm:$0xff] %v5390
  %5399 = vst [vmem:[#allocation2 + $0x230] sm:$0xff] %v5391
  %5400 = vst [vmem:[#allocation2 + $0x238] sm:$0xff] %v5392
  %v5401 = vld [vmem:[#allocation2] sm:$0xff]
  %v5402 = vld [vmem:[#allocation2 + $0x8] sm:$0xff]
  %v5403 = vld [vmem:[#allocation2 + $0x10] sm:$0xff]
  %v5404 = vld [vmem:[#allocation2 + $0x18] sm:$0xff]
  %v5405 = vld [vmem:[#allocation2 + $0x20] sm:$0xff]
  %v5406 = vld [vmem:[#allocation2 + $0x28] sm:$0xff]
  %v5407 = vld [vmem:[#allocation2 + $0x30] sm:$0xff]
  %v5408 = vld [vmem:[#allocation2 + $0x38] sm:$0xff]
  %v5409 = vld [vmem:[#allocation2 + $0x40] sm:$0xff]
  %v5410 = vld [vmem:[#allocation2 + $0x48] sm:$0xff]
  %v5411 = vld [vmem:[#allocation2 + $0x50] sm:$0xff]
  %v5412 = vld [vmem:[#allocation2 + $0x58] sm:$0xff]
  %v5413 = vld [vmem:[#allocation2 + $0x60] sm:$0xff]
  %v5414 = vld [vmem:[#allocation2 + $0x68] sm:$0xff]
  %v5415 = vld [vmem:[#allocation2 + $0x70] sm:$0xff]
  %v5416 = vld [vmem:[#allocation2 + $0x78] sm:$0xff]
  %v5417 = vld [vmem:[#allocation2 + $0x80] sm:$0xff]
  %v5418 = vld [vmem:[#allocation2 + $0x88] sm:$0xff]
  %v5419 = vld [vmem:[#allocation2 + $0x90] sm:$0xff]
  %v5420 = vld [vmem:[#allocation2 + $0x98] sm:$0xff]
  %v5421 = vld [vmem:[#allocation2 + $0xa0] sm:$0xff]
  %v5422 = vld [vmem:[#allocation2 + $0xa8] sm:$0xff]
  %v5423 = vld [vmem:[#allocation2 + $0xb0] sm:$0xff]
  %v5424 = vld [vmem:[#allocation2 + $0xb8] sm:$0xff]
  %v5425 = vld [vmem:[#allocation2 + $0xc0] sm:$0xff]
  %v5426 = vld [vmem:[#allocation2 + $0xc8] sm:$0xff]
  %v5427 = vld [vmem:[#allocation2 + $0xd0] sm:$0xff]
  %v5428 = vld [vmem:[#allocation2 + $0xd8] sm:$0xff]
  %v5429 = vld [vmem:[#allocation2 + $0xe0] sm:$0xff]
  %v5430 = vld [vmem:[#allocation2 + $0xe8] sm:$0xff]
  %v5431 = vld [vmem:[#allocation2 + $0xf0] sm:$0xff]
  %v5432 = vld [vmem:[#allocation2 + $0xf8] sm:$0xff]
  %v5433 = vld [vmem:[#allocation2 + $0x100] sm:$0xff]
  %v5434 = vld [vmem:[#allocation2 + $0x108] sm:$0xff]
  %v5435 = vld [vmem:[#allocation2 + $0x110] sm:$0xff]
  %v5436 = vld [vmem:[#allocation2 + $0x118] sm:$0xff]
  %v5437 = vld [vmem:[#allocation2 + $0x120] sm:$0xff]
  %v5438 = vld [vmem:[#allocation2 + $0x128] sm:$0xff]
  %v5439 = vld [vmem:[#allocation2 + $0x130] sm:$0xff]
  %v5440 = vld [vmem:[#allocation2 + $0x138] sm:$0xff]
  %v5441 = vld [vmem:[#allocation2 + $0x140] sm:$0xff]
  %v5442 = vld [vmem:[#allocation2 + $0x148] sm:$0xff]
  %v5443 = vld [vmem:[#allocation2 + $0x150] sm:$0xff]
  %v5444 = vld [vmem:[#allocation2 + $0x158] sm:$0xff]
  %v5445 = vld [vmem:[#allocation2 + $0x160] sm:$0xff]
  %v5446 = vld [vmem:[#allocation2 + $0x168] sm:$0xff]
  %v5447 = vld [vmem:[#allocation2 + $0x170] sm:$0xff]
  %v5448 = vld [vmem:[#allocation2 + $0x178] sm:$0xff]
  %v5449 = vld [vmem:[#allocation2 + $0x180] sm:$0xff]
  %v5450 = vld [vmem:[#allocation2 + $0x188] sm:$0xff]
  %v5451 = vld [vmem:[#allocation2 + $0x190] sm:$0xff]
  %v5452 = vld [vmem:[#allocation2 + $0x198] sm:$0xff]
  %v5453 = vld [vmem:[#allocation2 + $0x1a0] sm:$0xff]
  %v5454 = vld [vmem:[#allocation2 + $0x1a8] sm:$0xff]
  %v5455 = vld [vmem:[#allocation2 + $0x1b0] sm:$0xff]
  %v5456 = vld [vmem:[#allocation2 + $0x1b8] sm:$0xff]
  %v5457 = vld [vmem:[#allocation2 + $0x1c0] sm:$0xff]
  %v5458 = vld [vmem:[#allocation2 + $0x1c8] sm:$0xff]
  %v5459 = vld [vmem:[#allocation2 + $0x1d0] sm:$0xff]
  %v5460 = vld [vmem:[#allocation2 + $0x1d8] sm:$0xff]
  %v5461 = vld [vmem:[#allocation2 + $0x1e0] sm:$0xff]
  %v5462 = vld [vmem:[#allocation2 + $0x1e8] sm:$0xff]
  %v5463 = vld [vmem:[#allocation2 + $0x1f0] sm:$0xff]
  %v5464 = vld [vmem:[#allocation2 + $0x1f8] sm:$0xff]
  %v5465 = vld [vmem:[#allocation2 + $0x200] sm:$0xff]
  %v5466 = vld [vmem:[#allocation2 + $0x208] sm:$0xff]
  %v5467 = vld [vmem:[#allocation2 + $0x210] sm:$0xff]
  %v5468 = vld [vmem:[#allocation2 + $0x218] sm:$0xff]
  %v5469 = vld [vmem:[#allocation2 + $0x220] sm:$0xff]
  %v5470 = vld [vmem:[#allocation2 + $0x228] sm:$0xff]
  %v5471 = vld [vmem:[#allocation2 + $0x230] sm:$0xff]
  %v5472 = vld [vmem:[#allocation2 + $0x238] sm:$0xff]
  %s5473 = scalar_lea.vmem %s2, 64
  %v5474 = vld [vmem:[%s5473] sm:$0xff]
  %v5475 = vld [vmem:[%s5473 + $0x8] sm:$0xff]
  %v5476 = vld [vmem:[%s5473 + $0x10] sm:$0xff]
  %v5477 = vld [vmem:[%s5473 + $0x18] sm:$0xff]
  %s5478 = scalar_lea.vmem %s5, 96
  %v5479 = vld [vmem:[%s5478] sm:$0xff]
  %v5480 = vld [vmem:[%s5478 + $0x8] sm:$0xff]
  %5482 = vset.pattern.permute.xlu0 0
  %5483 = vperm.xlu0 %5482, %v5479
  %v5484 = vpop.permute.xlu0 %5483
  %5487 = vset.pattern.permute.xlu0 0
  %5488 = vperm.xlu0 %5487, %v5480
  %v5489 = vpop.permute.xlu0 %5488
  %v5492 = vsel %vm517, %v5475, 0
  %v5495 = vsel %vm517, %v5477, 0
  %5497 = vmatpush.msra.mxu0 %v5461
  %5498 = vmatpush.msra.mxu0 %v5457
  %5499 = vmatpush.msra.mxu0 %v5453
  %5500 = vmatpush.msra.mxu0 %v5449
  %5501 = vmatpush.msra.mxu0 %v5445
  %5502 = vmatpush.msra.mxu0 %v5441
  %5503 = vmatpush.msra.mxu0 %v5437
  %5504 = vmatpush.msra.mxu0 %v5433
  %5505 = vmatpush.msra.mxu0 %v5429
  %5506 = vmatpush.msra.mxu0 %v5425
  %5507 = vmatpush.msra.mxu0 %v5421
  %5508 = vmatpush.msra.mxu0 %v5417
  %5509 = vmatpush.msra.mxu0 %v5413
  %5510 = vmatpush.msra.mxu0 %v5409
  %5511 = vmatpush.msra.mxu0 %v5405
  %5512 = vmatpush.msra.mxu0 %v5401
  %5513 = vmatmul.f32.gmra.mxu0 %v5474
  %v5514 = vpop.f32.mrf.mxu0
  %v5515 = vadd.f32 %v5484, %v5514
  %5516 = vmatmul.f32.gmra.mxu0 %v5476
  %v5517 = vpop.f32.mrf.mxu0
  %v5518 = vadd.f32 %v5489, %v5517
  %5519 = vdwg.mxu0
  %5520 = vmatpush.msra.mxu0 0.0
  %5521 = vmatpush.msra.mxu0 0.0
  %5522 = vmatpush.msra.mxu0 0.0
  %5523 = vmatpush.msra.mxu0 0.0
  %5524 = vmatpush.msra.mxu0 0.0
  %5525 = vmatpush.msra.mxu0 0.0
  %5526 = vmatpush.msra.mxu0 0.0
  %5527 = vmatpush.msra.mxu0 0.0
  %5528 = vmatpush.msra.mxu0 0.0
  %5529 = vmatpush.msra.mxu0 0.0
  %5530 = vmatpush.msra.mxu0 0.0
  %5531 = vmatpush.msra.mxu0 0.0
  %5532 = vmatpush.msra.mxu0 0.0
  %5533 = vmatpush.msra.mxu0 0.0
  %5534 = vmatpush.msra.mxu0 %v5469
  %5535 = vmatpush.msra.mxu0 %v5465
  %5536 = vmatmul.f32.gmra.mxu0 %v5492
  %v5537 = vpop.f32.mrf.mxu0
  %v5538 = vadd.f32 %v5515, %v5537
  %5539 = vmatmul.f32.gmra.mxu0 %v5495
  %v5540 = vpop.f32.mrf.mxu0
  %v5541 = vadd.f32 %v5518, %v5540
  %5542 = vdwg.mxu0
  %5543 = vmatpush.msra.mxu0 %v5462
  %5544 = vmatpush.msra.mxu0 %v5458
  %5545 = vmatpush.msra.mxu0 %v5454
  %5546 = vmatpush.msra.mxu0 %v5450
  %5547 = vmatpush.msra.mxu0 %v5446
  %5548 = vmatpush.msra.mxu0 %v5442
  %5549 = vmatpush.msra.mxu0 %v5438
  %5550 = vmatpush.msra.mxu0 %v5434
  %5551 = vmatpush.msra.mxu0 %v5430
  %5552 = vmatpush.msra.mxu0 %v5426
  %5553 = vmatpush.msra.mxu0 %v5422
  %5554 = vmatpush.msra.mxu0 %v5418
  %5555 = vmatpush.msra.mxu0 %v5414
  %5556 = vmatpush.msra.mxu0 %v5410
  %5557 = vmatpush.msra.mxu0 %v5406
  %5558 = vmatpush.msra.mxu0 %v5402
  %5559 = vmatmul.f32.gmra.mxu0 %v5474
  %v5560 = vpop.f32.mrf.mxu0
  %v5561 = vadd.f32 %v5484, %v5560
  %5562 = vmatmul.f32.gmra.mxu0 %v5476
  %v5563 = vpop.f32.mrf.mxu0
  %v5564 = vadd.f32 %v5489, %v5563
  %5565 = vdwg.mxu0
  %5566 = vmatpush.msra.mxu0 0.0
  %5567 = vmatpush.msra.mxu0 0.0
  %5568 = vmatpush.msra.mxu0 0.0
  %5569 = vmatpush.msra.mxu0 0.0
  %5570 = vmatpush.msra.mxu0 0.0
  %5571 = vmatpush.msra.mxu0 0.0
  %5572 = vmatpush.msra.mxu0 0.0
  %5573 = vmatpush.msra.mxu0 0.0
  %5574 = vmatpush.msra.mxu0 0.0
  %5575 = vmatpush.msra.mxu0 0.0
  %5576 = vmatpush.msra.mxu0 0.0
  %5577 = vmatpush.msra.mxu0 0.0
  %5578 = vmatpush.msra.mxu0 0.0
  %5579 = vmatpush.msra.mxu0 0.0
  %5580 = vmatpush.msra.mxu0 %v5470
  %5581 = vmatpush.msra.mxu0 %v5466
  %5582 = vmatmul.f32.gmra.mxu0 %v5492
  %v5583 = vpop.f32.mrf.mxu0
  %v5584 = vadd.f32 %v5561, %v5583
  %5585 = vmatmul.f32.gmra.mxu0 %v5495
  %v5586 = vpop.f32.mrf.mxu0
  %v5587 = vadd.f32 %v5564, %v5586
  %5588 = vdwg.mxu0
  %5589 = vmatpush.msra.mxu0 %v5463
  %5590 = vmatpush.msra.mxu0 %v5459
  %5591 = vmatpush.msra.mxu0 %v5455
  %5592 = vmatpush.msra.mxu0 %v5451
  %5593 = vmatpush.msra.mxu0 %v5447
  %5594 = vmatpush.msra.mxu0 %v5443
  %5595 = vmatpush.msra.mxu0 %v5439
  %5596 = vmatpush.msra.mxu0 %v5435
  %5597 = vmatpush.msra.mxu0 %v5431
  %5598 = vmatpush.msra.mxu0 %v5427
  %5599 = vmatpush.msra.mxu0 %v5423
  %5600 = vmatpush.msra.mxu0 %v5419
  %5601 = vmatpush.msra.mxu0 %v5415
  %5602 = vmatpush.msra.mxu0 %v5411
  %5603 = vmatpush.msra.mxu0 %v5407
  %5604 = vmatpush.msra.mxu0 %v5403
  %5605 = vmatmul.f32.gmra.mxu0 %v5474
  %v5606 = vpop.f32.mrf.mxu0
  %v5607 = vadd.f32 %v5484, %v5606
  %5608 = vmatmul.f32.gmra.mxu0 %v5476
  %v5609 = vpop.f32.mrf.mxu0
  %v5610 = vadd.f32 %v5489, %v5609
  %5611 = vdwg.mxu0
  %5612 = vmatpush.msra.mxu0 0.0
  %5613 = vmatpush.msra.mxu0 0.0
  %5614 = vmatpush.msra.mxu0 0.0
  %5615 = vmatpush.msra.mxu0 0.0
  %5616 = vmatpush.msra.mxu0 0.0
  %5617 = vmatpush.msra.mxu0 0.0
  %5618 = vmatpush.msra.mxu0 0.0
  %5619 = vmatpush.msra.mxu0 0.0
  %5620 = vmatpush.msra.mxu0 0.0
  %5621 = vmatpush.msra.mxu0 0.0
  %5622 = vmatpush.msra.mxu0 0.0
  %5623 = vmatpush.msra.mxu0 0.0
  %5624 = vmatpush.msra.mxu0 0.0
  %5625 = vmatpush.msra.mxu0 0.0
  %5626 = vmatpush.msra.mxu0 %v5471
  %5627 = vmatpush.msra.mxu0 %v5467
  %5628 = vmatmul.f32.gmra.mxu0 %v5492
  %v5629 = vpop.f32.mrf.mxu0
  %v5630 = vadd.f32 %v5607, %v5629
  %5631 = vmatmul.f32.gmra.mxu0 %v5495
  %v5632 = vpop.f32.mrf.mxu0
  %v5633 = vadd.f32 %v5610, %v5632
  %5634 = vdwg.mxu0
  %5635 = vmatpush.msra.mxu0 %v5464
  %5636 = vmatpush.msra.mxu0 %v5460
  %5637 = vmatpush.msra.mxu0 %v5456
  %5638 = vmatpush.msra.mxu0 %v5452
  %5639 = vmatpush.msra.mxu0 %v5448
  %5640 = vmatpush.msra.mxu0 %v5444
  %5641 = vmatpush.msra.mxu0 %v5440
  %5642 = vmatpush.msra.mxu0 %v5436
  %5643 = vmatpush.msra.mxu0 %v5432
  %5644 = vmatpush.msra.mxu0 %v5428
  %5645 = vmatpush.msra.mxu0 %v5424
  %5646 = vmatpush.msra.mxu0 %v5420
  %5647 = vmatpush.msra.mxu0 %v5416
  %5648 = vmatpush.msra.mxu0 %v5412
  %5649 = vmatpush.msra.mxu0 %v5408
  %5650 = vmatpush.msra.mxu0 %v5404
  %5651 = vmatmul.f32.gmra.mxu0 %v5474
  %v5652 = vpop.f32.mrf.mxu0
  %v5653 = vadd.f32 %v5484, %v5652
  %5654 = vmatmul.f32.gmra.mxu0 %v5476
  %v5655 = vpop.f32.mrf.mxu0
  %v5656 = vadd.f32 %v5489, %v5655
  %5657 = vdwg.mxu0
  %5658 = vmatpush.msra.mxu0 0.0
  %5659 = vmatpush.msra.mxu0 0.0
  %5660 = vmatpush.msra.mxu0 0.0
  %5661 = vmatpush.msra.mxu0 0.0
  %5662 = vmatpush.msra.mxu0 0.0
  %5663 = vmatpush.msra.mxu0 0.0
  %5664 = vmatpush.msra.mxu0 0.0
  %5665 = vmatpush.msra.mxu0 0.0
  %5666 = vmatpush.msra.mxu0 0.0
  %5667 = vmatpush.msra.mxu0 0.0
  %5668 = vmatpush.msra.mxu0 0.0
  %5669 = vmatpush.msra.mxu0 0.0
  %5670 = vmatpush.msra.mxu0 0.0
  %5671 = vmatpush.msra.mxu0 0.0
  %5672 = vmatpush.msra.mxu0 %v5472
  %5673 = vmatpush.msra.mxu0 %v5468
  %5674 = vmatmul.f32.gmra.mxu0 %v5492
  %v5675 = vpop.f32.mrf.mxu0
  %v5676 = vadd.f32 %v5653, %v5675
  %5677 = vmatmul.f32.gmra.mxu0 %v5495
  %v5678 = vpop.f32.mrf.mxu0
  %v5679 = vadd.f32 %v5656, %v5678
  %5680 = vdwg.mxu0
  %v5681 = vmax.f32 %v5538, 0.0
  %v5682 = vmax.f32 %v5584, 0.0
  %v5683 = vmax.f32 %v5630, 0.0
  %v5684 = vmax.f32 %v5676, 0.0
  %v5685 = vmax.f32 %v5541, 0.0
  %v5686 = vmax.f32 %v5587, 0.0
  %v5687 = vmax.f32 %v5633, 0.0
  %v5688 = vmax.f32 %v5679, 0.0
  %5689 = vrot.lane.b32.xlu0 %v5681, 17
  %v5690 = vpop.permute.xlu0 %5689
  %5691 = vrot.lane.b32.xlu0 %v5685, 17
  %v5692 = vpop.permute.xlu0 %5691
  %5693 = vrot.lane.b32.xlu0 %v5682, 17
  %v5694 = vpop.permute.xlu0 %5693
  %5695 = vrot.lane.b32.xlu0 %v5686, 17
  %v5696 = vpop.permute.xlu0 %5695
  %5697 = vrot.lane.b32.xlu0 %v5683, 17
  %v5698 = vpop.permute.xlu0 %5697
  %5699 = vrot.lane.b32.xlu0 %v5687, 17
  %v5700 = vpop.permute.xlu0 %5699
  %5701 = vrot.lane.b32.xlu0 %v5684, 17
  %v5702 = vpop.permute.xlu0 %5701
  %5703 = vrot.lane.b32.xlu0 %v5688, 17
  %v5704 = vpop.permute.xlu0 %5703
  %v5705 = vsel %vm77, %v5698, %v5702
  %v5706 = vsel %vm77, %v5700, %v5704
  %v5707 = vsel %vm77, %v5694, %v5698
  %v5708 = vsel %vm77, %v5696, %v5700
  %v5709 = vsel %vm77, %v5690, %v5694
  %v5710 = vsel %vm77, %v5692, %v5696
  %v5711 = vsel %vm77, %v5702, %v5690
  %v5712 = vsel %vm77, %v5704, %v5692
  %v5713 = vmul.f32 %v5711, %v86
  %v5714 = vmul.f32 %v5709, %v87
  %v5715 = vmul.f32 %v5707, %v88
  %v5716 = vmul.f32 %v5705, %v89
  %v5717 = vmul.f32 %v5712, %v86
  %v5718 = vmul.f32 %v5710, %v87
  %v5719 = vmul.f32 %v5708, %v88
  %v5720 = vmul.f32 %v5706, %v89
  %5721 = vst [vmem:[#allocation2 + $0x240] sm:$0xff] %v5713
  %5722 = vst [vmem:[#allocation2 + $0x248] sm:$0xff] %v5714
  %5723 = vst [vmem:[#allocation2 + $0x250] sm:$0xff] %v5715
  %5724 = vst [vmem:[#allocation2 + $0x258] sm:$0xff] %v5716
  %5725 = vst [vmem:[#allocation2 + $0x260] sm:$0xff] %v5717
  %5726 = vst [vmem:[#allocation2 + $0x268] sm:$0xff] %v5718
  %5727 = vst [vmem:[#allocation2 + $0x270] sm:$0xff] %v5719
  %5728 = vst [vmem:[#allocation2 + $0x278] sm:$0xff] %v5720
  %5729 = vrot.lane.b32.xlu0 %v5681, 16
  %v5730 = vpop.permute.xlu0 %5729
  %5731 = vrot.lane.b32.xlu0 %v5685, 16
  %v5732 = vpop.permute.xlu0 %5731
  %5733 = vrot.lane.b32.xlu0 %v5682, 16
  %v5734 = vpop.permute.xlu0 %5733
  %5735 = vrot.lane.b32.xlu0 %v5686, 16
  %v5736 = vpop.permute.xlu0 %5735
  %5737 = vrot.lane.b32.xlu0 %v5683, 16
  %v5738 = vpop.permute.xlu0 %5737
  %5739 = vrot.lane.b32.xlu0 %v5687, 16
  %v5740 = vpop.permute.xlu0 %5739
  %5741 = vrot.lane.b32.xlu0 %v5684, 16
  %v5742 = vpop.permute.xlu0 %5741
  %5743 = vrot.lane.b32.xlu0 %v5688, 16
  %v5744 = vpop.permute.xlu0 %5743
  %v5745 = vsel %vm122, %v5738, %v5742
  %v5746 = vsel %vm122, %v5740, %v5744
  %v5747 = vsel %vm122, %v5734, %v5738
  %v5748 = vsel %vm122, %v5736, %v5740
  %v5749 = vsel %vm122, %v5730, %v5734
  %v5750 = vsel %vm122, %v5732, %v5736
  %v5751 = vsel %vm122, %v5742, %v5730
  %v5752 = vsel %vm122, %v5744, %v5732
  %v5753 = vmul.f32 %v5751, %v131
  %v5754 = vmul.f32 %v5749, %v132
  %v5755 = vmul.f32 %v5747, %v133
  %v5756 = vmul.f32 %v5745, %v134
  %v5757 = vmul.f32 %v5752, %v131
  %v5758 = vmul.f32 %v5750, %v132
  %v5759 = vmul.f32 %v5748, %v133
  %v5760 = vmul.f32 %v5746, %v134
  %5761 = vst [vmem:[#allocation2 + $0x280] sm:$0xff] %v5753
  %5762 = vst [vmem:[#allocation2 + $0x288] sm:$0xff] %v5754
  %5763 = vst [vmem:[#allocation2 + $0x290] sm:$0xff] %v5755
  %5764 = vst [vmem:[#allocation2 + $0x298] sm:$0xff] %v5756
  %5765 = vst [vmem:[#allocation2 + $0x2a0] sm:$0xff] %v5757
  %5766 = vst [vmem:[#allocation2 + $0x2a8] sm:$0xff] %v5758
  %5767 = vst [vmem:[#allocation2 + $0x2b0] sm:$0xff] %v5759
  %5768 = vst [vmem:[#allocation2 + $0x2b8] sm:$0xff] %v5760
  %5769 = vrot.lane.b32.xlu0 %v5681, 15
  %v5770 = vpop.permute.xlu0 %5769
  %5771 = vrot.lane.b32.xlu0 %v5685, 15
  %v5772 = vpop.permute.xlu0 %5771
  %5773 = vrot.lane.b32.xlu0 %v5682, 15
  %v5774 = vpop.permute.xlu0 %5773
  %5775 = vrot.lane.b32.xlu0 %v5686, 15
  %v5776 = vpop.permute.xlu0 %5775
  %5777 = vrot.lane.b32.xlu0 %v5683, 15
  %v5778 = vpop.permute.xlu0 %5777
  %5779 = vrot.lane.b32.xlu0 %v5687, 15
  %v5780 = vpop.permute.xlu0 %5779
  %5781 = vrot.lane.b32.xlu0 %v5684, 15
  %v5782 = vpop.permute.xlu0 %5781
  %5783 = vrot.lane.b32.xlu0 %v5688, 15
  %v5784 = vpop.permute.xlu0 %5783
  %v5785 = vsel %vm167, %v5778, %v5782
  %v5786 = vsel %vm167, %v5780, %v5784
  %v5787 = vsel %vm167, %v5774, %v5778
  %v5788 = vsel %vm167, %v5776, %v5780
  %v5789 = vsel %vm167, %v5770, %v5774
  %v5790 = vsel %vm167, %v5772, %v5776
  %v5791 = vsel %vm167, %v5782, %v5770
  %v5792 = vsel %vm167, %v5784, %v5772
  %v5793 = vmul.f32 %v5791, %v176
  %v5794 = vmul.f32 %v5789, %v177
  %v5795 = vmul.f32 %v5787, %v178
  %v5796 = vmul.f32 %v5785, %v179
  %v5797 = vmul.f32 %v5792, %v176
  %v5798 = vmul.f32 %v5790, %v177
  %v5799 = vmul.f32 %v5788, %v178
  %v5800 = vmul.f32 %v5786, %v179
  %5801 = vst [vmem:[#allocation2 + $0x2c0] sm:$0xff] %v5793
  %5802 = vst [vmem:[#allocation2 + $0x2c8] sm:$0xff] %v5794
  %5803 = vst [vmem:[#allocation2 + $0x2d0] sm:$0xff] %v5795
  %5804 = vst [vmem:[#allocation2 + $0x2d8] sm:$0xff] %v5796
  %5805 = vst [vmem:[#allocation2 + $0x2e0] sm:$0xff] %v5797
  %5806 = vst [vmem:[#allocation2 + $0x2e8] sm:$0xff] %v5798
  %5807 = vst [vmem:[#allocation2 + $0x2f0] sm:$0xff] %v5799
  %5808 = vst [vmem:[#allocation2 + $0x2f8] sm:$0xff] %v5800
  %5809 = vrot.lane.b32.xlu0 %v5681, 1
  %v5810 = vpop.permute.xlu0 %5809
  %5811 = vrot.lane.b32.xlu0 %v5685, 1
  %v5812 = vpop.permute.xlu0 %5811
  %5813 = vrot.lane.b32.xlu0 %v5682, 1
  %v5814 = vpop.permute.xlu0 %5813
  %5815 = vrot.lane.b32.xlu0 %v5686, 1
  %v5816 = vpop.permute.xlu0 %5815
  %5817 = vrot.lane.b32.xlu0 %v5683, 1
  %v5818 = vpop.permute.xlu0 %5817
  %5819 = vrot.lane.b32.xlu0 %v5687, 1
  %v5820 = vpop.permute.xlu0 %5819
  %5821 = vrot.lane.b32.xlu0 %v5684, 1
  %v5822 = vpop.permute.xlu0 %5821
  %5823 = vrot.lane.b32.xlu0 %v5688, 1
  %v5824 = vpop.permute.xlu0 %5823
  %v5825 = vsel %vm212, %v5818, %v5822
  %v5826 = vsel %vm212, %v5820, %v5824
  %v5827 = vsel %vm212, %v5814, %v5818
  %v5828 = vsel %vm212, %v5816, %v5820
  %v5829 = vsel %vm212, %v5810, %v5814
  %v5830 = vsel %vm212, %v5812, %v5816
  %v5831 = vsel %vm212, %v5822, %v5810
  %v5832 = vsel %vm212, %v5824, %v5812
  %v5833 = vmul.f32 %v5831, %v221
  %v5834 = vmul.f32 %v5829, %v222
  %v5835 = vmul.f32 %v5827, %v223
  %v5836 = vmul.f32 %v5825, %v224
  %v5837 = vmul.f32 %v5832, %v221
  %v5838 = vmul.f32 %v5830, %v222
  %v5839 = vmul.f32 %v5828, %v223
  %v5840 = vmul.f32 %v5826, %v224
  %5841 = vst [vmem:[#allocation2 + $0x300] sm:$0xff] %v5833
  %5842 = vst [vmem:[#allocation2 + $0x308] sm:$0xff] %v5834
  %5843 = vst [vmem:[#allocation2 + $0x310] sm:$0xff] %v5835
  %5844 = vst [vmem:[#allocation2 + $0x318] sm:$0xff] %v5836
  %5845 = vst [vmem:[#allocation2 + $0x320] sm:$0xff] %v5837
  %5846 = vst [vmem:[#allocation2 + $0x328] sm:$0xff] %v5838
  %5847 = vst [vmem:[#allocation2 + $0x330] sm:$0xff] %v5839
  %5848 = vst [vmem:[#allocation2 + $0x338] sm:$0xff] %v5840
  %5849 = vst [vmem:[#allocation2 + $0x340] sm:$0xff] %v5681
  %5850 = vst [vmem:[#allocation2 + $0x348] sm:$0xff] %v5682
  %5851 = vst [vmem:[#allocation2 + $0x350] sm:$0xff] %v5683
  %5852 = vst [vmem:[#allocation2 + $0x358] sm:$0xff] %v5684
  %5853 = vst [vmem:[#allocation2 + $0x360] sm:$0xff] %v5685
  %5854 = vst [vmem:[#allocation2 + $0x368] sm:$0xff] %v5686
  %5855 = vst [vmem:[#allocation2 + $0x370] sm:$0xff] %v5687
  %5856 = vst [vmem:[#allocation2 + $0x378] sm:$0xff] %v5688
  %5857 = vrot.lane.b32.xlu0 %v5681, 127
  %v5858 = vpop.permute.xlu0 %5857
  %5859 = vrot.lane.b32.xlu0 %v5685, 127
  %v5860 = vpop.permute.xlu0 %5859
  %5861 = vrot.lane.b32.xlu0 %v5682, 127
  %v5862 = vpop.permute.xlu0 %5861
  %5863 = vrot.lane.b32.xlu0 %v5686, 127
  %v5864 = vpop.permute.xlu0 %5863
  %5865 = vrot.lane.b32.xlu0 %v5683, 127
  %v5866 = vpop.permute.xlu0 %5865
  %5867 = vrot.lane.b32.xlu0 %v5687, 127
  %v5868 = vpop.permute.xlu0 %5867
  %5869 = vrot.lane.b32.xlu0 %v5684, 127
  %v5870 = vpop.permute.xlu0 %5869
  %5871 = vrot.lane.b32.xlu0 %v5688, 127
  %v5872 = vpop.permute.xlu0 %5871
  %v5873 = vsel %vm265, %v5866, %v5870
  %v5874 = vsel %vm265, %v5868, %v5872
  %v5875 = vsel %vm265, %v5862, %v5866
  %v5876 = vsel %vm265, %v5864, %v5868
  %v5877 = vsel %vm265, %v5858, %v5862
  %v5878 = vsel %vm265, %v5860, %v5864
  %v5879 = vsel %vm265, %v5870, %v5858
  %v5880 = vsel %vm265, %v5872, %v5860
  %v5881 = vmul.f32 %v5877, %v274
  %v5882 = vmul.f32 %v5875, %v275
  %v5883 = vmul.f32 %v5873, %v276
  %v5884 = vmul.f32 %v5879, %v277
  %v5885 = vmul.f32 %v5878, %v274
  %v5886 = vmul.f32 %v5876, %v275
  %v5887 = vmul.f32 %v5874, %v276
  %v5888 = vmul.f32 %v5880, %v277
  %5889 = vst [vmem:[#allocation2 + $0x380] sm:$0xff] %v5881
  %5890 = vst [vmem:[#allocation2 + $0x388] sm:$0xff] %v5882
  %5891 = vst [vmem:[#allocation2 + $0x390] sm:$0xff] %v5883
  %5892 = vst [vmem:[#allocation2 + $0x398] sm:$0xff] %v5884
  %5893 = vst [vmem:[#allocation2 + $0x3a0] sm:$0xff] %v5885
  %5894 = vst [vmem:[#allocation2 + $0x3a8] sm:$0xff] %v5886
  %5895 = vst [vmem:[#allocation2 + $0x3b0] sm:$0xff] %v5887
  %5896 = vst [vmem:[#allocation2 + $0x3b8] sm:$0xff] %v5888
  %5897 = vrot.lane.b32.xlu0 %v5681, 113
  %v5898 = vpop.permute.xlu0 %5897
  %5899 = vrot.lane.b32.xlu0 %v5685, 113
  %v5900 = vpop.permute.xlu0 %5899
  %5901 = vrot.lane.b32.xlu0 %v5682, 113
  %v5902 = vpop.permute.xlu0 %5901
  %5903 = vrot.lane.b32.xlu0 %v5686, 113
  %v5904 = vpop.permute.xlu0 %5903
  %5905 = vrot.lane.b32.xlu0 %v5683, 113
  %v5906 = vpop.permute.xlu0 %5905
  %5907 = vrot.lane.b32.xlu0 %v5687, 113
  %v5908 = vpop.permute.xlu0 %5907
  %5909 = vrot.lane.b32.xlu0 %v5684, 113
  %v5910 = vpop.permute.xlu0 %5909
  %5911 = vrot.lane.b32.xlu0 %v5688, 113
  %v5912 = vpop.permute.xlu0 %5911
  %v5913 = vsel %vm310, %v5906, %v5910
  %v5914 = vsel %vm310, %v5908, %v5912
  %v5915 = vsel %vm310, %v5902, %v5906
  %v5916 = vsel %vm310, %v5904, %v5908
  %v5917 = vsel %vm310, %v5898, %v5902
  %v5918 = vsel %vm310, %v5900, %v5904
  %v5919 = vsel %vm310, %v5910, %v5898
  %v5920 = vsel %vm310, %v5912, %v5900
  %v5921 = vmul.f32 %v5917, %v319
  %v5922 = vmul.f32 %v5915, %v320
  %v5923 = vmul.f32 %v5913, %v321
  %v5924 = vmul.f32 %v5919, %v322
  %v5925 = vmul.f32 %v5918, %v319
  %v5926 = vmul.f32 %v5916, %v320
  %v5927 = vmul.f32 %v5914, %v321
  %v5928 = vmul.f32 %v5920, %v322
  %5929 = vst [vmem:[#allocation2 + $0x3c0] sm:$0xff] %v5921
  %5930 = vst [vmem:[#allocation2 + $0x3c8] sm:$0xff] %v5922
  %5931 = vst [vmem:[#allocation2 + $0x3d0] sm:$0xff] %v5923
  %5932 = vst [vmem:[#allocation2 + $0x3d8] sm:$0xff] %v5924
  %5933 = vst [vmem:[#allocation2 + $0x3e0] sm:$0xff] %v5925
  %5934 = vst [vmem:[#allocation2 + $0x3e8] sm:$0xff] %v5926
  %5935 = vst [vmem:[#allocation2 + $0x3f0] sm:$0xff] %v5927
  %5936 = vst [vmem:[#allocation2 + $0x3f8] sm:$0xff] %v5928
  %5937 = vrot.lane.b32.xlu0 %v5681, 112
  %v5938 = vpop.permute.xlu0 %5937
  %5939 = vrot.lane.b32.xlu0 %v5685, 112
  %v5940 = vpop.permute.xlu0 %5939
  %5941 = vrot.lane.b32.xlu0 %v5682, 112
  %v5942 = vpop.permute.xlu0 %5941
  %5943 = vrot.lane.b32.xlu0 %v5686, 112
  %v5944 = vpop.permute.xlu0 %5943
  %5945 = vrot.lane.b32.xlu0 %v5683, 112
  %v5946 = vpop.permute.xlu0 %5945
  %5947 = vrot.lane.b32.xlu0 %v5687, 112
  %v5948 = vpop.permute.xlu0 %5947
  %5949 = vrot.lane.b32.xlu0 %v5684, 112
  %v5950 = vpop.permute.xlu0 %5949
  %5951 = vrot.lane.b32.xlu0 %v5688, 112
  %v5952 = vpop.permute.xlu0 %5951
  %v5953 = vsel %vm355, %v5946, %v5950
  %v5954 = vsel %vm355, %v5948, %v5952
  %v5955 = vsel %vm355, %v5942, %v5946
  %v5956 = vsel %vm355, %v5944, %v5948
  %v5957 = vsel %vm355, %v5938, %v5942
  %v5958 = vsel %vm355, %v5940, %v5944
  %v5959 = vsel %vm355, %v5950, %v5938
  %v5960 = vsel %vm355, %v5952, %v5940
  %v5961 = vmul.f32 %v5957, %v364
  %v5962 = vmul.f32 %v5955, %v365
  %v5963 = vmul.f32 %v5953, %v366
  %v5964 = vmul.f32 %v5959, %v367
  %v5965 = vmul.f32 %v5958, %v364
  %v5966 = vmul.f32 %v5956, %v365
  %v5967 = vmul.f32 %v5954, %v366
  %v5968 = vmul.f32 %v5960, %v367
  %5969 = vst [vmem:[#allocation2 + $0x400] sm:$0xff] %v5961
  %5970 = vst [vmem:[#allocation2 + $0x408] sm:$0xff] %v5962
  %5971 = vst [vmem:[#allocation2 + $0x410] sm:$0xff] %v5963
  %5972 = vst [vmem:[#allocation2 + $0x418] sm:$0xff] %v5964
  %5973 = vst [vmem:[#allocation2 + $0x420] sm:$0xff] %v5965
  %5974 = vst [vmem:[#allocation2 + $0x428] sm:$0xff] %v5966
  %5975 = vst [vmem:[#allocation2 + $0x430] sm:$0xff] %v5967
  %5976 = vst [vmem:[#allocation2 + $0x438] sm:$0xff] %v5968
  %5977 = vrot.lane.b32.xlu0 %v5681, 111
  %v5978 = vpop.permute.xlu0 %5977
  %5979 = vrot.lane.b32.xlu0 %v5685, 111
  %v5980 = vpop.permute.xlu0 %5979
  %5981 = vrot.lane.b32.xlu0 %v5682, 111
  %v5982 = vpop.permute.xlu0 %5981
  %5983 = vrot.lane.b32.xlu0 %v5686, 111
  %v5984 = vpop.permute.xlu0 %5983
  %5985 = vrot.lane.b32.xlu0 %v5683, 111
  %v5986 = vpop.permute.xlu0 %5985
  %5987 = vrot.lane.b32.xlu0 %v5687, 111
  %v5988 = vpop.permute.xlu0 %5987
  %5989 = vrot.lane.b32.xlu0 %v5684, 111
  %v5990 = vpop.permute.xlu0 %5989
  %5991 = vrot.lane.b32.xlu0 %v5688, 111
  %v5992 = vpop.permute.xlu0 %5991
  %v5993 = vsel %vm400, %v5986, %v5990
  %v5994 = vsel %vm400, %v5988, %v5992
  %v5995 = vsel %vm400, %v5982, %v5986
  %v5996 = vsel %vm400, %v5984, %v5988
  %v5997 = vsel %vm400, %v5978, %v5982
  %v5998 = vsel %vm400, %v5980, %v5984
  %v5999 = vsel %vm400, %v5990, %v5978
  %v6000 = vsel %vm400, %v5992, %v5980
  %v6001 = vmul.f32 %v5997, %v409
  %v6002 = vmul.f32 %v5995, %v410
  %v6003 = vmul.f32 %v5993, %v411
  %v6004 = vmul.f32 %v5999, %v412
  %v6005 = vmul.f32 %v5998, %v409
  %v6006 = vmul.f32 %v5996, %v410
  %v6007 = vmul.f32 %v5994, %v411
  %v6008 = vmul.f32 %v6000, %v412
  %6009 = vst [vmem:[#allocation2 + $0x440] sm:$0xff] %v6001
  %6010 = vst [vmem:[#allocation2 + $0x448] sm:$0xff] %v6002
  %6011 = vst [vmem:[#allocation2 + $0x450] sm:$0xff] %v6003
  %6012 = vst [vmem:[#allocation2 + $0x458] sm:$0xff] %v6004
  %6013 = vst [vmem:[#allocation2 + $0x460] sm:$0xff] %v6005
  %6014 = vst [vmem:[#allocation2 + $0x468] sm:$0xff] %v6006
  %6015 = vst [vmem:[#allocation2 + $0x470] sm:$0xff] %v6007
  %6016 = vst [vmem:[#allocation2 + $0x478] sm:$0xff] %v6008
  %v6017 = vld [vmem:[#allocation2] sm:$0xff]
  %v6018 = vld [vmem:[#allocation2 + $0x8] sm:$0xff]
  %v6019 = vld [vmem:[#allocation2 + $0x10] sm:$0xff]
  %v6020 = vld [vmem:[#allocation2 + $0x18] sm:$0xff]
  %v6021 = vld [vmem:[#allocation2 + $0x20] sm:$0xff]
  %v6022 = vld [vmem:[#allocation2 + $0x28] sm:$0xff]
  %v6023 = vld [vmem:[#allocation2 + $0x30] sm:$0xff]
  %v6024 = vld [vmem:[#allocation2 + $0x38] sm:$0xff]
  %v6025 = vld [vmem:[#allocation2 + $0x40] sm:$0xff]
  %v6026 = vld [vmem:[#allocation2 + $0x48] sm:$0xff]
  %v6027 = vld [vmem:[#allocation2 + $0x50] sm:$0xff]
  %v6028 = vld [vmem:[#allocation2 + $0x58] sm:$0xff]
  %v6029 = vld [vmem:[#allocation2 + $0x60] sm:$0xff]
  %v6030 = vld [vmem:[#allocation2 + $0x68] sm:$0xff]
  %v6031 = vld [vmem:[#allocation2 + $0x70] sm:$0xff]
  %v6032 = vld [vmem:[#allocation2 + $0x78] sm:$0xff]
  %v6033 = vld [vmem:[#allocation2 + $0x80] sm:$0xff]
  %v6034 = vld [vmem:[#allocation2 + $0x88] sm:$0xff]
  %v6035 = vld [vmem:[#allocation2 + $0x90] sm:$0xff]
  %v6036 = vld [vmem:[#allocation2 + $0x98] sm:$0xff]
  %v6037 = vld [vmem:[#allocation2 + $0xa0] sm:$0xff]
  %v6038 = vld [vmem:[#allocation2 + $0xa8] sm:$0xff]
  %v6039 = vld [vmem:[#allocation2 + $0xb0] sm:$0xff]
  %v6040 = vld [vmem:[#allocation2 + $0xb8] sm:$0xff]
  %v6041 = vld [vmem:[#allocation2 + $0xc0] sm:$0xff]
  %v6042 = vld [vmem:[#allocation2 + $0xc8] sm:$0xff]
  %v6043 = vld [vmem:[#allocation2 + $0xd0] sm:$0xff]
  %v6044 = vld [vmem:[#allocation2 + $0xd8] sm:$0xff]
  %v6045 = vld [vmem:[#allocation2 + $0xe0] sm:$0xff]
  %v6046 = vld [vmem:[#allocation2 + $0xe8] sm:$0xff]
  %v6047 = vld [vmem:[#allocation2 + $0xf0] sm:$0xff]
  %v6048 = vld [vmem:[#allocation2 + $0xf8] sm:$0xff]
  %v6049 = vld [vmem:[#allocation2 + $0x100] sm:$0xff]
  %v6050 = vld [vmem:[#allocation2 + $0x108] sm:$0xff]
  %v6051 = vld [vmem:[#allocation2 + $0x110] sm:$0xff]
  %v6052 = vld [vmem:[#allocation2 + $0x118] sm:$0xff]
  %v6053 = vld [vmem:[#allocation2 + $0x120] sm:$0xff]
  %v6054 = vld [vmem:[#allocation2 + $0x128] sm:$0xff]
  %v6055 = vld [vmem:[#allocation2 + $0x130] sm:$0xff]
  %v6056 = vld [vmem:[#allocation2 + $0x138] sm:$0xff]
  %v6057 = vld [vmem:[#allocation2 + $0x140] sm:$0xff]
  %v6058 = vld [vmem:[#allocation2 + $0x148] sm:$0xff]
  %v6059 = vld [vmem:[#allocation2 + $0x150] sm:$0xff]
  %v6060 = vld [vmem:[#allocation2 + $0x158] sm:$0xff]
  %v6061 = vld [vmem:[#allocation2 + $0x160] sm:$0xff]
  %v6062 = vld [vmem:[#allocation2 + $0x168] sm:$0xff]
  %v6063 = vld [vmem:[#allocation2 + $0x170] sm:$0xff]
  %v6064 = vld [vmem:[#allocation2 + $0x178] sm:$0xff]
  %v6065 = vld [vmem:[#allocation2 + $0x180] sm:$0xff]
  %v6066 = vld [vmem:[#allocation2 + $0x188] sm:$0xff]
  %v6067 = vld [vmem:[#allocation2 + $0x190] sm:$0xff]
  %v6068 = vld [vmem:[#allocation2 + $0x198] sm:$0xff]
  %v6069 = vld [vmem:[#allocation2 + $0x1a0] sm:$0xff]
  %v6070 = vld [vmem:[#allocation2 + $0x1a8] sm:$0xff]
  %v6071 = vld [vmem:[#allocation2 + $0x1b0] sm:$0xff]
  %v6072 = vld [vmem:[#allocation2 + $0x1b8] sm:$0xff]
  %v6073 = vld [vmem:[#allocation2 + $0x1c0] sm:$0xff]
  %v6074 = vld [vmem:[#allocation2 + $0x1c8] sm:$0xff]
  %v6075 = vld [vmem:[#allocation2 + $0x1d0] sm:$0xff]
  %v6076 = vld [vmem:[#allocation2 + $0x1d8] sm:$0xff]
  %v6077 = vld [vmem:[#allocation2 + $0x1e0] sm:$0xff]
  %v6078 = vld [vmem:[#allocation2 + $0x1e8] sm:$0xff]
  %v6079 = vld [vmem:[#allocation2 + $0x1f0] sm:$0xff]
  %v6080 = vld [vmem:[#allocation2 + $0x1f8] sm:$0xff]
  %v6081 = vld [vmem:[#allocation2 + $0x200] sm:$0xff]
  %v6082 = vld [vmem:[#allocation2 + $0x208] sm:$0xff]
  %v6083 = vld [vmem:[#allocation2 + $0x210] sm:$0xff]
  %v6084 = vld [vmem:[#allocation2 + $0x218] sm:$0xff]
  %v6085 = vld [vmem:[#allocation2 + $0x220] sm:$0xff]
  %v6086 = vld [vmem:[#allocation2 + $0x228] sm:$0xff]
  %v6087 = vld [vmem:[#allocation2 + $0x230] sm:$0xff]
  %v6088 = vld [vmem:[#allocation2 + $0x238] sm:$0xff]
  %v6089 = vld [vmem:[#allocation2 + $0x240] sm:$0xff]
  %v6090 = vld [vmem:[#allocation2 + $0x248] sm:$0xff]
  %v6091 = vld [vmem:[#allocation2 + $0x250] sm:$0xff]
  %v6092 = vld [vmem:[#allocation2 + $0x258] sm:$0xff]
  %v6093 = vld [vmem:[#allocation2 + $0x260] sm:$0xff]
  %v6094 = vld [vmem:[#allocation2 + $0x268] sm:$0xff]
  %v6095 = vld [vmem:[#allocation2 + $0x270] sm:$0xff]
  %v6096 = vld [vmem:[#allocation2 + $0x278] sm:$0xff]
  %v6097 = vld [vmem:[#allocation2 + $0x280] sm:$0xff]
  %v6098 = vld [vmem:[#allocation2 + $0x288] sm:$0xff]
  %v6099 = vld [vmem:[#allocation2 + $0x290] sm:$0xff]
  %v6100 = vld [vmem:[#allocation2 + $0x298] sm:$0xff]
  %v6101 = vld [vmem:[#allocation2 + $0x2a0] sm:$0xff]
  %v6102 = vld [vmem:[#allocation2 + $0x2a8] sm:$0xff]
  %v6103 = vld [vmem:[#allocation2 + $0x2b0] sm:$0xff]
  %v6104 = vld [vmem:[#allocation2 + $0x2b8] sm:$0xff]
  %v6105 = vld [vmem:[#allocation2 + $0x2c0] sm:$0xff]
  %v6106 = vld [vmem:[#allocation2 + $0x2c8] sm:$0xff]
  %v6107 = vld [vmem:[#allocation2 + $0x2d0] sm:$0xff]
  %v6108 = vld [vmem:[#allocation2 + $0x2d8] sm:$0xff]
  %v6109 = vld [vmem:[#allocation2 + $0x2e0] sm:$0xff]
  %v6110 = vld [vmem:[#allocation2 + $0x2e8] sm:$0xff]
  %v6111 = vld [vmem:[#allocation2 + $0x2f0] sm:$0xff]
  %v6112 = vld [vmem:[#allocation2 + $0x2f8] sm:$0xff]
  %v6113 = vld [vmem:[#allocation2 + $0x300] sm:$0xff]
  %v6114 = vld [vmem:[#allocation2 + $0x308] sm:$0xff]
  %v6115 = vld [vmem:[#allocation2 + $0x310] sm:$0xff]
  %v6116 = vld [vmem:[#allocation2 + $0x318] sm:$0xff]
  %v6117 = vld [vmem:[#allocation2 + $0x320] sm:$0xff]
  %v6118 = vld [vmem:[#allocation2 + $0x328] sm:$0xff]
  %v6119 = vld [vmem:[#allocation2 + $0x330] sm:$0xff]
  %v6120 = vld [vmem:[#allocation2 + $0x338] sm:$0xff]
  %v6121 = vld [vmem:[#allocation2 + $0x340] sm:$0xff]
  %v6122 = vld [vmem:[#allocation2 + $0x348] sm:$0xff]
  %v6123 = vld [vmem:[#allocation2 + $0x350] sm:$0xff]
  %v6124 = vld [vmem:[#allocation2 + $0x358] sm:$0xff]
  %v6125 = vld [vmem:[#allocation2 + $0x360] sm:$0xff]
  %v6126 = vld [vmem:[#allocation2 + $0x368] sm:$0xff]
  %v6127 = vld [vmem:[#allocation2 + $0x370] sm:$0xff]
  %v6128 = vld [vmem:[#allocation2 + $0x378] sm:$0xff]
  %v6129 = vld [vmem:[#allocation2 + $0x380] sm:$0xff]
  %v6130 = vld [vmem:[#allocation2 + $0x388] sm:$0xff]
  %v6131 = vld [vmem:[#allocation2 + $0x390] sm:$0xff]
  %v6132 = vld [vmem:[#allocation2 + $0x398] sm:$0xff]
  %v6133 = vld [vmem:[#allocation2 + $0x3a0] sm:$0xff]
  %v6134 = vld [vmem:[#allocation2 + $0x3a8] sm:$0xff]
  %v6135 = vld [vmem:[#allocation2 + $0x3b0] sm:$0xff]
  %v6136 = vld [vmem:[#allocation2 + $0x3b8] sm:$0xff]
  %v6137 = vld [vmem:[#allocation2 + $0x3c0] sm:$0xff]
  %v6138 = vld [vmem:[#allocation2 + $0x3c8] sm:$0xff]
  %v6139 = vld [vmem:[#allocation2 + $0x3d0] sm:$0xff]
  %v6140 = vld [vmem:[#allocation2 + $0x3d8] sm:$0xff]
  %v6141 = vld [vmem:[#allocation2 + $0x3e0] sm:$0xff]
  %v6142 = vld [vmem:[#allocation2 + $0x3e8] sm:$0xff]
  %v6143 = vld [vmem:[#allocation2 + $0x3f0] sm:$0xff]
  %v6144 = vld [vmem:[#allocation2 + $0x3f8] sm:$0xff]
  %v6145 = vld [vmem:[#allocation2 + $0x400] sm:$0xff]
  %v6146 = vld [vmem:[#allocation2 + $0x408] sm:$0xff]
  %v6147 = vld [vmem:[#allocation2 + $0x410] sm:$0xff]
  %v6148 = vld [vmem:[#allocation2 + $0x418] sm:$0xff]
  %v6149 = vld [vmem:[#allocation2 + $0x420] sm:$0xff]
  %v6150 = vld [vmem:[#allocation2 + $0x428] sm:$0xff]
  %v6151 = vld [vmem:[#allocation2 + $0x430] sm:$0xff]
  %v6152 = vld [vmem:[#allocation2 + $0x438] sm:$0xff]
  %v6153 = vld [vmem:[#allocation2 + $0x440] sm:$0xff]
  %v6154 = vld [vmem:[#allocation2 + $0x448] sm:$0xff]
  %v6155 = vld [vmem:[#allocation2 + $0x450] sm:$0xff]
  %v6156 = vld [vmem:[#allocation2 + $0x458] sm:$0xff]
  %v6157 = vld [vmem:[#allocation2 + $0x460] sm:$0xff]
  %v6158 = vld [vmem:[#allocation2 + $0x468] sm:$0xff]
  %v6159 = vld [vmem:[#allocation2 + $0x470] sm:$0xff]
  %v6160 = vld [vmem:[#allocation2 + $0x478] sm:$0xff]
  %s6161 = scalar_lea.vmem %s3, 96
  %v6162 = vld [vmem:[%s6161] sm:$0xff]
  %v6163 = vld [vmem:[%s6161 + $0x8] sm:$0xff]
  %v6164 = vld [vmem:[%s6161 + $0x10] sm:$0xff]
  %v6165 = vld [vmem:[%s6161 + $0x18] sm:$0xff]
  %v6166 = vld [vmem:[%s6161 + $0x20] sm:$0xff]
  %v6167 = vld [vmem:[%s6161 + $0x28] sm:$0xff]
  %s6168 = scalar_lea.vmem %s5, 112
  %v6169 = vld [vmem:[%s6168] sm:$0xff]
  %v6170 = vld [vmem:[%s6168 + $0x8] sm:$0xff]
  %6172 = vset.pattern.permute.xlu0 0
  %6173 = vperm.xlu0 %6172, %v6169
  %v6174 = vpop.permute.xlu0 %6173
  %6177 = vset.pattern.permute.xlu0 0
  %6178 = vperm.xlu0 %6177, %v6170
  %v6179 = vpop.permute.xlu0 %6178
  %v6182 = vsel %vm1207, %v6164, 0
  %v6185 = vsel %vm1207, %v6167, 0
  %6187 = vmatpush.msra.mxu0 %v6077
  %6188 = vmatpush.msra.mxu0 %v6073
  %6189 = vmatpush.msra.mxu0 %v6069
  %6190 = vmatpush.msra.mxu0 %v6065
  %6191 = vmatpush.msra.mxu0 %v6061
  %6192 = vmatpush.msra.mxu0 %v6057
  %6193 = vmatpush.msra.mxu0 %v6053
  %6194 = vmatpush.msra.mxu0 %v6049
  %6195 = vmatpush.msra.mxu0 %v6045
  %6196 = vmatpush.msra.mxu0 %v6041
  %6197 = vmatpush.msra.mxu0 %v6037
  %6198 = vmatpush.msra.mxu0 %v6033
  %6199 = vmatpush.msra.mxu0 %v6029
  %6200 = vmatpush.msra.mxu0 %v6025
  %6201 = vmatpush.msra.mxu0 %v6021
  %6202 = vmatpush.msra.mxu0 %v6017
  %6203 = vmatmul.f32.gmra.mxu0 %v6162
  %v6204 = vpop.f32.mrf.mxu0
  %v6205 = vadd.f32 %v6174, %v6204
  %6206 = vmatmul.f32.gmra.mxu0 %v6165
  %v6207 = vpop.f32.mrf.mxu0
  %v6208 = vadd.f32 %v6179, %v6207
  %6209 = vdwg.mxu0
  %6210 = vmatpush.msra.mxu0 %v6141
  %6211 = vmatpush.msra.mxu0 %v6137
  %6212 = vmatpush.msra.mxu0 %v6133
  %6213 = vmatpush.msra.mxu0 %v6129
  %6214 = vmatpush.msra.mxu0 %v6125
  %6215 = vmatpush.msra.mxu0 %v6121
  %6216 = vmatpush.msra.mxu0 %v6117
  %6217 = vmatpush.msra.mxu0 %v6113
  %6218 = vmatpush.msra.mxu0 %v6109
  %6219 = vmatpush.msra.mxu0 %v6105
  %6220 = vmatpush.msra.mxu0 %v6101
  %6221 = vmatpush.msra.mxu0 %v6097
  %6222 = vmatpush.msra.mxu0 %v6093
  %6223 = vmatpush.msra.mxu0 %v6089
  %6224 = vmatpush.msra.mxu0 %v6085
  %6225 = vmatpush.msra.mxu0 %v6081
  %6226 = vmatmul.f32.gmra.mxu0 %v6163
  %v6227 = vpop.f32.mrf.mxu0
  %v6228 = vadd.f32 %v6205, %v6227
  %6229 = vmatmul.f32.gmra.mxu0 %v6166
  %v6230 = vpop.f32.mrf.mxu0
  %v6231 = vadd.f32 %v6208, %v6230
  %6232 = vdwg.mxu0
  %6233 = vmatpush.msra.mxu0 0.0
  %6234 = vmatpush.msra.mxu0 0.0
  %6235 = vmatpush.msra.mxu0 0.0
  %6236 = vmatpush.msra.mxu0 0.0
  %6237 = vmatpush.msra.mxu0 0.0
  %6238 = vmatpush.msra.mxu0 0.0
  %6239 = vmatpush.msra.mxu0 0.0
  %6240 = vmatpush.msra.mxu0 0.0
  %6241 = vmatpush.msra.mxu0 0.0
  %6242 = vmatpush.msra.mxu0 0.0
  %6243 = vmatpush.msra.mxu0 0.0
  %6244 = vmatpush.msra.mxu0 0.0
  %6245 = vmatpush.msra.mxu0 %v6157
  %6246 = vmatpush.msra.mxu0 %v6153
  %6247 = vmatpush.msra.mxu0 %v6149
  %6248 = vmatpush.msra.mxu0 %v6145
  %6249 = vmatmul.f32.gmra.mxu0 %v6182
  %v6250 = vpop.f32.mrf.mxu0
  %v6251 = vadd.f32 %v6228, %v6250
  %6252 = vmatmul.f32.gmra.mxu0 %v6185
  %v6253 = vpop.f32.mrf.mxu0
  %v6254 = vadd.f32 %v6231, %v6253
  %6255 = vdwg.mxu0
  %6256 = vmatpush.msra.mxu0 %v6078
  %6257 = vmatpush.msra.mxu0 %v6074
  %6258 = vmatpush.msra.mxu0 %v6070
  %6259 = vmatpush.msra.mxu0 %v6066
  %6260 = vmatpush.msra.mxu0 %v6062
  %6261 = vmatpush.msra.mxu0 %v6058
  %6262 = vmatpush.msra.mxu0 %v6054
  %6263 = vmatpush.msra.mxu0 %v6050
  %6264 = vmatpush.msra.mxu0 %v6046
  %6265 = vmatpush.msra.mxu0 %v6042
  %6266 = vmatpush.msra.mxu0 %v6038
  %6267 = vmatpush.msra.mxu0 %v6034
  %6268 = vmatpush.msra.mxu0 %v6030
  %6269 = vmatpush.msra.mxu0 %v6026
  %6270 = vmatpush.msra.mxu0 %v6022
  %6271 = vmatpush.msra.mxu0 %v6018
  %6272 = vmatmul.f32.gmra.mxu0 %v6162
  %v6273 = vpop.f32.mrf.mxu0
  %v6274 = vadd.f32 %v6174, %v6273
  %6275 = vmatmul.f32.gmra.mxu0 %v6165
  %v6276 = vpop.f32.mrf.mxu0
  %v6277 = vadd.f32 %v6179, %v6276
  %6278 = vdwg.mxu0
  %6279 = vmatpush.msra.mxu0 %v6142
  %6280 = vmatpush.msra.mxu0 %v6138
  %6281 = vmatpush.msra.mxu0 %v6134
  %6282 = vmatpush.msra.mxu0 %v6130
  %6283 = vmatpush.msra.mxu0 %v6126
  %6284 = vmatpush.msra.mxu0 %v6122
  %6285 = vmatpush.msra.mxu0 %v6118
  %6286 = vmatpush.msra.mxu0 %v6114
  %6287 = vmatpush.msra.mxu0 %v6110
  %6288 = vmatpush.msra.mxu0 %v6106
  %6289 = vmatpush.msra.mxu0 %v6102
  %6290 = vmatpush.msra.mxu0 %v6098
  %6291 = vmatpush.msra.mxu0 %v6094
  %6292 = vmatpush.msra.mxu0 %v6090
  %6293 = vmatpush.msra.mxu0 %v6086
  %6294 = vmatpush.msra.mxu0 %v6082
  %6295 = vmatmul.f32.gmra.mxu0 %v6163
  %v6296 = vpop.f32.mrf.mxu0
  %v6297 = vadd.f32 %v6274, %v6296
  %6298 = vmatmul.f32.gmra.mxu0 %v6166
  %v6299 = vpop.f32.mrf.mxu0
  %v6300 = vadd.f32 %v6277, %v6299
  %6301 = vdwg.mxu0
  %6302 = vmatpush.msra.mxu0 0.0
  %6303 = vmatpush.msra.mxu0 0.0
  %6304 = vmatpush.msra.mxu0 0.0
  %6305 = vmatpush.msra.mxu0 0.0
  %6306 = vmatpush.msra.mxu0 0.0
  %6307 = vmatpush.msra.mxu0 0.0
  %6308 = vmatpush.msra.mxu0 0.0
  %6309 = vmatpush.msra.mxu0 0.0
  %6310 = vmatpush.msra.mxu0 0.0
  %6311 = vmatpush.msra.mxu0 0.0
  %6312 = vmatpush.msra.mxu0 0.0
  %6313 = vmatpush.msra.mxu0 0.0
  %6314 = vmatpush.msra.mxu0 %v6158
  %6315 = vmatpush.msra.mxu0 %v6154
  %6316 = vmatpush.msra.mxu0 %v6150
  %6317 = vmatpush.msra.mxu0 %v6146
  %6318 = vmatmul.f32.gmra.mxu0 %v6182
  %v6319 = vpop.f32.mrf.mxu0
  %v6320 = vadd.f32 %v6297, %v6319
  %6321 = vmatmul.f32.gmra.mxu0 %v6185
  %v6322 = vpop.f32.mrf.mxu0
  %v6323 = vadd.f32 %v6300, %v6322
  %6324 = vdwg.mxu0
  %6325 = vmatpush.msra.mxu0 %v6079
  %6326 = vmatpush.msra.mxu0 %v6075
  %6327 = vmatpush.msra.mxu0 %v6071
  %6328 = vmatpush.msra.mxu0 %v6067
  %6329 = vmatpush.msra.mxu0 %v6063
  %6330 = vmatpush.msra.mxu0 %v6059
  %6331 = vmatpush.msra.mxu0 %v6055
  %6332 = vmatpush.msra.mxu0 %v6051
  %6333 = vmatpush.msra.mxu0 %v6047
  %6334 = vmatpush.msra.mxu0 %v6043
  %6335 = vmatpush.msra.mxu0 %v6039
  %6336 = vmatpush.msra.mxu0 %v6035
  %6337 = vmatpush.msra.mxu0 %v6031
  %6338 = vmatpush.msra.mxu0 %v6027
  %6339 = vmatpush.msra.mxu0 %v6023
  %6340 = vmatpush.msra.mxu0 %v6019
  %6341 = vmatmul.f32.gmra.mxu0 %v6162
  %v6342 = vpop.f32.mrf.mxu0
  %v6343 = vadd.f32 %v6174, %v6342
  %6344 = vmatmul.f32.gmra.mxu0 %v6165
  %v6345 = vpop.f32.mrf.mxu0
  %v6346 = vadd.f32 %v6179, %v6345
  %6347 = vdwg.mxu0
  %6348 = vmatpush.msra.mxu0 %v6143
  %6349 = vmatpush.msra.mxu0 %v6139
  %6350 = vmatpush.msra.mxu0 %v6135
  %6351 = vmatpush.msra.mxu0 %v6131
  %6352 = vmatpush.msra.mxu0 %v6127
  %6353 = vmatpush.msra.mxu0 %v6123
  %6354 = vmatpush.msra.mxu0 %v6119
  %6355 = vmatpush.msra.mxu0 %v6115
  %6356 = vmatpush.msra.mxu0 %v6111
  %6357 = vmatpush.msra.mxu0 %v6107
  %6358 = vmatpush.msra.mxu0 %v6103
  %6359 = vmatpush.msra.mxu0 %v6099
  %6360 = vmatpush.msra.mxu0 %v6095
  %6361 = vmatpush.msra.mxu0 %v6091
  %6362 = vmatpush.msra.mxu0 %v6087
  %6363 = vmatpush.msra.mxu0 %v6083
  %6364 = vmatmul.f32.gmra.mxu0 %v6163
  %v6365 = vpop.f32.mrf.mxu0
  %v6366 = vadd.f32 %v6343, %v6365
  %6367 = vmatmul.f32.gmra.mxu0 %v6166
  %v6368 = vpop.f32.mrf.mxu0
  %v6369 = vadd.f32 %v6346, %v6368
  %6370 = vdwg.mxu0
  %6371 = vmatpush.msra.mxu0 0.0
  %6372 = vmatpush.msra.mxu0 0.0
  %6373 = vmatpush.msra.mxu0 0.0
  %6374 = vmatpush.msra.mxu0 0.0
  %6375 = vmatpush.msra.mxu0 0.0
  %6376 = vmatpush.msra.mxu0 0.0
  %6377 = vmatpush.msra.mxu0 0.0
  %6378 = vmatpush.msra.mxu0 0.0
  %6379 = vmatpush.msra.mxu0 0.0
  %6380 = vmatpush.msra.mxu0 0.0
  %6381 = vmatpush.msra.mxu0 0.0
  %6382 = vmatpush.msra.mxu0 0.0
  %6383 = vmatpush.msra.mxu0 %v6159
  %6384 = vmatpush.msra.mxu0 %v6155
  %6385 = vmatpush.msra.mxu0 %v6151
  %6386 = vmatpush.msra.mxu0 %v6147
  %6387 = vmatmul.f32.gmra.mxu0 %v6182
  %v6388 = vpop.f32.mrf.mxu0
  %v6389 = vadd.f32 %v6366, %v6388
  %6390 = vmatmul.f32.gmra.mxu0 %v6185
  %v6391 = vpop.f32.mrf.mxu0
  %v6392 = vadd.f32 %v6369, %v6391
  %6393 = vdwg.mxu0
  %6394 = vmatpush.msra.mxu0 %v6080
  %6395 = vmatpush.msra.mxu0 %v6076
  %6396 = vmatpush.msra.mxu0 %v6072
  %6397 = vmatpush.msra.mxu0 %v6068
  %6398 = vmatpush.msra.mxu0 %v6064
  %6399 = vmatpush.msra.mxu0 %v6060
  %6400 = vmatpush.msra.mxu0 %v6056
  %6401 = vmatpush.msra.mxu0 %v6052
  %6402 = vmatpush.msra.mxu0 %v6048
  %6403 = vmatpush.msra.mxu0 %v6044
  %6404 = vmatpush.msra.mxu0 %v6040
  %6405 = vmatpush.msra.mxu0 %v6036
  %6406 = vmatpush.msra.mxu0 %v6032
  %6407 = vmatpush.msra.mxu0 %v6028
  %6408 = vmatpush.msra.mxu0 %v6024
  %6409 = vmatpush.msra.mxu0 %v6020
  %6410 = vmatmul.f32.gmra.mxu0 %v6162
  %v6411 = vpop.f32.mrf.mxu0
  %v6412 = vadd.f32 %v6174, %v6411
  %6413 = vmatmul.f32.gmra.mxu0 %v6165
  %v6414 = vpop.f32.mrf.mxu0
  %v6415 = vadd.f32 %v6179, %v6414
  %6416 = vdwg.mxu0
  %6417 = vmatpush.msra.mxu0 %v6144
  %6418 = vmatpush.msra.mxu0 %v6140
  %6419 = vmatpush.msra.mxu0 %v6136
  %6420 = vmatpush.msra.mxu0 %v6132
  %6421 = vmatpush.msra.mxu0 %v6128
  %6422 = vmatpush.msra.mxu0 %v6124
  %6423 = vmatpush.msra.mxu0 %v6120
  %6424 = vmatpush.msra.mxu0 %v6116
  %6425 = vmatpush.msra.mxu0 %v6112
  %6426 = vmatpush.msra.mxu0 %v6108
  %6427 = vmatpush.msra.mxu0 %v6104
  %6428 = vmatpush.msra.mxu0 %v6100
  %6429 = vmatpush.msra.mxu0 %v6096
  %6430 = vmatpush.msra.mxu0 %v6092
  %6431 = vmatpush.msra.mxu0 %v6088
  %6432 = vmatpush.msra.mxu0 %v6084
  %6433 = vmatmul.f32.gmra.mxu0 %v6163
  %v6434 = vpop.f32.mrf.mxu0
  %v6435 = vadd.f32 %v6412, %v6434
  %6436 = vmatmul.f32.gmra.mxu0 %v6166
  %v6437 = vpop.f32.mrf.mxu0
  %v6438 = vadd.f32 %v6415, %v6437
  %6439 = vdwg.mxu0
  %6440 = vmatpush.msra.mxu0 0.0
  %6441 = vmatpush.msra.mxu0 0.0
  %6442 = vmatpush.msra.mxu0 0.0
  %6443 = vmatpush.msra.mxu0 0.0
  %6444 = vmatpush.msra.mxu0 0.0
  %6445 = vmatpush.msra.mxu0 0.0
  %6446 = vmatpush.msra.mxu0 0.0
  %6447 = vmatpush.msra.mxu0 0.0
  %6448 = vmatpush.msra.mxu0 0.0
  %6449 = vmatpush.msra.mxu0 0.0
  %6450 = vmatpush.msra.mxu0 0.0
  %6451 = vmatpush.msra.mxu0 0.0
  %6452 = vmatpush.msra.mxu0 %v6160
  %6453 = vmatpush.msra.mxu0 %v6156
  %6454 = vmatpush.msra.mxu0 %v6152
  %6455 = vmatpush.msra.mxu0 %v6148
  %6456 = vmatmul.f32.gmra.mxu0 %v6182
  %v6457 = vpop.f32.mrf.mxu0
  %v6458 = vadd.f32 %v6435, %v6457
  %6459 = vmatmul.f32.gmra.mxu0 %v6185
  %v6460 = vpop.f32.mrf.mxu0
  %v6461 = vadd.f32 %v6438, %v6460
  %6462 = vdwg.mxu0
  %v6463 = vmax.f32 %v6251, 0.0
  %v6464 = vmax.f32 %v6320, 0.0
  %v6465 = vmax.f32 %v6389, 0.0
  %v6466 = vmax.f32 %v6458, 0.0
  %v6467 = vmax.f32 %v6254, 0.0
  %v6468 = vmax.f32 %v6323, 0.0
  %v6469 = vmax.f32 %v6392, 0.0
  %v6470 = vmax.f32 %v6461, 0.0
  %6471 = vrot.lane.b32.xlu0 %v6463, 17
  %v6472 = vpop.permute.xlu0 %6471
  %6473 = vrot.lane.b32.xlu0 %v6467, 17
  %v6474 = vpop.permute.xlu0 %6473
  %6475 = vrot.lane.b32.xlu0 %v6464, 17
  %v6476 = vpop.permute.xlu0 %6475
  %6477 = vrot.lane.b32.xlu0 %v6468, 17
  %v6478 = vpop.permute.xlu0 %6477
  %6479 = vrot.lane.b32.xlu0 %v6465, 17
  %v6480 = vpop.permute.xlu0 %6479
  %6481 = vrot.lane.b32.xlu0 %v6469, 17
  %v6482 = vpop.permute.xlu0 %6481
  %6483 = vrot.lane.b32.xlu0 %v6466, 17
  %v6484 = vpop.permute.xlu0 %6483
  %6485 = vrot.lane.b32.xlu0 %v6470, 17
  %v6486 = vpop.permute.xlu0 %6485
  %v6487 = vsel %vm77, %v6480, %v6484
  %v6488 = vsel %vm77, %v6482, %v6486
  %v6489 = vsel %vm77, %v6476, %v6480
  %v6490 = vsel %vm77, %v6478, %v6482
  %v6491 = vsel %vm77, %v6472, %v6476
  %v6492 = vsel %vm77, %v6474, %v6478
  %v6493 = vsel %vm77, %v6484, %v6472
  %v6494 = vsel %vm77, %v6486, %v6474
  %v6495 = vmul.f32 %v6493, %v86
  %v6496 = vmul.f32 %v6491, %v87
  %v6497 = vmul.f32 %v6489, %v88
  %v6498 = vmul.f32 %v6487, %v89
  %v6499 = vmul.f32 %v6494, %v86
  %v6500 = vmul.f32 %v6492, %v87
  %v6501 = vmul.f32 %v6490, %v88
  %v6502 = vmul.f32 %v6488, %v89
  %6503 = vst [vmem:[#allocation2 + $0x480] sm:$0xff] %v6495
  %6504 = vst [vmem:[#allocation2 + $0x488] sm:$0xff] %v6496
  %6505 = vst [vmem:[#allocation2 + $0x490] sm:$0xff] %v6497
  %6506 = vst [vmem:[#allocation2 + $0x498] sm:$0xff] %v6498
  %6507 = vst [vmem:[#allocation2 + $0x4a0] sm:$0xff] %v6499
  %6508 = vst [vmem:[#allocation2 + $0x4a8] sm:$0xff] %v6500
  %6509 = vst [vmem:[#allocation2 + $0x4b0] sm:$0xff] %v6501
  %6510 = vst [vmem:[#allocation2 + $0x4b8] sm:$0xff] %v6502
  %6511 = vrot.lane.b32.xlu0 %v6463, 16
  %v6512 = vpop.permute.xlu0 %6511
  %6513 = vrot.lane.b32.xlu0 %v6467, 16
  %v6514 = vpop.permute.xlu0 %6513
  %6515 = vrot.lane.b32.xlu0 %v6464, 16
  %v6516 = vpop.permute.xlu0 %6515
  %6517 = vrot.lane.b32.xlu0 %v6468, 16
  %v6518 = vpop.permute.xlu0 %6517
  %6519 = vrot.lane.b32.xlu0 %v6465, 16
  %v6520 = vpop.permute.xlu0 %6519
  %6521 = vrot.lane.b32.xlu0 %v6469, 16
  %v6522 = vpop.permute.xlu0 %6521
  %6523 = vrot.lane.b32.xlu0 %v6466, 16
  %v6524 = vpop.permute.xlu0 %6523
  %6525 = vrot.lane.b32.xlu0 %v6470, 16
  %v6526 = vpop.permute.xlu0 %6525
  %v6527 = vsel %vm122, %v6520, %v6524
  %v6528 = vsel %vm122, %v6522, %v6526
  %v6529 = vsel %vm122, %v6516, %v6520
  %v6530 = vsel %vm122, %v6518, %v6522
  %v6531 = vsel %vm122, %v6512, %v6516
  %v6532 = vsel %vm122, %v6514, %v6518
  %v6533 = vsel %vm122, %v6524, %v6512
  %v6534 = vsel %vm122, %v6526, %v6514
  %v6535 = vmul.f32 %v6533, %v131
  %v6536 = vmul.f32 %v6531, %v132
  %v6537 = vmul.f32 %v6529, %v133
  %v6538 = vmul.f32 %v6527, %v134
  %v6539 = vmul.f32 %v6534, %v131
  %v6540 = vmul.f32 %v6532, %v132
  %v6541 = vmul.f32 %v6530, %v133
  %v6542 = vmul.f32 %v6528, %v134
  %6543 = vst [vmem:[#allocation2 + $0x4c0] sm:$0xff] %v6535
  %6544 = vst [vmem:[#allocation2 + $0x4c8] sm:$0xff] %v6536
  %6545 = vst [vmem:[#allocation2 + $0x4d0] sm:$0xff] %v6537
  %6546 = vst [vmem:[#allocation2 + $0x4d8] sm:$0xff] %v6538
  %6547 = vst [vmem:[#allocation2 + $0x4e0] sm:$0xff] %v6539
  %6548 = vst [vmem:[#allocation2 + $0x4e8] sm:$0xff] %v6540
  %6549 = vst [vmem:[#allocation2 + $0x4f0] sm:$0xff] %v6541
  %6550 = vst [vmem:[#allocation2 + $0x4f8] sm:$0xff] %v6542
  %6551 = vrot.lane.b32.xlu0 %v6463, 15
  %v6552 = vpop.permute.xlu0 %6551
  %6553 = vrot.lane.b32.xlu0 %v6467, 15
  %v6554 = vpop.permute.xlu0 %6553
  %6555 = vrot.lane.b32.xlu0 %v6464, 15
  %v6556 = vpop.permute.xlu0 %6555
  %6557 = vrot.lane.b32.xlu0 %v6468, 15
  %v6558 = vpop.permute.xlu0 %6557
  %6559 = vrot.lane.b32.xlu0 %v6465, 15
  %v6560 = vpop.permute.xlu0 %6559
  %6561 = vrot.lane.b32.xlu0 %v6469, 15
  %v6562 = vpop.permute.xlu0 %6561
  %6563 = vrot.lane.b32.xlu0 %v6466, 15
  %v6564 = vpop.permute.xlu0 %6563
  %6565 = vrot.lane.b32.xlu0 %v6470, 15
  %v6566 = vpop.permute.xlu0 %6565
  %v6567 = vsel %vm167, %v6560, %v6564
  %v6568 = vsel %vm167, %v6562, %v6566
  %v6569 = vsel %vm167, %v6556, %v6560
  %v6570 = vsel %vm167, %v6558, %v6562
  %v6571 = vsel %vm167, %v6552, %v6556
  %v6572 = vsel %vm167, %v6554, %v6558
  %v6573 = vsel %vm167, %v6564, %v6552
  %v6574 = vsel %vm167, %v6566, %v6554
  %v6575 = vmul.f32 %v6573, %v176
  %v6576 = vmul.f32 %v6571, %v177
  %v6577 = vmul.f32 %v6569, %v178
  %v6578 = vmul.f32 %v6567, %v179
  %v6579 = vmul.f32 %v6574, %v176
  %v6580 = vmul.f32 %v6572, %v177
  %v6581 = vmul.f32 %v6570, %v178
  %v6582 = vmul.f32 %v6568, %v179
  %6583 = vst [vmem:[#allocation2 + $0x500] sm:$0xff] %v6575
  %6584 = vst [vmem:[#allocation2 + $0x508] sm:$0xff] %v6576
  %6585 = vst [vmem:[#allocation2 + $0x510] sm:$0xff] %v6577
  %6586 = vst [vmem:[#allocation2 + $0x518] sm:$0xff] %v6578
  %6587 = vst [vmem:[#allocation2 + $0x520] sm:$0xff] %v6579
  %6588 = vst [vmem:[#allocation2 + $0x528] sm:$0xff] %v6580
  %6589 = vst [vmem:[#allocation2 + $0x530] sm:$0xff] %v6581
  %6590 = vst [vmem:[#allocation2 + $0x538] sm:$0xff] %v6582
  %6591 = vrot.lane.b32.xlu0 %v6463, 1
  %v6592 = vpop.permute.xlu0 %6591
  %6593 = vrot.lane.b32.xlu0 %v6467, 1
  %v6594 = vpop.permute.xlu0 %6593
  %6595 = vrot.lane.b32.xlu0 %v6464, 1
  %v6596 = vpop.permute.xlu0 %6595
  %6597 = vrot.lane.b32.xlu0 %v6468, 1
  %v6598 = vpop.permute.xlu0 %6597
  %6599 = vrot.lane.b32.xlu0 %v6465, 1
  %v6600 = vpop.permute.xlu0 %6599
  %6601 = vrot.lane.b32.xlu0 %v6469, 1
  %v6602 = vpop.permute.xlu0 %6601
  %6603 = vrot.lane.b32.xlu0 %v6466, 1
  %v6604 = vpop.permute.xlu0 %6603
  %6605 = vrot.lane.b32.xlu0 %v6470, 1
  %v6606 = vpop.permute.xlu0 %6605
  %v6607 = vsel %vm212, %v6600, %v6604
  %v6608 = vsel %vm212, %v6602, %v6606
  %v6609 = vsel %vm212, %v6596, %v6600
  %v6610 = vsel %vm212, %v6598, %v6602
  %v6611 = vsel %vm212, %v6592, %v6596
  %v6612 = vsel %vm212, %v6594, %v6598
  %v6613 = vsel %vm212, %v6604, %v6592
  %v6614 = vsel %vm212, %v6606, %v6594
  %v6615 = vmul.f32 %v6613, %v221
  %v6616 = vmul.f32 %v6611, %v222
  %v6617 = vmul.f32 %v6609, %v223
  %v6618 = vmul.f32 %v6607, %v224
  %v6619 = vmul.f32 %v6614, %v221
  %v6620 = vmul.f32 %v6612, %v222
  %v6621 = vmul.f32 %v6610, %v223
  %v6622 = vmul.f32 %v6608, %v224
  %6623 = vst [vmem:[#allocation2 + $0x540] sm:$0xff] %v6615
  %6624 = vst [vmem:[#allocation2 + $0x548] sm:$0xff] %v6616
  %6625 = vst [vmem:[#allocation2 + $0x550] sm:$0xff] %v6617
  %6626 = vst [vmem:[#allocation2 + $0x558] sm:$0xff] %v6618
  %6627 = vst [vmem:[#allocation2 + $0x560] sm:$0xff] %v6619
  %6628 = vst [vmem:[#allocation2 + $0x568] sm:$0xff] %v6620
  %6629 = vst [vmem:[#allocation2 + $0x570] sm:$0xff] %v6621
  %6630 = vst [vmem:[#allocation2 + $0x578] sm:$0xff] %v6622
  %6631 = vst [vmem:[#allocation2 + $0x580] sm:$0xff] %v6463
  %6632 = vst [vmem:[#allocation2 + $0x588] sm:$0xff] %v6464
  %6633 = vst [vmem:[#allocation2 + $0x590] sm:$0xff] %v6465
  %6634 = vst [vmem:[#allocation2 + $0x598] sm:$0xff] %v6466
  %6635 = vst [vmem:[#allocation2 + $0x5a0] sm:$0xff] %v6467
  %6636 = vst [vmem:[#allocation2 + $0x5a8] sm:$0xff] %v6468
  %6637 = vst [vmem:[#allocation2 + $0x5b0] sm:$0xff] %v6469
  %6638 = vst [vmem:[#allocation2 + $0x5b8] sm:$0xff] %v6470
  %6639 = vrot.lane.b32.xlu0 %v6463, 127
  %v6640 = vpop.permute.xlu0 %6639
  %6641 = vrot.lane.b32.xlu0 %v6467, 127
  %v6642 = vpop.permute.xlu0 %6641
  %6643 = vrot.lane.b32.xlu0 %v6464, 127
  %v6644 = vpop.permute.xlu0 %6643
  %6645 = vrot.lane.b32.xlu0 %v6468, 127
  %v6646 = vpop.permute.xlu0 %6645
  %6647 = vrot.lane.b32.xlu0 %v6465, 127
  %v6648 = vpop.permute.xlu0 %6647
  %6649 = vrot.lane.b32.xlu0 %v6469, 127
  %v6650 = vpop.permute.xlu0 %6649
  %6651 = vrot.lane.b32.xlu0 %v6466, 127
  %v6652 = vpop.permute.xlu0 %6651
  %6653 = vrot.lane.b32.xlu0 %v6470, 127
  %v6654 = vpop.permute.xlu0 %6653
  %v6655 = vsel %vm265, %v6648, %v6652
  %v6656 = vsel %vm265, %v6650, %v6654
  %v6657 = vsel %vm265, %v6644, %v6648
  %v6658 = vsel %vm265, %v6646, %v6650
  %v6659 = vsel %vm265, %v6640, %v6644
  %v6660 = vsel %vm265, %v6642, %v6646
  %v6661 = vsel %vm265, %v6652, %v6640
  %v6662 = vsel %vm265, %v6654, %v6642
  %v6663 = vmul.f32 %v6659, %v274
  %v6664 = vmul.f32 %v6657, %v275
  %v6665 = vmul.f32 %v6655, %v276
  %v6666 = vmul.f32 %v6661, %v277
  %v6667 = vmul.f32 %v6660, %v274
  %v6668 = vmul.f32 %v6658, %v275
  %v6669 = vmul.f32 %v6656, %v276
  %v6670 = vmul.f32 %v6662, %v277
  %6671 = vst [vmem:[#allocation2 + $0x5c0] sm:$0xff] %v6663
  %6672 = vst [vmem:[#allocation2 + $0x5c8] sm:$0xff] %v6664
  %6673 = vst [vmem:[#allocation2 + $0x5d0] sm:$0xff] %v6665
  %6674 = vst [vmem:[#allocation2 + $0x5d8] sm:$0xff] %v6666
  %6675 = vst [vmem:[#allocation2 + $0x5e0] sm:$0xff] %v6667
  %6676 = vst [vmem:[#allocation2 + $0x5e8] sm:$0xff] %v6668
  %6677 = vst [vmem:[#allocation2 + $0x5f0] sm:$0xff] %v6669
  %6678 = vst [vmem:[#allocation2 + $0x5f8] sm:$0xff] %v6670
  %6679 = vrot.lane.b32.xlu0 %v6463, 113
  %v6680 = vpop.permute.xlu0 %6679
  %6681 = vrot.lane.b32.xlu0 %v6467, 113
  %v6682 = vpop.permute.xlu0 %6681
  %6683 = vrot.lane.b32.xlu0 %v6464, 113
  %v6684 = vpop.permute.xlu0 %6683
  %6685 = vrot.lane.b32.xlu0 %v6468, 113
  %v6686 = vpop.permute.xlu0 %6685
  %6687 = vrot.lane.b32.xlu0 %v6465, 113
  %v6688 = vpop.permute.xlu0 %6687
  %6689 = vrot.lane.b32.xlu0 %v6469, 113
  %v6690 = vpop.permute.xlu0 %6689
  %6691 = vrot.lane.b32.xlu0 %v6466, 113
  %v6692 = vpop.permute.xlu0 %6691
  %6693 = vrot.lane.b32.xlu0 %v6470, 113
  %v6694 = vpop.permute.xlu0 %6693
  %v6695 = vsel %vm310, %v6688, %v6692
  %v6696 = vsel %vm310, %v6690, %v6694
  %v6697 = vsel %vm310, %v6684, %v6688
  %v6698 = vsel %vm310, %v6686, %v6690
  %v6699 = vsel %vm310, %v6680, %v6684
  %v6700 = vsel %vm310, %v6682, %v6686
  %v6701 = vsel %vm310, %v6692, %v6680
  %v6702 = vsel %vm310, %v6694, %v6682
  %v6703 = vmul.f32 %v6699, %v319
  %v6704 = vmul.f32 %v6697, %v320
  %v6705 = vmul.f32 %v6695, %v321
  %v6706 = vmul.f32 %v6701, %v322
  %v6707 = vmul.f32 %v6700, %v319
  %v6708 = vmul.f32 %v6698, %v320
  %v6709 = vmul.f32 %v6696, %v321
  %v6710 = vmul.f32 %v6702, %v322
  %6711 = vst [vmem:[#allocation2 + $0x600] sm:$0xff] %v6703
  %6712 = vst [vmem:[#allocation2 + $0x608] sm:$0xff] %v6704
  %6713 = vst [vmem:[#allocation2 + $0x610] sm:$0xff] %v6705
  %6714 = vst [vmem:[#allocation2 + $0x618] sm:$0xff] %v6706
  %6715 = vst [vmem:[#allocation2 + $0x620] sm:$0xff] %v6707
  %6716 = vst [vmem:[#allocation2 + $0x628] sm:$0xff] %v6708
  %6717 = vst [vmem:[#allocation2 + $0x630] sm:$0xff] %v6709
  %6718 = vst [vmem:[#allocation2 + $0x638] sm:$0xff] %v6710
  %6719 = vrot.lane.b32.xlu0 %v6463, 112
  %v6720 = vpop.permute.xlu0 %6719
  %6721 = vrot.lane.b32.xlu0 %v6467, 112
  %v6722 = vpop.permute.xlu0 %6721
  %6723 = vrot.lane.b32.xlu0 %v6464, 112
  %v6724 = vpop.permute.xlu0 %6723
  %6725 = vrot.lane.b32.xlu0 %v6468, 112
  %v6726 = vpop.permute.xlu0 %6725
  %6727 = vrot.lane.b32.xlu0 %v6465, 112
  %v6728 = vpop.permute.xlu0 %6727
  %6729 = vrot.lane.b32.xlu0 %v6469, 112
  %v6730 = vpop.permute.xlu0 %6729
  %6731 = vrot.lane.b32.xlu0 %v6466, 112
  %v6732 = vpop.permute.xlu0 %6731
  %6733 = vrot.lane.b32.xlu0 %v6470, 112
  %v6734 = vpop.permute.xlu0 %6733
  %v6735 = vsel %vm355, %v6728, %v6732
  %v6736 = vsel %vm355, %v6730, %v6734
  %v6737 = vsel %vm355, %v6724, %v6728
  %v6738 = vsel %vm355, %v6726, %v6730
  %v6739 = vsel %vm355, %v6720, %v6724
  %v6740 = vsel %vm355, %v6722, %v6726
  %v6741 = vsel %vm355, %v6732, %v6720
  %v6742 = vsel %vm355, %v6734, %v6722
  %v6743 = vmul.f32 %v6739, %v364
  %v6744 = vmul.f32 %v6737, %v365
  %v6745 = vmul.f32 %v6735, %v366
  %v6746 = vmul.f32 %v6741, %v367
  %v6747 = vmul.f32 %v6740, %v364
  %v6748 = vmul.f32 %v6738, %v365
  %v6749 = vmul.f32 %v6736, %v366
  %v6750 = vmul.f32 %v6742, %v367
  %6751 = vst [vmem:[#allocation2 + $0x640] sm:$0xff] %v6743
  %6752 = vst [vmem:[#allocation2 + $0x648] sm:$0xff] %v6744
  %6753 = vst [vmem:[#allocation2 + $0x650] sm:$0xff] %v6745
  %6754 = vst [vmem:[#allocation2 + $0x658] sm:$0xff] %v6746
  %6755 = vst [vmem:[#allocation2 + $0x660] sm:$0xff] %v6747
  %6756 = vst [vmem:[#allocation2 + $0x668] sm:$0xff] %v6748
  %6757 = vst [vmem:[#allocation2 + $0x670] sm:$0xff] %v6749
  %6758 = vst [vmem:[#allocation2 + $0x678] sm:$0xff] %v6750
  %6759 = vrot.lane.b32.xlu0 %v6463, 111
  %v6760 = vpop.permute.xlu0 %6759
  %6761 = vrot.lane.b32.xlu0 %v6467, 111
  %v6762 = vpop.permute.xlu0 %6761
  %6763 = vrot.lane.b32.xlu0 %v6464, 111
  %v6764 = vpop.permute.xlu0 %6763
  %6765 = vrot.lane.b32.xlu0 %v6468, 111
  %v6766 = vpop.permute.xlu0 %6765
  %6767 = vrot.lane.b32.xlu0 %v6465, 111
  %v6768 = vpop.permute.xlu0 %6767
  %6769 = vrot.lane.b32.xlu0 %v6469, 111
  %v6770 = vpop.permute.xlu0 %6769
  %6771 = vrot.lane.b32.xlu0 %v6466, 111
  %v6772 = vpop.permute.xlu0 %6771
  %6773 = vrot.lane.b32.xlu0 %v6470, 111
  %v6774 = vpop.permute.xlu0 %6773
  %v6775 = vsel %vm400, %v6768, %v6772
  %v6776 = vsel %vm400, %v6770, %v6774
  %v6777 = vsel %vm400, %v6764, %v6768
  %v6778 = vsel %vm400, %v6766, %v6770
  %v6779 = vsel %vm400, %v6760, %v6764
  %v6780 = vsel %vm400, %v6762, %v6766
  %v6781 = vsel %vm400, %v6772, %v6760
  %v6782 = vsel %vm400, %v6774, %v6762
  %v6783 = vmul.f32 %v6779, %v409
  %v6784 = vmul.f32 %v6777, %v410
  %v6785 = vmul.f32 %v6775, %v411
  %v6786 = vmul.f32 %v6781, %v412
  %v6787 = vmul.f32 %v6780, %v409
  %v6788 = vmul.f32 %v6778, %v410
  %v6789 = vmul.f32 %v6776, %v411
  %v6790 = vmul.f32 %v6782, %v412
  %6791 = vst [vmem:[#allocation2 + $0x680] sm:$0xff] %v6783
  %6792 = vst [vmem:[#allocation2 + $0x688] sm:$0xff] %v6784
  %6793 = vst [vmem:[#allocation2 + $0x690] sm:$0xff] %v6785
  %6794 = vst [vmem:[#allocation2 + $0x698] sm:$0xff] %v6786
  %6795 = vst [vmem:[#allocation2 + $0x6a0] sm:$0xff] %v6787
  %6796 = vst [vmem:[#allocation2 + $0x6a8] sm:$0xff] %v6788
  %6797 = vst [vmem:[#allocation2 + $0x6b0] sm:$0xff] %v6789
  %6798 = vst [vmem:[#allocation2 + $0x6b8] sm:$0xff] %v6790
  %v6799 = vld [vmem:[#allocation2] sm:$0xff]
  %v6800 = vld [vmem:[#allocation2 + $0x8] sm:$0xff]
  %v6801 = vld [vmem:[#allocation2 + $0x10] sm:$0xff]
  %v6802 = vld [vmem:[#allocation2 + $0x18] sm:$0xff]
  %v6803 = vld [vmem:[#allocation2 + $0x20] sm:$0xff]
  %v6804 = vld [vmem:[#allocation2 + $0x28] sm:$0xff]
  %v6805 = vld [vmem:[#allocation2 + $0x30] sm:$0xff]
  %v6806 = vld [vmem:[#allocation2 + $0x38] sm:$0xff]
  %v6807 = vld [vmem:[#allocation2 + $0x40] sm:$0xff]
  %v6808 = vld [vmem:[#allocation2 + $0x48] sm:$0xff]
  %v6809 = vld [vmem:[#allocation2 + $0x50] sm:$0xff]
  %v6810 = vld [vmem:[#allocation2 + $0x58] sm:$0xff]
  %v6811 = vld [vmem:[#allocation2 + $0x60] sm:$0xff]
  %v6812 = vld [vmem:[#allocation2 + $0x68] sm:$0xff]
  %v6813 = vld [vmem:[#allocation2 + $0x70] sm:$0xff]
  %v6814 = vld [vmem:[#allocation2 + $0x78] sm:$0xff]
  %v6815 = vld [vmem:[#allocation2 + $0x80] sm:$0xff]
  %v6816 = vld [vmem:[#allocation2 + $0x88] sm:$0xff]
  %v6817 = vld [vmem:[#allocation2 + $0x90] sm:$0xff]
  %v6818 = vld [vmem:[#allocation2 + $0x98] sm:$0xff]
  %v6819 = vld [vmem:[#allocation2 + $0xa0] sm:$0xff]
  %v6820 = vld [vmem:[#allocation2 + $0xa8] sm:$0xff]
  %v6821 = vld [vmem:[#allocation2 + $0xb0] sm:$0xff]
  %v6822 = vld [vmem:[#allocation2 + $0xb8] sm:$0xff]
  %v6823 = vld [vmem:[#allocation2 + $0xc0] sm:$0xff]
  %v6824 = vld [vmem:[#allocation2 + $0xc8] sm:$0xff]
  %v6825 = vld [vmem:[#allocation2 + $0xd0] sm:$0xff]
  %v6826 = vld [vmem:[#allocation2 + $0xd8] sm:$0xff]
  %v6827 = vld [vmem:[#allocation2 + $0xe0] sm:$0xff]
  %v6828 = vld [vmem:[#allocation2 + $0xe8] sm:$0xff]
  %v6829 = vld [vmem:[#allocation2 + $0xf0] sm:$0xff]
  %v6830 = vld [vmem:[#allocation2 + $0xf8] sm:$0xff]
  %v6831 = vld [vmem:[#allocation2 + $0x100] sm:$0xff]
  %v6832 = vld [vmem:[#allocation2 + $0x108] sm:$0xff]
  %v6833 = vld [vmem:[#allocation2 + $0x110] sm:$0xff]
  %v6834 = vld [vmem:[#allocation2 + $0x118] sm:$0xff]
  %v6835 = vld [vmem:[#allocation2 + $0x120] sm:$0xff]
  %v6836 = vld [vmem:[#allocation2 + $0x128] sm:$0xff]
  %v6837 = vld [vmem:[#allocation2 + $0x130] sm:$0xff]
  %v6838 = vld [vmem:[#allocation2 + $0x138] sm:$0xff]
  %v6839 = vld [vmem:[#allocation2 + $0x140] sm:$0xff]
  %v6840 = vld [vmem:[#allocation2 + $0x148] sm:$0xff]
  %v6841 = vld [vmem:[#allocation2 + $0x150] sm:$0xff]
  %v6842 = vld [vmem:[#allocation2 + $0x158] sm:$0xff]
  %v6843 = vld [vmem:[#allocation2 + $0x160] sm:$0xff]
  %v6844 = vld [vmem:[#allocation2 + $0x168] sm:$0xff]
  %v6845 = vld [vmem:[#allocation2 + $0x170] sm:$0xff]
  %v6846 = vld [vmem:[#allocation2 + $0x178] sm:$0xff]
  %v6847 = vld [vmem:[#allocation2 + $0x180] sm:$0xff]
  %v6848 = vld [vmem:[#allocation2 + $0x188] sm:$0xff]
  %v6849 = vld [vmem:[#allocation2 + $0x190] sm:$0xff]
  %v6850 = vld [vmem:[#allocation2 + $0x198] sm:$0xff]
  %v6851 = vld [vmem:[#allocation2 + $0x1a0] sm:$0xff]
  %v6852 = vld [vmem:[#allocation2 + $0x1a8] sm:$0xff]
  %v6853 = vld [vmem:[#allocation2 + $0x1b0] sm:$0xff]
  %v6854 = vld [vmem:[#allocation2 + $0x1b8] sm:$0xff]
  %v6855 = vld [vmem:[#allocation2 + $0x1c0] sm:$0xff]
  %v6856 = vld [vmem:[#allocation2 + $0x1c8] sm:$0xff]
  %v6857 = vld [vmem:[#allocation2 + $0x1d0] sm:$0xff]
  %v6858 = vld [vmem:[#allocation2 + $0x1d8] sm:$0xff]
  %v6859 = vld [vmem:[#allocation2 + $0x1e0] sm:$0xff]
  %v6860 = vld [vmem:[#allocation2 + $0x1e8] sm:$0xff]
  %v6861 = vld [vmem:[#allocation2 + $0x1f0] sm:$0xff]
  %v6862 = vld [vmem:[#allocation2 + $0x1f8] sm:$0xff]
  %v6863 = vld [vmem:[#allocation2 + $0x200] sm:$0xff]
  %v6864 = vld [vmem:[#allocation2 + $0x208] sm:$0xff]
  %v6865 = vld [vmem:[#allocation2 + $0x210] sm:$0xff]
  %v6866 = vld [vmem:[#allocation2 + $0x218] sm:$0xff]
  %v6867 = vld [vmem:[#allocation2 + $0x220] sm:$0xff]
  %v6868 = vld [vmem:[#allocation2 + $0x228] sm:$0xff]
  %v6869 = vld [vmem:[#allocation2 + $0x230] sm:$0xff]
  %v6870 = vld [vmem:[#allocation2 + $0x238] sm:$0xff]
  %v6871 = vld [vmem:[#allocation2 + $0x240] sm:$0xff]
  %v6872 = vld [vmem:[#allocation2 + $0x248] sm:$0xff]
  %v6873 = vld [vmem:[#allocation2 + $0x250] sm:$0xff]
  %v6874 = vld [vmem:[#allocation2 + $0x258] sm:$0xff]
  %v6875 = vld [vmem:[#allocation2 + $0x260] sm:$0xff]
  %v6876 = vld [vmem:[#allocation2 + $0x268] sm:$0xff]
  %v6877 = vld [vmem:[#allocation2 + $0x270] sm:$0xff]
  %v6878 = vld [vmem:[#allocation2 + $0x278] sm:$0xff]
  %v6879 = vld [vmem:[#allocation2 + $0x280] sm:$0xff]
  %v6880 = vld [vmem:[#allocation2 + $0x288] sm:$0xff]
  %v6881 = vld [vmem:[#allocation2 + $0x290] sm:$0xff]
  %v6882 = vld [vmem:[#allocation2 + $0x298] sm:$0xff]
  %v6883 = vld [vmem:[#allocation2 + $0x2a0] sm:$0xff]
  %v6884 = vld [vmem:[#allocation2 + $0x2a8] sm:$0xff]
  %v6885 = vld [vmem:[#allocation2 + $0x2b0] sm:$0xff]
  %v6886 = vld [vmem:[#allocation2 + $0x2b8] sm:$0xff]
  %v6887 = vld [vmem:[#allocation2 + $0x2c0] sm:$0xff]
  %v6888 = vld [vmem:[#allocation2 + $0x2c8] sm:$0xff]
  %v6889 = vld [vmem:[#allocation2 + $0x2d0] sm:$0xff]
  %v6890 = vld [vmem:[#allocation2 + $0x2d8] sm:$0xff]
  %v6891 = vld [vmem:[#allocation2 + $0x2e0] sm:$0xff]
  %v6892 = vld [vmem:[#allocation2 + $0x2e8] sm:$0xff]
  %v6893 = vld [vmem:[#allocation2 + $0x2f0] sm:$0xff]
  %v6894 = vld [vmem:[#allocation2 + $0x2f8] sm:$0xff]
  %v6895 = vld [vmem:[#allocation2 + $0x300] sm:$0xff]
  %v6896 = vld [vmem:[#allocation2 + $0x308] sm:$0xff]
  %v6897 = vld [vmem:[#allocation2 + $0x310] sm:$0xff]
  %v6898 = vld [vmem:[#allocation2 + $0x318] sm:$0xff]
  %v6899 = vld [vmem:[#allocation2 + $0x320] sm:$0xff]
  %v6900 = vld [vmem:[#allocation2 + $0x328] sm:$0xff]
  %v6901 = vld [vmem:[#allocation2 + $0x330] sm:$0xff]
  %v6902 = vld [vmem:[#allocation2 + $0x338] sm:$0xff]
  %v6903 = vld [vmem:[#allocation2 + $0x340] sm:$0xff]
  %v6904 = vld [vmem:[#allocation2 + $0x348] sm:$0xff]
  %v6905 = vld [vmem:[#allocation2 + $0x350] sm:$0xff]
  %v6906 = vld [vmem:[#allocation2 + $0x358] sm:$0xff]
  %v6907 = vld [vmem:[#allocation2 + $0x360] sm:$0xff]
  %v6908 = vld [vmem:[#allocation2 + $0x368] sm:$0xff]
  %v6909 = vld [vmem:[#allocation2 + $0x370] sm:$0xff]
  %v6910 = vld [vmem:[#allocation2 + $0x378] sm:$0xff]
  %v6911 = vld [vmem:[#allocation2 + $0x380] sm:$0xff]
  %v6912 = vld [vmem:[#allocation2 + $0x388] sm:$0xff]
  %v6913 = vld [vmem:[#allocation2 + $0x390] sm:$0xff]
  %v6914 = vld [vmem:[#allocation2 + $0x398] sm:$0xff]
  %v6915 = vld [vmem:[#allocation2 + $0x3a0] sm:$0xff]
  %v6916 = vld [vmem:[#allocation2 + $0x3a8] sm:$0xff]
  %v6917 = vld [vmem:[#allocation2 + $0x3b0] sm:$0xff]
  %v6918 = vld [vmem:[#allocation2 + $0x3b8] sm:$0xff]
  %v6919 = vld [vmem:[#allocation2 + $0x3c0] sm:$0xff]
  %v6920 = vld [vmem:[#allocation2 + $0x3c8] sm:$0xff]
  %v6921 = vld [vmem:[#allocation2 + $0x3d0] sm:$0xff]
  %v6922 = vld [vmem:[#allocation2 + $0x3d8] sm:$0xff]
  %v6923 = vld [vmem:[#allocation2 + $0x3e0] sm:$0xff]
  %v6924 = vld [vmem:[#allocation2 + $0x3e8] sm:$0xff]
  %v6925 = vld [vmem:[#allocation2 + $0x3f0] sm:$0xff]
  %v6926 = vld [vmem:[#allocation2 + $0x3f8] sm:$0xff]
  %v6927 = vld [vmem:[#allocation2 + $0x400] sm:$0xff]
  %v6928 = vld [vmem:[#allocation2 + $0x408] sm:$0xff]
  %v6929 = vld [vmem:[#allocation2 + $0x410] sm:$0xff]
  %v6930 = vld [vmem:[#allocation2 + $0x418] sm:$0xff]
  %v6931 = vld [vmem:[#allocation2 + $0x420] sm:$0xff]
  %v6932 = vld [vmem:[#allocation2 + $0x428] sm:$0xff]
  %v6933 = vld [vmem:[#allocation2 + $0x430] sm:$0xff]
  %v6934 = vld [vmem:[#allocation2 + $0x438] sm:$0xff]
  %v6935 = vld [vmem:[#allocation2 + $0x440] sm:$0xff]
  %v6936 = vld [vmem:[#allocation2 + $0x448] sm:$0xff]
  %v6937 = vld [vmem:[#allocation2 + $0x450] sm:$0xff]
  %v6938 = vld [vmem:[#allocation2 + $0x458] sm:$0xff]
  %v6939 = vld [vmem:[#allocation2 + $0x460] sm:$0xff]
  %v6940 = vld [vmem:[#allocation2 + $0x468] sm:$0xff]
  %v6941 = vld [vmem:[#allocation2 + $0x470] sm:$0xff]
  %v6942 = vld [vmem:[#allocation2 + $0x478] sm:$0xff]
  %v6943 = vld [vmem:[#allocation2 + $0x480] sm:$0xff]
  %v6944 = vld [vmem:[#allocation2 + $0x488] sm:$0xff]
  %v6945 = vld [vmem:[#allocation2 + $0x490] sm:$0xff]
  %v6946 = vld [vmem:[#allocation2 + $0x498] sm:$0xff]
  %v6947 = vld [vmem:[#allocation2 + $0x4a0] sm:$0xff]
  %v6948 = vld [vmem:[#allocation2 + $0x4a8] sm:$0xff]
  %v6949 = vld [vmem:[#allocation2 + $0x4b0] sm:$0xff]
  %v6950 = vld [vmem:[#allocation2 + $0x4b8] sm:$0xff]
  %v6951 = vld [vmem:[#allocation2 + $0x4c0] sm:$0xff]
  %v6952 = vld [vmem:[#allocation2 + $0x4c8] sm:$0xff]
  %v6953 = vld [vmem:[#allocation2 + $0x4d0] sm:$0xff]
  %v6954 = vld [vmem:[#allocation2 + $0x4d8] sm:$0xff]
  %v6955 = vld [vmem:[#allocation2 + $0x4e0] sm:$0xff]
  %v6956 = vld [vmem:[#allocation2 + $0x4e8] sm:$0xff]
  %v6957 = vld [vmem:[#allocation2 + $0x4f0] sm:$0xff]
  %v6958 = vld [vmem:[#allocation2 + $0x4f8] sm:$0xff]
  %v6959 = vld [vmem:[#allocation2 + $0x500] sm:$0xff]
  %v6960 = vld [vmem:[#allocation2 + $0x508] sm:$0xff]
  %v6961 = vld [vmem:[#allocation2 + $0x510] sm:$0xff]
  %v6962 = vld [vmem:[#allocation2 + $0x518] sm:$0xff]
  %v6963 = vld [vmem:[#allocation2 + $0x520] sm:$0xff]
  %v6964 = vld [vmem:[#allocation2 + $0x528] sm:$0xff]
  %v6965 = vld [vmem:[#allocation2 + $0x530] sm:$0xff]
  %v6966 = vld [vmem:[#allocation2 + $0x538] sm:$0xff]
  %v6967 = vld [vmem:[#allocation2 + $0x540] sm:$0xff]
  %v6968 = vld [vmem:[#allocation2 + $0x548] sm:$0xff]
  %v6969 = vld [vmem:[#allocation2 + $0x550] sm:$0xff]
  %v6970 = vld [vmem:[#allocation2 + $0x558] sm:$0xff]
  %v6971 = vld [vmem:[#allocation2 + $0x560] sm:$0xff]
  %v6972 = vld [vmem:[#allocation2 + $0x568] sm:$0xff]
  %v6973 = vld [vmem:[#allocation2 + $0x570] sm:$0xff]
  %v6974 = vld [vmem:[#allocation2 + $0x578] sm:$0xff]
  %v6975 = vld [vmem:[#allocation2 + $0x580] sm:$0xff]
  %v6976 = vld [vmem:[#allocation2 + $0x588] sm:$0xff]
  %v6977 = vld [vmem:[#allocation2 + $0x590] sm:$0xff]
  %v6978 = vld [vmem:[#allocation2 + $0x598] sm:$0xff]
  %v6979 = vld [vmem:[#allocation2 + $0x5a0] sm:$0xff]
  %v6980 = vld [vmem:[#allocation2 + $0x5a8] sm:$0xff]
  %v6981 = vld [vmem:[#allocation2 + $0x5b0] sm:$0xff]
  %v6982 = vld [vmem:[#allocation2 + $0x5b8] sm:$0xff]
  %v6983 = vld [vmem:[#allocation2 + $0x5c0] sm:$0xff]
  %v6984 = vld [vmem:[#allocation2 + $0x5c8] sm:$0xff]
  %v6985 = vld [vmem:[#allocation2 + $0x5d0] sm:$0xff]
  %v6986 = vld [vmem:[#allocation2 + $0x5d8] sm:$0xff]
  %v6987 = vld [vmem:[#allocation2 + $0x5e0] sm:$0xff]
  %v6988 = vld [vmem:[#allocation2 + $0x5e8] sm:$0xff]
  %v6989 = vld [vmem:[#allocation2 + $0x5f0] sm:$0xff]
  %v6990 = vld [vmem:[#allocation2 + $0x5f8] sm:$0xff]
  %v6991 = vld [vmem:[#allocation2 + $0x600] sm:$0xff]
  %v6992 = vld [vmem:[#allocation2 + $0x608] sm:$0xff]
  %v6993 = vld [vmem:[#allocation2 + $0x610] sm:$0xff]
  %v6994 = vld [vmem:[#allocation2 + $0x618] sm:$0xff]
  %v6995 = vld [vmem:[#allocation2 + $0x620] sm:$0xff]
  %v6996 = vld [vmem:[#allocation2 + $0x628] sm:$0xff]
  %v6997 = vld [vmem:[#allocation2 + $0x630] sm:$0xff]
  %v6998 = vld [vmem:[#allocation2 + $0x638] sm:$0xff]
  %v6999 = vld [vmem:[#allocation2 + $0x640] sm:$0xff]
  %v7000 = vld [vmem:[#allocation2 + $0x648] sm:$0xff]
  %v7001 = vld [vmem:[#allocation2 + $0x650] sm:$0xff]
  %v7002 = vld [vmem:[#allocation2 + $0x658] sm:$0xff]
  %v7003 = vld [vmem:[#allocation2 + $0x660] sm:$0xff]
  %v7004 = vld [vmem:[#allocation2 + $0x668] sm:$0xff]
  %v7005 = vld [vmem:[#allocation2 + $0x670] sm:$0xff]
  %v7006 = vld [vmem:[#allocation2 + $0x678] sm:$0xff]
  %v7007 = vld [vmem:[#allocation2 + $0x680] sm:$0xff]
  %v7008 = vld [vmem:[#allocation2 + $0x688] sm:$0xff]
  %v7009 = vld [vmem:[#allocation2 + $0x690] sm:$0xff]
  %v7010 = vld [vmem:[#allocation2 + $0x698] sm:$0xff]
  %v7011 = vld [vmem:[#allocation2 + $0x6a0] sm:$0xff]
  %v7012 = vld [vmem:[#allocation2 + $0x6a8] sm:$0xff]
  %v7013 = vld [vmem:[#allocation2 + $0x6b0] sm:$0xff]
  %v7014 = vld [vmem:[#allocation2 + $0x6b8] sm:$0xff]
  %s7015 = scalar_lea.vmem %s4, 128
  %v7016 = vld [vmem:[%s7015] sm:$0xff]
  %v7017 = vld [vmem:[%s7015 + $0x8] sm:$0xff]
  %v7018 = vld [vmem:[%s7015 + $0x10] sm:$0xff]
  %v7019 = vld [vmem:[%s7015 + $0x18] sm:$0xff]
  %v7020 = vld [vmem:[%s7015 + $0x20] sm:$0xff]
  %v7021 = vld [vmem:[%s7015 + $0x28] sm:$0xff]
  %v7022 = vld [vmem:[%s7015 + $0x30] sm:$0xff]
  %v7023 = vld [vmem:[%s7015 + $0x38] sm:$0xff]
  %s7024 = scalar_lea.vmem %s5, 128
  %v7025 = vld [vmem:[%s7024] sm:$0xff]
  %v7026 = vld [vmem:[%s7024 + $0x8] sm:$0xff]
  %7028 = vset.pattern.permute.xlu0 0
  %7029 = vperm.xlu0 %7028, %v7025
  %v7030 = vpop.permute.xlu0 %7029
  %7033 = vset.pattern.permute.xlu0 0
  %7034 = vperm.xlu0 %7033, %v7026
  %v7035 = vpop.permute.xlu0 %7034
  %v7038 = vsel %vm2063, %v7019, 0
  %v7041 = vsel %vm2063, %v7023, 0
  %7043 = vmatpush.msra.mxu0 %v6859
  %7044 = vmatpush.msra.mxu0 %v6855
  %7045 = vmatpush.msra.mxu0 %v6851
  %7046 = vmatpush.msra.mxu0 %v6847
  %7047 = vmatpush.msra.mxu0 %v6843
  %7048 = vmatpush.msra.mxu0 %v6839
  %7049 = vmatpush.msra.mxu0 %v6835
  %7050 = vmatpush.msra.mxu0 %v6831
  %7051 = vmatpush.msra.mxu0 %v6827
  %7052 = vmatpush.msra.mxu0 %v6823
  %7053 = vmatpush.msra.mxu0 %v6819
  %7054 = vmatpush.msra.mxu0 %v6815
  %7055 = vmatpush.msra.mxu0 %v6811
  %7056 = vmatpush.msra.mxu0 %v6807
  %7057 = vmatpush.msra.mxu0 %v6803
  %7058 = vmatpush.msra.mxu0 %v6799
  %7059 = vmatmul.f32.gmra.mxu0 %v7016
  %v7060 = vpop.f32.mrf.mxu0
  %v7061 = vadd.f32 %v7030, %v7060
  %7062 = vmatmul.f32.gmra.mxu0 %v7020
  %v7063 = vpop.f32.mrf.mxu0
  %v7064 = vadd.f32 %v7035, %v7063
  %7065 = vdwg.mxu0
  %7066 = vmatpush.msra.mxu0 %v6923
  %7067 = vmatpush.msra.mxu0 %v6919
  %7068 = vmatpush.msra.mxu0 %v6915
  %7069 = vmatpush.msra.mxu0 %v6911
  %7070 = vmatpush.msra.mxu0 %v6907
  %7071 = vmatpush.msra.mxu0 %v6903
  %7072 = vmatpush.msra.mxu0 %v6899
  %7073 = vmatpush.msra.mxu0 %v6895
  %7074 = vmatpush.msra.mxu0 %v6891
  %7075 = vmatpush.msra.mxu0 %v6887
  %7076 = vmatpush.msra.mxu0 %v6883
  %7077 = vmatpush.msra.mxu0 %v6879
  %7078 = vmatpush.msra.mxu0 %v6875
  %7079 = vmatpush.msra.mxu0 %v6871
  %7080 = vmatpush.msra.mxu0 %v6867
  %7081 = vmatpush.msra.mxu0 %v6863
  %7082 = vmatmul.f32.gmra.mxu0 %v7017
  %v7083 = vpop.f32.mrf.mxu0
  %v7084 = vadd.f32 %v7061, %v7083
  %7085 = vmatmul.f32.gmra.mxu0 %v7021
  %v7086 = vpop.f32.mrf.mxu0
  %v7087 = vadd.f32 %v7064, %v7086
  %7088 = vdwg.mxu0
  %7089 = vmatpush.msra.mxu0 %v6987
  %7090 = vmatpush.msra.mxu0 %v6983
  %7091 = vmatpush.msra.mxu0 %v6979
  %7092 = vmatpush.msra.mxu0 %v6975
  %7093 = vmatpush.msra.mxu0 %v6971
  %7094 = vmatpush.msra.mxu0 %v6967
  %7095 = vmatpush.msra.mxu0 %v6963
  %7096 = vmatpush.msra.mxu0 %v6959
  %7097 = vmatpush.msra.mxu0 %v6955
  %7098 = vmatpush.msra.mxu0 %v6951
  %7099 = vmatpush.msra.mxu0 %v6947
  %7100 = vmatpush.msra.mxu0 %v6943
  %7101 = vmatpush.msra.mxu0 %v6939
  %7102 = vmatpush.msra.mxu0 %v6935
  %7103 = vmatpush.msra.mxu0 %v6931
  %7104 = vmatpush.msra.mxu0 %v6927
  %7105 = vmatmul.f32.gmra.mxu0 %v7018
  %v7106 = vpop.f32.mrf.mxu0
  %v7107 = vadd.f32 %v7084, %v7106
  %7108 = vmatmul.f32.gmra.mxu0 %v7022
  %v7109 = vpop.f32.mrf.mxu0
  %v7110 = vadd.f32 %v7087, %v7109
  %7111 = vdwg.mxu0
  %7112 = vmatpush.msra.mxu0 0.0
  %7113 = vmatpush.msra.mxu0 0.0
  %7114 = vmatpush.msra.mxu0 0.0
  %7115 = vmatpush.msra.mxu0 0.0
  %7116 = vmatpush.msra.mxu0 0.0
  %7117 = vmatpush.msra.mxu0 0.0
  %7118 = vmatpush.msra.mxu0 0.0
  %7119 = vmatpush.msra.mxu0 0.0
  %7120 = vmatpush.msra.mxu0 0.0
  %7121 = vmatpush.msra.mxu0 0.0
  %7122 = vmatpush.msra.mxu0 %v7011
  %7123 = vmatpush.msra.mxu0 %v7007
  %7124 = vmatpush.msra.mxu0 %v7003
  %7125 = vmatpush.msra.mxu0 %v6999
  %7126 = vmatpush.msra.mxu0 %v6995
  %7127 = vmatpush.msra.mxu0 %v6991
  %7128 = vmatmul.f32.gmra.mxu0 %v7038
  %v7129 = vpop.f32.mrf.mxu0
  %v7130 = vadd.f32 %v7107, %v7129
  %7131 = vmatmul.f32.gmra.mxu0 %v7041
  %v7132 = vpop.f32.mrf.mxu0
  %v7133 = vadd.f32 %v7110, %v7132
  %7134 = vdwg.mxu0
  %7135 = vmatpush.msra.mxu0 %v6860
  %7136 = vmatpush.msra.mxu0 %v6856
  %7137 = vmatpush.msra.mxu0 %v6852
  %7138 = vmatpush.msra.mxu0 %v6848
  %7139 = vmatpush.msra.mxu0 %v6844
  %7140 = vmatpush.msra.mxu0 %v6840
  %7141 = vmatpush.msra.mxu0 %v6836
  %7142 = vmatpush.msra.mxu0 %v6832
  %7143 = vmatpush.msra.mxu0 %v6828
  %7144 = vmatpush.msra.mxu0 %v6824
  %7145 = vmatpush.msra.mxu0 %v6820
  %7146 = vmatpush.msra.mxu0 %v6816
  %7147 = vmatpush.msra.mxu0 %v6812
  %7148 = vmatpush.msra.mxu0 %v6808
  %7149 = vmatpush.msra.mxu0 %v6804
  %7150 = vmatpush.msra.mxu0 %v6800
  %7151 = vmatmul.f32.gmra.mxu0 %v7016
  %v7152 = vpop.f32.mrf.mxu0
  %v7153 = vadd.f32 %v7030, %v7152
  %7154 = vmatmul.f32.gmra.mxu0 %v7020
  %v7155 = vpop.f32.mrf.mxu0
  %v7156 = vadd.f32 %v7035, %v7155
  %7157 = vdwg.mxu0
  %7158 = vmatpush.msra.mxu0 %v6924
  %7159 = vmatpush.msra.mxu0 %v6920
  %7160 = vmatpush.msra.mxu0 %v6916
  %7161 = vmatpush.msra.mxu0 %v6912
  %7162 = vmatpush.msra.mxu0 %v6908
  %7163 = vmatpush.msra.mxu0 %v6904
  %7164 = vmatpush.msra.mxu0 %v6900
  %7165 = vmatpush.msra.mxu0 %v6896
  %7166 = vmatpush.msra.mxu0 %v6892
  %7167 = vmatpush.msra.mxu0 %v6888
  %7168 = vmatpush.msra.mxu0 %v6884
  %7169 = vmatpush.msra.mxu0 %v6880
  %7170 = vmatpush.msra.mxu0 %v6876
  %7171 = vmatpush.msra.mxu0 %v6872
  %7172 = vmatpush.msra.mxu0 %v6868
  %7173 = vmatpush.msra.mxu0 %v6864
  %7174 = vmatmul.f32.gmra.mxu0 %v7017
  %v7175 = vpop.f32.mrf.mxu0
  %v7176 = vadd.f32 %v7153, %v7175
  %7177 = vmatmul.f32.gmra.mxu0 %v7021
  %v7178 = vpop.f32.mrf.mxu0
  %v7179 = vadd.f32 %v7156, %v7178
  %7180 = vdwg.mxu0
  %7181 = vmatpush.msra.mxu0 %v6988
  %7182 = vmatpush.msra.mxu0 %v6984
  %7183 = vmatpush.msra.mxu0 %v6980
  %7184 = vmatpush.msra.mxu0 %v6976
  %7185 = vmatpush.msra.mxu0 %v6972
  %7186 = vmatpush.msra.mxu0 %v6968
  %7187 = vmatpush.msra.mxu0 %v6964
  %7188 = vmatpush.msra.mxu0 %v6960
  %7189 = vmatpush.msra.mxu0 %v6956
  %7190 = vmatpush.msra.mxu0 %v6952
  %7191 = vmatpush.msra.mxu0 %v6948
  %7192 = vmatpush.msra.mxu0 %v6944
  %7193 = vmatpush.msra.mxu0 %v6940
  %7194 = vmatpush.msra.mxu0 %v6936
  %7195 = vmatpush.msra.mxu0 %v6932
  %7196 = vmatpush.msra.mxu0 %v6928
  %7197 = vmatmul.f32.gmra.mxu0 %v7018
  %v7198 = vpop.f32.mrf.mxu0
  %v7199 = vadd.f32 %v7176, %v7198
  %7200 = vmatmul.f32.gmra.mxu0 %v7022
  %v7201 = vpop.f32.mrf.mxu0
  %v7202 = vadd.f32 %v7179, %v7201
  %7203 = vdwg.mxu0
  %7204 = vmatpush.msra.mxu0 0.0
  %7205 = vmatpush.msra.mxu0 0.0
  %7206 = vmatpush.msra.mxu0 0.0
  %7207 = vmatpush.msra.mxu0 0.0
  %7208 = vmatpush.msra.mxu0 0.0
  %7209 = vmatpush.msra.mxu0 0.0
  %7210 = vmatpush.msra.mxu0 0.0
  %7211 = vmatpush.msra.mxu0 0.0
  %7212 = vmatpush.msra.mxu0 0.0
  %7213 = vmatpush.msra.mxu0 0.0
  %7214 = vmatpush.msra.mxu0 %v7012
  %7215 = vmatpush.msra.mxu0 %v7008
  %7216 = vmatpush.msra.mxu0 %v7004
  %7217 = vmatpush.msra.mxu0 %v7000
  %7218 = vmatpush.msra.mxu0 %v6996
  %7219 = vmatpush.msra.mxu0 %v6992
  %7220 = vmatmul.f32.gmra.mxu0 %v7038
  %v7221 = vpop.f32.mrf.mxu0
  %v7222 = vadd.f32 %v7199, %v7221
  %7223 = vmatmul.f32.gmra.mxu0 %v7041
  %v7224 = vpop.f32.mrf.mxu0
  %v7225 = vadd.f32 %v7202, %v7224
  %7226 = vdwg.mxu0
  %7227 = vmatpush.msra.mxu0 %v6861
  %7228 = vmatpush.msra.mxu0 %v6857
  %7229 = vmatpush.msra.mxu0 %v6853
  %7230 = vmatpush.msra.mxu0 %v6849
  %7231 = vmatpush.msra.mxu0 %v6845
  %7232 = vmatpush.msra.mxu0 %v6841
  %7233 = vmatpush.msra.mxu0 %v6837
  %7234 = vmatpush.msra.mxu0 %v6833
  %7235 = vmatpush.msra.mxu0 %v6829
  %7236 = vmatpush.msra.mxu0 %v6825
  %7237 = vmatpush.msra.mxu0 %v6821
  %7238 = vmatpush.msra.mxu0 %v6817
  %7239 = vmatpush.msra.mxu0 %v6813
  %7240 = vmatpush.msra.mxu0 %v6809
  %7241 = vmatpush.msra.mxu0 %v6805
  %7242 = vmatpush.msra.mxu0 %v6801
  %7243 = vmatmul.f32.gmra.mxu0 %v7016
  %v7244 = vpop.f32.mrf.mxu0
  %v7245 = vadd.f32 %v7030, %v7244
  %7246 = vmatmul.f32.gmra.mxu0 %v7020
  %v7247 = vpop.f32.mrf.mxu0
  %v7248 = vadd.f32 %v7035, %v7247
  %7249 = vdwg.mxu0
  %7250 = vmatpush.msra.mxu0 %v6925
  %7251 = vmatpush.msra.mxu0 %v6921
  %7252 = vmatpush.msra.mxu0 %v6917
  %7253 = vmatpush.msra.mxu0 %v6913
  %7254 = vmatpush.msra.mxu0 %v6909
  %7255 = vmatpush.msra.mxu0 %v6905
  %7256 = vmatpush.msra.mxu0 %v6901
  %7257 = vmatpush.msra.mxu0 %v6897
  %7258 = vmatpush.msra.mxu0 %v6893
  %7259 = vmatpush.msra.mxu0 %v6889
  %7260 = vmatpush.msra.mxu0 %v6885
  %7261 = vmatpush.msra.mxu0 %v6881
  %7262 = vmatpush.msra.mxu0 %v6877
  %7263 = vmatpush.msra.mxu0 %v6873
  %7264 = vmatpush.msra.mxu0 %v6869
  %7265 = vmatpush.msra.mxu0 %v6865
  %7266 = vmatmul.f32.gmra.mxu0 %v7017
  %v7267 = vpop.f32.mrf.mxu0
  %v7268 = vadd.f32 %v7245, %v7267
  %7269 = vmatmul.f32.gmra.mxu0 %v7021
  %v7270 = vpop.f32.mrf.mxu0
  %v7271 = vadd.f32 %v7248, %v7270
  %7272 = vdwg.mxu0
  %7273 = vmatpush.msra.mxu0 %v6989
  %7274 = vmatpush.msra.mxu0 %v6985
  %7275 = vmatpush.msra.mxu0 %v6981
  %7276 = vmatpush.msra.mxu0 %v6977
  %7277 = vmatpush.msra.mxu0 %v6973
  %7278 = vmatpush.msra.mxu0 %v6969
  %7279 = vmatpush.msra.mxu0 %v6965
  %7280 = vmatpush.msra.mxu0 %v6961
  %7281 = vmatpush.msra.mxu0 %v6957
  %7282 = vmatpush.msra.mxu0 %v6953
  %7283 = vmatpush.msra.mxu0 %v6949
  %7284 = vmatpush.msra.mxu0 %v6945
  %7285 = vmatpush.msra.mxu0 %v6941
  %7286 = vmatpush.msra.mxu0 %v6937
  %7287 = vmatpush.msra.mxu0 %v6933
  %7288 = vmatpush.msra.mxu0 %v6929
  %7289 = vmatmul.f32.gmra.mxu0 %v7018
  %v7290 = vpop.f32.mrf.mxu0
  %v7291 = vadd.f32 %v7268, %v7290
  %7292 = vmatmul.f32.gmra.mxu0 %v7022
  %v7293 = vpop.f32.mrf.mxu0
  %v7294 = vadd.f32 %v7271, %v7293
  %7295 = vdwg.mxu0
  %7296 = vmatpush.msra.mxu0 0.0
  %7297 = vmatpush.msra.mxu0 0.0
  %7298 = vmatpush.msra.mxu0 0.0
  %7299 = vmatpush.msra.mxu0 0.0
  %7300 = vmatpush.msra.mxu0 0.0
  %7301 = vmatpush.msra.mxu0 0.0
  %7302 = vmatpush.msra.mxu0 0.0
  %7303 = vmatpush.msra.mxu0 0.0
  %7304 = vmatpush.msra.mxu0 0.0
  %7305 = vmatpush.msra.mxu0 0.0
  %7306 = vmatpush.msra.mxu0 %v7013
  %7307 = vmatpush.msra.mxu0 %v7009
  %7308 = vmatpush.msra.mxu0 %v7005
  %7309 = vmatpush.msra.mxu0 %v7001
  %7310 = vmatpush.msra.mxu0 %v6997
  %7311 = vmatpush.msra.mxu0 %v6993
  %7312 = vmatmul.f32.gmra.mxu0 %v7038
  %v7313 = vpop.f32.mrf.mxu0
  %v7314 = vadd.f32 %v7291, %v7313
  %7315 = vmatmul.f32.gmra.mxu0 %v7041
  %v7316 = vpop.f32.mrf.mxu0
  %v7317 = vadd.f32 %v7294, %v7316
  %7318 = vdwg.mxu0
  %7319 = vmatpush.msra.mxu0 %v6862
  %7320 = vmatpush.msra.mxu0 %v6858
  %7321 = vmatpush.msra.mxu0 %v6854
  %7322 = vmatpush.msra.mxu0 %v6850
  %7323 = vmatpush.msra.mxu0 %v6846
  %7324 = vmatpush.msra.mxu0 %v6842
  %7325 = vmatpush.msra.mxu0 %v6838
  %7326 = vmatpush.msra.mxu0 %v6834
  %7327 = vmatpush.msra.mxu0 %v6830
  %7328 = vmatpush.msra.mxu0 %v6826
  %7329 = vmatpush.msra.mxu0 %v6822
  %7330 = vmatpush.msra.mxu0 %v6818
  %7331 = vmatpush.msra.mxu0 %v6814
  %7332 = vmatpush.msra.mxu0 %v6810
  %7333 = vmatpush.msra.mxu0 %v6806
  %7334 = vmatpush.msra.mxu0 %v6802
  %7335 = vmatmul.f32.gmra.mxu0 %v7016
  %v7336 = vpop.f32.mrf.mxu0
  %v7337 = vadd.f32 %v7030, %v7336
  %7338 = vmatmul.f32.gmra.mxu0 %v7020
  %v7339 = vpop.f32.mrf.mxu0
  %v7340 = vadd.f32 %v7035, %v7339
  %7341 = vdwg.mxu0
  %7342 = vmatpush.msra.mxu0 %v6926
  %7343 = vmatpush.msra.mxu0 %v6922
  %7344 = vmatpush.msra.mxu0 %v6918
  %7345 = vmatpush.msra.mxu0 %v6914
  %7346 = vmatpush.msra.mxu0 %v6910
  %7347 = vmatpush.msra.mxu0 %v6906
  %7348 = vmatpush.msra.mxu0 %v6902
  %7349 = vmatpush.msra.mxu0 %v6898
  %7350 = vmatpush.msra.mxu0 %v6894
  %7351 = vmatpush.msra.mxu0 %v6890
  %7352 = vmatpush.msra.mxu0 %v6886
  %7353 = vmatpush.msra.mxu0 %v6882
  %7354 = vmatpush.msra.mxu0 %v6878
  %7355 = vmatpush.msra.mxu0 %v6874
  %7356 = vmatpush.msra.mxu0 %v6870
  %7357 = vmatpush.msra.mxu0 %v6866
  %7358 = vmatmul.f32.gmra.mxu0 %v7017
  %v7359 = vpop.f32.mrf.mxu0
  %v7360 = vadd.f32 %v7337, %v7359
  %7361 = vmatmul.f32.gmra.mxu0 %v7021
  %v7362 = vpop.f32.mrf.mxu0
  %v7363 = vadd.f32 %v7340, %v7362
  %7364 = vdwg.mxu0
  %7365 = vmatpush.msra.mxu0 %v6990
  %7366 = vmatpush.msra.mxu0 %v6986
  %7367 = vmatpush.msra.mxu0 %v6982
  %7368 = vmatpush.msra.mxu0 %v6978
  %7369 = vmatpush.msra.mxu0 %v6974
  %7370 = vmatpush.msra.mxu0 %v6970
  %7371 = vmatpush.msra.mxu0 %v6966
  %7372 = vmatpush.msra.mxu0 %v6962
  %7373 = vmatpush.msra.mxu0 %v6958
  %7374 = vmatpush.msra.mxu0 %v6954
  %7375 = vmatpush.msra.mxu0 %v6950
  %7376 = vmatpush.msra.mxu0 %v6946
  %7377 = vmatpush.msra.mxu0 %v6942
  %7378 = vmatpush.msra.mxu0 %v6938
  %7379 = vmatpush.msra.mxu0 %v6934
  %7380 = vmatpush.msra.mxu0 %v6930
  %7381 = vmatmul.f32.gmra.mxu0 %v7018
  %v7382 = vpop.f32.mrf.mxu0
  %v7383 = vadd.f32 %v7360, %v7382
  %7384 = vmatmul.f32.gmra.mxu0 %v7022
  %v7385 = vpop.f32.mrf.mxu0
  %v7386 = vadd.f32 %v7363, %v7385
  %7387 = vdwg.mxu0
  %7388 = vmatpush.msra.mxu0 0.0
  %7389 = vmatpush.msra.mxu0 0.0
  %7390 = vmatpush.msra.mxu0 0.0
  %7391 = vmatpush.msra.mxu0 0.0
  %7392 = vmatpush.msra.mxu0 0.0
  %7393 = vmatpush.msra.mxu0 0.0
  %7394 = vmatpush.msra.mxu0 0.0
  %7395 = vmatpush.msra.mxu0 0.0
  %7396 = vmatpush.msra.mxu0 0.0
  %7397 = vmatpush.msra.mxu0 0.0
  %7398 = vmatpush.msra.mxu0 %v7014
  %7399 = vmatpush.msra.mxu0 %v7010
  %7400 = vmatpush.msra.mxu0 %v7006
  %7401 = vmatpush.msra.mxu0 %v7002
  %7402 = vmatpush.msra.mxu0 %v6998
  %7403 = vmatpush.msra.mxu0 %v6994
  %7404 = vmatmul.f32.gmra.mxu0 %v7038
  %v7405 = vpop.f32.mrf.mxu0
  %v7406 = vadd.f32 %v7383, %v7405
  %7407 = vmatmul.f32.gmra.mxu0 %v7041
  %v7408 = vpop.f32.mrf.mxu0
  %v7409 = vadd.f32 %v7386, %v7408
  %7410 = vdwg.mxu0
  %v7411 = vadd.f32 %v7130, %v4999
  %v7412 = vadd.f32 %v7222, %v5022
  %v7413 = vadd.f32 %v7314, %v5045
  %v7414 = vadd.f32 %v7406, %v5068
  %v7415 = vadd.f32 %v7133, %v5002
  %v7416 = vadd.f32 %v7225, %v5025
  %v7417 = vadd.f32 %v7317, %v5048
  %v7418 = vadd.f32 %v7409, %v5071
  %7419 = vst [vmem:[#allocation3 + $0xc0] sm:$0xff] %v7411
  %7420 = vst [vmem:[#allocation3 + $0xc8] sm:$0xff] %v7412
  %7421 = vst [vmem:[#allocation3 + $0xd0] sm:$0xff] %v7413
  %7422 = vst [vmem:[#allocation3 + $0xd8] sm:$0xff] %v7414
  %7423 = vst [vmem:[#allocation3 + $0xe0] sm:$0xff] %v7415
  %7424 = vst [vmem:[#allocation3 + $0xe8] sm:$0xff] %v7416
  %7425 = vst [vmem:[#allocation3 + $0xf0] sm:$0xff] %v7417
  %7426 = vst [vmem:[#allocation3 + $0xf8] sm:$0xff] %v7418
  %v7427 = vld [vmem:[#allocation3] sm:$0xff]
  %v7428 = vld [vmem:[#allocation3 + $0x8] sm:$0xff]
  %v7429 = vld [vmem:[#allocation3 + $0x10] sm:$0xff]
  %v7430 = vld [vmem:[#allocation3 + $0x18] sm:$0xff]
  %v7431 = vld [vmem:[#allocation3 + $0x20] sm:$0xff]
  %v7432 = vld [vmem:[#allocation3 + $0x28] sm:$0xff]
  %v7433 = vld [vmem:[#allocation3 + $0x30] sm:$0xff]
  %v7434 = vld [vmem:[#allocation3 + $0x38] sm:$0xff]
  %v7435 = vld [vmem:[#allocation3 + $0x40] sm:$0xff]
  %v7436 = vld [vmem:[#allocation3 + $0x48] sm:$0xff]
  %v7437 = vld [vmem:[#allocation3 + $0x50] sm:$0xff]
  %v7438 = vld [vmem:[#allocation3 + $0x58] sm:$0xff]
  %v7439 = vld [vmem:[#allocation3 + $0x60] sm:$0xff]
  %v7440 = vld [vmem:[#allocation3 + $0x68] sm:$0xff]
  %v7441 = vld [vmem:[#allocation3 + $0x70] sm:$0xff]
  %v7442 = vld [vmem:[#allocation3 + $0x78] sm:$0xff]
  %v7443 = vld [vmem:[#allocation3 + $0x80] sm:$0xff]
  %v7444 = vld [vmem:[#allocation3 + $0x88] sm:$0xff]
  %v7445 = vld [vmem:[#allocation3 + $0x90] sm:$0xff]
  %v7446 = vld [vmem:[#allocation3 + $0x98] sm:$0xff]
  %v7447 = vld [vmem:[#allocation3 + $0xa0] sm:$0xff]
  %v7448 = vld [vmem:[#allocation3 + $0xa8] sm:$0xff]
  %v7449 = vld [vmem:[#allocation3 + $0xb0] sm:$0xff]
  %v7450 = vld [vmem:[#allocation3 + $0xb8] sm:$0xff]
  %v7451 = vld [vmem:[#allocation3 + $0xc0] sm:$0xff]
  %v7452 = vld [vmem:[#allocation3 + $0xc8] sm:$0xff]
  %v7453 = vld [vmem:[#allocation3 + $0xd0] sm:$0xff]
  %v7454 = vld [vmem:[#allocation3 + $0xd8] sm:$0xff]
  %v7455 = vld [vmem:[#allocation3 + $0xe0] sm:$0xff]
  %v7456 = vld [vmem:[#allocation3 + $0xe8] sm:$0xff]
  %v7457 = vld [vmem:[#allocation3 + $0xf0] sm:$0xff]
  %v7458 = vld [vmem:[#allocation3 + $0xf8] sm:$0xff]
  %v7459 = vld [vmem:[%s8] sm:$0xff]
  %v7460 = vld [vmem:[%s8 + $0x8] sm:$0xff]
  %s7461 = scalar_lea.vmem %s9, 32
  %v7462 = vld [vmem:[%s7461] sm:$0xff]
  %v7463 = vld [vmem:[%s7461 + $0x8] sm:$0xff]
  %7465 = vset.pattern.permute.xlu0 0
  %7466 = vperm.xlu0 %7465, %v7462
  %v7467 = vpop.permute.xlu0 %7466
  %7470 = vset.pattern.permute.xlu0 0
  %7471 = vperm.xlu0 %7470, %v7463
  %v7472 = vpop.permute.xlu0 %7471
  %vm7474 = vcmask 523264
  %v7476 = vsel %vm7474, %v7459, 0
  %v7479 = vsel %vm7474, %v7460, 0
  %7481 = vmatpush.msra.mxu0 0.0
  %7482 = vmatpush.msra.mxu0 0.0
  %7483 = vmatpush.msra.mxu0 0.0
  %7484 = vmatpush.msra.mxu0 0.0
  %7485 = vmatpush.msra.mxu0 0.0
  %7486 = vmatpush.msra.mxu0 0.0
  %7487 = vmatpush.msra.mxu0 0.0
  %7488 = vmatpush.msra.mxu0 0.0
  %7489 = vmatpush.msra.mxu0 %v7455
  %7490 = vmatpush.msra.mxu0 %v7451
  %7491 = vmatpush.msra.mxu0 %v7447
  %7492 = vmatpush.msra.mxu0 %v7443
  %7493 = vmatpush.msra.mxu0 %v7439
  %7494 = vmatpush.msra.mxu0 %v7435
  %7495 = vmatpush.msra.mxu0 %v7431
  %7496 = vmatpush.msra.mxu0 %v7427
  %7497 = vmatmul.f32.gmra.mxu0 %v7476
  %v7498 = vpop.f32.mrf.mxu0
  %v7499 = vadd.f32 %v7467, %v7498
  %7500 = vmatmul.f32.gmra.mxu0 %v7479
  %v7501 = vpop.f32.mrf.mxu0
  %v7502 = vadd.f32 %v7472, %v7501
  %7503 = vdwg.mxu0
  %7504 = vmatpush.msra.mxu0 0.0
  %7505 = vmatpush.msra.mxu0 0.0
  %7506 = vmatpush.msra.mxu0 0.0
  %7507 = vmatpush.msra.mxu0 0.0
  %7508 = vmatpush.msra.mxu0 0.0
  %7509 = vmatpush.msra.mxu0 0.0
  %7510 = vmatpush.msra.mxu0 0.0
  %7511 = vmatpush.msra.mxu0 0.0
  %7512 = vmatpush.msra.mxu0 %v7456
  %7513 = vmatpush.msra.mxu0 %v7452
  %7514 = vmatpush.msra.mxu0 %v7448
  %7515 = vmatpush.msra.mxu0 %v7444
  %7516 = vmatpush.msra.mxu0 %v7440
  %7517 = vmatpush.msra.mxu0 %v7436
  %7518 = vmatpush.msra.mxu0 %v7432
  %7519 = vmatpush.msra.mxu0 %v7428
  %7520 = vmatmul.f32.gmra.mxu0 %v7476
  %v7521 = vpop.f32.mrf.mxu0
  %v7522 = vadd.f32 %v7467, %v7521
  %7523 = vmatmul.f32.gmra.mxu0 %v7479
  %v7524 = vpop.f32.mrf.mxu0
  %v7525 = vadd.f32 %v7472, %v7524
  %7526 = vdwg.mxu0
  %7527 = vmatpush.msra.mxu0 0.0
  %7528 = vmatpush.msra.mxu0 0.0
  %7529 = vmatpush.msra.mxu0 0.0
  %7530 = vmatpush.msra.mxu0 0.0
  %7531 = vmatpush.msra.mxu0 0.0
  %7532 = vmatpush.msra.mxu0 0.0
  %7533 = vmatpush.msra.mxu0 0.0
  %7534 = vmatpush.msra.mxu0 0.0
  %7535 = vmatpush.msra.mxu0 %v7457
  %7536 = vmatpush.msra.mxu0 %v7453
  %7537 = vmatpush.msra.mxu0 %v7449
  %7538 = vmatpush.msra.mxu0 %v7445
  %7539 = vmatpush.msra.mxu0 %v7441
  %7540 = vmatpush.msra.mxu0 %v7437
  %7541 = vmatpush.msra.mxu0 %v7433
  %7542 = vmatpush.msra.mxu0 %v7429
  %7543 = vmatmul.f32.gmra.mxu0 %v7476
  %v7544 = vpop.f32.mrf.mxu0
  %v7545 = vadd.f32 %v7467, %v7544
  %7546 = vmatmul.f32.gmra.mxu0 %v7479
  %v7547 = vpop.f32.mrf.mxu0
  %v7548 = vadd.f32 %v7472, %v7547
  %7549 = vdwg.mxu0
  %7550 = vmatpush.msra.mxu0 0.0
  %7551 = vmatpush.msra.mxu0 0.0
  %7552 = vmatpush.msra.mxu0 0.0
  %7553 = vmatpush.msra.mxu0 0.0
  %7554 = vmatpush.msra.mxu0 0.0
  %7555 = vmatpush.msra.mxu0 0.0
  %7556 = vmatpush.msra.mxu0 0.0
  %7557 = vmatpush.msra.mxu0 0.0
  %7558 = vmatpush.msra.mxu0 %v7458
  %7559 = vmatpush.msra.mxu0 %v7454
  %7560 = vmatpush.msra.mxu0 %v7450
  %7561 = vmatpush.msra.mxu0 %v7446
  %7562 = vmatpush.msra.mxu0 %v7442
  %7563 = vmatpush.msra.mxu0 %v7438
  %7564 = vmatpush.msra.mxu0 %v7434
  %7565 = vmatpush.msra.mxu0 %v7430
  %7566 = vmatmul.f32.gmra.mxu0 %v7476
  %v7567 = vpop.f32.mrf.mxu0
  %v7568 = vadd.f32 %v7467, %v7567
  %7569 = vmatmul.f32.gmra.mxu0 %v7479
  %v7570 = vpop.f32.mrf.mxu0
  %v7571 = vadd.f32 %v7472, %v7570
  %7572 = vdwg.mxu0
  %7573 = vst [vmem:[%s10] sm:$0xff] %v7499
  %7574 = vst [vmem:[%s10 + $0x8] sm:$0xff] %v7522
  %7575 = vst [vmem:[%s10 + $0x10] sm:$0xff] %v7545
  %7576 = vst [vmem:[%s10 + $0x18] sm:$0xff] %v7568
  %7577 = vst [vmem:[%s10 + $0x20] sm:$0xff] %v7502
  %7578 = vst [vmem:[%s10 + $0x28] sm:$0xff] %v7525
  %7579 = vst [vmem:[%s10 + $0x30] sm:$0xff] %v7548
  %7580 = vst [vmem:[%s10 + $0x38] sm:$0xff] %v7571
  // Predicated region
  $region42: #{cascade_rdn_forward.1} parent=0 // pred_check
    _
  $region43: #{cascade_rdn_forward.1} parent=0 // pred_check_branch
    %7582 = sbr.rel (0) target = $region45
  $region44: #{cascade_rdn_forward.1} parent=0 // pred_region
    _
  $region45: #{cascade_rdn_forward.1} parent=0 // pred_fallthru
    _
  // Predicated region
  $region46: #{cascade_rdn_forward.1} parent=0 // pred_check
    _
  $region47: #{cascade_rdn_forward.1} parent=0 // pred_check_branch
    %7584 = sbr.rel (0) target = $region49
  $region48: #{cascade_rdn_forward.1} parent=0 // pred_region
    _
  $region49: #{cascade_rdn_forward.1} parent=0 // pred_fallthru
    _

</llo_original>
